<compile_context>
chip_gen: v7x
topology: tpu7x:2x2x1
jax: 0.10.0
libtpu: 0.0.40
codegen_flags: <defaults>
</compile_context>

<pallas_src>
import functools
import math

import jax
import jax.numpy as jnp
from jax import lax
from jax.experimental import pallas as pl
from jax.experimental.pallas import tpu as pltpu


FC_OUT_PAD = 128  # lane-dense padded width of the final Linear output


def _round_up(x, m):
    return ((x + m - 1) // m) * m


# ---------------------------------------------------------------------------
# Pallas kernels
# ---------------------------------------------------------------------------
def _matmul_bias_act_kernel(x_ref, w_ref, b_ref, o_ref, *, act):
    y = jnp.dot(x_ref[...], w_ref[...], preferred_element_type=jnp.float32)
    y = y + b_ref[...]
    if act == "relu":
        y = jnp.maximum(y, 0.0)
    o_ref[...] = y.astype(o_ref.dtype)


def matmul_bias_act(x, w, b, act="none", tile_m=256):
    """out = act(x @ w + b); x:(M,K) w:(K,N) b:(N,).

    Tiled over M with a parallel grid; K and N are zero-padded to multiples of
    128 so every block is lane-dense (unmasked vector loads/stores, full MXU
    columns).  Padding is stripped before returning.
    """
    M, K = x.shape
    K2, N = w.shape
    assert K == K2
    Kp = _round_up(K, 128)
    Np = _round_up(N, 128)
    Mp = _round_up(M, tile_m)

    x_p = jnp.pad(x, ((0, Mp - M), (0, Kp - K)))
    w_p = jnp.pad(w, ((0, Kp - K), (0, Np - N)))
    b_p = jnp.pad(b.reshape(1, N), ((0, 0), (0, Np - N)))

    out = pl.pallas_call(
        functools.partial(_matmul_bias_act_kernel, act=act),
        out_shape=jax.ShapeDtypeStruct((Mp, Np), jnp.float32),
        grid_spec=pltpu.PrefetchScalarGridSpec(
            num_scalar_prefetch=0,
            grid=(Mp // tile_m,),
            in_specs=[
                pl.BlockSpec((tile_m, Kp), lambda i: (i, 0)),
                pl.BlockSpec((Kp, Np), lambda i: (0, 0)),
                pl.BlockSpec((1, Np), lambda i: (0, 0)),
            ],
            out_specs=pl.BlockSpec((tile_m, Np), lambda i: (i, 0)),
        ),
        compiler_params=pltpu.CompilerParams(
            dimension_semantics=("parallel",)),
    )(x_p, w_p, b_p)
    return out[:M, :N]


def _rnn_fc_kernel(x_ref, h0_ref, h1_ref,
                   wih0_ref, whh0_ref, b0_ref,
                   wih1_ref, whh1_ref, b1_ref,
                   wfc_ref, bfc_ref,
                   q_ref, h0o_ref, h1o_ref):
    """Fused: 2-layer tanh-RNN (single time step) + Linear head.

    Weights are bf16, accumulation in f32 on the MXU; biases/activations f32.
    """
    bf16 = jnp.bfloat16
    x = x_ref[...].astype(bf16)
    h0 = h0_ref[...].astype(bf16)
    h1 = h1_ref[...].astype(bf16)

    a0 = jnp.tanh(
        jnp.dot(x, wih0_ref[...], preferred_element_type=jnp.float32)
        + jnp.dot(h0, whh0_ref[...], preferred_element_type=jnp.float32)
        + b0_ref[...])
    a1 = jnp.tanh(
        jnp.dot(a0.astype(bf16), wih1_ref[...], preferred_element_type=jnp.float32)
        + jnp.dot(h1, whh1_ref[...], preferred_element_type=jnp.float32)
        + b1_ref[...])
    q = jnp.dot(a1.astype(bf16), wfc_ref[...],
                preferred_element_type=jnp.float32) + bfc_ref[...]

    h0o_ref[...] = a0
    h1o_ref[...] = a1
    q_ref[...] = q


def rnn_fc_fused(params, x, h0, h1):
    B = x.shape[0]
    H = 512
    return pl.pallas_call(
        _rnn_fc_kernel,
        out_shape=(
            jax.ShapeDtypeStruct((B, FC_OUT_PAD), jnp.float32),  # padded Q
            jax.ShapeDtypeStruct((B, H), jnp.float32),           # new h layer 0
            jax.ShapeDtypeStruct((B, H), jnp.float32),           # new h layer 1
        ),
        compiler_params=pltpu.CompilerParams(
            vmem_limit_bytes=32 * 1024 * 1024),
    )(x, h0, h1,
      params["rnn_wih0"], params["rnn_whh0"], params["rnn_b0"],
      params["rnn_wih1"], params["rnn_whh1"], params["rnn_b1"],
      params["fc_w"], params["fc_b"])


# ---------------------------------------------------------------------------
# im2col glue (NHWC, static strided slices — no gathers, no layout shuffles)
# ---------------------------------------------------------------------------
def extract_patches_nhwc(x, k, s):
    B, H, W, C = x.shape
    Ho = (H - k) // s + 1
    Wo = (W - k) // s + 1
    slabs = []
    for di in range(k):
        for dj in range(k):
            slabs.append(lax.slice(
                x,
                (0, di, dj, 0),
                (B, di + (Ho - 1) * s + 1, dj + (Wo - 1) * s + 1, C),
                (1, s, s, 1)))                        # (B, Ho, Wo, C)
    p = jnp.stack(slabs, axis=3)                      # (B, Ho, Wo, k*k, C)
    return p.reshape(B * Ho * Wo, k * k * C), Ho, Wo  # feature order (kh,kw,C)


def conv_block(x, w_mat, b_vec, k, stride):
    """x: NHWC; w_mat: (k*k*Cin, Cout) with BN folded; returns NHWC."""
    patches, Ho, Wo = extract_patches_nhwc(x, k, stride)
    y = matmul_bias_act(patches, w_mat, b_vec, act="relu")   # (B*Ho*Wo, Cout)
    B = x.shape[0]
    Cout = w_mat.shape[1]
    return y.reshape(B, Ho, Wo, Cout)


# ---------------------------------------------------------------------------
# Parameter initialization (PyTorch layouts) + one-time preparation
# ---------------------------------------------------------------------------
def _uniform(key, shape, fan_in):
    bound = 1.0 / math.sqrt(fan_in)
    return jax.random.uniform(key, shape, jnp.float32, -bound, bound)


def init_params(key):
    ks = jax.random.split(key, 16)
    p = {}
    p["conv1_w"] = _uniform(ks[0], (32, 4, 8, 8), 4 * 8 * 8)
    p["conv1_b"] = _uniform(ks[1], (32,), 4 * 8 * 8)
    p["bn1"] = (jnp.ones(32), jnp.zeros(32), jnp.zeros(32), jnp.ones(32))
    p["conv2_w"] = _uniform(ks[2], (64, 32, 4, 4), 32 * 4 * 4)
    p["conv2_b"] = _uniform(ks[3], (64,), 32 * 4 * 4)
    p["bn2"] = (jnp.ones(64), jnp.zeros(64), jnp.zeros(64), jnp.ones(64))
    p["conv3_w"] = _uniform(ks[4], (64, 64, 3, 3), 64 * 3 * 3)
    p["conv3_b"] = _uniform(ks[5], (64,), 64 * 3 * 3)
    p["bn3"] = (jnp.ones(64), jnp.zeros(64), jnp.zeros(64), jnp.ones(64))
    H, IN = 512, 64 * 7 * 7
    p["rnn_wih0"] = _uniform(ks[6], (H, IN), H)
    p["rnn_whh0"] = _uniform(ks[7], (H, H), H)
    p["rnn_bih0"] = _uniform(ks[8], (H,), H)
    p["rnn_bhh0"] = _uniform(ks[9], (H,), H)
    p["rnn_wih1"] = _uniform(ks[10], (H, H), H)
    p["rnn_whh1"] = _uniform(ks[11], (H, H), H)
    p["rnn_bih1"] = _uniform(ks[12], (H,), H)
    p["rnn_bhh1"] = _uniform(ks[13], (H,), H)
    p["fc_w"] = _uniform(ks[14], (2, H), H)
    p["fc_b"] = _uniform(ks[15], (2,), H)
    return p


def prepare_params(raw, eps=1e-5):
    """One-time conversion: fold BN, reorder/transpose/cast weights, fold biases."""
    prep = {}
    # ---- convs: fold eval-mode BN and reshape to (kh*kw*Cin, Cout) ----------
    for idx, name in enumerate(("conv1", "conv2", "conv3"), start=1):
        w = raw[f"{name}_w"]                  # (Cout, Cin, kh, kw)
        b = raw[f"{name}_b"]
        gamma, beta, mean, var = raw[f"bn{idx}"]
        scale = gamma / jnp.sqrt(var + eps)
        Cout, Cin, k, _ = w.shape
        w_f = (w * scale[:, None, None, None])
        w_f = w_f.transpose(2, 3, 1, 0).reshape(k * k * Cin, Cout)
        prep[f"{name}_w"] = w_f
        prep[f"{name}_b"] = (b - mean) * scale + beta
    # ---- RNN + FC: pre-transpose, fold biases, cast big weights to bf16 -----
    H = 512
    # permute wih0 input features from PyTorch (C,H,W) flatten order to the
    # NHWC (H,W,C) flatten order used here, so semantics match a torch port.
    wih0 = raw["rnn_wih0"].reshape(H, 64, 7, 7).transpose(0, 2, 3, 1).reshape(H, 64 * 7 * 7)
    prep["rnn_wih0"] = wih0.T.astype(jnp.bfloat16)                # (3136, 512)
    prep["rnn_whh0"] = raw["rnn_whh0"].T.astype(jnp.bfloat16)     # (512, 512)
    prep["rnn_b0"] = (raw["rnn_bih0"] + raw["rnn_bhh0"]).reshape(1, H)
    prep["rnn_wih1"] = raw["rnn_wih1"].T.astype(jnp.bfloat16)
    prep["rnn_whh1"] = raw["rnn_whh1"].T.astype(jnp.bfloat16)
    prep["rnn_b1"] = (raw["rnn_bih1"] + raw["rnn_bhh1"]).reshape(1, H)
    # fc: (2, 512) -> (512, FC_OUT_PAD) lane-dense padded
    wfc = jnp.zeros((H, FC_OUT_PAD), jnp.float32).at[:, :2].set(raw["fc_w"].T)
    bfc = jnp.zeros((1, FC_OUT_PAD), jnp.float32).at[:, :2].set(raw["fc_b"])
    prep["fc_w"] = wfc.astype(jnp.bfloat16)
    prep["fc_b"] = bfc
    return prep


# ---------------------------------------------------------------------------
# Forward pass (mirrors model.forward)
# ---------------------------------------------------------------------------
def forward(params, x, hidden):
    # x: (B, 4, 84, 84) NCHW (PyTorch convention), hidden: (2, B, 512)
    x = jnp.transpose(x, (0, 2, 3, 1))                         # -> NHWC once
    x = conv_block(x, params["conv1_w"], params["conv1_b"], k=8, stride=4)  # (B,20,20,32)
    x = conv_block(x, params["conv2_w"], params["conv2_b"], k=4, stride=2)  # (B, 9, 9,64)
    x = conv_block(x, params["conv3_w"], params["conv3_b"], k=3, stride=1)  # (B, 7, 7,64)
    B = x.shape[0]
    flat = x.reshape(B, 7 * 7 * 64)      # seq_len == 1; wih0 was permuted to HWC order
    q_pad, _h0_new, _h1_new = rnn_fc_fused(params, flat, hidden[0], hidden[1])
    # nn.Module.forward returns only the Q-values; the updated hidden state
    # (_h0_new, _h1_new) is available from rnn_fc_fused for stateful rollouts.
    return q_pad[:, :2]


if __name__ == "__main__":
    key = jax.random.PRNGKey(0)
    pkey, xkey = jax.random.split(key)
    raw_params = init_params(pkey)
    params = prepare_params(raw_params)

    B = 2
    # spatial 84x84 is required by the module's 7*7*64 flatten
    x = jax.random.normal(xkey, (B, 4, 84, 84), jnp.float32)
    hidden = jnp.zeros((2, B, 512), jnp.float32)          # model.init_hidden(B)

    fwd = jax.jit(forward)
    out = jax.block_until_ready(fwd(params, x, hidden))
    assert out.shape == (B, 2) and out.dtype == jnp.float32
    print("KERNEL_OK")
</pallas_src>

<mosaic_0001>
module attributes {stable_mosaic.version = 11 : i64} {
  func.func @_matmul_bias_act_kernel(%arg0: i32, %arg1: memref<256x256xf32, #tpu.memory_space<vmem>>, %arg2: memref<256x128xf32, #tpu.memory_space<vmem>>, %arg3: memref<1x128xf32, #tpu.memory_space<vmem>>, %arg4: memref<256x128xf32, #tpu.memory_space<vmem>>) attributes {dimension_semantics = [#tpu.dimension_semantics<parallel>], iteration_bounds = array<i64: 4>, scalar_prefetch = 0 : i64, scratch_operands = 0 : i64, tpu.core_type = #tpu.core_type<tc>, window_params = [{transform_indices = @transform_0, window_bounds = array<i64: 256, 256>}, {pipeline_mode = #tpu.pipeline_mode<synchronous>, transform_indices = @transform_1, window_bounds = array<i64: 256, 128>}, {pipeline_mode = #tpu.pipeline_mode<synchronous>, transform_indices = @transform_2, window_bounds = array<i64: 1, 128>}, {transform_indices = @transform_3, window_bounds = array<i64: 256, 128>}]} {
    %c0 = arith.constant 0 : index
    %c0_0 = arith.constant 0 : index
    %0 = vector.load %arg1[%c0, %c0_0] : memref<256x256xf32, #tpu.memory_space<vmem>>, vector<256x256xf32>
    %c0_1 = arith.constant 0 : index
    %c0_2 = arith.constant 0 : index
    %1 = vector.load %arg2[%c0_1, %c0_2] : memref<256x128xf32, #tpu.memory_space<vmem>>, vector<256x128xf32>
    %cst = arith.constant dense<0.000000e+00> : vector<256x128xf32>
    %2 = tpu.matmul %0, %1, %cst {dimension_numbers = #tpu.dot_dimension_numbers<[1], [0], [0], [1], [0, 0, 1, 1], [], []>} : vector<256x256xf32>, vector<256x128xf32>, vector<256x128xf32> -> vector<256x128xf32>
    %c0_3 = arith.constant 0 : index
    %c0_4 = arith.constant 0 : index
    %3 = vector.load %arg3[%c0_3, %c0_4] : memref<1x128xf32, #tpu.memory_space<vmem>>, vector<1x128xf32>
    %4 = vector.broadcast %3 : vector<1x128xf32> to vector<256x128xf32>
    %5 = arith.addf %2, %4 : vector<256x128xf32>
    %cst_5 = arith.constant 0.000000e+00 : f32
    %6 = vector.broadcast %cst_5 : f32 to vector<256x128xf32>
    %7 = arith.maximumf %5, %6 : vector<256x128xf32>
    %c0_6 = arith.constant 0 : index
    %c0_7 = arith.constant 0 : index
    %8 = vector.load %arg4[%c0_6, %c0_7] : memref<256x128xf32, #tpu.memory_space<vmem>>, vector<256x128xf32>
    tpu.vector_store %arg4[%c0_6, %c0_7], %7 {strides = array<i32>} : memref<256x128xf32, #tpu.memory_space<vmem>>, vector<256x128xf32>,
    return
  }
  func.func @transform_0(%arg0: i32) -> (i32, i32) {
    %c0_i32 = arith.constant 0 : i32
    %c0_i32_0 = arith.constant 0 : i32
    return %arg0, %c0_i32 : i32, i32
  }
  func.func @transform_1(%arg0: i32) -> (i32, i32) {
    %c0_i32 = arith.constant 0 : i32
    %c0_i32_0 = arith.constant 0 : i32
    %c0_i32_1 = arith.constant 0 : i32
    return %c0_i32, %c0_i32_0 : i32, i32
  }
  func.func @transform_2(%arg0: i32) -> (i32, i32) {
    %c0_i32 = arith.constant 0 : i32
    %c0_i32_0 = arith.constant 0 : i32
    %c0_i32_1 = arith.constant 0 : i32
    return %c0_i32, %c0_i32_0 : i32, i32
  }
  func.func @transform_3(%arg0: i32) -> (i32, i32) {
    %c0_i32 = arith.constant 0 : i32
    %c0_i32_0 = arith.constant 0 : i32
    return %arg0, %c0_i32 : i32, i32
  }
}

module attributes {stable_mosaic.version = 11 : i64} {
  func.func @_matmul_bias_act_kernel(%arg0: i32, %arg1: memref<256x512xf32, #tpu.memory_space<vmem>>, %arg2: memref<512x128xf32, #tpu.memory_space<vmem>>, %arg3: memref<1x128xf32, #tpu.memory_space<vmem>>, %arg4: memref<256x128xf32, #tpu.memory_space<vmem>>) attributes {dimension_semantics = [#tpu.dimension_semantics<parallel>], iteration_bounds = array<i64: 1>, scalar_prefetch = 0 : i64, scratch_operands = 0 : i64, tpu.core_type = #tpu.core_type<tc>, window_params = [{transform_indices = @transform_0, window_bounds = array<i64: 256, 512>}, {pipeline_mode = #tpu.pipeline_mode<synchronous>, transform_indices = @transform_1, window_bounds = array<i64: 512, 128>}, {pipeline_mode = #tpu.pipeline_mode<synchronous>, transform_indices = @transform_2, window_bounds = array<i64: 1, 128>}, {transform_indices = @transform_3, window_bounds = array<i64: 256, 128>}]} {
    %c0 = arith.constant 0 : index
    %c0_0 = arith.constant 0 : index
    %0 = vector.load %arg1[%c0, %c0_0] : memref<256x512xf32, #tpu.memory_space<vmem>>, vector<256x512xf32>
    %c0_1 = arith.constant 0 : index
    %c0_2 = arith.constant 0 : index
    %1 = vector.load %arg2[%c0_1, %c0_2] : memref<512x128xf32, #tpu.memory_space<vmem>>, vector<512x128xf32>
    %cst = arith.constant dense<0.000000e+00> : vector<256x128xf32>
    %2 = tpu.matmul %0, %1, %cst {dimension_numbers = #tpu.dot_dimension_numbers<[1], [0], [0], [1], [0, 0, 1, 1], [], []>} : vector<256x512xf32>, vector<512x128xf32>, vector<256x128xf32> -> vector<256x128xf32>
    %c0_3 = arith.constant 0 : index
    %c0_4 = arith.constant 0 : index
    %3 = vector.load %arg3[%c0_3, %c0_4] : memref<1x128xf32, #tpu.memory_space<vmem>>, vector<1x128xf32>
    %4 = vector.broadcast %3 : vector<1x128xf32> to vector<256x128xf32>
    %5 = arith.addf %2, %4 : vector<256x128xf32>
    %cst_5 = arith.constant 0.000000e+00 : f32
    %6 = vector.broadcast %cst_5 : f32 to vector<256x128xf32>
    %7 = arith.maximumf %5, %6 : vector<256x128xf32>
    %c0_6 = arith.constant 0 : index
    %c0_7 = arith.constant 0 : index
    %8 = vector.load %arg4[%c0_6, %c0_7] : memref<256x128xf32, #tpu.memory_space<vmem>>, vector<256x128xf32>
    tpu.vector_store %arg4[%c0_6, %c0_7], %7 {strides = array<i32>} : memref<256x128xf32, #tpu.memory_space<vmem>>, vector<256x128xf32>,
    return
  }
  func.func @transform_0(%arg0: i32) -> (i32, i32) {
    %c0_i32 = arith.constant 0 : i32
    %c0_i32_0 = arith.constant 0 : i32
    return %arg0, %c0_i32 : i32, i32
  }
  func.func @transform_1(%arg0: i32) -> (i32, i32) {
    %c0_i32 = arith.constant 0 : i32
    %c0_i32_0 = arith.constant 0 : i32
    %c0_i32_1 = arith.constant 0 : i32
    return %c0_i32, %c0_i32_0 : i32, i32
  }
  func.func @transform_2(%arg0: i32) -> (i32, i32) {
    %c0_i32 = arith.constant 0 : i32
    %c0_i32_0 = arith.constant 0 : i32
    %c0_i32_1 = arith.constant 0 : i32
    return %c0_i32, %c0_i32_0 : i32, i32
  }
  func.func @transform_3(%arg0: i32) -> (i32, i32) {
    %c0_i32 = arith.constant 0 : i32
    %c0_i32_0 = arith.constant 0 : i32
    return %arg0, %c0_i32 : i32, i32
  }
}

module attributes {stable_mosaic.version = 11 : i64} {
  func.func @_matmul_bias_act_kernel(%arg0: i32, %arg1: memref<256x640xf32, #tpu.memory_space<vmem>>, %arg2: memref<640x128xf32, #tpu.memory_space<vmem>>, %arg3: memref<1x128xf32, #tpu.memory_space<vmem>>, %arg4: memref<256x128xf32, #tpu.memory_space<vmem>>) attributes {dimension_semantics = [#tpu.dimension_semantics<parallel>], iteration_bounds = array<i64: 1>, scalar_prefetch = 0 : i64, scratch_operands = 0 : i64, tpu.core_type = #tpu.core_type<tc>, window_params = [{transform_indices = @transform_0, window_bounds = array<i64: 256, 640>}, {pipeline_mode = #tpu.pipeline_mode<synchronous>, transform_indices = @transform_1, window_bounds = array<i64: 640, 128>}, {pipeline_mode = #tpu.pipeline_mode<synchronous>, transform_indices = @transform_2, window_bounds = array<i64: 1, 128>}, {transform_indices = @transform_3, window_bounds = array<i64: 256, 128>}]} {
    %c0 = arith.constant 0 : index
    %c0_0 = arith.constant 0 : index
    %0 = vector.load %arg1[%c0, %c0_0] : memref<256x640xf32, #tpu.memory_space<vmem>>, vector<256x640xf32>
    %c0_1 = arith.constant 0 : index
    %c0_2 = arith.constant 0 : index
    %1 = vector.load %arg2[%c0_1, %c0_2] : memref<640x128xf32, #tpu.memory_space<vmem>>, vector<640x128xf32>
    %cst = arith.constant dense<0.000000e+00> : vector<256x128xf32>
    %2 = tpu.matmul %0, %1, %cst {dimension_numbers = #tpu.dot_dimension_numbers<[1], [0], [0], [1], [0, 0, 1, 1], [], []>} : vector<256x640xf32>, vector<640x128xf32>, vector<256x128xf32> -> vector<256x128xf32>
    %c0_3 = arith.constant 0 : index
    %c0_4 = arith.constant 0 : index
    %3 = vector.load %arg3[%c0_3, %c0_4] : memref<1x128xf32, #tpu.memory_space<vmem>>, vector<1x128xf32>
    %4 = vector.broadcast %3 : vector<1x128xf32> to vector<256x128xf32>
    %5 = arith.addf %2, %4 : vector<256x128xf32>
    %cst_5 = arith.constant 0.000000e+00 : f32
    %6 = vector.broadcast %cst_5 : f32 to vector<256x128xf32>
    %7 = arith.maximumf %5, %6 : vector<256x128xf32>
    %c0_6 = arith.constant 0 : index
    %c0_7 = arith.constant 0 : index
    %8 = vector.load %arg4[%c0_6, %c0_7] : memref<256x128xf32, #tpu.memory_space<vmem>>, vector<256x128xf32>
    tpu.vector_store %arg4[%c0_6, %c0_7], %7 {strides = array<i32>} : memref<256x128xf32, #tpu.memory_space<vmem>>, vector<256x128xf32>,
    return
  }
  func.func @transform_0(%arg0: i32) -> (i32, i32) {
    %c0_i32 = arith.constant 0 : i32
    %c0_i32_0 = arith.constant 0 : i32
    return %arg0, %c0_i32 : i32, i32
  }
  func.func @transform_1(%arg0: i32) -> (i32, i32) {
    %c0_i32 = arith.constant 0 : i32
    %c0_i32_0 = arith.constant 0 : i32
    %c0_i32_1 = arith.constant 0 : i32
    return %c0_i32, %c0_i32_0 : i32, i32
  }
  func.func @transform_2(%arg0: i32) -> (i32, i32) {
    %c0_i32 = arith.constant 0 : i32
    %c0_i32_0 = arith.constant 0 : i32
    %c0_i32_1 = arith.constant 0 : i32
    return %c0_i32, %c0_i32_0 : i32, i32
  }
  func.func @transform_3(%arg0: i32) -> (i32, i32) {
    %c0_i32 = arith.constant 0 : i32
    %c0_i32_0 = arith.constant 0 : i32
    return %arg0, %c0_i32 : i32, i32
  }
}

module attributes {stable_mosaic.version = 11 : i64} {
  func.func @_rnn_fc_kernel(%arg0: memref<2x3136xf32, #tpu.memory_space<vmem>>, %arg1: memref<2x512xf32, #tpu.memory_space<vmem>>, %arg2: memref<2x512xf32, #tpu.memory_space<vmem>>, %arg3: memref<3136x512xbf16, #tpu.memory_space<vmem>>, %arg4: memref<512x512xbf16, #tpu.memory_space<vmem>>, %arg5: memref<1x512xf32, #tpu.memory_space<vmem>>, %arg6: memref<512x512xbf16, #tpu.memory_space<vmem>>, %arg7: memref<512x512xbf16, #tpu.memory_space<vmem>>, %arg8: memref<1x512xf32, #tpu.memory_space<vmem>>, %arg9: memref<512x128xbf16, #tpu.memory_space<vmem>>, %arg10: memref<1x128xf32, #tpu.memory_space<vmem>>, %arg11: memref<2x128xf32, #tpu.memory_space<vmem>>, %arg12: memref<2x512xf32, #tpu.memory_space<vmem>>, %arg13: memref<2x512xf32, #tpu.memory_space<vmem>>) attributes {dimension_semantics = [], scalar_prefetch = 0 : i64, scratch_operands = 0 : i64, tpu.core_type = #tpu.core_type<tc>} {
    %c0 = arith.constant 0 : index
    %c0_0 = arith.constant 0 : index
    %0 = vector.load %arg0[%c0, %c0_0] : memref<2x3136xf32, #tpu.memory_space<vmem>>, vector<2x3136xf32>
    %1 = arith.truncf %0 : vector<2x3136xf32> to vector<2x3136xbf16>
    %c0_1 = arith.constant 0 : index
    %c0_2 = arith.constant 0 : index
    %2 = vector.load %arg1[%c0_1, %c0_2] : memref<2x512xf32, #tpu.memory_space<vmem>>, vector<2x512xf32>
    %3 = arith.truncf %2 : vector<2x512xf32> to vector<2x512xbf16>
    %c0_3 = arith.constant 0 : index
    %c0_4 = arith.constant 0 : index
    %4 = vector.load %arg2[%c0_3, %c0_4] : memref<2x512xf32, #tpu.memory_space<vmem>>, vector<2x512xf32>
    %5 = arith.truncf %4 : vector<2x512xf32> to vector<2x512xbf16>
    %c0_5 = arith.constant 0 : index
    %c0_6 = arith.constant 0 : index
    %6 = vector.load %arg3[%c0_5, %c0_6] : memref<3136x512xbf16, #tpu.memory_space<vmem>>, vector<3136x512xbf16>
    %cst = arith.constant dense<0.000000e+00> : vector<2x512xf32>
    %7 = tpu.matmul %1, %6, %cst {dimension_numbers = #tpu.dot_dimension_numbers<[1], [0], [0], [1], [0, 0, 1, 1], [], []>} : vector<2x3136xbf16>, vector<3136x512xbf16>, vector<2x512xf32> -> vector<2x512xf32>
    %c0_7 = arith.constant 0 : index
    %c0_8 = arith.constant 0 : index
    %8 = vector.load %arg4[%c0_7, %c0_8] : memref<512x512xbf16, #tpu.memory_space<vmem>>, vector<512x512xbf16>
    %cst_9 = arith.constant dense<0.000000e+00> : vector<2x512xf32>
    %9 = tpu.matmul %3, %8, %cst_9 {dimension_numbers = #tpu.dot_dimension_numbers<[1], [0], [0], [1], [0, 0, 1, 1], [], []>} : vector<2x512xbf16>, vector<512x512xbf16>, vector<2x512xf32> -> vector<2x512xf32>
    %10 = arith.addf %7, %9 : vector<2x512xf32>
    %c0_10 = arith.constant 0 : index
    %c0_11 = arith.constant 0 : index
    %11 = vector.load %arg5[%c0_10, %c0_11] : memref<1x512xf32, #tpu.memory_space<vmem>>, vector<1x512xf32>
    %12 = vector.broadcast %11 : vector<1x512xf32> to vector<2x512xf32>
    %13 = arith.addf %10, %12 : vector<2x512xf32>
    %14 = math.tanh %13 : vector<2x512xf32>
    %15 = arith.truncf %14 : vector<2x512xf32> to vector<2x512xbf16>
    %c0_12 = arith.constant 0 : index
    %c0_13 = arith.constant 0 : index
    %16 = vector.load %arg6[%c0_12, %c0_13] : memref<512x512xbf16, #tpu.memory_space<vmem>>, vector<512x512xbf16>
    %cst_14 = arith.constant dense<0.000000e+00> : vector<2x512xf32>
    %17 = tpu.matmul %15, %16, %cst_14 {dimension_numbers = #tpu.dot_dimension_numbers<[1], [0], [0], [1], [0, 0, 1, 1], [], []>} : vector<2x512xbf16>, vector<512x512xbf16>, vector<2x512xf32> -> vector<2x512xf32>
    %c0_15 = arith.constant 0 : index
    %c0_16 = arith.constant 0 : index
    %18 = vector.load %arg7[%c0_15, %c0_16] : memref<512x512xbf16, #tpu.memory_space<vmem>>, vector<512x512xbf16>
    %cst_17 = arith.constant dense<0.000000e+00> : vector<2x512xf32>
    %19 = tpu.matmul %5, %18, %cst_17 {dimension_numbers = #tpu.dot_dimension_numbers<[1], [0], [0], [1], [0, 0, 1, 1], [], []>} : vector<2x512xbf16>, vector<512x512xbf16>, vector<2x512xf32> -> vector<2x512xf32>
    %20 = arith.addf %17, %19 : vector<2x512xf32>
    %c0_18 = arith.constant 0 : index
    %c0_19 = arith.constant 0 : index
    %21 = vector.load %arg8[%c0_18, %c0_19] : memref<1x512xf32, #tpu.memory_space<vmem>>, vector<1x512xf32>
    %22 = vector.broadcast %21 : vector<1x512xf32> to vector<2x512xf32>
    %23 = arith.addf %20, %22 : vector<2x512xf32>
    %24 = math.tanh %23 : vector<2x512xf32>
    %25 = arith.truncf %24 : vector<2x512xf32> to vector<2x512xbf16>
    %c0_20 = arith.constant 0 : index
    %c0_21 = arith.constant 0 : index
    %26 = vector.load %arg9[%c0_20, %c0_21] : memref<512x128xbf16, #tpu.memory_space<vmem>>, vector<512x128xbf16>
    %cst_22 = arith.constant dense<0.000000e+00> : vector<2x128xf32>
    %27 = tpu.matmul %25, %26, %cst_22 {dimension_numbers = #tpu.dot_dimension_numbers<[1], [0], [0], [1], [0, 0, 1, 1], [], []>} : vector<2x512xbf16>, vector<512x128xbf16>, vector<2x128xf32> -> vector<2x128xf32>
    %c0_23 = arith.constant 0 : index
    %c0_24 = arith.constant 0 : index
    %28 = vector.load %arg10[%c0_23, %c0_24] : memref<1x128xf32, #tpu.memory_space<vmem>>, vector<1x128xf32>
    %29 = vector.broadcast %28 : vector<1x128xf32> to vector<2x128xf32>
    %30 = arith.addf %27, %29 : vector<2x128xf32>
    %c0_25 = arith.constant 0 : index
    %c0_26 = arith.constant 0 : index
    %31 = vector.load %arg12[%c0_25, %c0_26] : memref<2x512xf32, #tpu.memory_space<vmem>>, vector<2x512xf32>
    tpu.vector_store %arg12[%c0_25, %c0_26], %14 {strides = array<i32>} : memref<2x512xf32, #tpu.memory_space<vmem>>, vector<2x512xf32>,
    %c0_27 = arith.constant 0 : index
    %c0_28 = arith.constant 0 : index
    %32 = vector.load %arg13[%c0_27, %c0_28] : memref<2x512xf32, #tpu.memory_space<vmem>>, vector<2x512xf32>
    tpu.vector_store %arg13[%c0_27, %c0_28], %24 {strides = array<i32>} : memref<2x512xf32, #tpu.memory_space<vmem>>, vector<2x512xf32>,
    %c0_29 = arith.constant 0 : index
    %c0_30 = arith.constant 0 : index
    %33 = vector.load %arg11[%c0_29, %c0_30] : memref<2x128xf32, #tpu.memory_space<vmem>>, vector<2x128xf32>
    tpu.vector_store %arg11[%c0_29, %c0_30], %30 {strides = array<i32>} : memref<2x128xf32, #tpu.memory_space<vmem>>, vector<2x128xf32>,
    return
  }
}

</mosaic_0001>

<llo_original>
// kernel: forward.4
$region0: #{forward.4}
  #allocation0 [shape = 'u32[]', space=smem, size = 0x4, offset = 0x4, fixed_abs, tag = 'smem constant byte address 0x4 - core index']
  #allocation1 [shape = 'u32[144,128]{1,0:T(1,128)}', space=vmem, size = 0x12000, scoped, tag = 'internal scratch']
  %s0 = inlined_call_operand.vmem [shape: f32[1024,256], index: 0, kind: input, shape index: {}]
  %s1 = inlined_call_operand.vmem [shape: f32[256,128], index: 1, kind: input, shape index: {}]
  %s2 = inlined_call_operand.vmem [shape: f32[1,128], index: 2, kind: input, shape index: {}]
  %s3 = inlined_call_operand.vmem [shape: f32[1024,128], index: 3, kind: output, shape index: {}]
  %s4 = sld [smem:[#allocation0]]
  $region45: #{forward.4} parent=0
    _
  %s6 = ssub.s32 1, %s4
  %s7 = scalar_select 0, %s6, %s4
  loop: start=0, step=1, limit=6
  $region2: #{forward.4} parent=0 // loop_pre_header
    _
  $region3: #{forward.4} parent=0 // loop_header
    %s9 = sphi 0, %s13
    %p10 = scmp.ge.s32.totalorder %s9, 6
    %s19 = sphi 0, %s21
    %s22 = sphi 0, %s19
    %s23 = sphi 0, %s22
    %s39 = sphi 0, %s23
    %s43 = sphi 0, %s43
    %s45 = sphi 0, %s43
    %s46 = sphi 0, %s45
    %s60 = sphi 0, %s46
    %s64 = sphi 0, %s64
    %s66 = sphi 0, %s64
    %s67 = sphi 0, %s66
    %s81 = sphi 0, %s67
    %s87 = sphi 0, %s89
    %s90 = sphi 0, %s87
    %s91 = sphi 0, %s90
    %s107 = sphi 0, %s91
  $region4: #{forward.4} parent=0 // loop_header_branch
    %12 = sbr.rel (%p10) target = $region8
  $region5: #{forward.4} parent=0 // loop_body
    %s14 = ssub.s32 %s9, 1
    %s15 = ssub.s32 %s9, 2
    %s16 = sadd.s32 %s9, 1
    %s17 = ssub.s32 %s9, %s16
    %p18 = scmp.eq.s32.totalorder %s17, 0
    %s20 = sadd.s32 %s19, 1
    %s21 = scalar_select %p18, %s19, %s20
    %p24 = pneg %p18
    %p25 = scmp.eq.s32.totalorder %s9, 3
    %p26 = por %p24, %p25
    %p27 = scmp.ne.s32.totalorder %s19, %s22
    %p28 = scmp.eq.s32.totalorder %s9, 0
    %p29 = por %p27, %p28
    %p30 = scmp.ne.s32.totalorder %s19, %s22
    %p31 = scmp.eq.s32.totalorder %s14, 3
    %p32 = por %p30, %p31
    %p33 = scmp.ne.s32.totalorder %s22, %s23
    %p34 = scmp.eq.s32.totalorder %s14, 0
    %p35 = por %p33, %p34
    %p36 = scmp.ne.s32.totalorder %s22, %s23
    %p37 = scmp.eq.s32.totalorder %s15, 3
    %p38 = por %p36, %p37
    %p40 = scmp.ne.s32.totalorder %s23, %s39
    %p41 = scmp.eq.s32.totalorder %s15, 0
    %p42 = por %p40, %p41
    %s44 = sadd.s32 %s43, 1
    %p47 = scmp.eq.s32.totalorder %s9, 3
    %p48 = scmp.ne.s32.totalorder %s43, %s45
    %p49 = scmp.eq.s32.totalorder %s9, 0
    %p50 = por %p48, %p49
    %p51 = scmp.ne.s32.totalorder %s43, %s45
    %p52 = scmp.eq.s32.totalorder %s14, 3
    %p53 = por %p51, %p52
    %p54 = scmp.ne.s32.totalorder %s45, %s46
    %p55 = scmp.eq.s32.totalorder %s14, 0
    %p56 = por %p54, %p55
    %p57 = scmp.ne.s32.totalorder %s45, %s46
    %p58 = scmp.eq.s32.totalorder %s15, 3
    %p59 = por %p57, %p58
    %p61 = scmp.ne.s32.totalorder %s46, %s60
    %p62 = scmp.eq.s32.totalorder %s15, 0
    %p63 = por %p61, %p62
    %s65 = sadd.s32 %s64, 1
    %p68 = scmp.eq.s32.totalorder %s9, 3
    %p69 = scmp.ne.s32.totalorder %s64, %s66
    %p70 = scmp.eq.s32.totalorder %s9, 0
    %p71 = por %p69, %p70
    %p72 = scmp.ne.s32.totalorder %s64, %s66
    %p73 = scmp.eq.s32.totalorder %s14, 3
    %p74 = por %p72, %p73
    %p75 = scmp.ne.s32.totalorder %s66, %s67
    %p76 = scmp.eq.s32.totalorder %s14, 0
    %p77 = por %p75, %p76
    %p78 = scmp.ne.s32.totalorder %s66, %s67
    %p79 = scmp.eq.s32.totalorder %s15, 3
    %p80 = por %p78, %p79
    %p82 = scmp.ne.s32.totalorder %s67, %s81
    %p83 = scmp.eq.s32.totalorder %s15, 0
    %p84 = por %p82, %p83
    %s85 = ssub.s32 %s9, %s16
    %p86 = scmp.eq.s32.totalorder %s85, 0
    %s88 = sadd.s32 %s87, 1
    %s89 = scalar_select %p86, %s87, %s88
    %p92 = pneg %p86
    %p93 = scmp.eq.s32.totalorder %s9, 3
    %p94 = por %p92, %p93
    %p95 = scmp.ne.s32.totalorder %s87, %s90
    %p96 = scmp.eq.s32.totalorder %s9, 0
    %p97 = por %p95, %p96
    %p98 = scmp.ne.s32.totalorder %s87, %s90
    %p99 = scmp.eq.s32.totalorder %s14, 3
    %p100 = por %p98, %p99
    %p101 = scmp.ne.s32.totalorder %s90, %s91
    %p102 = scmp.eq.s32.totalorder %s14, 0
    %p103 = por %p101, %p102
    %p104 = scmp.ne.s32.totalorder %s90, %s91
    %p105 = scmp.eq.s32.totalorder %s15, 3
    %p106 = por %p104, %p105
    %p108 = scmp.ne.s32.totalorder %s91, %s107
    %p109 = scmp.eq.s32.totalorder %s15, 0
    %p110 = por %p108, %p109
    %p111 = scmp.le.s32.totalorder 1, %s9
    %p112 = scmp.lt.s32.totalorder %s9, 5
    %p113 = pnand %p111, %p112
    %p114 = pneg %p113
    // Predicated region
    $region9: #{forward.4} parent=5 // pred_check
      _
    $region10: #{forward.4} parent=5 // pred_check_branch
      %116 = sbr.rel (%p113) target = $region12
    $region11: #{forward.4} parent=5 // pred_region
      %s117 = ssub.s32 %s9, 1
      // Predicated region
      $region13: #{forward.4} parent=11 // pred_check
        %p118 = pneg %p56
      $region14: #{forward.4} parent=11 // pred_check_branch
        %120 = sbr.rel (%p118) target = $region16
      $region15: #{forward.4} parent=11 // pred_region
        _
      $region16: #{forward.4} parent=11 // pred_fallthru
        _
      // Predicated region
      $region17: #{forward.4} parent=11 // pred_check
        %p121 = pneg %p77
      $region18: #{forward.4} parent=11 // pred_check_branch
        %123 = sbr.rel (%p121) target = $region20
      $region19: #{forward.4} parent=11 // pred_region
        _
      $region20: #{forward.4} parent=11 // pred_fallthru
        _
    $region12: #{forward.4} parent=5 // pred_fallthru
      _
    %p124 = scmp.lt.s32.totalorder %s9, 4
    // Predicated region
    $region21: #{forward.4} parent=5 // pred_check
      %p125 = pneg %p124
    $region22: #{forward.4} parent=5 // pred_check_branch
      %127 = sbr.rel (%p125) target = $region24
    $region23: #{forward.4} parent=5 // pred_region
      // Predicated region
      $region25: #{forward.4} parent=23 // pred_check
        %p128 = pneg %p29
      $region26: #{forward.4} parent=23 // pred_check_branch
        %130 = sbr.rel (%p128) target = $region28
      $region27: #{forward.4} parent=23 // pred_region
        %s131 = smul.u32 32, %s9
        %p132 = scmp.lt.s32.totalorder %s131, 127
        %s133 = scalar_select %p132, %s131, 127
        %s134 = smul.addr %s133, 2
        %s135 = smul.addr %s134, 8
        %s136 = scalar_lea.vmem %s0, %s135
        %s137 = smul.u32 32, %s9
      $region28: #{forward.4} parent=23 // pred_fallthru
        _
    $region24: #{forward.4} parent=5 // pred_fallthru
      _
    %p138 = scmp.le.s32.totalorder 1, %s9
    %p139 = scmp.lt.s32.totalorder %s9, 5
    %p140 = pnand %p138, %p139
    %p141 = pneg %p140
    // Predicated region
    $region29: #{forward.4} parent=5 // pred_check
      _
    $region30: #{forward.4} parent=5 // pred_check_branch
      %143 = sbr.rel (%p140) target = $region32
    $region31: #{forward.4} parent=5 // pred_region
      %s144 = ssub.s32 %s9, 1
      %s145 = smul.u32 32, %s14
      %p146 = scmp.lt.s32.totalorder %s145, 127
      %s147 = scalar_select %p146, %s145, 127
      %s148 = smul.addr %s147, 2
      %s149 = smul.addr %s148, 8
      %s150 = scalar_lea.vmem %s0, %s149
      %p151 = pneg %p35
      %p152 = pneg %p32
      %p153 = pneg %p56
      %p154 = pneg %p53
      %p155 = pneg %p77
      %p156 = pneg %p74
      %p157 = pneg %p103
      %p158 = pneg %p100
      %s159 = smul.u32 32, %s14
      %p160 = scmp.lt.s32.totalorder %s159, 127
      %s161 = scalar_select %p160, %s159, 127
      %s162 = smul.addr %s161, 8
      %s163 = scalar_lea.vmem %s3, %s162
      %s164 = smul.u32 32, %s14
      %p165 = scmp.lt.s32.totalorder %s164, 127
      %s166 = scalar_select %p165, %s164, 127
      %s167 = smul.addr %s166, 2
      %s168 = smul.addr %s167, 8
      %s169 = scalar_lea.vmem %s0, %s168
      %s170 = smul.u32 32, %s14
      %s171 = smul.u32 32, %s14
      %p172 = scmp.lt.s32.totalorder %s171, 127
      %s173 = scalar_select %p172, %s171, 127
      %s174 = smul.addr %s173, 8
      %s175 = scalar_lea.vmem %s3, %s174
      %s176 = smul.u32 32, %s14
      %v177 = vld [vmem:[%s169] sm:$0xff]
      %v178 = vld [vmem:[%s169 + $0x8] sm:$0xff]
      %v179 = vld [vmem:[%s169 + $0x10] sm:$0xff]
      %v180 = vld [vmem:[%s169 + $0x18] sm:$0xff]
      %v181 = vld [vmem:[%s169 + $0x20] sm:$0xff]
      %v182 = vld [vmem:[%s169 + $0x28] sm:$0xff]
      %v183 = vld [vmem:[%s169 + $0x30] sm:$0xff]
      %v184 = vld [vmem:[%s169 + $0x38] sm:$0xff]
      %v185 = vld [vmem:[%s169 + $0x40] sm:$0xff]
      %v186 = vld [vmem:[%s169 + $0x48] sm:$0xff]
      %v187 = vld [vmem:[%s169 + $0x50] sm:$0xff]
      %v188 = vld [vmem:[%s169 + $0x58] sm:$0xff]
      %v189 = vld [vmem:[%s169 + $0x60] sm:$0xff]
      %v190 = vld [vmem:[%s169 + $0x68] sm:$0xff]
      %v191 = vld [vmem:[%s169 + $0x70] sm:$0xff]
      %v192 = vld [vmem:[%s169 + $0x78] sm:$0xff]
      %v193 = vld [vmem:[%s169 + $0x80] sm:$0xff]
      %v194 = vld [vmem:[%s169 + $0x88] sm:$0xff]
      %v195 = vld [vmem:[%s169 + $0x90] sm:$0xff]
      %v196 = vld [vmem:[%s169 + $0x98] sm:$0xff]
      %v197 = vld [vmem:[%s169 + $0xa0] sm:$0xff]
      %v198 = vld [vmem:[%s169 + $0xa8] sm:$0xff]
      %v199 = vld [vmem:[%s169 + $0xb0] sm:$0xff]
      %v200 = vld [vmem:[%s169 + $0xb8] sm:$0xff]
      %v201 = vld [vmem:[%s169 + $0xc0] sm:$0xff]
      %v202 = vld [vmem:[%s169 + $0xc8] sm:$0xff]
      %v203 = vld [vmem:[%s169 + $0xd0] sm:$0xff]
      %v204 = vld [vmem:[%s169 + $0xd8] sm:$0xff]
      %v205 = vld [vmem:[%s169 + $0xe0] sm:$0xff]
      %v206 = vld [vmem:[%s169 + $0xe8] sm:$0xff]
      %v207 = vld [vmem:[%s169 + $0xf0] sm:$0xff]
      %v208 = vld [vmem:[%s169 + $0xf8] sm:$0xff]
      %v209 = vld [vmem:[%s169 + $0x100] sm:$0xff]
      %v210 = vld [vmem:[%s169 + $0x108] sm:$0xff]
      %v211 = vld [vmem:[%s169 + $0x110] sm:$0xff]
      %v212 = vld [vmem:[%s169 + $0x118] sm:$0xff]
      %v213 = vld [vmem:[%s169 + $0x120] sm:$0xff]
      %v214 = vld [vmem:[%s169 + $0x128] sm:$0xff]
      %v215 = vld [vmem:[%s169 + $0x130] sm:$0xff]
      %v216 = vld [vmem:[%s169 + $0x138] sm:$0xff]
      %v217 = vld [vmem:[%s169 + $0x140] sm:$0xff]
      %v218 = vld [vmem:[%s169 + $0x148] sm:$0xff]
      %v219 = vld [vmem:[%s169 + $0x150] sm:$0xff]
      %v220 = vld [vmem:[%s169 + $0x158] sm:$0xff]
      %v221 = vld [vmem:[%s169 + $0x160] sm:$0xff]
      %v222 = vld [vmem:[%s169 + $0x168] sm:$0xff]
      %v223 = vld [vmem:[%s169 + $0x170] sm:$0xff]
      %v224 = vld [vmem:[%s169 + $0x178] sm:$0xff]
      %v225 = vld [vmem:[%s169 + $0x180] sm:$0xff]
      %v226 = vld [vmem:[%s169 + $0x188] sm:$0xff]
      %v227 = vld [vmem:[%s169 + $0x190] sm:$0xff]
      %v228 = vld [vmem:[%s169 + $0x198] sm:$0xff]
      %v229 = vld [vmem:[%s169 + $0x1a0] sm:$0xff]
      %v230 = vld [vmem:[%s169 + $0x1a8] sm:$0xff]
      %v231 = vld [vmem:[%s169 + $0x1b0] sm:$0xff]
      %v232 = vld [vmem:[%s169 + $0x1b8] sm:$0xff]
      %v233 = vld [vmem:[%s169 + $0x1c0] sm:$0xff]
      %v234 = vld [vmem:[%s169 + $0x1c8] sm:$0xff]
      %v235 = vld [vmem:[%s169 + $0x1d0] sm:$0xff]
      %v236 = vld [vmem:[%s169 + $0x1d8] sm:$0xff]
      %v237 = vld [vmem:[%s169 + $0x1e0] sm:$0xff]
      %v238 = vld [vmem:[%s169 + $0x1e8] sm:$0xff]
      %v239 = vld [vmem:[%s169 + $0x1f0] sm:$0xff]
      %v240 = vld [vmem:[%s169 + $0x1f8] sm:$0xff]
      %v241 = vld [vmem:[%s1] sm:$0xff]
      %v242 = vld [vmem:[%s1 + $0x8] sm:$0xff]
      %v243 = vld [vmem:[%s1 + $0x10] sm:$0xff]
      %v244 = vld [vmem:[%s1 + $0x18] sm:$0xff]
      %v245 = vld [vmem:[%s1 + $0x20] sm:$0xff]
      %v246 = vld [vmem:[%s1 + $0x28] sm:$0xff]
      %v247 = vld [vmem:[%s1 + $0x30] sm:$0xff]
      %v248 = vld [vmem:[%s1 + $0x38] sm:$0xff]
      %v249 = vld [vmem:[%s1 + $0x40] sm:$0xff]
      %v250 = vld [vmem:[%s1 + $0x48] sm:$0xff]
      %v251 = vld [vmem:[%s1 + $0x50] sm:$0xff]
      %v252 = vld [vmem:[%s1 + $0x58] sm:$0xff]
      %v253 = vld [vmem:[%s1 + $0x60] sm:$0xff]
      %v254 = vld [vmem:[%s1 + $0x68] sm:$0xff]
      %v255 = vld [vmem:[%s1 + $0x70] sm:$0xff]
      %v256 = vld [vmem:[%s1 + $0x78] sm:$0xff]
      %v257 = vld [vmem:[%s1 + $0x80] sm:$0xff]
      %v258 = vld [vmem:[%s1 + $0x88] sm:$0xff]
      %v259 = vld [vmem:[%s1 + $0x90] sm:$0xff]
      %v260 = vld [vmem:[%s1 + $0x98] sm:$0xff]
      %v261 = vld [vmem:[%s1 + $0xa0] sm:$0xff]
      %v262 = vld [vmem:[%s1 + $0xa8] sm:$0xff]
      %v263 = vld [vmem:[%s1 + $0xb0] sm:$0xff]
      %v264 = vld [vmem:[%s1 + $0xb8] sm:$0xff]
      %v265 = vld [vmem:[%s1 + $0xc0] sm:$0xff]
      %v266 = vld [vmem:[%s1 + $0xc8] sm:$0xff]
      %v267 = vld [vmem:[%s1 + $0xd0] sm:$0xff]
      %v268 = vld [vmem:[%s1 + $0xd8] sm:$0xff]
      %v269 = vld [vmem:[%s1 + $0xe0] sm:$0xff]
      %v270 = vld [vmem:[%s1 + $0xe8] sm:$0xff]
      %v271 = vld [vmem:[%s1 + $0xf0] sm:$0xff]
      %v272 = vld [vmem:[%s1 + $0xf8] sm:$0xff]
      %v273 = vld [vmem:[%s2] sm:$0x1]
      %v275 = vlaneseq
      %v276 = vshrl.u32 %v275, 7
      %v277 = vsub.s32 0, %v276
      %v278 = vrot.slane %v273, %v277
      %280 = vmatprep.subr.mxu0 0.0
      %281 = vmatpush1.msra.mxu0 %v241
      %282 = vmatprep.subr.mxu0 0.0
      %283 = vmatpush1.msra.mxu0 %v242
      %284 = vmatprep.subr.mxu0 0.0
      %285 = vmatpush1.msra.mxu0 %v243
      %286 = vmatprep.subr.mxu0 0.0
      %287 = vmatpush1.msra.mxu0 %v244
      %288 = vmatprep.subr.mxu0 0.0
      %289 = vmatpush1.msra.mxu0 %v245
      %290 = vmatprep.subr.mxu0 0.0
      %291 = vmatpush1.msra.mxu0 %v246
      %292 = vmatprep.subr.mxu0 0.0
      %293 = vmatpush1.msra.mxu0 %v247
      %294 = vmatprep.subr.mxu0 0.0
      %295 = vmatpush1.msra.mxu0 %v248
      %296 = vmatprep.subr.mxu0 0.0
      %297 = vmatpush1.msra.mxu0 %v249
      %298 = vmatprep.subr.mxu0 0.0
      %299 = vmatpush1.msra.mxu0 %v250
      %300 = vmatprep.subr.mxu0 0.0
      %301 = vmatpush1.msra.mxu0 %v251
      %302 = vmatprep.subr.mxu0 0.0
      %303 = vmatpush1.msra.mxu0 %v252
      %304 = vmatprep.subr.mxu0 0.0
      %305 = vmatpush1.msra.mxu0 %v253
      %306 = vmatprep.subr.mxu0 0.0
      %307 = vmatpush1.msra.mxu0 %v254
      %308 = vmatprep.subr.mxu0 0.0
      %309 = vmatpush1.msra.mxu0 %v255
      %310 = vmatprep.subr.mxu0 0.0
      %311 = vmatpush1.msra.mxu0 %v256
      %312 = vmatprep.subr.mxu0 0.0
      %313 = vmatpush1.msra.mxu0 %v257
      %314 = vmatprep.subr.mxu0 0.0
      %315 = vmatpush1.msra.mxu0 %v258
      %316 = vmatprep.subr.mxu0 0.0
      %317 = vmatpush1.msra.mxu0 %v259
      %318 = vmatprep.subr.mxu0 0.0
      %319 = vmatpush1.msra.mxu0 %v260
      %320 = vmatprep.subr.mxu0 0.0
      %321 = vmatpush1.msra.mxu0 %v261
      %322 = vmatprep.subr.mxu0 0.0
      %323 = vmatpush1.msra.mxu0 %v262
      %324 = vmatprep.subr.mxu0 0.0
      %325 = vmatpush1.msra.mxu0 %v263
      %326 = vmatprep.subr.mxu0 0.0
      %327 = vmatpush1.msra.mxu0 %v264
      %328 = vmatprep.subr.mxu0 0.0
      %329 = vmatpush1.msra.mxu0 %v265
      %330 = vmatprep.subr.mxu0 0.0
      %331 = vmatpush1.msra.mxu0 %v266
      %332 = vmatprep.subr.mxu0 0.0
      %333 = vmatpush1.msra.mxu0 %v267
      %334 = vmatprep.subr.mxu0 0.0
      %335 = vmatpush1.msra.mxu0 %v268
      %336 = vmatprep.subr.mxu0 0.0
      %337 = vmatpush1.msra.mxu0 %v269
      %338 = vmatprep.subr.mxu0 0.0
      %339 = vmatpush1.msra.mxu0 %v270
      %340 = vmatprep.subr.mxu0 0.0
      %341 = vmatpush1.msra.mxu0 %v271
      %342 = vmatprep.subr.mxu0 0.0
      %343 = vmatpush1.msra.mxu0 %v272
      %344 = vmatprep.mubr.f32.mxu0 %v178
      %345 = vmatmul.mubr.f32.gmra.mrb[0].mxu0 %v177
      %v346 = vpop.f32.mrb[0].mxu0
      %v347 = vadd.f32 %v278, %v346
      %v348 = vpop.f32.mrb[0].mxu0
      %349 = vmatprep.mubr.f32.mxu0 %v180
      %350 = vmatmul.mubr.f32.gmra.mrb[0].mxu0 %v179
      %v351 = vpop.f32.mrb[0].mxu0
      %v352 = vadd.f32 %v278, %v351
      %v353 = vpop.f32.mrb[0].mxu0
      %354 = vmatprep.mubr.f32.mxu0 %v182
      %355 = vmatmul.mubr.f32.gmra.mrb[0].mxu0 %v181
      %v356 = vpop.f32.mrb[0].mxu0
      %v357 = vadd.f32 %v278, %v356
      %v358 = vpop.f32.mrb[0].mxu0
      %359 = vmatprep.mubr.f32.mxu0 %v184
      %360 = vmatmul.mubr.f32.gmra.mrb[0].mxu0 %v183
      %v361 = vpop.f32.mrb[0].mxu0
      %v362 = vadd.f32 %v278, %v361
      %v363 = vpop.f32.mrb[0].mxu0
      %364 = vmatprep.mubr.f32.mxu0 %v186
      %365 = vmatmul.mubr.f32.gmra.mrb[0].mxu0 %v185
      %v366 = vpop.f32.mrb[0].mxu0
      %v367 = vadd.f32 %v278, %v366
      %v368 = vpop.f32.mrb[0].mxu0
      %369 = vmatprep.mubr.f32.mxu0 %v188
      %370 = vmatmul.mubr.f32.gmra.mrb[0].mxu0 %v187
      %v371 = vpop.f32.mrb[0].mxu0
      %v372 = vadd.f32 %v278, %v371
      %v373 = vpop.f32.mrb[0].mxu0
      %374 = vmatprep.mubr.f32.mxu0 %v190
      %375 = vmatmul.mubr.f32.gmra.mrb[0].mxu0 %v189
      %v376 = vpop.f32.mrb[0].mxu0
      %v377 = vadd.f32 %v278, %v376
      %v378 = vpop.f32.mrb[0].mxu0
      %379 = vmatprep.mubr.f32.mxu0 %v192
      %380 = vmatmul.mubr.f32.gmra.mrb[0].mxu0 %v191
      %v381 = vpop.f32.mrb[0].mxu0
      %v382 = vadd.f32 %v278, %v381
      %v383 = vpop.f32.mrb[0].mxu0
      %384 = vmatprep.mubr.f32.mxu0 %v194
      %385 = vmatmul.mubr.f32.gmra.mrb[0].mxu0 %v193
      %v386 = vpop.f32.mrb[0].mxu0
      %v387 = vadd.f32 %v278, %v386
      %v388 = vpop.f32.mrb[0].mxu0
      %389 = vmatprep.mubr.f32.mxu0 %v196
      %390 = vmatmul.mubr.f32.gmra.mrb[0].mxu0 %v195
      %v391 = vpop.f32.mrb[0].mxu0
      %v392 = vadd.f32 %v278, %v391
      %v393 = vpop.f32.mrb[0].mxu0
      %394 = vmatprep.mubr.f32.mxu0 %v198
      %395 = vmatmul.mubr.f32.gmra.mrb[0].mxu0 %v197
      %v396 = vpop.f32.mrb[0].mxu0
      %v397 = vadd.f32 %v278, %v396
      %v398 = vpop.f32.mrb[0].mxu0
      %399 = vmatprep.mubr.f32.mxu0 %v200
      %400 = vmatmul.mubr.f32.gmra.mrb[0].mxu0 %v199
      %v401 = vpop.f32.mrb[0].mxu0
      %v402 = vadd.f32 %v278, %v401
      %v403 = vpop.f32.mrb[0].mxu0
      %404 = vmatprep.mubr.f32.mxu0 %v202
      %405 = vmatmul.mubr.f32.gmra.mrb[0].mxu0 %v201
      %v406 = vpop.f32.mrb[0].mxu0
      %v407 = vadd.f32 %v278, %v406
      %v408 = vpop.f32.mrb[0].mxu0
      %409 = vmatprep.mubr.f32.mxu0 %v204
      %410 = vmatmul.mubr.f32.gmra.mrb[0].mxu0 %v203
      %v411 = vpop.f32.mrb[0].mxu0
      %v412 = vadd.f32 %v278, %v411
      %v413 = vpop.f32.mrb[0].mxu0
      %414 = vmatprep.mubr.f32.mxu0 %v206
      %415 = vmatmul.mubr.f32.gmra.mrb[0].mxu0 %v205
      %v416 = vpop.f32.mrb[0].mxu0
      %v417 = vadd.f32 %v278, %v416
      %v418 = vpop.f32.mrb[0].mxu0
      %419 = vmatprep.mubr.f32.mxu0 %v208
      %420 = vmatmul.mubr.f32.gmra.mrb[0].mxu0 %v207
      %v421 = vpop.f32.mrb[0].mxu0
      %v422 = vadd.f32 %v278, %v421
      %v423 = vpop.f32.mrb[0].mxu0
      %424 = vmatprep.mubr.f32.mxu0 %v210
      %425 = vmatmul.mubr.f32.gmra.mrb[0].mxu0 %v209
      %v426 = vpop.f32.mrb[0].mxu0
      %v427 = vadd.f32 %v278, %v426
      %v428 = vpop.f32.mrb[0].mxu0
      %429 = vmatprep.mubr.f32.mxu0 %v212
      %430 = vmatmul.mubr.f32.gmra.mrb[0].mxu0 %v211
      %v431 = vpop.f32.mrb[0].mxu0
      %v432 = vadd.f32 %v278, %v431
      %v433 = vpop.f32.mrb[0].mxu0
      %434 = vmatprep.mubr.f32.mxu0 %v214
      %435 = vmatmul.mubr.f32.gmra.mrb[0].mxu0 %v213
      %v436 = vpop.f32.mrb[0].mxu0
      %v437 = vadd.f32 %v278, %v436
      %v438 = vpop.f32.mrb[0].mxu0
      %439 = vmatprep.mubr.f32.mxu0 %v216
      %440 = vmatmul.mubr.f32.gmra.mrb[0].mxu0 %v215
      %v441 = vpop.f32.mrb[0].mxu0
      %v442 = vadd.f32 %v278, %v441
      %v443 = vpop.f32.mrb[0].mxu0
      %444 = vmatprep.mubr.f32.mxu0 %v218
      %445 = vmatmul.mubr.f32.gmra.mrb[0].mxu0 %v217
      %v446 = vpop.f32.mrb[0].mxu0
      %v447 = vadd.f32 %v278, %v446
      %v448 = vpop.f32.mrb[0].mxu0
      %449 = vmatprep.mubr.f32.mxu0 %v220
      %450 = vmatmul.mubr.f32.gmra.mrb[0].mxu0 %v219
      %v451 = vpop.f32.mrb[0].mxu0
      %v452 = vadd.f32 %v278, %v451
      %v453 = vpop.f32.mrb[0].mxu0
      %454 = vmatprep.mubr.f32.mxu0 %v222
      %455 = vmatmul.mubr.f32.gmra.mrb[0].mxu0 %v221
      %v456 = vpop.f32.mrb[0].mxu0
      %v457 = vadd.f32 %v278, %v456
      %v458 = vpop.f32.mrb[0].mxu0
      %459 = vmatprep.mubr.f32.mxu0 %v224
      %460 = vmatmul.mubr.f32.gmra.mrb[0].mxu0 %v223
      %v461 = vpop.f32.mrb[0].mxu0
      %v462 = vadd.f32 %v278, %v461
      %v463 = vpop.f32.mrb[0].mxu0
      %464 = vmatprep.mubr.f32.mxu0 %v226
      %465 = vmatmul.mubr.f32.gmra.mrb[0].mxu0 %v225
      %v466 = vpop.f32.mrb[0].mxu0
      %v467 = vadd.f32 %v278, %v466
      %v468 = vpop.f32.mrb[0].mxu0
      %469 = vmatprep.mubr.f32.mxu0 %v228
      %470 = vmatmul.mubr.f32.gmra.mrb[0].mxu0 %v227
      %v471 = vpop.f32.mrb[0].mxu0
      %v472 = vadd.f32 %v278, %v471
      %v473 = vpop.f32.mrb[0].mxu0
      %474 = vmatprep.mubr.f32.mxu0 %v230
      %475 = vmatmul.mubr.f32.gmra.mrb[0].mxu0 %v229
      %v476 = vpop.f32.mrb[0].mxu0
      %v477 = vadd.f32 %v278, %v476
      %v478 = vpop.f32.mrb[0].mxu0
      %479 = vmatprep.mubr.f32.mxu0 %v232
      %480 = vmatmul.mubr.f32.gmra.mrb[0].mxu0 %v231
      %v481 = vpop.f32.mrb[0].mxu0
      %v482 = vadd.f32 %v278, %v481
      %v483 = vpop.f32.mrb[0].mxu0
      %484 = vmatprep.mubr.f32.mxu0 %v234
      %485 = vmatmul.mubr.f32.gmra.mrb[0].mxu0 %v233
      %v486 = vpop.f32.mrb[0].mxu0
      %v487 = vadd.f32 %v278, %v486
      %v488 = vpop.f32.mrb[0].mxu0
      %489 = vmatprep.mubr.f32.mxu0 %v236
      %490 = vmatmul.mubr.f32.gmra.mrb[0].mxu0 %v235
      %v491 = vpop.f32.mrb[0].mxu0
      %v492 = vadd.f32 %v278, %v491
      %v493 = vpop.f32.mrb[0].mxu0
      %494 = vmatprep.mubr.f32.mxu0 %v238
      %495 = vmatmul.mubr.f32.gmra.mrb[0].mxu0 %v237
      %v496 = vpop.f32.mrb[0].mxu0
      %v497 = vadd.f32 %v278, %v496
      %v498 = vpop.f32.mrb[0].mxu0
      %499 = vmatprep.mubr.f32.mxu0 %v240
      %500 = vmatmul.mubr.f32.gmra.mrb[0].mxu0 %v239
      %v501 = vpop.f32.mrb[0].mxu0
      %v502 = vadd.f32 %v278, %v501
      %v503 = vpop.f32.mrb[0].mxu0
      %504 = vdwg.mxu0
      %v505 = vmax.f32 %v347, 0.0
      %v506 = vmax.f32 %v352, 0.0
      %v507 = vmax.f32 %v357, 0.0
      %v508 = vmax.f32 %v362, 0.0
      %v509 = vmax.f32 %v367, 0.0
      %v510 = vmax.f32 %v372, 0.0
      %v511 = vmax.f32 %v377, 0.0
      %v512 = vmax.f32 %v382, 0.0
      %v513 = vmax.f32 %v387, 0.0
      %v514 = vmax.f32 %v392, 0.0
      %v515 = vmax.f32 %v397, 0.0
      %v516 = vmax.f32 %v402, 0.0
      %v517 = vmax.f32 %v407, 0.0
      %v518 = vmax.f32 %v412, 0.0
      %v519 = vmax.f32 %v417, 0.0
      %v520 = vmax.f32 %v422, 0.0
      %v521 = vmax.f32 %v427, 0.0
      %v522 = vmax.f32 %v432, 0.0
      %v523 = vmax.f32 %v437, 0.0
      %v524 = vmax.f32 %v442, 0.0
      %v525 = vmax.f32 %v447, 0.0
      %v526 = vmax.f32 %v452, 0.0
      %v527 = vmax.f32 %v457, 0.0
      %v528 = vmax.f32 %v462, 0.0
      %v529 = vmax.f32 %v467, 0.0
      %v530 = vmax.f32 %v472, 0.0
      %v531 = vmax.f32 %v477, 0.0
      %v532 = vmax.f32 %v482, 0.0
      %v533 = vmax.f32 %v487, 0.0
      %v534 = vmax.f32 %v492, 0.0
      %v535 = vmax.f32 %v497, 0.0
      %v536 = vmax.f32 %v502, 0.0
      %537 = vst [vmem:[%s175] sm:$0xff] %v505
      %538 = vst [vmem:[%s175 + $0x8] sm:$0xff] %v506
      %539 = vst [vmem:[%s175 + $0x10] sm:$0xff] %v507
      %540 = vst [vmem:[%s175 + $0x18] sm:$0xff] %v508
      %541 = vst [vmem:[%s175 + $0x20] sm:$0xff] %v509
      %542 = vst [vmem:[%s175 + $0x28] sm:$0xff] %v510
      %543 = vst [vmem:[%s175 + $0x30] sm:$0xff] %v511
      %544 = vst [vmem:[%s175 + $0x38] sm:$0xff] %v512
      %545 = vst [vmem:[%s175 + $0x40] sm:$0xff] %v513
      %546 = vst [vmem:[%s175 + $0x48] sm:$0xff] %v514
      %547 = vst [vmem:[%s175 + $0x50] sm:$0xff] %v515
      %548 = vst [vmem:[%s175 + $0x58] sm:$0xff] %v516
      %549 = vst [vmem:[%s175 + $0x60] sm:$0xff] %v517
      %550 = vst [vmem:[%s175 + $0x68] sm:$0xff] %v518
      %551 = vst [vmem:[%s175 + $0x70] sm:$0xff] %v519
      %552 = vst [vmem:[%s175 + $0x78] sm:$0xff] %v520
      %553 = vst [vmem:[%s175 + $0x80] sm:$0xff] %v521
      %554 = vst [vmem:[%s175 + $0x88] sm:$0xff] %v522
      %555 = vst [vmem:[%s175 + $0x90] sm:$0xff] %v523
      %556 = vst [vmem:[%s175 + $0x98] sm:$0xff] %v524
      %557 = vst [vmem:[%s175 + $0xa0] sm:$0xff] %v525
      %558 = vst [vmem:[%s175 + $0xa8] sm:$0xff] %v526
      %559 = vst [vmem:[%s175 + $0xb0] sm:$0xff] %v527
      %560 = vst [vmem:[%s175 + $0xb8] sm:$0xff] %v528
      %561 = vst [vmem:[%s175 + $0xc0] sm:$0xff] %v529
      %562 = vst [vmem:[%s175 + $0xc8] sm:$0xff] %v530
      %563 = vst [vmem:[%s175 + $0xd0] sm:$0xff] %v531
      %564 = vst [vmem:[%s175 + $0xd8] sm:$0xff] %v532
      %565 = vst [vmem:[%s175 + $0xe0] sm:$0xff] %v533
      %566 = vst [vmem:[%s175 + $0xe8] sm:$0xff] %v534
      %567 = vst [vmem:[%s175 + $0xf0] sm:$0xff] %v535
      %568 = vst [vmem:[%s175 + $0xf8] sm:$0xff] %v536
      %s569 = smul.u32 32, %s14
      %p570 = scmp.lt.s32.totalorder %s569, 127
      %s571 = scalar_select %p570, %s569, 127
      %s572 = smul.addr %s571, 8
      %s573 = scalar_lea.vmem %s3, %s572
      // Predicated region
      $region33: #{forward.4} parent=31 // pred_check
        %p574 = pneg %p100
      $region34: #{forward.4} parent=31 // pred_check_branch
        %576 = sbr.rel (%p574) target = $region36
      $region35: #{forward.4} parent=31 // pred_region
        %s577 = smul.u32 32, %s14
      $region36: #{forward.4} parent=31 // pred_fallthru
        _
    $region32: #{forward.4} parent=5 // pred_fallthru
      _
    %p578 = scmp.le.s32.totalorder 2, %s9
    // Predicated region
    $region37: #{forward.4} parent=5 // pred_check
      %p579 = pneg %p578
    $region38: #{forward.4} parent=5 // pred_check_branch
      %581 = sbr.rel (%p579) target = $region40
    $region39: #{forward.4} parent=5 // pred_region
      %s582 = ssub.s32 %s9, 2
      // Predicated region
      $region41: #{forward.4} parent=39 // pred_check
        %p583 = pneg %p106
      $region42: #{forward.4} parent=39 // pred_check_branch
        %585 = sbr.rel (%p583) target = $region44
      $region43: #{forward.4} parent=39 // pred_region
        %s586 = smul.u32 32, %s15
        %p587 = scmp.lt.s32.totalorder %s586, 127
        %s588 = scalar_select %p587, %s586, 127
        %s589 = smul.addr %s588, 8
        %s590 = scalar_lea.vmem %s3, %s589
      $region44: #{forward.4} parent=39 // pred_fallthru
        _
    $region40: #{forward.4} parent=5 // pred_fallthru
      _
  $region6: #{forward.4} parent=0 // loop_footer
    %s13 = sadd.s32 1, %s9
  $region7: #{forward.4} parent=0 // loop_footer_branch
    %8 = sbr.rel target = $region3
  $region8: #{forward.4} parent=0 // loop_exit
    _

// kernel: forward.5
$region0: #{forward.5}
  #allocation0 [shape = 'u32[]', space=smem, size = 0x4, offset = 0x4, fixed_abs, tag = 'smem constant byte address 0x4 - core index']
  #allocation1 [shape = 'u32[144,128]{1,0:T(1,128)}', space=vmem, size = 0x12000, scoped, tag = 'internal scratch']
  %s0 = inlined_call_operand.vmem [shape: f32[256,512], index: 0, kind: input, shape index: {}]
  %s1 = inlined_call_operand.vmem [shape: f32[512,128], index: 1, kind: input, shape index: {}]
  %s2 = inlined_call_operand.vmem [shape: f32[1,128], index: 2, kind: input, shape index: {}]
  %s3 = inlined_call_operand.vmem [shape: f32[256,128], index: 3, kind: output, shape index: {}]
  %s4 = sld [smem:[#allocation0]]
  $region22: #{forward.5} parent=0
    _
  %s6 = ssub.s32 1, %s4
  %s7 = scalar_select 0, %s6, %s4
  // Predicated region
  $region2: #{forward.5} parent=0 // pred_check
    _
  $region3: #{forward.5} parent=0 // pred_check_branch
    %9 = sbr.rel (0) target = $region5
  $region4: #{forward.5} parent=0 // pred_region
    _
  $region5: #{forward.5} parent=0 // pred_fallthru
    _
  // Predicated region
  $region6: #{forward.5} parent=0 // pred_check
    _
  $region7: #{forward.5} parent=0 // pred_check_branch
    %11 = sbr.rel (0) target = $region9
  $region8: #{forward.5} parent=0 // pred_region
    _
  $region9: #{forward.5} parent=0 // pred_fallthru
    _
  // Predicated region
  $region10: #{forward.5} parent=0 // pred_check
    _
  $region11: #{forward.5} parent=0 // pred_check_branch
    %13 = sbr.rel (0) target = $region13
  $region12: #{forward.5} parent=0 // pred_region
    _
  $region13: #{forward.5} parent=0 // pred_fallthru
    _
  %v14 = vld [vmem:[%s0] sm:$0xff]
  %v15 = vld [vmem:[%s0 + $0x8] sm:$0xff]
  %v16 = vld [vmem:[%s0 + $0x10] sm:$0xff]
  %v17 = vld [vmem:[%s0 + $0x18] sm:$0xff]
  %v18 = vld [vmem:[%s0 + $0x20] sm:$0xff]
  %v19 = vld [vmem:[%s0 + $0x28] sm:$0xff]
  %v20 = vld [vmem:[%s0 + $0x30] sm:$0xff]
  %v21 = vld [vmem:[%s0 + $0x38] sm:$0xff]
  %v22 = vld [vmem:[%s0 + $0x40] sm:$0xff]
  %v23 = vld [vmem:[%s0 + $0x48] sm:$0xff]
  %v24 = vld [vmem:[%s0 + $0x50] sm:$0xff]
  %v25 = vld [vmem:[%s0 + $0x58] sm:$0xff]
  %v26 = vld [vmem:[%s0 + $0x60] sm:$0xff]
  %v27 = vld [vmem:[%s0 + $0x68] sm:$0xff]
  %v28 = vld [vmem:[%s0 + $0x70] sm:$0xff]
  %v29 = vld [vmem:[%s0 + $0x78] sm:$0xff]
  %v30 = vld [vmem:[%s0 + $0x80] sm:$0xff]
  %v31 = vld [vmem:[%s0 + $0x88] sm:$0xff]
  %v32 = vld [vmem:[%s0 + $0x90] sm:$0xff]
  %v33 = vld [vmem:[%s0 + $0x98] sm:$0xff]
  %v34 = vld [vmem:[%s0 + $0xa0] sm:$0xff]
  %v35 = vld [vmem:[%s0 + $0xa8] sm:$0xff]
  %v36 = vld [vmem:[%s0 + $0xb0] sm:$0xff]
  %v37 = vld [vmem:[%s0 + $0xb8] sm:$0xff]
  %v38 = vld [vmem:[%s0 + $0xc0] sm:$0xff]
  %v39 = vld [vmem:[%s0 + $0xc8] sm:$0xff]
  %v40 = vld [vmem:[%s0 + $0xd0] sm:$0xff]
  %v41 = vld [vmem:[%s0 + $0xd8] sm:$0xff]
  %v42 = vld [vmem:[%s0 + $0xe0] sm:$0xff]
  %v43 = vld [vmem:[%s0 + $0xe8] sm:$0xff]
  %v44 = vld [vmem:[%s0 + $0xf0] sm:$0xff]
  %v45 = vld [vmem:[%s0 + $0xf8] sm:$0xff]
  %v46 = vld [vmem:[%s0 + $0x100] sm:$0xff]
  %v47 = vld [vmem:[%s0 + $0x108] sm:$0xff]
  %v48 = vld [vmem:[%s0 + $0x110] sm:$0xff]
  %v49 = vld [vmem:[%s0 + $0x118] sm:$0xff]
  %v50 = vld [vmem:[%s0 + $0x120] sm:$0xff]
  %v51 = vld [vmem:[%s0 + $0x128] sm:$0xff]
  %v52 = vld [vmem:[%s0 + $0x130] sm:$0xff]
  %v53 = vld [vmem:[%s0 + $0x138] sm:$0xff]
  %v54 = vld [vmem:[%s0 + $0x140] sm:$0xff]
  %v55 = vld [vmem:[%s0 + $0x148] sm:$0xff]
  %v56 = vld [vmem:[%s0 + $0x150] sm:$0xff]
  %v57 = vld [vmem:[%s0 + $0x158] sm:$0xff]
  %v58 = vld [vmem:[%s0 + $0x160] sm:$0xff]
  %v59 = vld [vmem:[%s0 + $0x168] sm:$0xff]
  %v60 = vld [vmem:[%s0 + $0x170] sm:$0xff]
  %v61 = vld [vmem:[%s0 + $0x178] sm:$0xff]
  %v62 = vld [vmem:[%s0 + $0x180] sm:$0xff]
  %v63 = vld [vmem:[%s0 + $0x188] sm:$0xff]
  %v64 = vld [vmem:[%s0 + $0x190] sm:$0xff]
  %v65 = vld [vmem:[%s0 + $0x198] sm:$0xff]
  %v66 = vld [vmem:[%s0 + $0x1a0] sm:$0xff]
  %v67 = vld [vmem:[%s0 + $0x1a8] sm:$0xff]
  %v68 = vld [vmem:[%s0 + $0x1b0] sm:$0xff]
  %v69 = vld [vmem:[%s0 + $0x1b8] sm:$0xff]
  %v70 = vld [vmem:[%s0 + $0x1c0] sm:$0xff]
  %v71 = vld [vmem:[%s0 + $0x1c8] sm:$0xff]
  %v72 = vld [vmem:[%s0 + $0x1d0] sm:$0xff]
  %v73 = vld [vmem:[%s0 + $0x1d8] sm:$0xff]
  %v74 = vld [vmem:[%s0 + $0x1e0] sm:$0xff]
  %v75 = vld [vmem:[%s0 + $0x1e8] sm:$0xff]
  %v76 = vld [vmem:[%s0 + $0x1f0] sm:$0xff]
  %v77 = vld [vmem:[%s0 + $0x1f8] sm:$0xff]
  %v78 = vld [vmem:[%s0 + $0x200] sm:$0xff]
  %v79 = vld [vmem:[%s0 + $0x208] sm:$0xff]
  %v80 = vld [vmem:[%s0 + $0x210] sm:$0xff]
  %v81 = vld [vmem:[%s0 + $0x218] sm:$0xff]
  %v82 = vld [vmem:[%s0 + $0x220] sm:$0xff]
  %v83 = vld [vmem:[%s0 + $0x228] sm:$0xff]
  %v84 = vld [vmem:[%s0 + $0x230] sm:$0xff]
  %v85 = vld [vmem:[%s0 + $0x238] sm:$0xff]
  %v86 = vld [vmem:[%s0 + $0x240] sm:$0xff]
  %v87 = vld [vmem:[%s0 + $0x248] sm:$0xff]
  %v88 = vld [vmem:[%s0 + $0x250] sm:$0xff]
  %v89 = vld [vmem:[%s0 + $0x258] sm:$0xff]
  %v90 = vld [vmem:[%s0 + $0x260] sm:$0xff]
  %v91 = vld [vmem:[%s0 + $0x268] sm:$0xff]
  %v92 = vld [vmem:[%s0 + $0x270] sm:$0xff]
  %v93 = vld [vmem:[%s0 + $0x278] sm:$0xff]
  %v94 = vld [vmem:[%s0 + $0x280] sm:$0xff]
  %v95 = vld [vmem:[%s0 + $0x288] sm:$0xff]
  %v96 = vld [vmem:[%s0 + $0x290] sm:$0xff]
  %v97 = vld [vmem:[%s0 + $0x298] sm:$0xff]
  %v98 = vld [vmem:[%s0 + $0x2a0] sm:$0xff]
  %v99 = vld [vmem:[%s0 + $0x2a8] sm:$0xff]
  %v100 = vld [vmem:[%s0 + $0x2b0] sm:$0xff]
  %v101 = vld [vmem:[%s0 + $0x2b8] sm:$0xff]
  %v102 = vld [vmem:[%s0 + $0x2c0] sm:$0xff]
  %v103 = vld [vmem:[%s0 + $0x2c8] sm:$0xff]
  %v104 = vld [vmem:[%s0 + $0x2d0] sm:$0xff]
  %v105 = vld [vmem:[%s0 + $0x2d8] sm:$0xff]
  %v106 = vld [vmem:[%s0 + $0x2e0] sm:$0xff]
  %v107 = vld [vmem:[%s0 + $0x2e8] sm:$0xff]
  %v108 = vld [vmem:[%s0 + $0x2f0] sm:$0xff]
  %v109 = vld [vmem:[%s0 + $0x2f8] sm:$0xff]
  %v110 = vld [vmem:[%s0 + $0x300] sm:$0xff]
  %v111 = vld [vmem:[%s0 + $0x308] sm:$0xff]
  %v112 = vld [vmem:[%s0 + $0x310] sm:$0xff]
  %v113 = vld [vmem:[%s0 + $0x318] sm:$0xff]
  %v114 = vld [vmem:[%s0 + $0x320] sm:$0xff]
  %v115 = vld [vmem:[%s0 + $0x328] sm:$0xff]
  %v116 = vld [vmem:[%s0 + $0x330] sm:$0xff]
  %v117 = vld [vmem:[%s0 + $0x338] sm:$0xff]
  %v118 = vld [vmem:[%s0 + $0x340] sm:$0xff]
  %v119 = vld [vmem:[%s0 + $0x348] sm:$0xff]
  %v120 = vld [vmem:[%s0 + $0x350] sm:$0xff]
  %v121 = vld [vmem:[%s0 + $0x358] sm:$0xff]
  %v122 = vld [vmem:[%s0 + $0x360] sm:$0xff]
  %v123 = vld [vmem:[%s0 + $0x368] sm:$0xff]
  %v124 = vld [vmem:[%s0 + $0x370] sm:$0xff]
  %v125 = vld [vmem:[%s0 + $0x378] sm:$0xff]
  %v126 = vld [vmem:[%s0 + $0x380] sm:$0xff]
  %v127 = vld [vmem:[%s0 + $0x388] sm:$0xff]
  %v128 = vld [vmem:[%s0 + $0x390] sm:$0xff]
  %v129 = vld [vmem:[%s0 + $0x398] sm:$0xff]
  %v130 = vld [vmem:[%s0 + $0x3a0] sm:$0xff]
  %v131 = vld [vmem:[%s0 + $0x3a8] sm:$0xff]
  %v132 = vld [vmem:[%s0 + $0x3b0] sm:$0xff]
  %v133 = vld [vmem:[%s0 + $0x3b8] sm:$0xff]
  %v134 = vld [vmem:[%s0 + $0x3c0] sm:$0xff]
  %v135 = vld [vmem:[%s0 + $0x3c8] sm:$0xff]
  %v136 = vld [vmem:[%s0 + $0x3d0] sm:$0xff]
  %v137 = vld [vmem:[%s0 + $0x3d8] sm:$0xff]
  %v138 = vld [vmem:[%s0 + $0x3e0] sm:$0xff]
  %v139 = vld [vmem:[%s0 + $0x3e8] sm:$0xff]
  %v140 = vld [vmem:[%s0 + $0x3f0] sm:$0xff]
  %v141 = vld [vmem:[%s0 + $0x3f8] sm:$0xff]
  %v142 = vld [vmem:[%s1] sm:$0xff]
  %v143 = vld [vmem:[%s1 + $0x8] sm:$0xff]
  %v144 = vld [vmem:[%s1 + $0x10] sm:$0xff]
  %v145 = vld [vmem:[%s1 + $0x18] sm:$0xff]
  %v146 = vld [vmem:[%s1 + $0x20] sm:$0xff]
  %v147 = vld [vmem:[%s1 + $0x28] sm:$0xff]
  %v148 = vld [vmem:[%s1 + $0x30] sm:$0xff]
  %v149 = vld [vmem:[%s1 + $0x38] sm:$0xff]
  %v150 = vld [vmem:[%s1 + $0x40] sm:$0xff]
  %v151 = vld [vmem:[%s1 + $0x48] sm:$0xff]
  %v152 = vld [vmem:[%s1 + $0x50] sm:$0xff]
  %v153 = vld [vmem:[%s1 + $0x58] sm:$0xff]
  %v154 = vld [vmem:[%s1 + $0x60] sm:$0xff]
  %v155 = vld [vmem:[%s1 + $0x68] sm:$0xff]
  %v156 = vld [vmem:[%s1 + $0x70] sm:$0xff]
  %v157 = vld [vmem:[%s1 + $0x78] sm:$0xff]
  %v158 = vld [vmem:[%s1 + $0x80] sm:$0xff]
  %v159 = vld [vmem:[%s1 + $0x88] sm:$0xff]
  %v160 = vld [vmem:[%s1 + $0x90] sm:$0xff]
  %v161 = vld [vmem:[%s1 + $0x98] sm:$0xff]
  %v162 = vld [vmem:[%s1 + $0xa0] sm:$0xff]
  %v163 = vld [vmem:[%s1 + $0xa8] sm:$0xff]
  %v164 = vld [vmem:[%s1 + $0xb0] sm:$0xff]
  %v165 = vld [vmem:[%s1 + $0xb8] sm:$0xff]
  %v166 = vld [vmem:[%s1 + $0xc0] sm:$0xff]
  %v167 = vld [vmem:[%s1 + $0xc8] sm:$0xff]
  %v168 = vld [vmem:[%s1 + $0xd0] sm:$0xff]
  %v169 = vld [vmem:[%s1 + $0xd8] sm:$0xff]
  %v170 = vld [vmem:[%s1 + $0xe0] sm:$0xff]
  %v171 = vld [vmem:[%s1 + $0xe8] sm:$0xff]
  %v172 = vld [vmem:[%s1 + $0xf0] sm:$0xff]
  %v173 = vld [vmem:[%s1 + $0xf8] sm:$0xff]
  %v174 = vld [vmem:[%s1 + $0x100] sm:$0xff]
  %v175 = vld [vmem:[%s1 + $0x108] sm:$0xff]
  %v176 = vld [vmem:[%s1 + $0x110] sm:$0xff]
  %v177 = vld [vmem:[%s1 + $0x118] sm:$0xff]
  %v178 = vld [vmem:[%s1 + $0x120] sm:$0xff]
  %v179 = vld [vmem:[%s1 + $0x128] sm:$0xff]
  %v180 = vld [vmem:[%s1 + $0x130] sm:$0xff]
  %v181 = vld [vmem:[%s1 + $0x138] sm:$0xff]
  %v182 = vld [vmem:[%s1 + $0x140] sm:$0xff]
  %v183 = vld [vmem:[%s1 + $0x148] sm:$0xff]
  %v184 = vld [vmem:[%s1 + $0x150] sm:$0xff]
  %v185 = vld [vmem:[%s1 + $0x158] sm:$0xff]
  %v186 = vld [vmem:[%s1 + $0x160] sm:$0xff]
  %v187 = vld [vmem:[%s1 + $0x168] sm:$0xff]
  %v188 = vld [vmem:[%s1 + $0x170] sm:$0xff]
  %v189 = vld [vmem:[%s1 + $0x178] sm:$0xff]
  %v190 = vld [vmem:[%s1 + $0x180] sm:$0xff]
  %v191 = vld [vmem:[%s1 + $0x188] sm:$0xff]
  %v192 = vld [vmem:[%s1 + $0x190] sm:$0xff]
  %v193 = vld [vmem:[%s1 + $0x198] sm:$0xff]
  %v194 = vld [vmem:[%s1 + $0x1a0] sm:$0xff]
  %v195 = vld [vmem:[%s1 + $0x1a8] sm:$0xff]
  %v196 = vld [vmem:[%s1 + $0x1b0] sm:$0xff]
  %v197 = vld [vmem:[%s1 + $0x1b8] sm:$0xff]
  %v198 = vld [vmem:[%s1 + $0x1c0] sm:$0xff]
  %v199 = vld [vmem:[%s1 + $0x1c8] sm:$0xff]
  %v200 = vld [vmem:[%s1 + $0x1d0] sm:$0xff]
  %v201 = vld [vmem:[%s1 + $0x1d8] sm:$0xff]
  %v202 = vld [vmem:[%s1 + $0x1e0] sm:$0xff]
  %v203 = vld [vmem:[%s1 + $0x1e8] sm:$0xff]
  %v204 = vld [vmem:[%s1 + $0x1f0] sm:$0xff]
  %v205 = vld [vmem:[%s1 + $0x1f8] sm:$0xff]
  %v206 = vld [vmem:[%s2] sm:$0x1]
  %v208 = vlaneseq
  %v209 = vshrl.u32 %v208, 7
  %v210 = vsub.s32 0, %v209
  %v211 = vrot.slane %v206, %v210
  %213 = vmatprep.subr.mxu0 0.0
  %214 = vmatpush1.msra.mxu0 %v142
  %215 = vmatprep.subr.mxu0 0.0
  %216 = vmatpush1.msra.mxu0 %v143
  %217 = vmatprep.subr.mxu0 0.0
  %218 = vmatpush1.msra.mxu0 %v144
  %219 = vmatprep.subr.mxu0 0.0
  %220 = vmatpush1.msra.mxu0 %v145
  %221 = vmatprep.subr.mxu0 0.0
  %222 = vmatpush1.msra.mxu0 %v146
  %223 = vmatprep.subr.mxu0 0.0
  %224 = vmatpush1.msra.mxu0 %v147
  %225 = vmatprep.subr.mxu0 0.0
  %226 = vmatpush1.msra.mxu0 %v148
  %227 = vmatprep.subr.mxu0 0.0
  %228 = vmatpush1.msra.mxu0 %v149
  %229 = vmatprep.subr.mxu0 0.0
  %230 = vmatpush1.msra.mxu0 %v150
  %231 = vmatprep.subr.mxu0 0.0
  %232 = vmatpush1.msra.mxu0 %v151
  %233 = vmatprep.subr.mxu0 0.0
  %234 = vmatpush1.msra.mxu0 %v152
  %235 = vmatprep.subr.mxu0 0.0
  %236 = vmatpush1.msra.mxu0 %v153
  %237 = vmatprep.subr.mxu0 0.0
  %238 = vmatpush1.msra.mxu0 %v154
  %239 = vmatprep.subr.mxu0 0.0
  %240 = vmatpush1.msra.mxu0 %v155
  %241 = vmatprep.subr.mxu0 0.0
  %242 = vmatpush1.msra.mxu0 %v156
  %243 = vmatprep.subr.mxu0 0.0
  %244 = vmatpush1.msra.mxu0 %v157
  %245 = vmatprep.subr.mxu0 0.0
  %246 = vmatpush1.msra.mxu0 %v158
  %247 = vmatprep.subr.mxu0 0.0
  %248 = vmatpush1.msra.mxu0 %v159
  %249 = vmatprep.subr.mxu0 0.0
  %250 = vmatpush1.msra.mxu0 %v160
  %251 = vmatprep.subr.mxu0 0.0
  %252 = vmatpush1.msra.mxu0 %v161
  %253 = vmatprep.subr.mxu0 0.0
  %254 = vmatpush1.msra.mxu0 %v162
  %255 = vmatprep.subr.mxu0 0.0
  %256 = vmatpush1.msra.mxu0 %v163
  %257 = vmatprep.subr.mxu0 0.0
  %258 = vmatpush1.msra.mxu0 %v164
  %259 = vmatprep.subr.mxu0 0.0
  %260 = vmatpush1.msra.mxu0 %v165
  %261 = vmatprep.subr.mxu0 0.0
  %262 = vmatpush1.msra.mxu0 %v166
  %263 = vmatprep.subr.mxu0 0.0
  %264 = vmatpush1.msra.mxu0 %v167
  %265 = vmatprep.subr.mxu0 0.0
  %266 = vmatpush1.msra.mxu0 %v168
  %267 = vmatprep.subr.mxu0 0.0
  %268 = vmatpush1.msra.mxu0 %v169
  %269 = vmatprep.subr.mxu0 0.0
  %270 = vmatpush1.msra.mxu0 %v170
  %271 = vmatprep.subr.mxu0 0.0
  %272 = vmatpush1.msra.mxu0 %v171
  %273 = vmatprep.subr.mxu0 0.0
  %274 = vmatpush1.msra.mxu0 %v172
  %275 = vmatprep.subr.mxu0 0.0
  %276 = vmatpush1.msra.mxu0 %v173
  %277 = vmatprep.mubr.f32.mxu0 %v15
  %278 = vmatmul.mubr.f32.gmra.mrb[0].mxu0 %v14
  %v279 = vpop.f32.mrb[0].mxu0
  %v280 = vadd.f32 %v211, %v279
  %v281 = vpop.f32.mrb[0].mxu0
  %282 = vmatprep.mubr.f32.mxu0 %v19
  %283 = vmatmul.mubr.f32.gmra.mrb[0].mxu0 %v18
  %v284 = vpop.f32.mrb[0].mxu0
  %v285 = vadd.f32 %v211, %v284
  %v286 = vpop.f32.mrb[0].mxu0
  %287 = vmatprep.mubr.f32.mxu0 %v23
  %288 = vmatmul.mubr.f32.gmra.mrb[0].mxu0 %v22
  %v289 = vpop.f32.mrb[0].mxu0
  %v290 = vadd.f32 %v211, %v289
  %v291 = vpop.f32.mrb[0].mxu0
  %292 = vmatprep.mubr.f32.mxu0 %v27
  %293 = vmatmul.mubr.f32.gmra.mrb[0].mxu0 %v26
  %v294 = vpop.f32.mrb[0].mxu0
  %v295 = vadd.f32 %v211, %v294
  %v296 = vpop.f32.mrb[0].mxu0
  %297 = vmatprep.mubr.f32.mxu0 %v31
  %298 = vmatmul.mubr.f32.gmra.mrb[0].mxu0 %v30
  %v299 = vpop.f32.mrb[0].mxu0
  %v300 = vadd.f32 %v211, %v299
  %v301 = vpop.f32.mrb[0].mxu0
  %302 = vmatprep.mubr.f32.mxu0 %v35
  %303 = vmatmul.mubr.f32.gmra.mrb[0].mxu0 %v34
  %v304 = vpop.f32.mrb[0].mxu0
  %v305 = vadd.f32 %v211, %v304
  %v306 = vpop.f32.mrb[0].mxu0
  %307 = vmatprep.mubr.f32.mxu0 %v39
  %308 = vmatmul.mubr.f32.gmra.mrb[0].mxu0 %v38
  %v309 = vpop.f32.mrb[0].mxu0
  %v310 = vadd.f32 %v211, %v309
  %v311 = vpop.f32.mrb[0].mxu0
  %312 = vmatprep.mubr.f32.mxu0 %v43
  %313 = vmatmul.mubr.f32.gmra.mrb[0].mxu0 %v42
  %v314 = vpop.f32.mrb[0].mxu0
  %v315 = vadd.f32 %v211, %v314
  %v316 = vpop.f32.mrb[0].mxu0
  %317 = vmatprep.mubr.f32.mxu0 %v47
  %318 = vmatmul.mubr.f32.gmra.mrb[0].mxu0 %v46
  %v319 = vpop.f32.mrb[0].mxu0
  %v320 = vadd.f32 %v211, %v319
  %v321 = vpop.f32.mrb[0].mxu0
  %322 = vmatprep.mubr.f32.mxu0 %v51
  %323 = vmatmul.mubr.f32.gmra.mrb[0].mxu0 %v50
  %v324 = vpop.f32.mrb[0].mxu0
  %v325 = vadd.f32 %v211, %v324
  %v326 = vpop.f32.mrb[0].mxu0
  %327 = vmatprep.mubr.f32.mxu0 %v55
  %328 = vmatmul.mubr.f32.gmra.mrb[0].mxu0 %v54
  %v329 = vpop.f32.mrb[0].mxu0
  %v330 = vadd.f32 %v211, %v329
  %v331 = vpop.f32.mrb[0].mxu0
  %332 = vmatprep.mubr.f32.mxu0 %v59
  %333 = vmatmul.mubr.f32.gmra.mrb[0].mxu0 %v58
  %v334 = vpop.f32.mrb[0].mxu0
  %v335 = vadd.f32 %v211, %v334
  %v336 = vpop.f32.mrb[0].mxu0
  %337 = vmatprep.mubr.f32.mxu0 %v63
  %338 = vmatmul.mubr.f32.gmra.mrb[0].mxu0 %v62
  %v339 = vpop.f32.mrb[0].mxu0
  %v340 = vadd.f32 %v211, %v339
  %v341 = vpop.f32.mrb[0].mxu0
  %342 = vmatprep.mubr.f32.mxu0 %v67
  %343 = vmatmul.mubr.f32.gmra.mrb[0].mxu0 %v66
  %v344 = vpop.f32.mrb[0].mxu0
  %v345 = vadd.f32 %v211, %v344
  %v346 = vpop.f32.mrb[0].mxu0
  %347 = vmatprep.mubr.f32.mxu0 %v71
  %348 = vmatmul.mubr.f32.gmra.mrb[0].mxu0 %v70
  %v349 = vpop.f32.mrb[0].mxu0
  %v350 = vadd.f32 %v211, %v349
  %v351 = vpop.f32.mrb[0].mxu0
  %352 = vmatprep.mubr.f32.mxu0 %v75
  %353 = vmatmul.mubr.f32.gmra.mrb[0].mxu0 %v74
  %v354 = vpop.f32.mrb[0].mxu0
  %v355 = vadd.f32 %v211, %v354
  %v356 = vpop.f32.mrb[0].mxu0
  %357 = vmatprep.mubr.f32.mxu0 %v79
  %358 = vmatmul.mubr.f32.gmra.mrb[0].mxu0 %v78
  %v359 = vpop.f32.mrb[0].mxu0
  %v360 = vadd.f32 %v211, %v359
  %v361 = vpop.f32.mrb[0].mxu0
  %362 = vmatprep.mubr.f32.mxu0 %v83
  %363 = vmatmul.mubr.f32.gmra.mrb[0].mxu0 %v82
  %v364 = vpop.f32.mrb[0].mxu0
  %v365 = vadd.f32 %v211, %v364
  %v366 = vpop.f32.mrb[0].mxu0
  %367 = vmatprep.mubr.f32.mxu0 %v87
  %368 = vmatmul.mubr.f32.gmra.mrb[0].mxu0 %v86
  %v369 = vpop.f32.mrb[0].mxu0
  %v370 = vadd.f32 %v211, %v369
  %v371 = vpop.f32.mrb[0].mxu0
  %372 = vmatprep.mubr.f32.mxu0 %v91
  %373 = vmatmul.mubr.f32.gmra.mrb[0].mxu0 %v90
  %v374 = vpop.f32.mrb[0].mxu0
  %v375 = vadd.f32 %v211, %v374
  %v376 = vpop.f32.mrb[0].mxu0
  %377 = vmatprep.mubr.f32.mxu0 %v95
  %378 = vmatmul.mubr.f32.gmra.mrb[0].mxu0 %v94
  %v379 = vpop.f32.mrb[0].mxu0
  %v380 = vadd.f32 %v211, %v379
  %v381 = vpop.f32.mrb[0].mxu0
  %382 = vmatprep.mubr.f32.mxu0 %v99
  %383 = vmatmul.mubr.f32.gmra.mrb[0].mxu0 %v98
  %v384 = vpop.f32.mrb[0].mxu0
  %v385 = vadd.f32 %v211, %v384
  %v386 = vpop.f32.mrb[0].mxu0
  %387 = vmatprep.mubr.f32.mxu0 %v103
  %388 = vmatmul.mubr.f32.gmra.mrb[0].mxu0 %v102
  %v389 = vpop.f32.mrb[0].mxu0
  %v390 = vadd.f32 %v211, %v389
  %v391 = vpop.f32.mrb[0].mxu0
  %392 = vmatprep.mubr.f32.mxu0 %v107
  %393 = vmatmul.mubr.f32.gmra.mrb[0].mxu0 %v106
  %v394 = vpop.f32.mrb[0].mxu0
  %v395 = vadd.f32 %v211, %v394
  %v396 = vpop.f32.mrb[0].mxu0
  %397 = vmatprep.mubr.f32.mxu0 %v111
  %398 = vmatmul.mubr.f32.gmra.mrb[0].mxu0 %v110
  %v399 = vpop.f32.mrb[0].mxu0
  %v400 = vadd.f32 %v211, %v399
  %v401 = vpop.f32.mrb[0].mxu0
  %402 = vmatprep.mubr.f32.mxu0 %v115
  %403 = vmatmul.mubr.f32.gmra.mrb[0].mxu0 %v114
  %v404 = vpop.f32.mrb[0].mxu0
  %v405 = vadd.f32 %v211, %v404
  %v406 = vpop.f32.mrb[0].mxu0
  %407 = vmatprep.mubr.f32.mxu0 %v119
  %408 = vmatmul.mubr.f32.gmra.mrb[0].mxu0 %v118
  %v409 = vpop.f32.mrb[0].mxu0
  %v410 = vadd.f32 %v211, %v409
  %v411 = vpop.f32.mrb[0].mxu0
  %412 = vmatprep.mubr.f32.mxu0 %v123
  %413 = vmatmul.mubr.f32.gmra.mrb[0].mxu0 %v122
  %v414 = vpop.f32.mrb[0].mxu0
  %v415 = vadd.f32 %v211, %v414
  %v416 = vpop.f32.mrb[0].mxu0
  %417 = vmatprep.mubr.f32.mxu0 %v127
  %418 = vmatmul.mubr.f32.gmra.mrb[0].mxu0 %v126
  %v419 = vpop.f32.mrb[0].mxu0
  %v420 = vadd.f32 %v211, %v419
  %v421 = vpop.f32.mrb[0].mxu0
  %422 = vmatprep.mubr.f32.mxu0 %v131
  %423 = vmatmul.mubr.f32.gmra.mrb[0].mxu0 %v130
  %v424 = vpop.f32.mrb[0].mxu0
  %v425 = vadd.f32 %v211, %v424
  %v426 = vpop.f32.mrb[0].mxu0
  %427 = vmatprep.mubr.f32.mxu0 %v135
  %428 = vmatmul.mubr.f32.gmra.mrb[0].mxu0 %v134
  %v429 = vpop.f32.mrb[0].mxu0
  %v430 = vadd.f32 %v211, %v429
  %v431 = vpop.f32.mrb[0].mxu0
  %432 = vmatprep.mubr.f32.mxu0 %v139
  %433 = vmatmul.mubr.f32.gmra.mrb[0].mxu0 %v138
  %v434 = vpop.f32.mrb[0].mxu0
  %v435 = vadd.f32 %v211, %v434
  %v436 = vpop.f32.mrb[0].mxu0
  %437 = vdwg.mxu0
  %438 = vmatprep.subr.mxu0 0.0
  %439 = vmatpush1.msra.mxu0 %v174
  %440 = vmatprep.subr.mxu0 0.0
  %441 = vmatpush1.msra.mxu0 %v175
  %442 = vmatprep.subr.mxu0 0.0
  %443 = vmatpush1.msra.mxu0 %v176
  %444 = vmatprep.subr.mxu0 0.0
  %445 = vmatpush1.msra.mxu0 %v177
  %446 = vmatprep.subr.mxu0 0.0
  %447 = vmatpush1.msra.mxu0 %v178
  %448 = vmatprep.subr.mxu0 0.0
  %449 = vmatpush1.msra.mxu0 %v179
  %450 = vmatprep.subr.mxu0 0.0
  %451 = vmatpush1.msra.mxu0 %v180
  %452 = vmatprep.subr.mxu0 0.0
  %453 = vmatpush1.msra.mxu0 %v181
  %454 = vmatprep.subr.mxu0 0.0
  %455 = vmatpush1.msra.mxu0 %v182
  %456 = vmatprep.subr.mxu0 0.0
  %457 = vmatpush1.msra.mxu0 %v183
  %458 = vmatprep.subr.mxu0 0.0
  %459 = vmatpush1.msra.mxu0 %v184
  %460 = vmatprep.subr.mxu0 0.0
  %461 = vmatpush1.msra.mxu0 %v185
  %462 = vmatprep.subr.mxu0 0.0
  %463 = vmatpush1.msra.mxu0 %v186
  %464 = vmatprep.subr.mxu0 0.0
  %465 = vmatpush1.msra.mxu0 %v187
  %466 = vmatprep.subr.mxu0 0.0
  %467 = vmatpush1.msra.mxu0 %v188
  %468 = vmatprep.subr.mxu0 0.0
  %469 = vmatpush1.msra.mxu0 %v189
  %470 = vmatprep.subr.mxu0 0.0
  %471 = vmatpush1.msra.mxu0 %v190
  %472 = vmatprep.subr.mxu0 0.0
  %473 = vmatpush1.msra.mxu0 %v191
  %474 = vmatprep.subr.mxu0 0.0
  %475 = vmatpush1.msra.mxu0 %v192
  %476 = vmatprep.subr.mxu0 0.0
  %477 = vmatpush1.msra.mxu0 %v193
  %478 = vmatprep.subr.mxu0 0.0
  %479 = vmatpush1.msra.mxu0 %v194
  %480 = vmatprep.subr.mxu0 0.0
  %481 = vmatpush1.msra.mxu0 %v195
  %482 = vmatprep.subr.mxu0 0.0
  %483 = vmatpush1.msra.mxu0 %v196
  %484 = vmatprep.subr.mxu0 0.0
  %485 = vmatpush1.msra.mxu0 %v197
  %486 = vmatprep.subr.mxu0 0.0
  %487 = vmatpush1.msra.mxu0 %v198
  %488 = vmatprep.subr.mxu0 0.0
  %489 = vmatpush1.msra.mxu0 %v199
  %490 = vmatprep.subr.mxu0 0.0
  %491 = vmatpush1.msra.mxu0 %v200
  %492 = vmatprep.subr.mxu0 0.0
  %493 = vmatpush1.msra.mxu0 %v201
  %494 = vmatprep.subr.mxu0 0.0
  %495 = vmatpush1.msra.mxu0 %v202
  %496 = vmatprep.subr.mxu0 0.0
  %497 = vmatpush1.msra.mxu0 %v203
  %498 = vmatprep.subr.mxu0 0.0
  %499 = vmatpush1.msra.mxu0 %v204
  %500 = vmatprep.subr.mxu0 0.0
  %501 = vmatpush1.msra.mxu0 %v205
  %502 = vmatprep.mubr.f32.mxu0 %v17
  %503 = vmatmul.mubr.f32.gmra.mrb[0].mxu0 %v16
  %v504 = vpop.f32.mrb[0].mxu0
  %v505 = vadd.f32 %v280, %v504
  %v506 = vpop.f32.mrb[0].mxu0
  %507 = vmatprep.mubr.f32.mxu0 %v21
  %508 = vmatmul.mubr.f32.gmra.mrb[0].mxu0 %v20
  %v509 = vpop.f32.mrb[0].mxu0
  %v510 = vadd.f32 %v285, %v509
  %v511 = vpop.f32.mrb[0].mxu0
  %512 = vmatprep.mubr.f32.mxu0 %v25
  %513 = vmatmul.mubr.f32.gmra.mrb[0].mxu0 %v24
  %v514 = vpop.f32.mrb[0].mxu0
  %v515 = vadd.f32 %v290, %v514
  %v516 = vpop.f32.mrb[0].mxu0
  %517 = vmatprep.mubr.f32.mxu0 %v29
  %518 = vmatmul.mubr.f32.gmra.mrb[0].mxu0 %v28
  %v519 = vpop.f32.mrb[0].mxu0
  %v520 = vadd.f32 %v295, %v519
  %v521 = vpop.f32.mrb[0].mxu0
  %522 = vmatprep.mubr.f32.mxu0 %v33
  %523 = vmatmul.mubr.f32.gmra.mrb[0].mxu0 %v32
  %v524 = vpop.f32.mrb[0].mxu0
  %v525 = vadd.f32 %v300, %v524
  %v526 = vpop.f32.mrb[0].mxu0
  %527 = vmatprep.mubr.f32.mxu0 %v37
  %528 = vmatmul.mubr.f32.gmra.mrb[0].mxu0 %v36
  %v529 = vpop.f32.mrb[0].mxu0
  %v530 = vadd.f32 %v305, %v529
  %v531 = vpop.f32.mrb[0].mxu0
  %532 = vmatprep.mubr.f32.mxu0 %v41
  %533 = vmatmul.mubr.f32.gmra.mrb[0].mxu0 %v40
  %v534 = vpop.f32.mrb[0].mxu0
  %v535 = vadd.f32 %v310, %v534
  %v536 = vpop.f32.mrb[0].mxu0
  %537 = vmatprep.mubr.f32.mxu0 %v45
  %538 = vmatmul.mubr.f32.gmra.mrb[0].mxu0 %v44
  %v539 = vpop.f32.mrb[0].mxu0
  %v540 = vadd.f32 %v315, %v539
  %v541 = vpop.f32.mrb[0].mxu0
  %542 = vmatprep.mubr.f32.mxu0 %v49
  %543 = vmatmul.mubr.f32.gmra.mrb[0].mxu0 %v48
  %v544 = vpop.f32.mrb[0].mxu0
  %v545 = vadd.f32 %v320, %v544
  %v546 = vpop.f32.mrb[0].mxu0
  %547 = vmatprep.mubr.f32.mxu0 %v53
  %548 = vmatmul.mubr.f32.gmra.mrb[0].mxu0 %v52
  %v549 = vpop.f32.mrb[0].mxu0
  %v550 = vadd.f32 %v325, %v549
  %v551 = vpop.f32.mrb[0].mxu0
  %552 = vmatprep.mubr.f32.mxu0 %v57
  %553 = vmatmul.mubr.f32.gmra.mrb[0].mxu0 %v56
  %v554 = vpop.f32.mrb[0].mxu0
  %v555 = vadd.f32 %v330, %v554
  %v556 = vpop.f32.mrb[0].mxu0
  %557 = vmatprep.mubr.f32.mxu0 %v61
  %558 = vmatmul.mubr.f32.gmra.mrb[0].mxu0 %v60
  %v559 = vpop.f32.mrb[0].mxu0
  %v560 = vadd.f32 %v335, %v559
  %v561 = vpop.f32.mrb[0].mxu0
  %562 = vmatprep.mubr.f32.mxu0 %v65
  %563 = vmatmul.mubr.f32.gmra.mrb[0].mxu0 %v64
  %v564 = vpop.f32.mrb[0].mxu0
  %v565 = vadd.f32 %v340, %v564
  %v566 = vpop.f32.mrb[0].mxu0
  %567 = vmatprep.mubr.f32.mxu0 %v69
  %568 = vmatmul.mubr.f32.gmra.mrb[0].mxu0 %v68
  %v569 = vpop.f32.mrb[0].mxu0
  %v570 = vadd.f32 %v345, %v569
  %v571 = vpop.f32.mrb[0].mxu0
  %572 = vmatprep.mubr.f32.mxu0 %v73
  %573 = vmatmul.mubr.f32.gmra.mrb[0].mxu0 %v72
  %v574 = vpop.f32.mrb[0].mxu0
  %v575 = vadd.f32 %v350, %v574
  %v576 = vpop.f32.mrb[0].mxu0
  %577 = vmatprep.mubr.f32.mxu0 %v77
  %578 = vmatmul.mubr.f32.gmra.mrb[0].mxu0 %v76
  %v579 = vpop.f32.mrb[0].mxu0
  %v580 = vadd.f32 %v355, %v579
  %v581 = vpop.f32.mrb[0].mxu0
  %582 = vmatprep.mubr.f32.mxu0 %v81
  %583 = vmatmul.mubr.f32.gmra.mrb[0].mxu0 %v80
  %v584 = vpop.f32.mrb[0].mxu0
  %v585 = vadd.f32 %v360, %v584
  %v586 = vpop.f32.mrb[0].mxu0
  %587 = vmatprep.mubr.f32.mxu0 %v85
  %588 = vmatmul.mubr.f32.gmra.mrb[0].mxu0 %v84
  %v589 = vpop.f32.mrb[0].mxu0
  %v590 = vadd.f32 %v365, %v589
  %v591 = vpop.f32.mrb[0].mxu0
  %592 = vmatprep.mubr.f32.mxu0 %v89
  %593 = vmatmul.mubr.f32.gmra.mrb[0].mxu0 %v88
  %v594 = vpop.f32.mrb[0].mxu0
  %v595 = vadd.f32 %v370, %v594
  %v596 = vpop.f32.mrb[0].mxu0
  %597 = vmatprep.mubr.f32.mxu0 %v93
  %598 = vmatmul.mubr.f32.gmra.mrb[0].mxu0 %v92
  %v599 = vpop.f32.mrb[0].mxu0
  %v600 = vadd.f32 %v375, %v599
  %v601 = vpop.f32.mrb[0].mxu0
  %602 = vmatprep.mubr.f32.mxu0 %v97
  %603 = vmatmul.mubr.f32.gmra.mrb[0].mxu0 %v96
  %v604 = vpop.f32.mrb[0].mxu0
  %v605 = vadd.f32 %v380, %v604
  %v606 = vpop.f32.mrb[0].mxu0
  %607 = vmatprep.mubr.f32.mxu0 %v101
  %608 = vmatmul.mubr.f32.gmra.mrb[0].mxu0 %v100
  %v609 = vpop.f32.mrb[0].mxu0
  %v610 = vadd.f32 %v385, %v609
  %v611 = vpop.f32.mrb[0].mxu0
  %612 = vmatprep.mubr.f32.mxu0 %v105
  %613 = vmatmul.mubr.f32.gmra.mrb[0].mxu0 %v104
  %v614 = vpop.f32.mrb[0].mxu0
  %v615 = vadd.f32 %v390, %v614
  %v616 = vpop.f32.mrb[0].mxu0
  %617 = vmatprep.mubr.f32.mxu0 %v109
  %618 = vmatmul.mubr.f32.gmra.mrb[0].mxu0 %v108
  %v619 = vpop.f32.mrb[0].mxu0
  %v620 = vadd.f32 %v395, %v619
  %v621 = vpop.f32.mrb[0].mxu0
  %622 = vmatprep.mubr.f32.mxu0 %v113
  %623 = vmatmul.mubr.f32.gmra.mrb[0].mxu0 %v112
  %v624 = vpop.f32.mrb[0].mxu0
  %v625 = vadd.f32 %v400, %v624
  %v626 = vpop.f32.mrb[0].mxu0
  %627 = vmatprep.mubr.f32.mxu0 %v117
  %628 = vmatmul.mubr.f32.gmra.mrb[0].mxu0 %v116
  %v629 = vpop.f32.mrb[0].mxu0
  %v630 = vadd.f32 %v405, %v629
  %v631 = vpop.f32.mrb[0].mxu0
  %632 = vmatprep.mubr.f32.mxu0 %v121
  %633 = vmatmul.mubr.f32.gmra.mrb[0].mxu0 %v120
  %v634 = vpop.f32.mrb[0].mxu0
  %v635 = vadd.f32 %v410, %v634
  %v636 = vpop.f32.mrb[0].mxu0
  %637 = vmatprep.mubr.f32.mxu0 %v125
  %638 = vmatmul.mubr.f32.gmra.mrb[0].mxu0 %v124
  %v639 = vpop.f32.mrb[0].mxu0
  %v640 = vadd.f32 %v415, %v639
  %v641 = vpop.f32.mrb[0].mxu0
  %642 = vmatprep.mubr.f32.mxu0 %v129
  %643 = vmatmul.mubr.f32.gmra.mrb[0].mxu0 %v128
  %v644 = vpop.f32.mrb[0].mxu0
  %v645 = vadd.f32 %v420, %v644
  %v646 = vpop.f32.mrb[0].mxu0
  %647 = vmatprep.mubr.f32.mxu0 %v133
  %648 = vmatmul.mubr.f32.gmra.mrb[0].mxu0 %v132
  %v649 = vpop.f32.mrb[0].mxu0
  %v650 = vadd.f32 %v425, %v649
  %v651 = vpop.f32.mrb[0].mxu0
  %652 = vmatprep.mubr.f32.mxu0 %v137
  %653 = vmatmul.mubr.f32.gmra.mrb[0].mxu0 %v136
  %v654 = vpop.f32.mrb[0].mxu0
  %v655 = vadd.f32 %v430, %v654
  %v656 = vpop.f32.mrb[0].mxu0
  %657 = vmatprep.mubr.f32.mxu0 %v141
  %658 = vmatmul.mubr.f32.gmra.mrb[0].mxu0 %v140
  %v659 = vpop.f32.mrb[0].mxu0
  %v660 = vadd.f32 %v435, %v659
  %v661 = vpop.f32.mrb[0].mxu0
  %662 = vdwg.mxu0
  %v663 = vmax.f32 %v505, 0.0
  %v664 = vmax.f32 %v510, 0.0
  %v665 = vmax.f32 %v515, 0.0
  %v666 = vmax.f32 %v520, 0.0
  %v667 = vmax.f32 %v525, 0.0
  %v668 = vmax.f32 %v530, 0.0
  %v669 = vmax.f32 %v535, 0.0
  %v670 = vmax.f32 %v540, 0.0
  %v671 = vmax.f32 %v545, 0.0
  %v672 = vmax.f32 %v550, 0.0
  %v673 = vmax.f32 %v555, 0.0
  %v674 = vmax.f32 %v560, 0.0
  %v675 = vmax.f32 %v565, 0.0
  %v676 = vmax.f32 %v570, 0.0
  %v677 = vmax.f32 %v575, 0.0
  %v678 = vmax.f32 %v580, 0.0
  %v679 = vmax.f32 %v585, 0.0
  %v680 = vmax.f32 %v590, 0.0
  %v681 = vmax.f32 %v595, 0.0
  %v682 = vmax.f32 %v600, 0.0
  %v683 = vmax.f32 %v605, 0.0
  %v684 = vmax.f32 %v610, 0.0
  %v685 = vmax.f32 %v615, 0.0
  %v686 = vmax.f32 %v620, 0.0
  %v687 = vmax.f32 %v625, 0.0
  %v688 = vmax.f32 %v630, 0.0
  %v689 = vmax.f32 %v635, 0.0
  %v690 = vmax.f32 %v640, 0.0
  %v691 = vmax.f32 %v645, 0.0
  %v692 = vmax.f32 %v650, 0.0
  %v693 = vmax.f32 %v655, 0.0
  %v694 = vmax.f32 %v660, 0.0
  %695 = vst [vmem:[%s3] sm:$0xff] %v663
  %696 = vst [vmem:[%s3 + $0x8] sm:$0xff] %v664
  %697 = vst [vmem:[%s3 + $0x10] sm:$0xff] %v665
  %698 = vst [vmem:[%s3 + $0x18] sm:$0xff] %v666
  %699 = vst [vmem:[%s3 + $0x20] sm:$0xff] %v667
  %700 = vst [vmem:[%s3 + $0x28] sm:$0xff] %v668
  %701 = vst [vmem:[%s3 + $0x30] sm:$0xff] %v669
  %702 = vst [vmem:[%s3 + $0x38] sm:$0xff] %v670
  %703 = vst [vmem:[%s3 + $0x40] sm:$0xff] %v671
  %704 = vst [vmem:[%s3 + $0x48] sm:$0xff] %v672
  %705 = vst [vmem:[%s3 + $0x50] sm:$0xff] %v673
  %706 = vst [vmem:[%s3 + $0x58] sm:$0xff] %v674
  %707 = vst [vmem:[%s3 + $0x60] sm:$0xff] %v675
  %708 = vst [vmem:[%s3 + $0x68] sm:$0xff] %v676
  %709 = vst [vmem:[%s3 + $0x70] sm:$0xff] %v677
  %710 = vst [vmem:[%s3 + $0x78] sm:$0xff] %v678
  %711 = vst [vmem:[%s3 + $0x80] sm:$0xff] %v679
  %712 = vst [vmem:[%s3 + $0x88] sm:$0xff] %v680
  %713 = vst [vmem:[%s3 + $0x90] sm:$0xff] %v681
  %714 = vst [vmem:[%s3 + $0x98] sm:$0xff] %v682
  %715 = vst [vmem:[%s3 + $0xa0] sm:$0xff] %v683
  %716 = vst [vmem:[%s3 + $0xa8] sm:$0xff] %v684
  %717 = vst [vmem:[%s3 + $0xb0] sm:$0xff] %v685
  %718 = vst [vmem:[%s3 + $0xb8] sm:$0xff] %v686
  %719 = vst [vmem:[%s3 + $0xc0] sm:$0xff] %v687
  %720 = vst [vmem:[%s3 + $0xc8] sm:$0xff] %v688
  %721 = vst [vmem:[%s3 + $0xd0] sm:$0xff] %v689
  %722 = vst [vmem:[%s3 + $0xd8] sm:$0xff] %v690
  %723 = vst [vmem:[%s3 + $0xe0] sm:$0xff] %v691
  %724 = vst [vmem:[%s3 + $0xe8] sm:$0xff] %v692
  %725 = vst [vmem:[%s3 + $0xf0] sm:$0xff] %v693
  %726 = vst [vmem:[%s3 + $0xf8] sm:$0xff] %v694
  // Predicated region
  $region14: #{forward.5} parent=0 // pred_check
    _
  $region15: #{forward.5} parent=0 // pred_check_branch
    %728 = sbr.rel (0) target = $region17
  $region16: #{forward.5} parent=0 // pred_region
    _
  $region17: #{forward.5} parent=0 // pred_fallthru
    _
  // Predicated region
  $region18: #{forward.5} parent=0 // pred_check
    _
  $region19: #{forward.5} parent=0 // pred_check_branch
    %730 = sbr.rel (0) target = $region21
  $region20: #{forward.5} parent=0 // pred_region
    _
  $region21: #{forward.5} parent=0 // pred_fallthru
    _

// kernel: forward.6
$region0: #{forward.6}
  #allocation0 [shape = 'u32[]', space=smem, size = 0x4, offset = 0x4, fixed_abs, tag = 'smem constant byte address 0x4 - core index']
  #allocation1 [shape = 'u32[144,128]{1,0:T(1,128)}', space=vmem, size = 0x12000, scoped, tag = 'internal scratch']
  %s0 = inlined_call_operand.vmem [shape: f32[256,640], index: 0, kind: input, shape index: {}]
  %s1 = inlined_call_operand.vmem [shape: f32[640,128], index: 1, kind: input, shape index: {}]
  %s2 = inlined_call_operand.vmem [shape: f32[1,128], index: 2, kind: input, shape index: {}]
  %s3 = inlined_call_operand.vmem [shape: f32[256,128], index: 3, kind: output, shape index: {}]
  %s4 = sld [smem:[#allocation0]]
  $region22: #{forward.6} parent=0
    _
  %s6 = ssub.s32 1, %s4
  %s7 = scalar_select 0, %s6, %s4
  // Predicated region
  $region2: #{forward.6} parent=0 // pred_check
    _
  $region3: #{forward.6} parent=0 // pred_check_branch
    %9 = sbr.rel (0) target = $region5
  $region4: #{forward.6} parent=0 // pred_region
    _
  $region5: #{forward.6} parent=0 // pred_fallthru
    _
  // Predicated region
  $region6: #{forward.6} parent=0 // pred_check
    _
  $region7: #{forward.6} parent=0 // pred_check_branch
    %11 = sbr.rel (0) target = $region9
  $region8: #{forward.6} parent=0 // pred_region
    _
  $region9: #{forward.6} parent=0 // pred_fallthru
    _
  // Predicated region
  $region10: #{forward.6} parent=0 // pred_check
    _
  $region11: #{forward.6} parent=0 // pred_check_branch
    %13 = sbr.rel (0) target = $region13
  $region12: #{forward.6} parent=0 // pred_region
    _
  $region13: #{forward.6} parent=0 // pred_fallthru
    _
  %v14 = vld [vmem:[%s0] sm:$0xff]
  %v15 = vld [vmem:[%s0 + $0x8] sm:$0xff]
  %v16 = vld [vmem:[%s0 + $0x10] sm:$0xff]
  %v17 = vld [vmem:[%s0 + $0x18] sm:$0xff]
  %v18 = vld [vmem:[%s0 + $0x20] sm:$0xff]
  %v19 = vld [vmem:[%s0 + $0x28] sm:$0xff]
  %v20 = vld [vmem:[%s0 + $0x30] sm:$0xff]
  %v21 = vld [vmem:[%s0 + $0x38] sm:$0xff]
  %v22 = vld [vmem:[%s0 + $0x40] sm:$0xff]
  %v23 = vld [vmem:[%s0 + $0x48] sm:$0xff]
  %v24 = vld [vmem:[%s0 + $0x50] sm:$0xff]
  %v25 = vld [vmem:[%s0 + $0x58] sm:$0xff]
  %v26 = vld [vmem:[%s0 + $0x60] sm:$0xff]
  %v27 = vld [vmem:[%s0 + $0x68] sm:$0xff]
  %v28 = vld [vmem:[%s0 + $0x70] sm:$0xff]
  %v29 = vld [vmem:[%s0 + $0x78] sm:$0xff]
  %v30 = vld [vmem:[%s0 + $0x80] sm:$0xff]
  %v31 = vld [vmem:[%s0 + $0x88] sm:$0xff]
  %v32 = vld [vmem:[%s0 + $0x90] sm:$0xff]
  %v33 = vld [vmem:[%s0 + $0x98] sm:$0xff]
  %v34 = vld [vmem:[%s0 + $0xa0] sm:$0xff]
  %v35 = vld [vmem:[%s0 + $0xa8] sm:$0xff]
  %v36 = vld [vmem:[%s0 + $0xb0] sm:$0xff]
  %v37 = vld [vmem:[%s0 + $0xb8] sm:$0xff]
  %v38 = vld [vmem:[%s0 + $0xc0] sm:$0xff]
  %v39 = vld [vmem:[%s0 + $0xc8] sm:$0xff]
  %v40 = vld [vmem:[%s0 + $0xd0] sm:$0xff]
  %v41 = vld [vmem:[%s0 + $0xd8] sm:$0xff]
  %v42 = vld [vmem:[%s0 + $0xe0] sm:$0xff]
  %v43 = vld [vmem:[%s0 + $0xe8] sm:$0xff]
  %v44 = vld [vmem:[%s0 + $0xf0] sm:$0xff]
  %v45 = vld [vmem:[%s0 + $0xf8] sm:$0xff]
  %v46 = vld [vmem:[%s0 + $0x100] sm:$0xff]
  %v47 = vld [vmem:[%s0 + $0x108] sm:$0xff]
  %v48 = vld [vmem:[%s0 + $0x110] sm:$0xff]
  %v49 = vld [vmem:[%s0 + $0x118] sm:$0xff]
  %v50 = vld [vmem:[%s0 + $0x120] sm:$0xff]
  %v51 = vld [vmem:[%s0 + $0x128] sm:$0xff]
  %v52 = vld [vmem:[%s0 + $0x130] sm:$0xff]
  %v53 = vld [vmem:[%s0 + $0x138] sm:$0xff]
  %v54 = vld [vmem:[%s0 + $0x140] sm:$0xff]
  %v55 = vld [vmem:[%s0 + $0x148] sm:$0xff]
  %v56 = vld [vmem:[%s0 + $0x150] sm:$0xff]
  %v57 = vld [vmem:[%s0 + $0x158] sm:$0xff]
  %v58 = vld [vmem:[%s0 + $0x160] sm:$0xff]
  %v59 = vld [vmem:[%s0 + $0x168] sm:$0xff]
  %v60 = vld [vmem:[%s0 + $0x170] sm:$0xff]
  %v61 = vld [vmem:[%s0 + $0x178] sm:$0xff]
  %v62 = vld [vmem:[%s0 + $0x180] sm:$0xff]
  %v63 = vld [vmem:[%s0 + $0x188] sm:$0xff]
  %v64 = vld [vmem:[%s0 + $0x190] sm:$0xff]
  %v65 = vld [vmem:[%s0 + $0x198] sm:$0xff]
  %v66 = vld [vmem:[%s0 + $0x1a0] sm:$0xff]
  %v67 = vld [vmem:[%s0 + $0x1a8] sm:$0xff]
  %v68 = vld [vmem:[%s0 + $0x1b0] sm:$0xff]
  %v69 = vld [vmem:[%s0 + $0x1b8] sm:$0xff]
  %v70 = vld [vmem:[%s0 + $0x1c0] sm:$0xff]
  %v71 = vld [vmem:[%s0 + $0x1c8] sm:$0xff]
  %v72 = vld [vmem:[%s0 + $0x1d0] sm:$0xff]
  %v73 = vld [vmem:[%s0 + $0x1d8] sm:$0xff]
  %v74 = vld [vmem:[%s0 + $0x1e0] sm:$0xff]
  %v75 = vld [vmem:[%s0 + $0x1e8] sm:$0xff]
  %v76 = vld [vmem:[%s0 + $0x1f0] sm:$0xff]
  %v77 = vld [vmem:[%s0 + $0x1f8] sm:$0xff]
  %v78 = vld [vmem:[%s0 + $0x200] sm:$0xff]
  %v79 = vld [vmem:[%s0 + $0x208] sm:$0xff]
  %v80 = vld [vmem:[%s0 + $0x210] sm:$0xff]
  %v81 = vld [vmem:[%s0 + $0x218] sm:$0xff]
  %v82 = vld [vmem:[%s0 + $0x220] sm:$0xff]
  %v83 = vld [vmem:[%s0 + $0x228] sm:$0xff]
  %v84 = vld [vmem:[%s0 + $0x230] sm:$0xff]
  %v85 = vld [vmem:[%s0 + $0x238] sm:$0xff]
  %v86 = vld [vmem:[%s0 + $0x240] sm:$0xff]
  %v87 = vld [vmem:[%s0 + $0x248] sm:$0xff]
  %v88 = vld [vmem:[%s0 + $0x250] sm:$0xff]
  %v89 = vld [vmem:[%s0 + $0x258] sm:$0xff]
  %v90 = vld [vmem:[%s0 + $0x260] sm:$0xff]
  %v91 = vld [vmem:[%s0 + $0x268] sm:$0xff]
  %v92 = vld [vmem:[%s0 + $0x270] sm:$0xff]
  %v93 = vld [vmem:[%s0 + $0x278] sm:$0xff]
  %v94 = vld [vmem:[%s0 + $0x280] sm:$0xff]
  %v95 = vld [vmem:[%s0 + $0x288] sm:$0xff]
  %v96 = vld [vmem:[%s0 + $0x290] sm:$0xff]
  %v97 = vld [vmem:[%s0 + $0x298] sm:$0xff]
  %v98 = vld [vmem:[%s0 + $0x2a0] sm:$0xff]
  %v99 = vld [vmem:[%s0 + $0x2a8] sm:$0xff]
  %v100 = vld [vmem:[%s0 + $0x2b0] sm:$0xff]
  %v101 = vld [vmem:[%s0 + $0x2b8] sm:$0xff]
  %v102 = vld [vmem:[%s0 + $0x2c0] sm:$0xff]
  %v103 = vld [vmem:[%s0 + $0x2c8] sm:$0xff]
  %v104 = vld [vmem:[%s0 + $0x2d0] sm:$0xff]
  %v105 = vld [vmem:[%s0 + $0x2d8] sm:$0xff]
  %v106 = vld [vmem:[%s0 + $0x2e0] sm:$0xff]
  %v107 = vld [vmem:[%s0 + $0x2e8] sm:$0xff]
  %v108 = vld [vmem:[%s0 + $0x2f0] sm:$0xff]
  %v109 = vld [vmem:[%s0 + $0x2f8] sm:$0xff]
  %v110 = vld [vmem:[%s0 + $0x300] sm:$0xff]
  %v111 = vld [vmem:[%s0 + $0x308] sm:$0xff]
  %v112 = vld [vmem:[%s0 + $0x310] sm:$0xff]
  %v113 = vld [vmem:[%s0 + $0x318] sm:$0xff]
  %v114 = vld [vmem:[%s0 + $0x320] sm:$0xff]
  %v115 = vld [vmem:[%s0 + $0x328] sm:$0xff]
  %v116 = vld [vmem:[%s0 + $0x330] sm:$0xff]
  %v117 = vld [vmem:[%s0 + $0x338] sm:$0xff]
  %v118 = vld [vmem:[%s0 + $0x340] sm:$0xff]
  %v119 = vld [vmem:[%s0 + $0x348] sm:$0xff]
  %v120 = vld [vmem:[%s0 + $0x350] sm:$0xff]
  %v121 = vld [vmem:[%s0 + $0x358] sm:$0xff]
  %v122 = vld [vmem:[%s0 + $0x360] sm:$0xff]
  %v123 = vld [vmem:[%s0 + $0x368] sm:$0xff]
  %v124 = vld [vmem:[%s0 + $0x370] sm:$0xff]
  %v125 = vld [vmem:[%s0 + $0x378] sm:$0xff]
  %v126 = vld [vmem:[%s0 + $0x380] sm:$0xff]
  %v127 = vld [vmem:[%s0 + $0x388] sm:$0xff]
  %v128 = vld [vmem:[%s0 + $0x390] sm:$0xff]
  %v129 = vld [vmem:[%s0 + $0x398] sm:$0xff]
  %v130 = vld [vmem:[%s0 + $0x3a0] sm:$0xff]
  %v131 = vld [vmem:[%s0 + $0x3a8] sm:$0xff]
  %v132 = vld [vmem:[%s0 + $0x3b0] sm:$0xff]
  %v133 = vld [vmem:[%s0 + $0x3b8] sm:$0xff]
  %v134 = vld [vmem:[%s0 + $0x3c0] sm:$0xff]
  %v135 = vld [vmem:[%s0 + $0x3c8] sm:$0xff]
  %v136 = vld [vmem:[%s0 + $0x3d0] sm:$0xff]
  %v137 = vld [vmem:[%s0 + $0x3d8] sm:$0xff]
  %v138 = vld [vmem:[%s0 + $0x3e0] sm:$0xff]
  %v139 = vld [vmem:[%s0 + $0x3e8] sm:$0xff]
  %v140 = vld [vmem:[%s0 + $0x3f0] sm:$0xff]
  %v141 = vld [vmem:[%s0 + $0x3f8] sm:$0xff]
  %v142 = vld [vmem:[%s0 + $0x400] sm:$0xff]
  %v143 = vld [vmem:[%s0 + $0x408] sm:$0xff]
  %v144 = vld [vmem:[%s0 + $0x410] sm:$0xff]
  %v145 = vld [vmem:[%s0 + $0x418] sm:$0xff]
  %v146 = vld [vmem:[%s0 + $0x420] sm:$0xff]
  %v147 = vld [vmem:[%s0 + $0x428] sm:$0xff]
  %v148 = vld [vmem:[%s0 + $0x430] sm:$0xff]
  %v149 = vld [vmem:[%s0 + $0x438] sm:$0xff]
  %v150 = vld [vmem:[%s0 + $0x440] sm:$0xff]
  %v151 = vld [vmem:[%s0 + $0x448] sm:$0xff]
  %v152 = vld [vmem:[%s0 + $0x450] sm:$0xff]
  %v153 = vld [vmem:[%s0 + $0x458] sm:$0xff]
  %v154 = vld [vmem:[%s0 + $0x460] sm:$0xff]
  %v155 = vld [vmem:[%s0 + $0x468] sm:$0xff]
  %v156 = vld [vmem:[%s0 + $0x470] sm:$0xff]
  %v157 = vld [vmem:[%s0 + $0x478] sm:$0xff]
  %v158 = vld [vmem:[%s0 + $0x480] sm:$0xff]
  %v159 = vld [vmem:[%s0 + $0x488] sm:$0xff]
  %v160 = vld [vmem:[%s0 + $0x490] sm:$0xff]
  %v161 = vld [vmem:[%s0 + $0x498] sm:$0xff]
  %v162 = vld [vmem:[%s0 + $0x4a0] sm:$0xff]
  %v163 = vld [vmem:[%s0 + $0x4a8] sm:$0xff]
  %v164 = vld [vmem:[%s0 + $0x4b0] sm:$0xff]
  %v165 = vld [vmem:[%s0 + $0x4b8] sm:$0xff]
  %v166 = vld [vmem:[%s0 + $0x4c0] sm:$0xff]
  %v167 = vld [vmem:[%s0 + $0x4c8] sm:$0xff]
  %v168 = vld [vmem:[%s0 + $0x4d0] sm:$0xff]
  %v169 = vld [vmem:[%s0 + $0x4d8] sm:$0xff]
  %v170 = vld [vmem:[%s0 + $0x4e0] sm:$0xff]
  %v171 = vld [vmem:[%s0 + $0x4e8] sm:$0xff]
  %v172 = vld [vmem:[%s0 + $0x4f0] sm:$0xff]
  %v173 = vld [vmem:[%s0 + $0x4f8] sm:$0xff]
  %v174 = vld [vmem:[%s1] sm:$0xff]
  %v175 = vld [vmem:[%s1 + $0x8] sm:$0xff]
  %v176 = vld [vmem:[%s1 + $0x10] sm:$0xff]
  %v177 = vld [vmem:[%s1 + $0x18] sm:$0xff]
  %v178 = vld [vmem:[%s1 + $0x20] sm:$0xff]
  %v179 = vld [vmem:[%s1 + $0x28] sm:$0xff]
  %v180 = vld [vmem:[%s1 + $0x30] sm:$0xff]
  %v181 = vld [vmem:[%s1 + $0x38] sm:$0xff]
  %v182 = vld [vmem:[%s1 + $0x40] sm:$0xff]
  %v183 = vld [vmem:[%s1 + $0x48] sm:$0xff]
  %v184 = vld [vmem:[%s1 + $0x50] sm:$0xff]
  %v185 = vld [vmem:[%s1 + $0x58] sm:$0xff]
  %v186 = vld [vmem:[%s1 + $0x60] sm:$0xff]
  %v187 = vld [vmem:[%s1 + $0x68] sm:$0xff]
  %v188 = vld [vmem:[%s1 + $0x70] sm:$0xff]
  %v189 = vld [vmem:[%s1 + $0x78] sm:$0xff]
  %v190 = vld [vmem:[%s1 + $0x80] sm:$0xff]
  %v191 = vld [vmem:[%s1 + $0x88] sm:$0xff]
  %v192 = vld [vmem:[%s1 + $0x90] sm:$0xff]
  %v193 = vld [vmem:[%s1 + $0x98] sm:$0xff]
  %v194 = vld [vmem:[%s1 + $0xa0] sm:$0xff]
  %v195 = vld [vmem:[%s1 + $0xa8] sm:$0xff]
  %v196 = vld [vmem:[%s1 + $0xb0] sm:$0xff]
  %v197 = vld [vmem:[%s1 + $0xb8] sm:$0xff]
  %v198 = vld [vmem:[%s1 + $0xc0] sm:$0xff]
  %v199 = vld [vmem:[%s1 + $0xc8] sm:$0xff]
  %v200 = vld [vmem:[%s1 + $0xd0] sm:$0xff]
  %v201 = vld [vmem:[%s1 + $0xd8] sm:$0xff]
  %v202 = vld [vmem:[%s1 + $0xe0] sm:$0xff]
  %v203 = vld [vmem:[%s1 + $0xe8] sm:$0xff]
  %v204 = vld [vmem:[%s1 + $0xf0] sm:$0xff]
  %v205 = vld [vmem:[%s1 + $0xf8] sm:$0xff]
  %v206 = vld [vmem:[%s1 + $0x100] sm:$0xff]
  %v207 = vld [vmem:[%s1 + $0x108] sm:$0xff]
  %v208 = vld [vmem:[%s1 + $0x110] sm:$0xff]
  %v209 = vld [vmem:[%s1 + $0x118] sm:$0xff]
  %v210 = vld [vmem:[%s1 + $0x120] sm:$0xff]
  %v211 = vld [vmem:[%s1 + $0x128] sm:$0xff]
  %v212 = vld [vmem:[%s1 + $0x130] sm:$0xff]
  %v213 = vld [vmem:[%s1 + $0x138] sm:$0xff]
  %v214 = vld [vmem:[%s1 + $0x140] sm:$0xff]
  %v215 = vld [vmem:[%s1 + $0x148] sm:$0xff]
  %v216 = vld [vmem:[%s1 + $0x150] sm:$0xff]
  %v217 = vld [vmem:[%s1 + $0x158] sm:$0xff]
  %v218 = vld [vmem:[%s1 + $0x160] sm:$0xff]
  %v219 = vld [vmem:[%s1 + $0x168] sm:$0xff]
  %v220 = vld [vmem:[%s1 + $0x170] sm:$0xff]
  %v221 = vld [vmem:[%s1 + $0x178] sm:$0xff]
  %v222 = vld [vmem:[%s1 + $0x180] sm:$0xff]
  %v223 = vld [vmem:[%s1 + $0x188] sm:$0xff]
  %v224 = vld [vmem:[%s1 + $0x190] sm:$0xff]
  %v225 = vld [vmem:[%s1 + $0x198] sm:$0xff]
  %v226 = vld [vmem:[%s1 + $0x1a0] sm:$0xff]
  %v227 = vld [vmem:[%s1 + $0x1a8] sm:$0xff]
  %v228 = vld [vmem:[%s1 + $0x1b0] sm:$0xff]
  %v229 = vld [vmem:[%s1 + $0x1b8] sm:$0xff]
  %v230 = vld [vmem:[%s1 + $0x1c0] sm:$0xff]
  %v231 = vld [vmem:[%s1 + $0x1c8] sm:$0xff]
  %v232 = vld [vmem:[%s1 + $0x1d0] sm:$0xff]
  %v233 = vld [vmem:[%s1 + $0x1d8] sm:$0xff]
  %v234 = vld [vmem:[%s1 + $0x1e0] sm:$0xff]
  %v235 = vld [vmem:[%s1 + $0x1e8] sm:$0xff]
  %v236 = vld [vmem:[%s1 + $0x1f0] sm:$0xff]
  %v237 = vld [vmem:[%s1 + $0x1f8] sm:$0xff]
  %v238 = vld [vmem:[%s1 + $0x200] sm:$0xff]
  %v239 = vld [vmem:[%s1 + $0x208] sm:$0xff]
  %v240 = vld [vmem:[%s1 + $0x210] sm:$0xff]
  %v241 = vld [vmem:[%s1 + $0x218] sm:$0xff]
  %v242 = vld [vmem:[%s1 + $0x220] sm:$0xff]
  %v243 = vld [vmem:[%s1 + $0x228] sm:$0xff]
  %v244 = vld [vmem:[%s1 + $0x230] sm:$0xff]
  %v245 = vld [vmem:[%s1 + $0x238] sm:$0xff]
  %v246 = vld [vmem:[%s1 + $0x240] sm:$0xff]
  %v247 = vld [vmem:[%s1 + $0x248] sm:$0xff]
  %v248 = vld [vmem:[%s1 + $0x250] sm:$0xff]
  %v249 = vld [vmem:[%s1 + $0x258] sm:$0xff]
  %v250 = vld [vmem:[%s1 + $0x260] sm:$0xff]
  %v251 = vld [vmem:[%s1 + $0x268] sm:$0xff]
  %v252 = vld [vmem:[%s1 + $0x270] sm:$0xff]
  %v253 = vld [vmem:[%s1 + $0x278] sm:$0xff]
  %v254 = vld [vmem:[%s2] sm:$0x1]
  %v256 = vlaneseq
  %v257 = vshrl.u32 %v256, 7
  %v258 = vsub.s32 0, %v257
  %v259 = vrot.slane %v254, %v258
  %261 = vmatprep.subr.mxu0 0.0
  %262 = vmatpush1.msra.mxu0 %v174
  %263 = vmatprep.subr.mxu0 0.0
  %264 = vmatpush1.msra.mxu0 %v175
  %265 = vmatprep.subr.mxu0 0.0
  %266 = vmatpush1.msra.mxu0 %v176
  %267 = vmatprep.subr.mxu0 0.0
  %268 = vmatpush1.msra.mxu0 %v177
  %269 = vmatprep.subr.mxu0 0.0
  %270 = vmatpush1.msra.mxu0 %v178
  %271 = vmatprep.subr.mxu0 0.0
  %272 = vmatpush1.msra.mxu0 %v179
  %273 = vmatprep.subr.mxu0 0.0
  %274 = vmatpush1.msra.mxu0 %v180
  %275 = vmatprep.subr.mxu0 0.0
  %276 = vmatpush1.msra.mxu0 %v181
  %277 = vmatprep.subr.mxu0 0.0
  %278 = vmatpush1.msra.mxu0 %v182
  %279 = vmatprep.subr.mxu0 0.0
  %280 = vmatpush1.msra.mxu0 %v183
  %281 = vmatprep.subr.mxu0 0.0
  %282 = vmatpush1.msra.mxu0 %v184
  %283 = vmatprep.subr.mxu0 0.0
  %284 = vmatpush1.msra.mxu0 %v185
  %285 = vmatprep.subr.mxu0 0.0
  %286 = vmatpush1.msra.mxu0 %v186
  %287 = vmatprep.subr.mxu0 0.0
  %288 = vmatpush1.msra.mxu0 %v187
  %289 = vmatprep.subr.mxu0 0.0
  %290 = vmatpush1.msra.mxu0 %v188
  %291 = vmatprep.subr.mxu0 0.0
  %292 = vmatpush1.msra.mxu0 %v189
  %293 = vmatprep.subr.mxu0 0.0
  %294 = vmatpush1.msra.mxu0 %v190
  %295 = vmatprep.subr.mxu0 0.0
  %296 = vmatpush1.msra.mxu0 %v191
  %297 = vmatprep.subr.mxu0 0.0
  %298 = vmatpush1.msra.mxu0 %v192
  %299 = vmatprep.subr.mxu0 0.0
  %300 = vmatpush1.msra.mxu0 %v193
  %301 = vmatprep.subr.mxu0 0.0
  %302 = vmatpush1.msra.mxu0 %v194
  %303 = vmatprep.subr.mxu0 0.0
  %304 = vmatpush1.msra.mxu0 %v195
  %305 = vmatprep.subr.mxu0 0.0
  %306 = vmatpush1.msra.mxu0 %v196
  %307 = vmatprep.subr.mxu0 0.0
  %308 = vmatpush1.msra.mxu0 %v197
  %309 = vmatprep.subr.mxu0 0.0
  %310 = vmatpush1.msra.mxu0 %v198
  %311 = vmatprep.subr.mxu0 0.0
  %312 = vmatpush1.msra.mxu0 %v199
  %313 = vmatprep.subr.mxu0 0.0
  %314 = vmatpush1.msra.mxu0 %v200
  %315 = vmatprep.subr.mxu0 0.0
  %316 = vmatpush1.msra.mxu0 %v201
  %317 = vmatprep.subr.mxu0 0.0
  %318 = vmatpush1.msra.mxu0 %v202
  %319 = vmatprep.subr.mxu0 0.0
  %320 = vmatpush1.msra.mxu0 %v203
  %321 = vmatprep.subr.mxu0 0.0
  %322 = vmatpush1.msra.mxu0 %v204
  %323 = vmatprep.subr.mxu0 0.0
  %324 = vmatpush1.msra.mxu0 %v205
  %325 = vmatprep.mubr.f32.mxu0 %v15
  %326 = vmatmul.mubr.f32.gmra.mrb[0].mxu0 %v14
  %v327 = vpop.f32.mrb[0].mxu0
  %v328 = vadd.f32 %v259, %v327
  %v329 = vpop.f32.mrb[0].mxu0
  %330 = vmatprep.mubr.f32.mxu0 %v20
  %331 = vmatmul.mubr.f32.gmra.mrb[0].mxu0 %v19
  %v332 = vpop.f32.mrb[0].mxu0
  %v333 = vadd.f32 %v259, %v332
  %v334 = vpop.f32.mrb[0].mxu0
  %335 = vmatprep.mubr.f32.mxu0 %v25
  %336 = vmatmul.mubr.f32.gmra.mrb[0].mxu0 %v24
  %v337 = vpop.f32.mrb[0].mxu0
  %v338 = vadd.f32 %v259, %v337
  %v339 = vpop.f32.mrb[0].mxu0
  %340 = vmatprep.mubr.f32.mxu0 %v30
  %341 = vmatmul.mubr.f32.gmra.mrb[0].mxu0 %v29
  %v342 = vpop.f32.mrb[0].mxu0
  %v343 = vadd.f32 %v259, %v342
  %v344 = vpop.f32.mrb[0].mxu0
  %345 = vmatprep.mubr.f32.mxu0 %v35
  %346 = vmatmul.mubr.f32.gmra.mrb[0].mxu0 %v34
  %v347 = vpop.f32.mrb[0].mxu0
  %v348 = vadd.f32 %v259, %v347
  %v349 = vpop.f32.mrb[0].mxu0
  %350 = vmatprep.mubr.f32.mxu0 %v40
  %351 = vmatmul.mubr.f32.gmra.mrb[0].mxu0 %v39
  %v352 = vpop.f32.mrb[0].mxu0
  %v353 = vadd.f32 %v259, %v352
  %v354 = vpop.f32.mrb[0].mxu0
  %355 = vmatprep.mubr.f32.mxu0 %v45
  %356 = vmatmul.mubr.f32.gmra.mrb[0].mxu0 %v44
  %v357 = vpop.f32.mrb[0].mxu0
  %v358 = vadd.f32 %v259, %v357
  %v359 = vpop.f32.mrb[0].mxu0
  %360 = vmatprep.mubr.f32.mxu0 %v50
  %361 = vmatmul.mubr.f32.gmra.mrb[0].mxu0 %v49
  %v362 = vpop.f32.mrb[0].mxu0
  %v363 = vadd.f32 %v259, %v362
  %v364 = vpop.f32.mrb[0].mxu0
  %365 = vmatprep.mubr.f32.mxu0 %v55
  %366 = vmatmul.mubr.f32.gmra.mrb[0].mxu0 %v54
  %v367 = vpop.f32.mrb[0].mxu0
  %v368 = vadd.f32 %v259, %v367
  %v369 = vpop.f32.mrb[0].mxu0
  %370 = vmatprep.mubr.f32.mxu0 %v60
  %371 = vmatmul.mubr.f32.gmra.mrb[0].mxu0 %v59
  %v372 = vpop.f32.mrb[0].mxu0
  %v373 = vadd.f32 %v259, %v372
  %v374 = vpop.f32.mrb[0].mxu0
  %375 = vmatprep.mubr.f32.mxu0 %v65
  %376 = vmatmul.mubr.f32.gmra.mrb[0].mxu0 %v64
  %v377 = vpop.f32.mrb[0].mxu0
  %v378 = vadd.f32 %v259, %v377
  %v379 = vpop.f32.mrb[0].mxu0
  %380 = vmatprep.mubr.f32.mxu0 %v70
  %381 = vmatmul.mubr.f32.gmra.mrb[0].mxu0 %v69
  %v382 = vpop.f32.mrb[0].mxu0
  %v383 = vadd.f32 %v259, %v382
  %v384 = vpop.f32.mrb[0].mxu0
  %385 = vmatprep.mubr.f32.mxu0 %v75
  %386 = vmatmul.mubr.f32.gmra.mrb[0].mxu0 %v74
  %v387 = vpop.f32.mrb[0].mxu0
  %v388 = vadd.f32 %v259, %v387
  %v389 = vpop.f32.mrb[0].mxu0
  %390 = vmatprep.mubr.f32.mxu0 %v80
  %391 = vmatmul.mubr.f32.gmra.mrb[0].mxu0 %v79
  %v392 = vpop.f32.mrb[0].mxu0
  %v393 = vadd.f32 %v259, %v392
  %v394 = vpop.f32.mrb[0].mxu0
  %395 = vmatprep.mubr.f32.mxu0 %v85
  %396 = vmatmul.mubr.f32.gmra.mrb[0].mxu0 %v84
  %v397 = vpop.f32.mrb[0].mxu0
  %v398 = vadd.f32 %v259, %v397
  %v399 = vpop.f32.mrb[0].mxu0
  %400 = vmatprep.mubr.f32.mxu0 %v90
  %401 = vmatmul.mubr.f32.gmra.mrb[0].mxu0 %v89
  %v402 = vpop.f32.mrb[0].mxu0
  %v403 = vadd.f32 %v259, %v402
  %v404 = vpop.f32.mrb[0].mxu0
  %405 = vmatprep.mubr.f32.mxu0 %v95
  %406 = vmatmul.mubr.f32.gmra.mrb[0].mxu0 %v94
  %v407 = vpop.f32.mrb[0].mxu0
  %v408 = vadd.f32 %v259, %v407
  %v409 = vpop.f32.mrb[0].mxu0
  %410 = vmatprep.mubr.f32.mxu0 %v100
  %411 = vmatmul.mubr.f32.gmra.mrb[0].mxu0 %v99
  %v412 = vpop.f32.mrb[0].mxu0
  %v413 = vadd.f32 %v259, %v412
  %v414 = vpop.f32.mrb[0].mxu0
  %415 = vmatprep.mubr.f32.mxu0 %v105
  %416 = vmatmul.mubr.f32.gmra.mrb[0].mxu0 %v104
  %v417 = vpop.f32.mrb[0].mxu0
  %v418 = vadd.f32 %v259, %v417
  %v419 = vpop.f32.mrb[0].mxu0
  %420 = vmatprep.mubr.f32.mxu0 %v110
  %421 = vmatmul.mubr.f32.gmra.mrb[0].mxu0 %v109
  %v422 = vpop.f32.mrb[0].mxu0
  %v423 = vadd.f32 %v259, %v422
  %v424 = vpop.f32.mrb[0].mxu0
  %425 = vmatprep.mubr.f32.mxu0 %v115
  %426 = vmatmul.mubr.f32.gmra.mrb[0].mxu0 %v114
  %v427 = vpop.f32.mrb[0].mxu0
  %v428 = vadd.f32 %v259, %v427
  %v429 = vpop.f32.mrb[0].mxu0
  %430 = vmatprep.mubr.f32.mxu0 %v120
  %431 = vmatmul.mubr.f32.gmra.mrb[0].mxu0 %v119
  %v432 = vpop.f32.mrb[0].mxu0
  %v433 = vadd.f32 %v259, %v432
  %v434 = vpop.f32.mrb[0].mxu0
  %435 = vmatprep.mubr.f32.mxu0 %v125
  %436 = vmatmul.mubr.f32.gmra.mrb[0].mxu0 %v124
  %v437 = vpop.f32.mrb[0].mxu0
  %v438 = vadd.f32 %v259, %v437
  %v439 = vpop.f32.mrb[0].mxu0
  %440 = vmatprep.mubr.f32.mxu0 %v130
  %441 = vmatmul.mubr.f32.gmra.mrb[0].mxu0 %v129
  %v442 = vpop.f32.mrb[0].mxu0
  %v443 = vadd.f32 %v259, %v442
  %v444 = vpop.f32.mrb[0].mxu0
  %445 = vmatprep.mubr.f32.mxu0 %v135
  %446 = vmatmul.mubr.f32.gmra.mrb[0].mxu0 %v134
  %v447 = vpop.f32.mrb[0].mxu0
  %v448 = vadd.f32 %v259, %v447
  %v449 = vpop.f32.mrb[0].mxu0
  %450 = vmatprep.mubr.f32.mxu0 %v140
  %451 = vmatmul.mubr.f32.gmra.mrb[0].mxu0 %v139
  %v452 = vpop.f32.mrb[0].mxu0
  %v453 = vadd.f32 %v259, %v452
  %v454 = vpop.f32.mrb[0].mxu0
  %455 = vmatprep.mubr.f32.mxu0 %v145
  %456 = vmatmul.mubr.f32.gmra.mrb[0].mxu0 %v144
  %v457 = vpop.f32.mrb[0].mxu0
  %v458 = vadd.f32 %v259, %v457
  %v459 = vpop.f32.mrb[0].mxu0
  %460 = vmatprep.mubr.f32.mxu0 %v150
  %461 = vmatmul.mubr.f32.gmra.mrb[0].mxu0 %v149
  %v462 = vpop.f32.mrb[0].mxu0
  %v463 = vadd.f32 %v259, %v462
  %v464 = vpop.f32.mrb[0].mxu0
  %465 = vmatprep.mubr.f32.mxu0 %v155
  %466 = vmatmul.mubr.f32.gmra.mrb[0].mxu0 %v154
  %v467 = vpop.f32.mrb[0].mxu0
  %v468 = vadd.f32 %v259, %v467
  %v469 = vpop.f32.mrb[0].mxu0
  %470 = vmatprep.mubr.f32.mxu0 %v160
  %471 = vmatmul.mubr.f32.gmra.mrb[0].mxu0 %v159
  %v472 = vpop.f32.mrb[0].mxu0
  %v473 = vadd.f32 %v259, %v472
  %v474 = vpop.f32.mrb[0].mxu0
  %475 = vmatprep.mubr.f32.mxu0 %v165
  %476 = vmatmul.mubr.f32.gmra.mrb[0].mxu0 %v164
  %v477 = vpop.f32.mrb[0].mxu0
  %v478 = vadd.f32 %v259, %v477
  %v479 = vpop.f32.mrb[0].mxu0
  %480 = vmatprep.mubr.f32.mxu0 %v170
  %481 = vmatmul.mubr.f32.gmra.mrb[0].mxu0 %v169
  %v482 = vpop.f32.mrb[0].mxu0
  %v483 = vadd.f32 %v259, %v482
  %v484 = vpop.f32.mrb[0].mxu0
  %485 = vdwg.mxu0
  %486 = vmatprep.subr.mxu0 0.0
  %487 = vmatpush1.msra.mxu0 %v206
  %488 = vmatprep.subr.mxu0 0.0
  %489 = vmatpush1.msra.mxu0 %v207
  %490 = vmatprep.subr.mxu0 0.0
  %491 = vmatpush1.msra.mxu0 %v208
  %492 = vmatprep.subr.mxu0 0.0
  %493 = vmatpush1.msra.mxu0 %v209
  %494 = vmatprep.subr.mxu0 0.0
  %495 = vmatpush1.msra.mxu0 %v210
  %496 = vmatprep.subr.mxu0 0.0
  %497 = vmatpush1.msra.mxu0 %v211
  %498 = vmatprep.subr.mxu0 0.0
  %499 = vmatpush1.msra.mxu0 %v212
  %500 = vmatprep.subr.mxu0 0.0
  %501 = vmatpush1.msra.mxu0 %v213
  %502 = vmatprep.subr.mxu0 0.0
  %503 = vmatpush1.msra.mxu0 %v214
  %504 = vmatprep.subr.mxu0 0.0
  %505 = vmatpush1.msra.mxu0 %v215
  %506 = vmatprep.subr.mxu0 0.0
  %507 = vmatpush1.msra.mxu0 %v216
  %508 = vmatprep.subr.mxu0 0.0
  %509 = vmatpush1.msra.mxu0 %v217
  %510 = vmatprep.subr.mxu0 0.0
  %511 = vmatpush1.msra.mxu0 %v218
  %512 = vmatprep.subr.mxu0 0.0
  %513 = vmatpush1.msra.mxu0 %v219
  %514 = vmatprep.subr.mxu0 0.0
  %515 = vmatpush1.msra.mxu0 %v220
  %516 = vmatprep.subr.mxu0 0.0
  %517 = vmatpush1.msra.mxu0 %v221
  %518 = vmatprep.subr.mxu0 0.0
  %519 = vmatpush1.msra.mxu0 %v222
  %520 = vmatprep.subr.mxu0 0.0
  %521 = vmatpush1.msra.mxu0 %v223
  %522 = vmatprep.subr.mxu0 0.0
  %523 = vmatpush1.msra.mxu0 %v224
  %524 = vmatprep.subr.mxu0 0.0
  %525 = vmatpush1.msra.mxu0 %v225
  %526 = vmatprep.subr.mxu0 0.0
  %527 = vmatpush1.msra.mxu0 %v226
  %528 = vmatprep.subr.mxu0 0.0
  %529 = vmatpush1.msra.mxu0 %v227
  %530 = vmatprep.subr.mxu0 0.0
  %531 = vmatpush1.msra.mxu0 %v228
  %532 = vmatprep.subr.mxu0 0.0
  %533 = vmatpush1.msra.mxu0 %v229
  %534 = vmatprep.subr.mxu0 0.0
  %535 = vmatpush1.msra.mxu0 %v230
  %536 = vmatprep.subr.mxu0 0.0
  %537 = vmatpush1.msra.mxu0 %v231
  %538 = vmatprep.subr.mxu0 0.0
  %539 = vmatpush1.msra.mxu0 %v232
  %540 = vmatprep.subr.mxu0 0.0
  %541 = vmatpush1.msra.mxu0 %v233
  %542 = vmatprep.subr.mxu0 0.0
  %543 = vmatpush1.msra.mxu0 %v234
  %544 = vmatprep.subr.mxu0 0.0
  %545 = vmatpush1.msra.mxu0 %v235
  %546 = vmatprep.subr.mxu0 0.0
  %547 = vmatpush1.msra.mxu0 %v236
  %548 = vmatprep.subr.mxu0 0.0
  %549 = vmatpush1.msra.mxu0 %v237
  %550 = vmatprep.mubr.f32.mxu0 %v17
  %551 = vmatmul.mubr.f32.gmra.mrb[0].mxu0 %v16
  %v552 = vpop.f32.mrb[0].mxu0
  %v553 = vadd.f32 %v328, %v552
  %v554 = vpop.f32.mrb[0].mxu0
  %555 = vmatprep.mubr.f32.mxu0 %v22
  %556 = vmatmul.mubr.f32.gmra.mrb[0].mxu0 %v21
  %v557 = vpop.f32.mrb[0].mxu0
  %v558 = vadd.f32 %v333, %v557
  %v559 = vpop.f32.mrb[0].mxu0
  %560 = vmatprep.mubr.f32.mxu0 %v27
  %561 = vmatmul.mubr.f32.gmra.mrb[0].mxu0 %v26
  %v562 = vpop.f32.mrb[0].mxu0
  %v563 = vadd.f32 %v338, %v562
  %v564 = vpop.f32.mrb[0].mxu0
  %565 = vmatprep.mubr.f32.mxu0 %v32
  %566 = vmatmul.mubr.f32.gmra.mrb[0].mxu0 %v31
  %v567 = vpop.f32.mrb[0].mxu0
  %v568 = vadd.f32 %v343, %v567
  %v569 = vpop.f32.mrb[0].mxu0
  %570 = vmatprep.mubr.f32.mxu0 %v37
  %571 = vmatmul.mubr.f32.gmra.mrb[0].mxu0 %v36
  %v572 = vpop.f32.mrb[0].mxu0
  %v573 = vadd.f32 %v348, %v572
  %v574 = vpop.f32.mrb[0].mxu0
  %575 = vmatprep.mubr.f32.mxu0 %v42
  %576 = vmatmul.mubr.f32.gmra.mrb[0].mxu0 %v41
  %v577 = vpop.f32.mrb[0].mxu0
  %v578 = vadd.f32 %v353, %v577
  %v579 = vpop.f32.mrb[0].mxu0
  %580 = vmatprep.mubr.f32.mxu0 %v47
  %581 = vmatmul.mubr.f32.gmra.mrb[0].mxu0 %v46
  %v582 = vpop.f32.mrb[0].mxu0
  %v583 = vadd.f32 %v358, %v582
  %v584 = vpop.f32.mrb[0].mxu0
  %585 = vmatprep.mubr.f32.mxu0 %v52
  %586 = vmatmul.mubr.f32.gmra.mrb[0].mxu0 %v51
  %v587 = vpop.f32.mrb[0].mxu0
  %v588 = vadd.f32 %v363, %v587
  %v589 = vpop.f32.mrb[0].mxu0
  %590 = vmatprep.mubr.f32.mxu0 %v57
  %591 = vmatmul.mubr.f32.gmra.mrb[0].mxu0 %v56
  %v592 = vpop.f32.mrb[0].mxu0
  %v593 = vadd.f32 %v368, %v592
  %v594 = vpop.f32.mrb[0].mxu0
  %595 = vmatprep.mubr.f32.mxu0 %v62
  %596 = vmatmul.mubr.f32.gmra.mrb[0].mxu0 %v61
  %v597 = vpop.f32.mrb[0].mxu0
  %v598 = vadd.f32 %v373, %v597
  %v599 = vpop.f32.mrb[0].mxu0
  %600 = vmatprep.mubr.f32.mxu0 %v67
  %601 = vmatmul.mubr.f32.gmra.mrb[0].mxu0 %v66
  %v602 = vpop.f32.mrb[0].mxu0
  %v603 = vadd.f32 %v378, %v602
  %v604 = vpop.f32.mrb[0].mxu0
  %605 = vmatprep.mubr.f32.mxu0 %v72
  %606 = vmatmul.mubr.f32.gmra.mrb[0].mxu0 %v71
  %v607 = vpop.f32.mrb[0].mxu0
  %v608 = vadd.f32 %v383, %v607
  %v609 = vpop.f32.mrb[0].mxu0
  %610 = vmatprep.mubr.f32.mxu0 %v77
  %611 = vmatmul.mubr.f32.gmra.mrb[0].mxu0 %v76
  %v612 = vpop.f32.mrb[0].mxu0
  %v613 = vadd.f32 %v388, %v612
  %v614 = vpop.f32.mrb[0].mxu0
  %615 = vmatprep.mubr.f32.mxu0 %v82
  %616 = vmatmul.mubr.f32.gmra.mrb[0].mxu0 %v81
  %v617 = vpop.f32.mrb[0].mxu0
  %v618 = vadd.f32 %v393, %v617
  %v619 = vpop.f32.mrb[0].mxu0
  %620 = vmatprep.mubr.f32.mxu0 %v87
  %621 = vmatmul.mubr.f32.gmra.mrb[0].mxu0 %v86
  %v622 = vpop.f32.mrb[0].mxu0
  %v623 = vadd.f32 %v398, %v622
  %v624 = vpop.f32.mrb[0].mxu0
  %625 = vmatprep.mubr.f32.mxu0 %v92
  %626 = vmatmul.mubr.f32.gmra.mrb[0].mxu0 %v91
  %v627 = vpop.f32.mrb[0].mxu0
  %v628 = vadd.f32 %v403, %v627
  %v629 = vpop.f32.mrb[0].mxu0
  %630 = vmatprep.mubr.f32.mxu0 %v97
  %631 = vmatmul.mubr.f32.gmra.mrb[0].mxu0 %v96
  %v632 = vpop.f32.mrb[0].mxu0
  %v633 = vadd.f32 %v408, %v632
  %v634 = vpop.f32.mrb[0].mxu0
  %635 = vmatprep.mubr.f32.mxu0 %v102
  %636 = vmatmul.mubr.f32.gmra.mrb[0].mxu0 %v101
  %v637 = vpop.f32.mrb[0].mxu0
  %v638 = vadd.f32 %v413, %v637
  %v639 = vpop.f32.mrb[0].mxu0
  %640 = vmatprep.mubr.f32.mxu0 %v107
  %641 = vmatmul.mubr.f32.gmra.mrb[0].mxu0 %v106
  %v642 = vpop.f32.mrb[0].mxu0
  %v643 = vadd.f32 %v418, %v642
  %v644 = vpop.f32.mrb[0].mxu0
  %645 = vmatprep.mubr.f32.mxu0 %v112
  %646 = vmatmul.mubr.f32.gmra.mrb[0].mxu0 %v111
  %v647 = vpop.f32.mrb[0].mxu0
  %v648 = vadd.f32 %v423, %v647
  %v649 = vpop.f32.mrb[0].mxu0
  %650 = vmatprep.mubr.f32.mxu0 %v117
  %651 = vmatmul.mubr.f32.gmra.mrb[0].mxu0 %v116
  %v652 = vpop.f32.mrb[0].mxu0
  %v653 = vadd.f32 %v428, %v652
  %v654 = vpop.f32.mrb[0].mxu0
  %655 = vmatprep.mubr.f32.mxu0 %v122
  %656 = vmatmul.mubr.f32.gmra.mrb[0].mxu0 %v121
  %v657 = vpop.f32.mrb[0].mxu0
  %v658 = vadd.f32 %v433, %v657
  %v659 = vpop.f32.mrb[0].mxu0
  %660 = vmatprep.mubr.f32.mxu0 %v127
  %661 = vmatmul.mubr.f32.gmra.mrb[0].mxu0 %v126
  %v662 = vpop.f32.mrb[0].mxu0
  %v663 = vadd.f32 %v438, %v662
  %v664 = vpop.f32.mrb[0].mxu0
  %665 = vmatprep.mubr.f32.mxu0 %v132
  %666 = vmatmul.mubr.f32.gmra.mrb[0].mxu0 %v131
  %v667 = vpop.f32.mrb[0].mxu0
  %v668 = vadd.f32 %v443, %v667
  %v669 = vpop.f32.mrb[0].mxu0
  %670 = vmatprep.mubr.f32.mxu0 %v137
  %671 = vmatmul.mubr.f32.gmra.mrb[0].mxu0 %v136
  %v672 = vpop.f32.mrb[0].mxu0
  %v673 = vadd.f32 %v448, %v672
  %v674 = vpop.f32.mrb[0].mxu0
  %675 = vmatprep.mubr.f32.mxu0 %v142
  %676 = vmatmul.mubr.f32.gmra.mrb[0].mxu0 %v141
  %v677 = vpop.f32.mrb[0].mxu0
  %v678 = vadd.f32 %v453, %v677
  %v679 = vpop.f32.mrb[0].mxu0
  %680 = vmatprep.mubr.f32.mxu0 %v147
  %681 = vmatmul.mubr.f32.gmra.mrb[0].mxu0 %v146
  %v682 = vpop.f32.mrb[0].mxu0
  %v683 = vadd.f32 %v458, %v682
  %v684 = vpop.f32.mrb[0].mxu0
  %685 = vmatprep.mubr.f32.mxu0 %v152
  %686 = vmatmul.mubr.f32.gmra.mrb[0].mxu0 %v151
  %v687 = vpop.f32.mrb[0].mxu0
  %v688 = vadd.f32 %v463, %v687
  %v689 = vpop.f32.mrb[0].mxu0
  %690 = vmatprep.mubr.f32.mxu0 %v157
  %691 = vmatmul.mubr.f32.gmra.mrb[0].mxu0 %v156
  %v692 = vpop.f32.mrb[0].mxu0
  %v693 = vadd.f32 %v468, %v692
  %v694 = vpop.f32.mrb[0].mxu0
  %695 = vmatprep.mubr.f32.mxu0 %v162
  %696 = vmatmul.mubr.f32.gmra.mrb[0].mxu0 %v161
  %v697 = vpop.f32.mrb[0].mxu0
  %v698 = vadd.f32 %v473, %v697
  %v699 = vpop.f32.mrb[0].mxu0
  %700 = vmatprep.mubr.f32.mxu0 %v167
  %701 = vmatmul.mubr.f32.gmra.mrb[0].mxu0 %v166
  %v702 = vpop.f32.mrb[0].mxu0
  %v703 = vadd.f32 %v478, %v702
  %v704 = vpop.f32.mrb[0].mxu0
  %705 = vmatprep.mubr.f32.mxu0 %v172
  %706 = vmatmul.mubr.f32.gmra.mrb[0].mxu0 %v171
  %v707 = vpop.f32.mrb[0].mxu0
  %v708 = vadd.f32 %v483, %v707
  %v709 = vpop.f32.mrb[0].mxu0
  %710 = vdwg.mxu0
  %711 = vmatprep.subr.mxu0 0.0
  %712 = vmatpush1.msra.mxu0 %v238
  %713 = vmatprep.subr.mxu0 0.0
  %714 = vmatpush1.msra.mxu0 %v239
  %715 = vmatprep.subr.mxu0 0.0
  %716 = vmatpush1.msra.mxu0 %v240
  %717 = vmatprep.subr.mxu0 0.0
  %718 = vmatpush1.msra.mxu0 %v241
  %719 = vmatprep.subr.mxu0 0.0
  %720 = vmatpush1.msra.mxu0 %v242
  %721 = vmatprep.subr.mxu0 0.0
  %722 = vmatpush1.msra.mxu0 %v243
  %723 = vmatprep.subr.mxu0 0.0
  %724 = vmatpush1.msra.mxu0 %v244
  %725 = vmatprep.subr.mxu0 0.0
  %726 = vmatpush1.msra.mxu0 %v245
  %727 = vmatprep.subr.mxu0 0.0
  %728 = vmatpush1.msra.mxu0 %v246
  %729 = vmatprep.subr.mxu0 0.0
  %730 = vmatpush1.msra.mxu0 %v247
  %731 = vmatprep.subr.mxu0 0.0
  %732 = vmatpush1.msra.mxu0 %v248
  %733 = vmatprep.subr.mxu0 0.0
  %734 = vmatpush1.msra.mxu0 %v249
  %735 = vmatprep.subr.mxu0 0.0
  %736 = vmatpush1.msra.mxu0 %v250
  %737 = vmatprep.subr.mxu0 0.0
  %738 = vmatpush1.msra.mxu0 %v251
  %739 = vmatprep.subr.mxu0 0.0
  %740 = vmatpush1.msra.mxu0 %v252
  %741 = vmatprep.subr.mxu0 0.0
  %742 = vmatpush1.msra.mxu0 %v253
  %743 = vmatprep.subr.mxu0 0.0
  %744 = vmatpush1.msra.mxu0 0.0
  %745 = vmatprep.subr.mxu0 0.0
  %746 = vmatpush1.msra.mxu0 0.0
  %747 = vmatprep.subr.mxu0 0.0
  %748 = vmatpush1.msra.mxu0 0.0
  %749 = vmatprep.subr.mxu0 0.0
  %750 = vmatpush1.msra.mxu0 0.0
  %751 = vmatprep.subr.mxu0 0.0
  %752 = vmatpush1.msra.mxu0 0.0
  %753 = vmatprep.subr.mxu0 0.0
  %754 = vmatpush1.msra.mxu0 0.0
  %755 = vmatprep.subr.mxu0 0.0
  %756 = vmatpush1.msra.mxu0 0.0
  %757 = vmatprep.subr.mxu0 0.0
  %758 = vmatpush1.msra.mxu0 0.0
  %759 = vmatprep.subr.mxu0 0.0
  %760 = vmatpush1.msra.mxu0 0.0
  %761 = vmatprep.subr.mxu0 0.0
  %762 = vmatpush1.msra.mxu0 0.0
  %763 = vmatprep.subr.mxu0 0.0
  %764 = vmatpush1.msra.mxu0 0.0
  %765 = vmatprep.subr.mxu0 0.0
  %766 = vmatpush1.msra.mxu0 0.0
  %767 = vmatprep.subr.mxu0 0.0
  %768 = vmatpush1.msra.mxu0 0.0
  %769 = vmatprep.subr.mxu0 0.0
  %770 = vmatpush1.msra.mxu0 0.0
  %771 = vmatprep.subr.mxu0 0.0
  %772 = vmatpush1.msra.mxu0 0.0
  %773 = vmatprep.subr.mxu0 0.0
  %774 = vmatpush1.msra.mxu0 0.0
  %775 = vmatprep.mubr.f32.mxu0 0.0
  %776 = vmatmul.mubr.f32.gmra.mrb[0].mxu0 %v18
  %v777 = vpop.f32.mrb[0].mxu0
  %v778 = vadd.f32 %v553, %v777
  %v779 = vpop.f32.mrb[0].mxu0
  %780 = vmatprep.mubr.f32.mxu0 0.0
  %781 = vmatmul.mubr.f32.gmra.mrb[0].mxu0 %v23
  %v782 = vpop.f32.mrb[0].mxu0
  %v783 = vadd.f32 %v558, %v782
  %v784 = vpop.f32.mrb[0].mxu0
  %785 = vmatprep.mubr.f32.mxu0 0.0
  %786 = vmatmul.mubr.f32.gmra.mrb[0].mxu0 %v28
  %v787 = vpop.f32.mrb[0].mxu0
  %v788 = vadd.f32 %v563, %v787
  %v789 = vpop.f32.mrb[0].mxu0
  %790 = vmatprep.mubr.f32.mxu0 0.0
  %791 = vmatmul.mubr.f32.gmra.mrb[0].mxu0 %v33
  %v792 = vpop.f32.mrb[0].mxu0
  %v793 = vadd.f32 %v568, %v792
  %v794 = vpop.f32.mrb[0].mxu0
  %795 = vmatprep.mubr.f32.mxu0 0.0
  %796 = vmatmul.mubr.f32.gmra.mrb[0].mxu0 %v38
  %v797 = vpop.f32.mrb[0].mxu0
  %v798 = vadd.f32 %v573, %v797
  %v799 = vpop.f32.mrb[0].mxu0
  %800 = vmatprep.mubr.f32.mxu0 0.0
  %801 = vmatmul.mubr.f32.gmra.mrb[0].mxu0 %v43
  %v802 = vpop.f32.mrb[0].mxu0
  %v803 = vadd.f32 %v578, %v802
  %v804 = vpop.f32.mrb[0].mxu0
  %805 = vmatprep.mubr.f32.mxu0 0.0
  %806 = vmatmul.mubr.f32.gmra.mrb[0].mxu0 %v48
  %v807 = vpop.f32.mrb[0].mxu0
  %v808 = vadd.f32 %v583, %v807
  %v809 = vpop.f32.mrb[0].mxu0
  %810 = vmatprep.mubr.f32.mxu0 0.0
  %811 = vmatmul.mubr.f32.gmra.mrb[0].mxu0 %v53
  %v812 = vpop.f32.mrb[0].mxu0
  %v813 = vadd.f32 %v588, %v812
  %v814 = vpop.f32.mrb[0].mxu0
  %815 = vmatprep.mubr.f32.mxu0 0.0
  %816 = vmatmul.mubr.f32.gmra.mrb[0].mxu0 %v58
  %v817 = vpop.f32.mrb[0].mxu0
  %v818 = vadd.f32 %v593, %v817
  %v819 = vpop.f32.mrb[0].mxu0
  %820 = vmatprep.mubr.f32.mxu0 0.0
  %821 = vmatmul.mubr.f32.gmra.mrb[0].mxu0 %v63
  %v822 = vpop.f32.mrb[0].mxu0
  %v823 = vadd.f32 %v598, %v822
  %v824 = vpop.f32.mrb[0].mxu0
  %825 = vmatprep.mubr.f32.mxu0 0.0
  %826 = vmatmul.mubr.f32.gmra.mrb[0].mxu0 %v68
  %v827 = vpop.f32.mrb[0].mxu0
  %v828 = vadd.f32 %v603, %v827
  %v829 = vpop.f32.mrb[0].mxu0
  %830 = vmatprep.mubr.f32.mxu0 0.0
  %831 = vmatmul.mubr.f32.gmra.mrb[0].mxu0 %v73
  %v832 = vpop.f32.mrb[0].mxu0
  %v833 = vadd.f32 %v608, %v832
  %v834 = vpop.f32.mrb[0].mxu0
  %835 = vmatprep.mubr.f32.mxu0 0.0
  %836 = vmatmul.mubr.f32.gmra.mrb[0].mxu0 %v78
  %v837 = vpop.f32.mrb[0].mxu0
  %v838 = vadd.f32 %v613, %v837
  %v839 = vpop.f32.mrb[0].mxu0
  %840 = vmatprep.mubr.f32.mxu0 0.0
  %841 = vmatmul.mubr.f32.gmra.mrb[0].mxu0 %v83
  %v842 = vpop.f32.mrb[0].mxu0
  %v843 = vadd.f32 %v618, %v842
  %v844 = vpop.f32.mrb[0].mxu0
  %845 = vmatprep.mubr.f32.mxu0 0.0
  %846 = vmatmul.mubr.f32.gmra.mrb[0].mxu0 %v88
  %v847 = vpop.f32.mrb[0].mxu0
  %v848 = vadd.f32 %v623, %v847
  %v849 = vpop.f32.mrb[0].mxu0
  %850 = vmatprep.mubr.f32.mxu0 0.0
  %851 = vmatmul.mubr.f32.gmra.mrb[0].mxu0 %v93
  %v852 = vpop.f32.mrb[0].mxu0
  %v853 = vadd.f32 %v628, %v852
  %v854 = vpop.f32.mrb[0].mxu0
  %855 = vmatprep.mubr.f32.mxu0 0.0
  %856 = vmatmul.mubr.f32.gmra.mrb[0].mxu0 %v98
  %v857 = vpop.f32.mrb[0].mxu0
  %v858 = vadd.f32 %v633, %v857
  %v859 = vpop.f32.mrb[0].mxu0
  %860 = vmatprep.mubr.f32.mxu0 0.0
  %861 = vmatmul.mubr.f32.gmra.mrb[0].mxu0 %v103
  %v862 = vpop.f32.mrb[0].mxu0
  %v863 = vadd.f32 %v638, %v862
  %v864 = vpop.f32.mrb[0].mxu0
  %865 = vmatprep.mubr.f32.mxu0 0.0
  %866 = vmatmul.mubr.f32.gmra.mrb[0].mxu0 %v108
  %v867 = vpop.f32.mrb[0].mxu0
  %v868 = vadd.f32 %v643, %v867
  %v869 = vpop.f32.mrb[0].mxu0
  %870 = vmatprep.mubr.f32.mxu0 0.0
  %871 = vmatmul.mubr.f32.gmra.mrb[0].mxu0 %v113
  %v872 = vpop.f32.mrb[0].mxu0
  %v873 = vadd.f32 %v648, %v872
  %v874 = vpop.f32.mrb[0].mxu0
  %875 = vmatprep.mubr.f32.mxu0 0.0
  %876 = vmatmul.mubr.f32.gmra.mrb[0].mxu0 %v118
  %v877 = vpop.f32.mrb[0].mxu0
  %v878 = vadd.f32 %v653, %v877
  %v879 = vpop.f32.mrb[0].mxu0
  %880 = vmatprep.mubr.f32.mxu0 0.0
  %881 = vmatmul.mubr.f32.gmra.mrb[0].mxu0 %v123
  %v882 = vpop.f32.mrb[0].mxu0
  %v883 = vadd.f32 %v658, %v882
  %v884 = vpop.f32.mrb[0].mxu0
  %885 = vmatprep.mubr.f32.mxu0 0.0
  %886 = vmatmul.mubr.f32.gmra.mrb[0].mxu0 %v128
  %v887 = vpop.f32.mrb[0].mxu0
  %v888 = vadd.f32 %v663, %v887
  %v889 = vpop.f32.mrb[0].mxu0
  %890 = vmatprep.mubr.f32.mxu0 0.0
  %891 = vmatmul.mubr.f32.gmra.mrb[0].mxu0 %v133
  %v892 = vpop.f32.mrb[0].mxu0
  %v893 = vadd.f32 %v668, %v892
  %v894 = vpop.f32.mrb[0].mxu0
  %895 = vmatprep.mubr.f32.mxu0 0.0
  %896 = vmatmul.mubr.f32.gmra.mrb[0].mxu0 %v138
  %v897 = vpop.f32.mrb[0].mxu0
  %v898 = vadd.f32 %v673, %v897
  %v899 = vpop.f32.mrb[0].mxu0
  %900 = vmatprep.mubr.f32.mxu0 0.0
  %901 = vmatmul.mubr.f32.gmra.mrb[0].mxu0 %v143
  %v902 = vpop.f32.mrb[0].mxu0
  %v903 = vadd.f32 %v678, %v902
  %v904 = vpop.f32.mrb[0].mxu0
  %905 = vmatprep.mubr.f32.mxu0 0.0
  %906 = vmatmul.mubr.f32.gmra.mrb[0].mxu0 %v148
  %v907 = vpop.f32.mrb[0].mxu0
  %v908 = vadd.f32 %v683, %v907
  %v909 = vpop.f32.mrb[0].mxu0
  %910 = vmatprep.mubr.f32.mxu0 0.0
  %911 = vmatmul.mubr.f32.gmra.mrb[0].mxu0 %v153
  %v912 = vpop.f32.mrb[0].mxu0
  %v913 = vadd.f32 %v688, %v912
  %v914 = vpop.f32.mrb[0].mxu0
  %915 = vmatprep.mubr.f32.mxu0 0.0
  %916 = vmatmul.mubr.f32.gmra.mrb[0].mxu0 %v158
  %v917 = vpop.f32.mrb[0].mxu0
  %v918 = vadd.f32 %v693, %v917
  %v919 = vpop.f32.mrb[0].mxu0
  %920 = vmatprep.mubr.f32.mxu0 0.0
  %921 = vmatmul.mubr.f32.gmra.mrb[0].mxu0 %v163
  %v922 = vpop.f32.mrb[0].mxu0
  %v923 = vadd.f32 %v698, %v922
  %v924 = vpop.f32.mrb[0].mxu0
  %925 = vmatprep.mubr.f32.mxu0 0.0
  %926 = vmatmul.mubr.f32.gmra.mrb[0].mxu0 %v168
  %v927 = vpop.f32.mrb[0].mxu0
  %v928 = vadd.f32 %v703, %v927
  %v929 = vpop.f32.mrb[0].mxu0
  %930 = vmatprep.mubr.f32.mxu0 0.0
  %931 = vmatmul.mubr.f32.gmra.mrb[0].mxu0 %v173
  %v932 = vpop.f32.mrb[0].mxu0
  %v933 = vadd.f32 %v708, %v932
  %v934 = vpop.f32.mrb[0].mxu0
  %935 = vdwg.mxu0
  %v936 = vmax.f32 %v778, 0.0
  %v937 = vmax.f32 %v783, 0.0
  %v938 = vmax.f32 %v788, 0.0
  %v939 = vmax.f32 %v793, 0.0
  %v940 = vmax.f32 %v798, 0.0
  %v941 = vmax.f32 %v803, 0.0
  %v942 = vmax.f32 %v808, 0.0
  %v943 = vmax.f32 %v813, 0.0
  %v944 = vmax.f32 %v818, 0.0
  %v945 = vmax.f32 %v823, 0.0
  %v946 = vmax.f32 %v828, 0.0
  %v947 = vmax.f32 %v833, 0.0
  %v948 = vmax.f32 %v838, 0.0
  %v949 = vmax.f32 %v843, 0.0
  %v950 = vmax.f32 %v848, 0.0
  %v951 = vmax.f32 %v853, 0.0
  %v952 = vmax.f32 %v858, 0.0
  %v953 = vmax.f32 %v863, 0.0
  %v954 = vmax.f32 %v868, 0.0
  %v955 = vmax.f32 %v873, 0.0
  %v956 = vmax.f32 %v878, 0.0
  %v957 = vmax.f32 %v883, 0.0
  %v958 = vmax.f32 %v888, 0.0
  %v959 = vmax.f32 %v893, 0.0
  %v960 = vmax.f32 %v898, 0.0
  %v961 = vmax.f32 %v903, 0.0
  %v962 = vmax.f32 %v908, 0.0
  %v963 = vmax.f32 %v913, 0.0
  %v964 = vmax.f32 %v918, 0.0
  %v965 = vmax.f32 %v923, 0.0
  %v966 = vmax.f32 %v928, 0.0
  %v967 = vmax.f32 %v933, 0.0
  %968 = vst [vmem:[%s3] sm:$0xff] %v936
  %969 = vst [vmem:[%s3 + $0x8] sm:$0xff] %v937
  %970 = vst [vmem:[%s3 + $0x10] sm:$0xff] %v938
  %971 = vst [vmem:[%s3 + $0x18] sm:$0xff] %v939
  %972 = vst [vmem:[%s3 + $0x20] sm:$0xff] %v940
  %973 = vst [vmem:[%s3 + $0x28] sm:$0xff] %v941
  %974 = vst [vmem:[%s3 + $0x30] sm:$0xff] %v942
  %975 = vst [vmem:[%s3 + $0x38] sm:$0xff] %v943
  %976 = vst [vmem:[%s3 + $0x40] sm:$0xff] %v944
  %977 = vst [vmem:[%s3 + $0x48] sm:$0xff] %v945
  %978 = vst [vmem:[%s3 + $0x50] sm:$0xff] %v946
  %979 = vst [vmem:[%s3 + $0x58] sm:$0xff] %v947
  %980 = vst [vmem:[%s3 + $0x60] sm:$0xff] %v948
  %981 = vst [vmem:[%s3 + $0x68] sm:$0xff] %v949
  %982 = vst [vmem:[%s3 + $0x70] sm:$0xff] %v950
  %983 = vst [vmem:[%s3 + $0x78] sm:$0xff] %v951
  %984 = vst [vmem:[%s3 + $0x80] sm:$0xff] %v952
  %985 = vst [vmem:[%s3 + $0x88] sm:$0xff] %v953
  %986 = vst [vmem:[%s3 + $0x90] sm:$0xff] %v954
  %987 = vst [vmem:[%s3 + $0x98] sm:$0xff] %v955
  %988 = vst [vmem:[%s3 + $0xa0] sm:$0xff] %v956
  %989 = vst [vmem:[%s3 + $0xa8] sm:$0xff] %v957
  %990 = vst [vmem:[%s3 + $0xb0] sm:$0xff] %v958
  %991 = vst [vmem:[%s3 + $0xb8] sm:$0xff] %v959
  %992 = vst [vmem:[%s3 + $0xc0] sm:$0xff] %v960
  %993 = vst [vmem:[%s3 + $0xc8] sm:$0xff] %v961
  %994 = vst [vmem:[%s3 + $0xd0] sm:$0xff] %v962
  %995 = vst [vmem:[%s3 + $0xd8] sm:$0xff] %v963
  %996 = vst [vmem:[%s3 + $0xe0] sm:$0xff] %v964
  %997 = vst [vmem:[%s3 + $0xe8] sm:$0xff] %v965
  %998 = vst [vmem:[%s3 + $0xf0] sm:$0xff] %v966
  %999 = vst [vmem:[%s3 + $0xf8] sm:$0xff] %v967
  // Predicated region
  $region14: #{forward.6} parent=0 // pred_check
    _
  $region15: #{forward.6} parent=0 // pred_check_branch
    %1001 = sbr.rel (0) target = $region17
  $region16: #{forward.6} parent=0 // pred_region
    _
  $region17: #{forward.6} parent=0 // pred_fallthru
    _
  // Predicated region
  $region18: #{forward.6} parent=0 // pred_check
    _
  $region19: #{forward.6} parent=0 // pred_check_branch
    %1003 = sbr.rel (0) target = $region21
  $region20: #{forward.6} parent=0 // pred_region
    _
  $region21: #{forward.6} parent=0 // pred_fallthru
    _

// kernel: forward.7
$region0: #{forward.7}
  #allocation0 [shape = 'u32[]', space=smem, size = 0x4, offset = 0x4, fixed_abs, tag = 'smem constant byte address 0x4 - core index']
  #allocation1 [shape = 'u32[144,128]{1,0:T(1,128)}', space=vmem, size = 0x12000, scoped, tag = 'internal scratch']
  %s0 = inlined_call_operand.vmem [shape: f32[2,3136], index: 0, kind: input, shape index: {}]
  %s1 = inlined_call_operand.vmem [shape: f32[2,512], index: 1, kind: input, shape index: {}]
  %s2 = inlined_call_operand.vmem [shape: f32[2,512], index: 2, kind: input, shape index: {}]
  %s3 = inlined_call_operand.vmem [shape: bf16[3136,512], index: 3, kind: input, shape index: {}]
  %s4 = inlined_call_operand.vmem [shape: bf16[512,512], index: 4, kind: input, shape index: {}]
  %s5 = inlined_call_operand.vmem [shape: f32[1,512], index: 5, kind: input, shape index: {}]
  %s6 = inlined_call_operand.vmem [shape: bf16[512,512], index: 6, kind: input, shape index: {}]
  %s7 = inlined_call_operand.vmem [shape: bf16[512,512], index: 7, kind: input, shape index: {}]
  %s8 = inlined_call_operand.vmem [shape: f32[1,512], index: 8, kind: input, shape index: {}]
  %s9 = inlined_call_operand.vmem [shape: bf16[512,128], index: 9, kind: input, shape index: {}]
  %s10 = inlined_call_operand.vmem [shape: f32[1,128], index: 10, kind: input, shape index: {}]
  %s11 = inlined_call_operand.hbm [shape: f32[2,128], index: 11, kind: output, shape index: {0}]
  %s12 = inlined_call_operand.hbm [shape: f32[2,512], index: 12, kind: output, shape index: {1}]
  %s13 = inlined_call_operand.hbm [shape: f32[2,512], index: 13, kind: output, shape index: {2}]
  %14 = xla_tuple %s11, %s12, %s13
  %s15 = sld [smem:[#allocation0]]
  $region70: #{forward.7} parent=0
    _
  %s17 = ssub.s32 1, %s15
  %s18 = scalar_select 0, %s17, %s15
  $region1: #{forward.7} parent=0
    #allocation2 [shape = 'u8[1024]{0}', space=vmem, size = 0x400, scoped, tag = 'output window, operand 0, single buffered']
    #allocation3 [shape = 's32[1]{0}', space=sflag, size = 0x4, scoped, tag = 'scoped memory for forward.7']
    #allocation4 [shape = 'u8[4096]{0}', space=vmem, size = 0x1000, scoped, tag = 'output window, operand 1, single buffered']
    #allocation5 [shape = 's32[1]{0}', space=sflag, size = 0x4, scoped, tag = 'scoped memory for forward.7']
    #allocation6 [shape = 'u8[4096]{0}', space=vmem, size = 0x1000, scoped, tag = 'output window, operand 2, single buffered']
    %19 = vsyncpa [#allocation3], 0
    %20 = vsyncpa [#allocation5], 0
    // Predicated region
    $region2: #{forward.7} parent=1 // pred_check
      _
    $region3: #{forward.7} parent=1 // pred_check_branch
      %22 = sbr.rel (0) target = $region5
    $region4: #{forward.7} parent=1 // pred_region
      _
    $region5: #{forward.7} parent=1 // pred_fallthru
      _
    // Predicated region
    $region6: #{forward.7} parent=1 // pred_check
      _
    $region7: #{forward.7} parent=1 // pred_check_branch
      %24 = sbr.rel (0) target = $region9
    $region8: #{forward.7} parent=1 // pred_region
      _
    $region9: #{forward.7} parent=1 // pred_fallthru
      _
    // Predicated region
    $region10: #{forward.7} parent=1 // pred_check
      _
    $region11: #{forward.7} parent=1 // pred_check_branch
      %26 = sbr.rel (0) target = $region13
    $region12: #{forward.7} parent=1 // pred_region
      _
    $region13: #{forward.7} parent=1 // pred_fallthru
      _
    // Predicated region
    $region14: #{forward.7} parent=1 // pred_check
      _
    $region15: #{forward.7} parent=1 // pred_check_branch
      %28 = sbr.rel (0) target = $region17
    $region16: #{forward.7} parent=1 // pred_region
      _
    $region17: #{forward.7} parent=1 // pred_fallthru
      _
    // Predicated region
    $region18: #{forward.7} parent=1 // pred_check
      _
    $region19: #{forward.7} parent=1 // pred_check_branch
      %30 = sbr.rel (0) target = $region21
    $region20: #{forward.7} parent=1 // pred_region
      _
    $region21: #{forward.7} parent=1 // pred_fallthru
      _
    // Predicated region
    $region22: #{forward.7} parent=1 // pred_check
      _
    $region23: #{forward.7} parent=1 // pred_check_branch
      %32 = sbr.rel (0) target = $region25
    $region24: #{forward.7} parent=1 // pred_region
      _
    $region25: #{forward.7} parent=1 // pred_fallthru
      _
    // Predicated region
    $region26: #{forward.7} parent=1 // pred_check
      _
    $region27: #{forward.7} parent=1 // pred_check_branch
      %34 = sbr.rel (0) target = $region29
    $region28: #{forward.7} parent=1 // pred_region
      _
    $region29: #{forward.7} parent=1 // pred_fallthru
      _
    // Predicated region
    $region30: #{forward.7} parent=1 // pred_check
      _
    $region31: #{forward.7} parent=1 // pred_check_branch
      %36 = sbr.rel (0) target = $region33
    $region32: #{forward.7} parent=1 // pred_region
      _
    $region33: #{forward.7} parent=1 // pred_fallthru
      _
    // Predicated region
    $region34: #{forward.7} parent=1 // pred_check
      _
    $region35: #{forward.7} parent=1 // pred_check_branch
      %38 = sbr.rel (0) target = $region37
    $region36: #{forward.7} parent=1 // pred_region
      _
    $region37: #{forward.7} parent=1 // pred_fallthru
      _
    // Predicated region
    $region38: #{forward.7} parent=1 // pred_check
      _
    $region39: #{forward.7} parent=1 // pred_check_branch
      %40 = sbr.rel (0) target = $region41
    $region40: #{forward.7} parent=1 // pred_region
      _
    $region41: #{forward.7} parent=1 // pred_fallthru
      _
    // Predicated region
    $region42: #{forward.7} parent=1 // pred_check
      _
    $region43: #{forward.7} parent=1 // pred_check_branch
      %42 = sbr.rel (0) target = $region45
    $region44: #{forward.7} parent=1 // pred_region
      _
    $region45: #{forward.7} parent=1 // pred_fallthru
      _
    %v44 = vld [vmem:[%s0] sm:$0xff]
    %v45 = vld [vmem:[%s0 + $0x8] sm:$0xff]
    %v46 = vld [vmem:[%s0 + $0x10] sm:$0xff]
    %v47 = vld [vmem:[%s0 + $0x18] sm:$0xff]
    %v48 = vld [vmem:[%s0 + $0x20] sm:$0xff]
    %v49 = vld [vmem:[%s0 + $0x28] sm:$0xff]
    %v50 = vld [vmem:[%s0 + $0x30] sm:$0x3]
    %v58 = vcombine.high %v44, %v44
    %v60 = vunpack.c.l.s4 1983009808
    %v61 = vunpack.c.0.s8 %v60
    %v62 = vlaneseq
    %v63 = vshrl.u32 %v62, 7
    %v64 = vsub.s32 %v61, %v63
    %v65 = vrot.slane %v44, %v64
    %v67 = vunpack.c.l.s4 1983009808
    %v68 = vunpack.c.0.s8 %v67
    %v69 = vlaneseq
    %v70 = vshrl.u32 %v69, 7
    %v71 = vsub.s32 %v68, %v70
    %v72 = vrot.slane %v58, %v71
    %v73 = vcombine.high %v65, %v65
    %v74 = vcombine.high %v72, %v72
    %v75 = vcombine.high %v45, %v45
    %v77 = vunpack.c.l.s4 1983009808
    %v78 = vunpack.c.0.s8 %v77
    %v79 = vlaneseq
    %v80 = vshrl.u32 %v79, 7
    %v81 = vsub.s32 %v78, %v80
    %v82 = vrot.slane %v45, %v81
    %v84 = vunpack.c.l.s4 1983009808
    %v85 = vunpack.c.0.s8 %v84
    %v86 = vlaneseq
    %v87 = vshrl.u32 %v86, 7
    %v88 = vsub.s32 %v85, %v87
    %v89 = vrot.slane %v75, %v88
    %v90 = vcombine.high %v82, %v82
    %v91 = vcombine.high %v89, %v89
    %v92 = vcombine.high %v46, %v46
    %v94 = vunpack.c.l.s4 1983009808
    %v95 = vunpack.c.0.s8 %v94
    %v96 = vlaneseq
    %v97 = vshrl.u32 %v96, 7
    %v98 = vsub.s32 %v95, %v97
    %v99 = vrot.slane %v46, %v98
    %v101 = vunpack.c.l.s4 1983009808
    %v102 = vunpack.c.0.s8 %v101
    %v103 = vlaneseq
    %v104 = vshrl.u32 %v103, 7
    %v105 = vsub.s32 %v102, %v104
    %v106 = vrot.slane %v92, %v105
    %v107 = vcombine.high %v99, %v99
    %v108 = vcombine.high %v106, %v106
    %v109 = vcombine.high %v47, %v47
    %v111 = vunpack.c.l.s4 1983009808
    %v112 = vunpack.c.0.s8 %v111
    %v113 = vlaneseq
    %v114 = vshrl.u32 %v113, 7
    %v115 = vsub.s32 %v112, %v114
    %v116 = vrot.slane %v47, %v115
    %v118 = vunpack.c.l.s4 1983009808
    %v119 = vunpack.c.0.s8 %v118
    %v120 = vlaneseq
    %v121 = vshrl.u32 %v120, 7
    %v122 = vsub.s32 %v119, %v121
    %v123 = vrot.slane %v109, %v122
    %v124 = vcombine.high %v116, %v116
    %v125 = vcombine.high %v123, %v123
    %v126 = vcombine.high %v48, %v48
    %v128 = vunpack.c.l.s4 1983009808
    %v129 = vunpack.c.0.s8 %v128
    %v130 = vlaneseq
    %v131 = vshrl.u32 %v130, 7
    %v132 = vsub.s32 %v129, %v131
    %v133 = vrot.slane %v48, %v132
    %v135 = vunpack.c.l.s4 1983009808
    %v136 = vunpack.c.0.s8 %v135
    %v137 = vlaneseq
    %v138 = vshrl.u32 %v137, 7
    %v139 = vsub.s32 %v136, %v138
    %v140 = vrot.slane %v126, %v139
    %v141 = vcombine.high %v133, %v133
    %v142 = vcombine.high %v140, %v140
    %v143 = vcombine.high %v49, %v49
    %v145 = vunpack.c.l.s4 1983009808
    %v146 = vunpack.c.0.s8 %v145
    %v147 = vlaneseq
    %v148 = vshrl.u32 %v147, 7
    %v149 = vsub.s32 %v146, %v148
    %v150 = vrot.slane %v49, %v149
    %v152 = vunpack.c.l.s4 1983009808
    %v153 = vunpack.c.0.s8 %v152
    %v154 = vlaneseq
    %v155 = vshrl.u32 %v154, 7
    %v156 = vsub.s32 %v153, %v155
    %v157 = vrot.slane %v143, %v156
    %v158 = vcombine.high %v150, %v150
    %v159 = vcombine.high %v157, %v157
    %v161 = vunpack.c.l.s4 1983009808
    %v162 = vunpack.c.0.s8 %v161
    %v163 = vlaneseq
    %v164 = vshrl.u32 %v163, 7
    %v165 = vsub.s32 %v162, %v164
    %v166 = vrot.slane %v50, %v165
    %v192 = vpack.c.bf16 %v65, %v65
    %v193 = vpack.c.bf16 %v73, %v73
    %v194 = vpack.c.bf16 %v72, %v72
    %v195 = vpack.c.bf16 %v74, %v74
    %v196 = vpack.c.bf16 %v82, %v82
    %v197 = vpack.c.bf16 %v90, %v90
    %v198 = vpack.c.bf16 %v89, %v89
    %v199 = vpack.c.bf16 %v91, %v91
    %v200 = vpack.c.bf16 %v99, %v99
    %v201 = vpack.c.bf16 %v107, %v107
    %v202 = vpack.c.bf16 %v106, %v106
    %v203 = vpack.c.bf16 %v108, %v108
    %v204 = vpack.c.bf16 %v116, %v116
    %v205 = vpack.c.bf16 %v124, %v124
    %v206 = vpack.c.bf16 %v123, %v123
    %v207 = vpack.c.bf16 %v125, %v125
    %v208 = vpack.c.bf16 %v133, %v133
    %v209 = vpack.c.bf16 %v141, %v141
    %v210 = vpack.c.bf16 %v140, %v140
    %v211 = vpack.c.bf16 %v142, %v142
    %v212 = vpack.c.bf16 %v150, %v150
    %v213 = vpack.c.bf16 %v158, %v158
    %v214 = vpack.c.bf16 %v157, %v157
    %v215 = vpack.c.bf16 %v159, %v159
    %v216 = vpack.c.bf16 %v166, %v166
    %v217 = vld [vmem:[%s1] sm:$0xff]
    %v219 = vcombine.high %v217, %v217
    %v221 = vunpack.c.l.s4 1983009808
    %v222 = vunpack.c.0.s8 %v221
    %v223 = vlaneseq
    %v224 = vshrl.u32 %v223, 7
    %v225 = vsub.s32 %v222, %v224
    %v226 = vrot.slane %v217, %v225
    %v228 = vunpack.c.l.s4 1983009808
    %v229 = vunpack.c.0.s8 %v228
    %v230 = vlaneseq
    %v231 = vshrl.u32 %v230, 7
    %v232 = vsub.s32 %v229, %v231
    %v233 = vrot.slane %v219, %v232
    %v234 = vcombine.high %v226, %v226
    %v235 = vcombine.high %v233, %v233
    %v240 = vpack.c.bf16 %v226, %v226
    %v241 = vpack.c.bf16 %v234, %v234
    %v242 = vpack.c.bf16 %v233, %v233
    %v243 = vpack.c.bf16 %v235, %v235
    %v244 = vld [vmem:[%s2] sm:$0xff]
    %v246 = vcombine.high %v244, %v244
    %v248 = vunpack.c.l.s4 1983009808
    %v249 = vunpack.c.0.s8 %v248
    %v250 = vlaneseq
    %v251 = vshrl.u32 %v250, 7
    %v252 = vsub.s32 %v249, %v251
    %v253 = vrot.slane %v244, %v252
    %v255 = vunpack.c.l.s4 1983009808
    %v256 = vunpack.c.0.s8 %v255
    %v257 = vlaneseq
    %v258 = vshrl.u32 %v257, 7
    %v259 = vsub.s32 %v256, %v258
    %v260 = vrot.slane %v246, %v259
    %v261 = vcombine.high %v253, %v253
    %v262 = vcombine.high %v260, %v260
    %v267 = vpack.c.bf16 %v253, %v253
    %v268 = vpack.c.bf16 %v261, %v261
    %v269 = vpack.c.bf16 %v260, %v260
    %v270 = vpack.c.bf16 %v262, %v262
    %v271 = vld [vmem:[%s3] sm:$0xff]
    %v272 = vld [vmem:[%s3 + $0x8] sm:$0xff]
    %v273 = vld [vmem:[%s3 + $0x10] sm:$0xff]
    %v274 = vld [vmem:[%s3 + $0x18] sm:$0xff]
    %v275 = vld [vmem:[%s3 + $0x20] sm:$0xff]
    %v276 = vld [vmem:[%s3 + $0x28] sm:$0xff]
    %v277 = vld [vmem:[%s3 + $0x30] sm:$0xff]
    %v278 = vld [vmem:[%s3 + $0x38] sm:$0xff]
    %v279 = vld [vmem:[%s3 + $0x40] sm:$0xff]
    %v280 = vld [vmem:[%s3 + $0x48] sm:$0xff]
    %v281 = vld [vmem:[%s3 + $0x50] sm:$0xff]
    %v282 = vld [vmem:[%s3 + $0x58] sm:$0xff]
    %v283 = vld [vmem:[%s3 + $0x60] sm:$0xff]
    %v284 = vld [vmem:[%s3 + $0x68] sm:$0xff]
    %v285 = vld [vmem:[%s3 + $0x70] sm:$0xff]
    %v286 = vld [vmem:[%s3 + $0x78] sm:$0xff]
    %v287 = vld [vmem:[%s3 + $0x80] sm:$0xff]
    %v288 = vld [vmem:[%s3 + $0x88] sm:$0xff]
    %v289 = vld [vmem:[%s3 + $0x90] sm:$0xff]
    %v290 = vld [vmem:[%s3 + $0x98] sm:$0xff]
    %v291 = vld [vmem:[%s3 + $0xa0] sm:$0xff]
    %v292 = vld [vmem:[%s3 + $0xa8] sm:$0xff]
    %v293 = vld [vmem:[%s3 + $0xb0] sm:$0xff]
    %v294 = vld [vmem:[%s3 + $0xb8] sm:$0xff]
    %v295 = vld [vmem:[%s3 + $0xc0] sm:$0xff]
    %v296 = vld [vmem:[%s3 + $0xc8] sm:$0xff]
    %v297 = vld [vmem:[%s3 + $0xd0] sm:$0xff]
    %v298 = vld [vmem:[%s3 + $0xd8] sm:$0xff]
    %v299 = vld [vmem:[%s3 + $0xe0] sm:$0xff]
    %v300 = vld [vmem:[%s3 + $0xe8] sm:$0xff]
    %v301 = vld [vmem:[%s3 + $0xf0] sm:$0xff]
    %v302 = vld [vmem:[%s3 + $0xf8] sm:$0xff]
    %v303 = vld [vmem:[%s3 + $0x100] sm:$0xff]
    %v304 = vld [vmem:[%s3 + $0x108] sm:$0xff]
    %v305 = vld [vmem:[%s3 + $0x110] sm:$0xff]
    %v306 = vld [vmem:[%s3 + $0x118] sm:$0xff]
    %v307 = vld [vmem:[%s3 + $0x120] sm:$0xff]
    %v308 = vld [vmem:[%s3 + $0x128] sm:$0xff]
    %v309 = vld [vmem:[%s3 + $0x130] sm:$0xff]
    %v310 = vld [vmem:[%s3 + $0x138] sm:$0xff]
    %v311 = vld [vmem:[%s3 + $0x140] sm:$0xff]
    %v312 = vld [vmem:[%s3 + $0x148] sm:$0xff]
    %v313 = vld [vmem:[%s3 + $0x150] sm:$0xff]
    %v314 = vld [vmem:[%s3 + $0x158] sm:$0xff]
    %v315 = vld [vmem:[%s3 + $0x160] sm:$0xff]
    %v316 = vld [vmem:[%s3 + $0x168] sm:$0xff]
    %v317 = vld [vmem:[%s3 + $0x170] sm:$0xff]
    %v318 = vld [vmem:[%s3 + $0x178] sm:$0xff]
    %v319 = vld [vmem:[%s3 + $0x180] sm:$0xff]
    %v320 = vld [vmem:[%s3 + $0x188] sm:$0xff]
    %v321 = vld [vmem:[%s3 + $0x190] sm:$0xff]
    %v322 = vld [vmem:[%s3 + $0x198] sm:$0xff]
    %v323 = vld [vmem:[%s3 + $0x1a0] sm:$0xff]
    %v324 = vld [vmem:[%s3 + $0x1a8] sm:$0xff]
    %v325 = vld [vmem:[%s3 + $0x1b0] sm:$0xff]
    %v326 = vld [vmem:[%s3 + $0x1b8] sm:$0xff]
    %v327 = vld [vmem:[%s3 + $0x1c0] sm:$0xff]
    %v328 = vld [vmem:[%s3 + $0x1c8] sm:$0xff]
    %v329 = vld [vmem:[%s3 + $0x1d0] sm:$0xff]
    %v330 = vld [vmem:[%s3 + $0x1d8] sm:$0xff]
    %v331 = vld [vmem:[%s3 + $0x1e0] sm:$0xff]
    %v332 = vld [vmem:[%s3 + $0x1e8] sm:$0xff]
    %v333 = vld [vmem:[%s3 + $0x1f0] sm:$0xff]
    %v334 = vld [vmem:[%s3 + $0x1f8] sm:$0xff]
    %v335 = vld [vmem:[%s3 + $0x200] sm:$0xff]
    %v336 = vld [vmem:[%s3 + $0x208] sm:$0xff]
    %v337 = vld [vmem:[%s3 + $0x210] sm:$0xff]
    %v338 = vld [vmem:[%s3 + $0x218] sm:$0xff]
    %v339 = vld [vmem:[%s3 + $0x220] sm:$0xff]
    %v340 = vld [vmem:[%s3 + $0x228] sm:$0xff]
    %v341 = vld [vmem:[%s3 + $0x230] sm:$0xff]
    %v342 = vld [vmem:[%s3 + $0x238] sm:$0xff]
    %v343 = vld [vmem:[%s3 + $0x240] sm:$0xff]
    %v344 = vld [vmem:[%s3 + $0x248] sm:$0xff]
    %v345 = vld [vmem:[%s3 + $0x250] sm:$0xff]
    %v346 = vld [vmem:[%s3 + $0x258] sm:$0xff]
    %v347 = vld [vmem:[%s3 + $0x260] sm:$0xff]
    %v348 = vld [vmem:[%s3 + $0x268] sm:$0xff]
    %v349 = vld [vmem:[%s3 + $0x270] sm:$0xff]
    %v350 = vld [vmem:[%s3 + $0x278] sm:$0xff]
    %v351 = vld [vmem:[%s3 + $0x280] sm:$0xff]
    %v352 = vld [vmem:[%s3 + $0x288] sm:$0xff]
    %v353 = vld [vmem:[%s3 + $0x290] sm:$0xff]
    %v354 = vld [vmem:[%s3 + $0x298] sm:$0xff]
    %v355 = vld [vmem:[%s3 + $0x2a0] sm:$0xff]
    %v356 = vld [vmem:[%s3 + $0x2a8] sm:$0xff]
    %v357 = vld [vmem:[%s3 + $0x2b0] sm:$0xff]
    %v358 = vld [vmem:[%s3 + $0x2b8] sm:$0xff]
    %v359 = vld [vmem:[%s3 + $0x2c0] sm:$0xff]
    %v360 = vld [vmem:[%s3 + $0x2c8] sm:$0xff]
    %v361 = vld [vmem:[%s3 + $0x2d0] sm:$0xff]
    %v362 = vld [vmem:[%s3 + $0x2d8] sm:$0xff]
    %v363 = vld [vmem:[%s3 + $0x2e0] sm:$0xff]
    %v364 = vld [vmem:[%s3 + $0x2e8] sm:$0xff]
    %v365 = vld [vmem:[%s3 + $0x2f0] sm:$0xff]
    %v366 = vld [vmem:[%s3 + $0x2f8] sm:$0xff]
    %v367 = vld [vmem:[%s3 + $0x300] sm:$0xff]
    %v368 = vld [vmem:[%s3 + $0x308] sm:$0xff]
    %v369 = vld [vmem:[%s3 + $0x310] sm:$0xff]
    %v370 = vld [vmem:[%s3 + $0x318] sm:$0xff]
    %v371 = vld [vmem:[%s3 + $0x320] sm:$0xff]
    %v372 = vld [vmem:[%s3 + $0x328] sm:$0xff]
    %v373 = vld [vmem:[%s3 + $0x330] sm:$0xff]
    %v374 = vld [vmem:[%s3 + $0x338] sm:$0xff]
    %v375 = vld [vmem:[%s3 + $0x340] sm:$0xff]
    %v376 = vld [vmem:[%s3 + $0x348] sm:$0xff]
    %v377 = vld [vmem:[%s3 + $0x350] sm:$0xff]
    %v378 = vld [vmem:[%s3 + $0x358] sm:$0xff]
    %v379 = vld [vmem:[%s3 + $0x360] sm:$0xff]
    %v380 = vld [vmem:[%s3 + $0x368] sm:$0xff]
    %v381 = vld [vmem:[%s3 + $0x370] sm:$0xff]
    %v382 = vld [vmem:[%s3 + $0x378] sm:$0xff]
    %v383 = vld [vmem:[%s3 + $0x380] sm:$0xff]
    %v384 = vld [vmem:[%s3 + $0x388] sm:$0xff]
    %v385 = vld [vmem:[%s3 + $0x390] sm:$0xff]
    %v386 = vld [vmem:[%s3 + $0x398] sm:$0xff]
    %v387 = vld [vmem:[%s3 + $0x3a0] sm:$0xff]
    %v388 = vld [vmem:[%s3 + $0x3a8] sm:$0xff]
    %v389 = vld [vmem:[%s3 + $0x3b0] sm:$0xff]
    %v390 = vld [vmem:[%s3 + $0x3b8] sm:$0xff]
    %v391 = vld [vmem:[%s3 + $0x3c0] sm:$0xff]
    %v392 = vld [vmem:[%s3 + $0x3c8] sm:$0xff]
    %v393 = vld [vmem:[%s3 + $0x3d0] sm:$0xff]
    %v394 = vld [vmem:[%s3 + $0x3d8] sm:$0xff]
    %v395 = vld [vmem:[%s3 + $0x3e0] sm:$0xff]
    %v396 = vld [vmem:[%s3 + $0x3e8] sm:$0xff]
    %v397 = vld [vmem:[%s3 + $0x3f0] sm:$0xff]
    %v398 = vld [vmem:[%s3 + $0x3f8] sm:$0xff]
    %v399 = vld [vmem:[%s3 + $0x400] sm:$0xff]
    %v400 = vld [vmem:[%s3 + $0x408] sm:$0xff]
    %v401 = vld [vmem:[%s3 + $0x410] sm:$0xff]
    %v402 = vld [vmem:[%s3 + $0x418] sm:$0xff]
    %v403 = vld [vmem:[%s3 + $0x420] sm:$0xff]
    %v404 = vld [vmem:[%s3 + $0x428] sm:$0xff]
    %v405 = vld [vmem:[%s3 + $0x430] sm:$0xff]
    %v406 = vld [vmem:[%s3 + $0x438] sm:$0xff]
    %v407 = vld [vmem:[%s3 + $0x440] sm:$0xff]
    %v408 = vld [vmem:[%s3 + $0x448] sm:$0xff]
    %v409 = vld [vmem:[%s3 + $0x450] sm:$0xff]
    %v410 = vld [vmem:[%s3 + $0x458] sm:$0xff]
    %v411 = vld [vmem:[%s3 + $0x460] sm:$0xff]
    %v412 = vld [vmem:[%s3 + $0x468] sm:$0xff]
    %v413 = vld [vmem:[%s3 + $0x470] sm:$0xff]
    %v414 = vld [vmem:[%s3 + $0x478] sm:$0xff]
    %v415 = vld [vmem:[%s3 + $0x480] sm:$0xff]
    %v416 = vld [vmem:[%s3 + $0x488] sm:$0xff]
    %v417 = vld [vmem:[%s3 + $0x490] sm:$0xff]
    %v418 = vld [vmem:[%s3 + $0x498] sm:$0xff]
    %v419 = vld [vmem:[%s3 + $0x4a0] sm:$0xff]
    %v420 = vld [vmem:[%s3 + $0x4a8] sm:$0xff]
    %v421 = vld [vmem:[%s3 + $0x4b0] sm:$0xff]
    %v422 = vld [vmem:[%s3 + $0x4b8] sm:$0xff]
    %v423 = vld [vmem:[%s3 + $0x4c0] sm:$0xff]
    %v424 = vld [vmem:[%s3 + $0x4c8] sm:$0xff]
    %v425 = vld [vmem:[%s3 + $0x4d0] sm:$0xff]
    %v426 = vld [vmem:[%s3 + $0x4d8] sm:$0xff]
    %v427 = vld [vmem:[%s3 + $0x4e0] sm:$0xff]
    %v428 = vld [vmem:[%s3 + $0x4e8] sm:$0xff]
    %v429 = vld [vmem:[%s3 + $0x4f0] sm:$0xff]
    %v430 = vld [vmem:[%s3 + $0x4f8] sm:$0xff]
    %v431 = vld [vmem:[%s3 + $0x500] sm:$0xff]
    %v432 = vld [vmem:[%s3 + $0x508] sm:$0xff]
    %v433 = vld [vmem:[%s3 + $0x510] sm:$0xff]
    %v434 = vld [vmem:[%s3 + $0x518] sm:$0xff]
    %v435 = vld [vmem:[%s3 + $0x520] sm:$0xff]
    %v436 = vld [vmem:[%s3 + $0x528] sm:$0xff]
    %v437 = vld [vmem:[%s3 + $0x530] sm:$0xff]
    %v438 = vld [vmem:[%s3 + $0x538] sm:$0xff]
    %v439 = vld [vmem:[%s3 + $0x540] sm:$0xff]
    %v440 = vld [vmem:[%s3 + $0x548] sm:$0xff]
    %v441 = vld [vmem:[%s3 + $0x550] sm:$0xff]
    %v442 = vld [vmem:[%s3 + $0x558] sm:$0xff]
    %v443 = vld [vmem:[%s3 + $0x560] sm:$0xff]
    %v444 = vld [vmem:[%s3 + $0x568] sm:$0xff]
    %v445 = vld [vmem:[%s3 + $0x570] sm:$0xff]
    %v446 = vld [vmem:[%s3 + $0x578] sm:$0xff]
    %v447 = vld [vmem:[%s3 + $0x580] sm:$0xff]
    %v448 = vld [vmem:[%s3 + $0x588] sm:$0xff]
    %v449 = vld [vmem:[%s3 + $0x590] sm:$0xff]
    %v450 = vld [vmem:[%s3 + $0x598] sm:$0xff]
    %v451 = vld [vmem:[%s3 + $0x5a0] sm:$0xff]
    %v452 = vld [vmem:[%s3 + $0x5a8] sm:$0xff]
    %v453 = vld [vmem:[%s3 + $0x5b0] sm:$0xff]
    %v454 = vld [vmem:[%s3 + $0x5b8] sm:$0xff]
    %v455 = vld [vmem:[%s3 + $0x5c0] sm:$0xff]
    %v456 = vld [vmem:[%s3 + $0x5c8] sm:$0xff]
    %v457 = vld [vmem:[%s3 + $0x5d0] sm:$0xff]
    %v458 = vld [vmem:[%s3 + $0x5d8] sm:$0xff]
    %v459 = vld [vmem:[%s3 + $0x5e0] sm:$0xff]
    %v460 = vld [vmem:[%s3 + $0x5e8] sm:$0xff]
    %v461 = vld [vmem:[%s3 + $0x5f0] sm:$0xff]
    %v462 = vld [vmem:[%s3 + $0x5f8] sm:$0xff]
    %v463 = vld [vmem:[%s3 + $0x600] sm:$0xff]
    %v464 = vld [vmem:[%s3 + $0x608] sm:$0xff]
    %v465 = vld [vmem:[%s3 + $0x610] sm:$0xff]
    %v466 = vld [vmem:[%s3 + $0x618] sm:$0xff]
    %v467 = vld [vmem:[%s3 + $0x620] sm:$0xff]
    %v468 = vld [vmem:[%s3 + $0x628] sm:$0xff]
    %v469 = vld [vmem:[%s3 + $0x630] sm:$0xff]
    %v470 = vld [vmem:[%s3 + $0x638] sm:$0xff]
    %v471 = vld [vmem:[%s3 + $0x640] sm:$0xff]
    %v472 = vld [vmem:[%s3 + $0x648] sm:$0xff]
    %v473 = vld [vmem:[%s3 + $0x650] sm:$0xff]
    %v474 = vld [vmem:[%s3 + $0x658] sm:$0xff]
    %v475 = vld [vmem:[%s3 + $0x660] sm:$0xff]
    %v476 = vld [vmem:[%s3 + $0x668] sm:$0xff]
    %v477 = vld [vmem:[%s3 + $0x670] sm:$0xff]
    %v478 = vld [vmem:[%s3 + $0x678] sm:$0xff]
    %v479 = vld [vmem:[%s3 + $0x680] sm:$0xff]
    %v480 = vld [vmem:[%s3 + $0x688] sm:$0xff]
    %v481 = vld [vmem:[%s3 + $0x690] sm:$0xff]
    %v482 = vld [vmem:[%s3 + $0x698] sm:$0xff]
    %v483 = vld [vmem:[%s3 + $0x6a0] sm:$0xff]
    %v484 = vld [vmem:[%s3 + $0x6a8] sm:$0xff]
    %v485 = vld [vmem:[%s3 + $0x6b0] sm:$0xff]
    %v486 = vld [vmem:[%s3 + $0x6b8] sm:$0xff]
    %v487 = vld [vmem:[%s3 + $0x6c0] sm:$0xff]
    %v488 = vld [vmem:[%s3 + $0x6c8] sm:$0xff]
    %v489 = vld [vmem:[%s3 + $0x6d0] sm:$0xff]
    %v490 = vld [vmem:[%s3 + $0x6d8] sm:$0xff]
    %v491 = vld [vmem:[%s3 + $0x6e0] sm:$0xff]
    %v492 = vld [vmem:[%s3 + $0x6e8] sm:$0xff]
    %v493 = vld [vmem:[%s3 + $0x6f0] sm:$0xff]
    %v494 = vld [vmem:[%s3 + $0x6f8] sm:$0xff]
    %v495 = vld [vmem:[%s3 + $0x700] sm:$0xff]
    %v496 = vld [vmem:[%s3 + $0x708] sm:$0xff]
    %v497 = vld [vmem:[%s3 + $0x710] sm:$0xff]
    %v498 = vld [vmem:[%s3 + $0x718] sm:$0xff]
    %v499 = vld [vmem:[%s3 + $0x720] sm:$0xff]
    %v500 = vld [vmem:[%s3 + $0x728] sm:$0xff]
    %v501 = vld [vmem:[%s3 + $0x730] sm:$0xff]
    %v502 = vld [vmem:[%s3 + $0x738] sm:$0xff]
    %v503 = vld [vmem:[%s3 + $0x740] sm:$0xff]
    %v504 = vld [vmem:[%s3 + $0x748] sm:$0xff]
    %v505 = vld [vmem:[%s3 + $0x750] sm:$0xff]
    %v506 = vld [vmem:[%s3 + $0x758] sm:$0xff]
    %v507 = vld [vmem:[%s3 + $0x760] sm:$0xff]
    %v508 = vld [vmem:[%s3 + $0x768] sm:$0xff]
    %v509 = vld [vmem:[%s3 + $0x770] sm:$0xff]
    %v510 = vld [vmem:[%s3 + $0x778] sm:$0xff]
    %v511 = vld [vmem:[%s3 + $0x780] sm:$0xff]
    %v512 = vld [vmem:[%s3 + $0x788] sm:$0xff]
    %v513 = vld [vmem:[%s3 + $0x790] sm:$0xff]
    %v514 = vld [vmem:[%s3 + $0x798] sm:$0xff]
    %v515 = vld [vmem:[%s3 + $0x7a0] sm:$0xff]
    %v516 = vld [vmem:[%s3 + $0x7a8] sm:$0xff]
    %v517 = vld [vmem:[%s3 + $0x7b0] sm:$0xff]
    %v518 = vld [vmem:[%s3 + $0x7b8] sm:$0xff]
    %v519 = vld [vmem:[%s3 + $0x7c0] sm:$0xff]
    %v520 = vld [vmem:[%s3 + $0x7c8] sm:$0xff]
    %v521 = vld [vmem:[%s3 + $0x7d0] sm:$0xff]
    %v522 = vld [vmem:[%s3 + $0x7d8] sm:$0xff]
    %v523 = vld [vmem:[%s3 + $0x7e0] sm:$0xff]
    %v524 = vld [vmem:[%s3 + $0x7e8] sm:$0xff]
    %v525 = vld [vmem:[%s3 + $0x7f0] sm:$0xff]
    %v526 = vld [vmem:[%s3 + $0x7f8] sm:$0xff]
    %v527 = vld [vmem:[%s3 + $0x800] sm:$0xff]
    %v528 = vld [vmem:[%s3 + $0x808] sm:$0xff]
    %v529 = vld [vmem:[%s3 + $0x810] sm:$0xff]
    %v530 = vld [vmem:[%s3 + $0x818] sm:$0xff]
    %v531 = vld [vmem:[%s3 + $0x820] sm:$0xff]
    %v532 = vld [vmem:[%s3 + $0x828] sm:$0xff]
    %v533 = vld [vmem:[%s3 + $0x830] sm:$0xff]
    %v534 = vld [vmem:[%s3 + $0x838] sm:$0xff]
    %v535 = vld [vmem:[%s3 + $0x840] sm:$0xff]
    %v536 = vld [vmem:[%s3 + $0x848] sm:$0xff]
    %v537 = vld [vmem:[%s3 + $0x850] sm:$0xff]
    %v538 = vld [vmem:[%s3 + $0x858] sm:$0xff]
    %v539 = vld [vmem:[%s3 + $0x860] sm:$0xff]
    %v540 = vld [vmem:[%s3 + $0x868] sm:$0xff]
    %v541 = vld [vmem:[%s3 + $0x870] sm:$0xff]
    %v542 = vld [vmem:[%s3 + $0x878] sm:$0xff]
    %v543 = vld [vmem:[%s3 + $0x880] sm:$0xff]
    %v544 = vld [vmem:[%s3 + $0x888] sm:$0xff]
    %v545 = vld [vmem:[%s3 + $0x890] sm:$0xff]
    %v546 = vld [vmem:[%s3 + $0x898] sm:$0xff]
    %v547 = vld [vmem:[%s3 + $0x8a0] sm:$0xff]
    %v548 = vld [vmem:[%s3 + $0x8a8] sm:$0xff]
    %v549 = vld [vmem:[%s3 + $0x8b0] sm:$0xff]
    %v550 = vld [vmem:[%s3 + $0x8b8] sm:$0xff]
    %v551 = vld [vmem:[%s3 + $0x8c0] sm:$0xff]
    %v552 = vld [vmem:[%s3 + $0x8c8] sm:$0xff]
    %v553 = vld [vmem:[%s3 + $0x8d0] sm:$0xff]
    %v554 = vld [vmem:[%s3 + $0x8d8] sm:$0xff]
    %v555 = vld [vmem:[%s3 + $0x8e0] sm:$0xff]
    %v556 = vld [vmem:[%s3 + $0x8e8] sm:$0xff]
    %v557 = vld [vmem:[%s3 + $0x8f0] sm:$0xff]
    %v558 = vld [vmem:[%s3 + $0x8f8] sm:$0xff]
    %v559 = vld [vmem:[%s3 + $0x900] sm:$0xff]
    %v560 = vld [vmem:[%s3 + $0x908] sm:$0xff]
    %v561 = vld [vmem:[%s3 + $0x910] sm:$0xff]
    %v562 = vld [vmem:[%s3 + $0x918] sm:$0xff]
    %v563 = vld [vmem:[%s3 + $0x920] sm:$0xff]
    %v564 = vld [vmem:[%s3 + $0x928] sm:$0xff]
    %v565 = vld [vmem:[%s3 + $0x930] sm:$0xff]
    %v566 = vld [vmem:[%s3 + $0x938] sm:$0xff]
    %v567 = vld [vmem:[%s3 + $0x940] sm:$0xff]
    %v568 = vld [vmem:[%s3 + $0x948] sm:$0xff]
    %v569 = vld [vmem:[%s3 + $0x950] sm:$0xff]
    %v570 = vld [vmem:[%s3 + $0x958] sm:$0xff]
    %v571 = vld [vmem:[%s3 + $0x960] sm:$0xff]
    %v572 = vld [vmem:[%s3 + $0x968] sm:$0xff]
    %v573 = vld [vmem:[%s3 + $0x970] sm:$0xff]
    %v574 = vld [vmem:[%s3 + $0x978] sm:$0xff]
    %v575 = vld [vmem:[%s3 + $0x980] sm:$0xff]
    %v576 = vld [vmem:[%s3 + $0x988] sm:$0xff]
    %v577 = vld [vmem:[%s3 + $0x990] sm:$0xff]
    %v578 = vld [vmem:[%s3 + $0x998] sm:$0xff]
    %v579 = vld [vmem:[%s3 + $0x9a0] sm:$0xff]
    %v580 = vld [vmem:[%s3 + $0x9a8] sm:$0xff]
    %v581 = vld [vmem:[%s3 + $0x9b0] sm:$0xff]
    %v582 = vld [vmem:[%s3 + $0x9b8] sm:$0xff]
    %v583 = vld [vmem:[%s3 + $0x9c0] sm:$0xff]
    %v584 = vld [vmem:[%s3 + $0x9c8] sm:$0xff]
    %v585 = vld [vmem:[%s3 + $0x9d0] sm:$0xff]
    %v586 = vld [vmem:[%s3 + $0x9d8] sm:$0xff]
    %v587 = vld [vmem:[%s3 + $0x9e0] sm:$0xff]
    %v588 = vld [vmem:[%s3 + $0x9e8] sm:$0xff]
    %v589 = vld [vmem:[%s3 + $0x9f0] sm:$0xff]
    %v590 = vld [vmem:[%s3 + $0x9f8] sm:$0xff]
    %v591 = vld [vmem:[%s3 + $0xa00] sm:$0xff]
    %v592 = vld [vmem:[%s3 + $0xa08] sm:$0xff]
    %v593 = vld [vmem:[%s3 + $0xa10] sm:$0xff]
    %v594 = vld [vmem:[%s3 + $0xa18] sm:$0xff]
    %v595 = vld [vmem:[%s3 + $0xa20] sm:$0xff]
    %v596 = vld [vmem:[%s3 + $0xa28] sm:$0xff]
    %v597 = vld [vmem:[%s3 + $0xa30] sm:$0xff]
    %v598 = vld [vmem:[%s3 + $0xa38] sm:$0xff]
    %v599 = vld [vmem:[%s3 + $0xa40] sm:$0xff]
    %v600 = vld [vmem:[%s3 + $0xa48] sm:$0xff]
    %v601 = vld [vmem:[%s3 + $0xa50] sm:$0xff]
    %v602 = vld [vmem:[%s3 + $0xa58] sm:$0xff]
    %v603 = vld [vmem:[%s3 + $0xa60] sm:$0xff]
    %v604 = vld [vmem:[%s3 + $0xa68] sm:$0xff]
    %v605 = vld [vmem:[%s3 + $0xa70] sm:$0xff]
    %v606 = vld [vmem:[%s3 + $0xa78] sm:$0xff]
    %v607 = vld [vmem:[%s3 + $0xa80] sm:$0xff]
    %v608 = vld [vmem:[%s3 + $0xa88] sm:$0xff]
    %v609 = vld [vmem:[%s3 + $0xa90] sm:$0xff]
    %v610 = vld [vmem:[%s3 + $0xa98] sm:$0xff]
    %v611 = vld [vmem:[%s3 + $0xaa0] sm:$0xff]
    %v612 = vld [vmem:[%s3 + $0xaa8] sm:$0xff]
    %v613 = vld [vmem:[%s3 + $0xab0] sm:$0xff]
    %v614 = vld [vmem:[%s3 + $0xab8] sm:$0xff]
    %v615 = vld [vmem:[%s3 + $0xac0] sm:$0xff]
    %v616 = vld [vmem:[%s3 + $0xac8] sm:$0xff]
    %v617 = vld [vmem:[%s3 + $0xad0] sm:$0xff]
    %v618 = vld [vmem:[%s3 + $0xad8] sm:$0xff]
    %v619 = vld [vmem:[%s3 + $0xae0] sm:$0xff]
    %v620 = vld [vmem:[%s3 + $0xae8] sm:$0xff]
    %v621 = vld [vmem:[%s3 + $0xaf0] sm:$0xff]
    %v622 = vld [vmem:[%s3 + $0xaf8] sm:$0xff]
    %v623 = vld [vmem:[%s3 + $0xb00] sm:$0xff]
    %v624 = vld [vmem:[%s3 + $0xb08] sm:$0xff]
    %v625 = vld [vmem:[%s3 + $0xb10] sm:$0xff]
    %v626 = vld [vmem:[%s3 + $0xb18] sm:$0xff]
    %v627 = vld [vmem:[%s3 + $0xb20] sm:$0xff]
    %v628 = vld [vmem:[%s3 + $0xb28] sm:$0xff]
    %v629 = vld [vmem:[%s3 + $0xb30] sm:$0xff]
    %v630 = vld [vmem:[%s3 + $0xb38] sm:$0xff]
    %v631 = vld [vmem:[%s3 + $0xb40] sm:$0xff]
    %v632 = vld [vmem:[%s3 + $0xb48] sm:$0xff]
    %v633 = vld [vmem:[%s3 + $0xb50] sm:$0xff]
    %v634 = vld [vmem:[%s3 + $0xb58] sm:$0xff]
    %v635 = vld [vmem:[%s3 + $0xb60] sm:$0xff]
    %v636 = vld [vmem:[%s3 + $0xb68] sm:$0xff]
    %v637 = vld [vmem:[%s3 + $0xb70] sm:$0xff]
    %v638 = vld [vmem:[%s3 + $0xb78] sm:$0xff]
    %v639 = vld [vmem:[%s3 + $0xb80] sm:$0xff]
    %v640 = vld [vmem:[%s3 + $0xb88] sm:$0xff]
    %v641 = vld [vmem:[%s3 + $0xb90] sm:$0xff]
    %v642 = vld [vmem:[%s3 + $0xb98] sm:$0xff]
    %v643 = vld [vmem:[%s3 + $0xba0] sm:$0xff]
    %v644 = vld [vmem:[%s3 + $0xba8] sm:$0xff]
    %v645 = vld [vmem:[%s3 + $0xbb0] sm:$0xff]
    %v646 = vld [vmem:[%s3 + $0xbb8] sm:$0xff]
    %v647 = vld [vmem:[%s3 + $0xbc0] sm:$0xff]
    %v648 = vld [vmem:[%s3 + $0xbc8] sm:$0xff]
    %v649 = vld [vmem:[%s3 + $0xbd0] sm:$0xff]
    %v650 = vld [vmem:[%s3 + $0xbd8] sm:$0xff]
    %v651 = vld [vmem:[%s3 + $0xbe0] sm:$0xff]
    %v652 = vld [vmem:[%s3 + $0xbe8] sm:$0xff]
    %v653 = vld [vmem:[%s3 + $0xbf0] sm:$0xff]
    %v654 = vld [vmem:[%s3 + $0xbf8] sm:$0xff]
    %v655 = vld [vmem:[%s3 + $0xc00] sm:$0xff]
    %v656 = vld [vmem:[%s3 + $0xc08] sm:$0xff]
    %v657 = vld [vmem:[%s3 + $0xc10] sm:$0xff]
    %v658 = vld [vmem:[%s3 + $0xc18] sm:$0xff]
    %v659 = vld [vmem:[%s3 + $0xc20] sm:$0xff]
    %v660 = vld [vmem:[%s3 + $0xc28] sm:$0xff]
    %v661 = vld [vmem:[%s3 + $0xc30] sm:$0xff]
    %v662 = vld [vmem:[%s3 + $0xc38] sm:$0xff]
    %v663 = vld [vmem:[%s3 + $0xc40] sm:$0xff]
    %v664 = vld [vmem:[%s3 + $0xc48] sm:$0xff]
    %v665 = vld [vmem:[%s3 + $0xc50] sm:$0xff]
    %v666 = vld [vmem:[%s3 + $0xc58] sm:$0xff]
    %v667 = vld [vmem:[%s3 + $0xc60] sm:$0xff]
    %v668 = vld [vmem:[%s3 + $0xc68] sm:$0xff]
    %v669 = vld [vmem:[%s3 + $0xc70] sm:$0xff]
    %v670 = vld [vmem:[%s3 + $0xc78] sm:$0xff]
    %v671 = vld [vmem:[%s3 + $0xc80] sm:$0xff]
    %v672 = vld [vmem:[%s3 + $0xc88] sm:$0xff]
    %v673 = vld [vmem:[%s3 + $0xc90] sm:$0xff]
    %v674 = vld [vmem:[%s3 + $0xc98] sm:$0xff]
    %v675 = vld [vmem:[%s3 + $0xca0] sm:$0xff]
    %v676 = vld [vmem:[%s3 + $0xca8] sm:$0xff]
    %v677 = vld [vmem:[%s3 + $0xcb0] sm:$0xff]
    %v678 = vld [vmem:[%s3 + $0xcb8] sm:$0xff]
    %v679 = vld [vmem:[%s3 + $0xcc0] sm:$0xff]
    %v680 = vld [vmem:[%s3 + $0xcc8] sm:$0xff]
    %v681 = vld [vmem:[%s3 + $0xcd0] sm:$0xff]
    %v682 = vld [vmem:[%s3 + $0xcd8] sm:$0xff]
    %v683 = vld [vmem:[%s3 + $0xce0] sm:$0xff]
    %v684 = vld [vmem:[%s3 + $0xce8] sm:$0xff]
    %v685 = vld [vmem:[%s3 + $0xcf0] sm:$0xff]
    %v686 = vld [vmem:[%s3 + $0xcf8] sm:$0xff]
    %v687 = vld [vmem:[%s3 + $0xd00] sm:$0xff]
    %v688 = vld [vmem:[%s3 + $0xd08] sm:$0xff]
    %v689 = vld [vmem:[%s3 + $0xd10] sm:$0xff]
    %v690 = vld [vmem:[%s3 + $0xd18] sm:$0xff]
    %v691 = vld [vmem:[%s3 + $0xd20] sm:$0xff]
    %v692 = vld [vmem:[%s3 + $0xd28] sm:$0xff]
    %v693 = vld [vmem:[%s3 + $0xd30] sm:$0xff]
    %v694 = vld [vmem:[%s3 + $0xd38] sm:$0xff]
    %v695 = vld [vmem:[%s3 + $0xd40] sm:$0xff]
    %v696 = vld [vmem:[%s3 + $0xd48] sm:$0xff]
    %v697 = vld [vmem:[%s3 + $0xd50] sm:$0xff]
    %v698 = vld [vmem:[%s3 + $0xd58] sm:$0xff]
    %v699 = vld [vmem:[%s3 + $0xd60] sm:$0xff]
    %v700 = vld [vmem:[%s3 + $0xd68] sm:$0xff]
    %v701 = vld [vmem:[%s3 + $0xd70] sm:$0xff]
    %v702 = vld [vmem:[%s3 + $0xd78] sm:$0xff]
    %v703 = vld [vmem:[%s3 + $0xd80] sm:$0xff]
    %v704 = vld [vmem:[%s3 + $0xd88] sm:$0xff]
    %v705 = vld [vmem:[%s3 + $0xd90] sm:$0xff]
    %v706 = vld [vmem:[%s3 + $0xd98] sm:$0xff]
    %v707 = vld [vmem:[%s3 + $0xda0] sm:$0xff]
    %v708 = vld [vmem:[%s3 + $0xda8] sm:$0xff]
    %v709 = vld [vmem:[%s3 + $0xdb0] sm:$0xff]
    %v710 = vld [vmem:[%s3 + $0xdb8] sm:$0xff]
    %v711 = vld [vmem:[%s3 + $0xdc0] sm:$0xff]
    %v712 = vld [vmem:[%s3 + $0xdc8] sm:$0xff]
    %v713 = vld [vmem:[%s3 + $0xdd0] sm:$0xff]
    %v714 = vld [vmem:[%s3 + $0xdd8] sm:$0xff]
    %v715 = vld [vmem:[%s3 + $0xde0] sm:$0xff]
    %v716 = vld [vmem:[%s3 + $0xde8] sm:$0xff]
    %v717 = vld [vmem:[%s3 + $0xdf0] sm:$0xff]
    %v718 = vld [vmem:[%s3 + $0xdf8] sm:$0xff]
    %v719 = vld [vmem:[%s3 + $0xe00] sm:$0xff]
    %v720 = vld [vmem:[%s3 + $0xe08] sm:$0xff]
    %v721 = vld [vmem:[%s3 + $0xe10] sm:$0xff]
    %v722 = vld [vmem:[%s3 + $0xe18] sm:$0xff]
    %v723 = vld [vmem:[%s3 + $0xe20] sm:$0xff]
    %v724 = vld [vmem:[%s3 + $0xe28] sm:$0xff]
    %v725 = vld [vmem:[%s3 + $0xe30] sm:$0xff]
    %v726 = vld [vmem:[%s3 + $0xe38] sm:$0xff]
    %v727 = vld [vmem:[%s3 + $0xe40] sm:$0xff]
    %v728 = vld [vmem:[%s3 + $0xe48] sm:$0xff]
    %v729 = vld [vmem:[%s3 + $0xe50] sm:$0xff]
    %v730 = vld [vmem:[%s3 + $0xe58] sm:$0xff]
    %v731 = vld [vmem:[%s3 + $0xe60] sm:$0xff]
    %v732 = vld [vmem:[%s3 + $0xe68] sm:$0xff]
    %v733 = vld [vmem:[%s3 + $0xe70] sm:$0xff]
    %v734 = vld [vmem:[%s3 + $0xe78] sm:$0xff]
    %v735 = vld [vmem:[%s3 + $0xe80] sm:$0xff]
    %v736 = vld [vmem:[%s3 + $0xe88] sm:$0xff]
    %v737 = vld [vmem:[%s3 + $0xe90] sm:$0xff]
    %v738 = vld [vmem:[%s3 + $0xe98] sm:$0xff]
    %v739 = vld [vmem:[%s3 + $0xea0] sm:$0xff]
    %v740 = vld [vmem:[%s3 + $0xea8] sm:$0xff]
    %v741 = vld [vmem:[%s3 + $0xeb0] sm:$0xff]
    %v742 = vld [vmem:[%s3 + $0xeb8] sm:$0xff]
    %v743 = vld [vmem:[%s3 + $0xec0] sm:$0xff]
    %v744 = vld [vmem:[%s3 + $0xec8] sm:$0xff]
    %v745 = vld [vmem:[%s3 + $0xed0] sm:$0xff]
    %v746 = vld [vmem:[%s3 + $0xed8] sm:$0xff]
    %v747 = vld [vmem:[%s3 + $0xee0] sm:$0xff]
    %v748 = vld [vmem:[%s3 + $0xee8] sm:$0xff]
    %v749 = vld [vmem:[%s3 + $0xef0] sm:$0xff]
    %v750 = vld [vmem:[%s3 + $0xef8] sm:$0xff]
    %v751 = vld [vmem:[%s3 + $0xf00] sm:$0xff]
    %v752 = vld [vmem:[%s3 + $0xf08] sm:$0xff]
    %v753 = vld [vmem:[%s3 + $0xf10] sm:$0xff]
    %v754 = vld [vmem:[%s3 + $0xf18] sm:$0xff]
    %v755 = vld [vmem:[%s3 + $0xf20] sm:$0xff]
    %v756 = vld [vmem:[%s3 + $0xf28] sm:$0xff]
    %v757 = vld [vmem:[%s3 + $0xf30] sm:$0xff]
    %v758 = vld [vmem:[%s3 + $0xf38] sm:$0xff]
    %v759 = vld [vmem:[%s3 + $0xf40] sm:$0xff]
    %v760 = vld [vmem:[%s3 + $0xf48] sm:$0xff]
    %v761 = vld [vmem:[%s3 + $0xf50] sm:$0xff]
    %v762 = vld [vmem:[%s3 + $0xf58] sm:$0xff]
    %v763 = vld [vmem:[%s3 + $0xf60] sm:$0xff]
    %v764 = vld [vmem:[%s3 + $0xf68] sm:$0xff]
    %v765 = vld [vmem:[%s3 + $0xf70] sm:$0xff]
    %v766 = vld [vmem:[%s3 + $0xf78] sm:$0xff]
    %v767 = vld [vmem:[%s3 + $0xf80] sm:$0xff]
    %v768 = vld [vmem:[%s3 + $0xf88] sm:$0xff]
    %v769 = vld [vmem:[%s3 + $0xf90] sm:$0xff]
    %v770 = vld [vmem:[%s3 + $0xf98] sm:$0xff]
    %v771 = vld [vmem:[%s3 + $0xfa0] sm:$0xff]
    %v772 = vld [vmem:[%s3 + $0xfa8] sm:$0xff]
    %v773 = vld [vmem:[%s3 + $0xfb0] sm:$0xff]
    %v774 = vld [vmem:[%s3 + $0xfb8] sm:$0xff]
    %v775 = vld [vmem:[%s3 + $0xfc0] sm:$0xff]
    %v776 = vld [vmem:[%s3 + $0xfc8] sm:$0xff]
    %v777 = vld [vmem:[%s3 + $0xfd0] sm:$0xff]
    %v778 = vld [vmem:[%s3 + $0xfd8] sm:$0xff]
    %v779 = vld [vmem:[%s3 + $0xfe0] sm:$0xff]
    %v780 = vld [vmem:[%s3 + $0xfe8] sm:$0xff]
    %v781 = vld [vmem:[%s3 + $0xff0] sm:$0xff]
    %v782 = vld [vmem:[%s3 + $0xff8] sm:$0xff]
    %v783 = vld [vmem:[%s3 + $0x1000] sm:$0xff]
    %v784 = vld [vmem:[%s3 + $0x1008] sm:$0xff]
    %v785 = vld [vmem:[%s3 + $0x1010] sm:$0xff]
    %v786 = vld [vmem:[%s3 + $0x1018] sm:$0xff]
    %v787 = vld [vmem:[%s3 + $0x1020] sm:$0xff]
    %v788 = vld [vmem:[%s3 + $0x1028] sm:$0xff]
    %v789 = vld [vmem:[%s3 + $0x1030] sm:$0xff]
    %v790 = vld [vmem:[%s3 + $0x1038] sm:$0xff]
    %v791 = vld [vmem:[%s3 + $0x1040] sm:$0xff]
    %v792 = vld [vmem:[%s3 + $0x1048] sm:$0xff]
    %v793 = vld [vmem:[%s3 + $0x1050] sm:$0xff]
    %v794 = vld [vmem:[%s3 + $0x1058] sm:$0xff]
    %v795 = vld [vmem:[%s3 + $0x1060] sm:$0xff]
    %v796 = vld [vmem:[%s3 + $0x1068] sm:$0xff]
    %v797 = vld [vmem:[%s3 + $0x1070] sm:$0xff]
    %v798 = vld [vmem:[%s3 + $0x1078] sm:$0xff]
    %v799 = vld [vmem:[%s3 + $0x1080] sm:$0xff]
    %v800 = vld [vmem:[%s3 + $0x1088] sm:$0xff]
    %v801 = vld [vmem:[%s3 + $0x1090] sm:$0xff]
    %v802 = vld [vmem:[%s3 + $0x1098] sm:$0xff]
    %v803 = vld [vmem:[%s3 + $0x10a0] sm:$0xff]
    %v804 = vld [vmem:[%s3 + $0x10a8] sm:$0xff]
    %v805 = vld [vmem:[%s3 + $0x10b0] sm:$0xff]
    %v806 = vld [vmem:[%s3 + $0x10b8] sm:$0xff]
    %v807 = vld [vmem:[%s3 + $0x10c0] sm:$0xff]
    %v808 = vld [vmem:[%s3 + $0x10c8] sm:$0xff]
    %v809 = vld [vmem:[%s3 + $0x10d0] sm:$0xff]
    %v810 = vld [vmem:[%s3 + $0x10d8] sm:$0xff]
    %v811 = vld [vmem:[%s3 + $0x10e0] sm:$0xff]
    %v812 = vld [vmem:[%s3 + $0x10e8] sm:$0xff]
    %v813 = vld [vmem:[%s3 + $0x10f0] sm:$0xff]
    %v814 = vld [vmem:[%s3 + $0x10f8] sm:$0xff]
    %v815 = vld [vmem:[%s3 + $0x1100] sm:$0xff]
    %v816 = vld [vmem:[%s3 + $0x1108] sm:$0xff]
    %v817 = vld [vmem:[%s3 + $0x1110] sm:$0xff]
    %v818 = vld [vmem:[%s3 + $0x1118] sm:$0xff]
    %v819 = vld [vmem:[%s3 + $0x1120] sm:$0xff]
    %v820 = vld [vmem:[%s3 + $0x1128] sm:$0xff]
    %v821 = vld [vmem:[%s3 + $0x1130] sm:$0xff]
    %v822 = vld [vmem:[%s3 + $0x1138] sm:$0xff]
    %v823 = vld [vmem:[%s3 + $0x1140] sm:$0xff]
    %v824 = vld [vmem:[%s3 + $0x1148] sm:$0xff]
    %v825 = vld [vmem:[%s3 + $0x1150] sm:$0xff]
    %v826 = vld [vmem:[%s3 + $0x1158] sm:$0xff]
    %v827 = vld [vmem:[%s3 + $0x1160] sm:$0xff]
    %v828 = vld [vmem:[%s3 + $0x1168] sm:$0xff]
    %v829 = vld [vmem:[%s3 + $0x1170] sm:$0xff]
    %v830 = vld [vmem:[%s3 + $0x1178] sm:$0xff]
    %v831 = vld [vmem:[%s3 + $0x1180] sm:$0xff]
    %v832 = vld [vmem:[%s3 + $0x1188] sm:$0xff]
    %v833 = vld [vmem:[%s3 + $0x1190] sm:$0xff]
    %v834 = vld [vmem:[%s3 + $0x1198] sm:$0xff]
    %v835 = vld [vmem:[%s3 + $0x11a0] sm:$0xff]
    %v836 = vld [vmem:[%s3 + $0x11a8] sm:$0xff]
    %v837 = vld [vmem:[%s3 + $0x11b0] sm:$0xff]
    %v838 = vld [vmem:[%s3 + $0x11b8] sm:$0xff]
    %v839 = vld [vmem:[%s3 + $0x11c0] sm:$0xff]
    %v840 = vld [vmem:[%s3 + $0x11c8] sm:$0xff]
    %v841 = vld [vmem:[%s3 + $0x11d0] sm:$0xff]
    %v842 = vld [vmem:[%s3 + $0x11d8] sm:$0xff]
    %v843 = vld [vmem:[%s3 + $0x11e0] sm:$0xff]
    %v844 = vld [vmem:[%s3 + $0x11e8] sm:$0xff]
    %v845 = vld [vmem:[%s3 + $0x11f0] sm:$0xff]
    %v846 = vld [vmem:[%s3 + $0x11f8] sm:$0xff]
    %v847 = vld [vmem:[%s3 + $0x1200] sm:$0xff]
    %v848 = vld [vmem:[%s3 + $0x1208] sm:$0xff]
    %v849 = vld [vmem:[%s3 + $0x1210] sm:$0xff]
    %v850 = vld [vmem:[%s3 + $0x1218] sm:$0xff]
    %v851 = vld [vmem:[%s3 + $0x1220] sm:$0xff]
    %v852 = vld [vmem:[%s3 + $0x1228] sm:$0xff]
    %v853 = vld [vmem:[%s3 + $0x1230] sm:$0xff]
    %v854 = vld [vmem:[%s3 + $0x1238] sm:$0xff]
    %v855 = vld [vmem:[%s3 + $0x1240] sm:$0xff]
    %v856 = vld [vmem:[%s3 + $0x1248] sm:$0xff]
    %v857 = vld [vmem:[%s3 + $0x1250] sm:$0xff]
    %v858 = vld [vmem:[%s3 + $0x1258] sm:$0xff]
    %v859 = vld [vmem:[%s3 + $0x1260] sm:$0xff]
    %v860 = vld [vmem:[%s3 + $0x1268] sm:$0xff]
    %v861 = vld [vmem:[%s3 + $0x1270] sm:$0xff]
    %v862 = vld [vmem:[%s3 + $0x1278] sm:$0xff]
    %v863 = vld [vmem:[%s3 + $0x1280] sm:$0xff]
    %v864 = vld [vmem:[%s3 + $0x1288] sm:$0xff]
    %v865 = vld [vmem:[%s3 + $0x1290] sm:$0xff]
    %v866 = vld [vmem:[%s3 + $0x1298] sm:$0xff]
    %v867 = vld [vmem:[%s3 + $0x12a0] sm:$0xff]
    %v868 = vld [vmem:[%s3 + $0x12a8] sm:$0xff]
    %v869 = vld [vmem:[%s3 + $0x12b0] sm:$0xff]
    %v870 = vld [vmem:[%s3 + $0x12b8] sm:$0xff]
    %v871 = vld [vmem:[%s3 + $0x12c0] sm:$0xff]
    %v872 = vld [vmem:[%s3 + $0x12c8] sm:$0xff]
    %v873 = vld [vmem:[%s3 + $0x12d0] sm:$0xff]
    %v874 = vld [vmem:[%s3 + $0x12d8] sm:$0xff]
    %v875 = vld [vmem:[%s3 + $0x12e0] sm:$0xff]
    %v876 = vld [vmem:[%s3 + $0x12e8] sm:$0xff]
    %v877 = vld [vmem:[%s3 + $0x12f0] sm:$0xff]
    %v878 = vld [vmem:[%s3 + $0x12f8] sm:$0xff]
    %v879 = vld [vmem:[%s3 + $0x1300] sm:$0xff]
    %v880 = vld [vmem:[%s3 + $0x1308] sm:$0xff]
    %v881 = vld [vmem:[%s3 + $0x1310] sm:$0xff]
    %v882 = vld [vmem:[%s3 + $0x1318] sm:$0xff]
    %v883 = vld [vmem:[%s3 + $0x1320] sm:$0xff]
    %v884 = vld [vmem:[%s3 + $0x1328] sm:$0xff]
    %v885 = vld [vmem:[%s3 + $0x1330] sm:$0xff]
    %v886 = vld [vmem:[%s3 + $0x1338] sm:$0xff]
    %v887 = vld [vmem:[%s3 + $0x1340] sm:$0xff]
    %v888 = vld [vmem:[%s3 + $0x1348] sm:$0xff]
    %v889 = vld [vmem:[%s3 + $0x1350] sm:$0xff]
    %v890 = vld [vmem:[%s3 + $0x1358] sm:$0xff]
    %v891 = vld [vmem:[%s3 + $0x1360] sm:$0xff]
    %v892 = vld [vmem:[%s3 + $0x1368] sm:$0xff]
    %v893 = vld [vmem:[%s3 + $0x1370] sm:$0xff]
    %v894 = vld [vmem:[%s3 + $0x1378] sm:$0xff]
    %v895 = vld [vmem:[%s3 + $0x1380] sm:$0xff]
    %v896 = vld [vmem:[%s3 + $0x1388] sm:$0xff]
    %v897 = vld [vmem:[%s3 + $0x1390] sm:$0xff]
    %v898 = vld [vmem:[%s3 + $0x1398] sm:$0xff]
    %v899 = vld [vmem:[%s3 + $0x13a0] sm:$0xff]
    %v900 = vld [vmem:[%s3 + $0x13a8] sm:$0xff]
    %v901 = vld [vmem:[%s3 + $0x13b0] sm:$0xff]
    %v902 = vld [vmem:[%s3 + $0x13b8] sm:$0xff]
    %v903 = vld [vmem:[%s3 + $0x13c0] sm:$0xff]
    %v904 = vld [vmem:[%s3 + $0x13c8] sm:$0xff]
    %v905 = vld [vmem:[%s3 + $0x13d0] sm:$0xff]
    %v906 = vld [vmem:[%s3 + $0x13d8] sm:$0xff]
    %v907 = vld [vmem:[%s3 + $0x13e0] sm:$0xff]
    %v908 = vld [vmem:[%s3 + $0x13e8] sm:$0xff]
    %v909 = vld [vmem:[%s3 + $0x13f0] sm:$0xff]
    %v910 = vld [vmem:[%s3 + $0x13f8] sm:$0xff]
    %v911 = vld [vmem:[%s3 + $0x1400] sm:$0xff]
    %v912 = vld [vmem:[%s3 + $0x1408] sm:$0xff]
    %v913 = vld [vmem:[%s3 + $0x1410] sm:$0xff]
    %v914 = vld [vmem:[%s3 + $0x1418] sm:$0xff]
    %v915 = vld [vmem:[%s3 + $0x1420] sm:$0xff]
    %v916 = vld [vmem:[%s3 + $0x1428] sm:$0xff]
    %v917 = vld [vmem:[%s3 + $0x1430] sm:$0xff]
    %v918 = vld [vmem:[%s3 + $0x1438] sm:$0xff]
    %v919 = vld [vmem:[%s3 + $0x1440] sm:$0xff]
    %v920 = vld [vmem:[%s3 + $0x1448] sm:$0xff]
    %v921 = vld [vmem:[%s3 + $0x1450] sm:$0xff]
    %v922 = vld [vmem:[%s3 + $0x1458] sm:$0xff]
    %v923 = vld [vmem:[%s3 + $0x1460] sm:$0xff]
    %v924 = vld [vmem:[%s3 + $0x1468] sm:$0xff]
    %v925 = vld [vmem:[%s3 + $0x1470] sm:$0xff]
    %v926 = vld [vmem:[%s3 + $0x1478] sm:$0xff]
    %v927 = vld [vmem:[%s3 + $0x1480] sm:$0xff]
    %v928 = vld [vmem:[%s3 + $0x1488] sm:$0xff]
    %v929 = vld [vmem:[%s3 + $0x1490] sm:$0xff]
    %v930 = vld [vmem:[%s3 + $0x1498] sm:$0xff]
    %v931 = vld [vmem:[%s3 + $0x14a0] sm:$0xff]
    %v932 = vld [vmem:[%s3 + $0x14a8] sm:$0xff]
    %v933 = vld [vmem:[%s3 + $0x14b0] sm:$0xff]
    %v934 = vld [vmem:[%s3 + $0x14b8] sm:$0xff]
    %v935 = vld [vmem:[%s3 + $0x14c0] sm:$0xff]
    %v936 = vld [vmem:[%s3 + $0x14c8] sm:$0xff]
    %v937 = vld [vmem:[%s3 + $0x14d0] sm:$0xff]
    %v938 = vld [vmem:[%s3 + $0x14d8] sm:$0xff]
    %v939 = vld [vmem:[%s3 + $0x14e0] sm:$0xff]
    %v940 = vld [vmem:[%s3 + $0x14e8] sm:$0xff]
    %v941 = vld [vmem:[%s3 + $0x14f0] sm:$0xff]
    %v942 = vld [vmem:[%s3 + $0x14f8] sm:$0xff]
    %v943 = vld [vmem:[%s3 + $0x1500] sm:$0xff]
    %v944 = vld [vmem:[%s3 + $0x1508] sm:$0xff]
    %v945 = vld [vmem:[%s3 + $0x1510] sm:$0xff]
    %v946 = vld [vmem:[%s3 + $0x1518] sm:$0xff]
    %v947 = vld [vmem:[%s3 + $0x1520] sm:$0xff]
    %v948 = vld [vmem:[%s3 + $0x1528] sm:$0xff]
    %v949 = vld [vmem:[%s3 + $0x1530] sm:$0xff]
    %v950 = vld [vmem:[%s3 + $0x1538] sm:$0xff]
    %v951 = vld [vmem:[%s3 + $0x1540] sm:$0xff]
    %v952 = vld [vmem:[%s3 + $0x1548] sm:$0xff]
    %v953 = vld [vmem:[%s3 + $0x1550] sm:$0xff]
    %v954 = vld [vmem:[%s3 + $0x1558] sm:$0xff]
    %v955 = vld [vmem:[%s3 + $0x1560] sm:$0xff]
    %v956 = vld [vmem:[%s3 + $0x1568] sm:$0xff]
    %v957 = vld [vmem:[%s3 + $0x1570] sm:$0xff]
    %v958 = vld [vmem:[%s3 + $0x1578] sm:$0xff]
    %v959 = vld [vmem:[%s3 + $0x1580] sm:$0xff]
    %v960 = vld [vmem:[%s3 + $0x1588] sm:$0xff]
    %v961 = vld [vmem:[%s3 + $0x1590] sm:$0xff]
    %v962 = vld [vmem:[%s3 + $0x1598] sm:$0xff]
    %v963 = vld [vmem:[%s3 + $0x15a0] sm:$0xff]
    %v964 = vld [vmem:[%s3 + $0x15a8] sm:$0xff]
    %v965 = vld [vmem:[%s3 + $0x15b0] sm:$0xff]
    %v966 = vld [vmem:[%s3 + $0x15b8] sm:$0xff]
    %v967 = vld [vmem:[%s3 + $0x15c0] sm:$0xff]
    %v968 = vld [vmem:[%s3 + $0x15c8] sm:$0xff]
    %v969 = vld [vmem:[%s3 + $0x15d0] sm:$0xff]
    %v970 = vld [vmem:[%s3 + $0x15d8] sm:$0xff]
    %v971 = vld [vmem:[%s3 + $0x15e0] sm:$0xff]
    %v972 = vld [vmem:[%s3 + $0x15e8] sm:$0xff]
    %v973 = vld [vmem:[%s3 + $0x15f0] sm:$0xff]
    %v974 = vld [vmem:[%s3 + $0x15f8] sm:$0xff]
    %v975 = vld [vmem:[%s3 + $0x1600] sm:$0xff]
    %v976 = vld [vmem:[%s3 + $0x1608] sm:$0xff]
    %v977 = vld [vmem:[%s3 + $0x1610] sm:$0xff]
    %v978 = vld [vmem:[%s3 + $0x1618] sm:$0xff]
    %v979 = vld [vmem:[%s3 + $0x1620] sm:$0xff]
    %v980 = vld [vmem:[%s3 + $0x1628] sm:$0xff]
    %v981 = vld [vmem:[%s3 + $0x1630] sm:$0xff]
    %v982 = vld [vmem:[%s3 + $0x1638] sm:$0xff]
    %v983 = vld [vmem:[%s3 + $0x1640] sm:$0xff]
    %v984 = vld [vmem:[%s3 + $0x1648] sm:$0xff]
    %v985 = vld [vmem:[%s3 + $0x1650] sm:$0xff]
    %v986 = vld [vmem:[%s3 + $0x1658] sm:$0xff]
    %v987 = vld [vmem:[%s3 + $0x1660] sm:$0xff]
    %v988 = vld [vmem:[%s3 + $0x1668] sm:$0xff]
    %v989 = vld [vmem:[%s3 + $0x1670] sm:$0xff]
    %v990 = vld [vmem:[%s3 + $0x1678] sm:$0xff]
    %v991 = vld [vmem:[%s3 + $0x1680] sm:$0xff]
    %v992 = vld [vmem:[%s3 + $0x1688] sm:$0xff]
    %v993 = vld [vmem:[%s3 + $0x1690] sm:$0xff]
    %v994 = vld [vmem:[%s3 + $0x1698] sm:$0xff]
    %v995 = vld [vmem:[%s3 + $0x16a0] sm:$0xff]
    %v996 = vld [vmem:[%s3 + $0x16a8] sm:$0xff]
    %v997 = vld [vmem:[%s3 + $0x16b0] sm:$0xff]
    %v998 = vld [vmem:[%s3 + $0x16b8] sm:$0xff]
    %v999 = vld [vmem:[%s3 + $0x16c0] sm:$0xff]
    %v1000 = vld [vmem:[%s3 + $0x16c8] sm:$0xff]
    %v1001 = vld [vmem:[%s3 + $0x16d0] sm:$0xff]
    %v1002 = vld [vmem:[%s3 + $0x16d8] sm:$0xff]
    %v1003 = vld [vmem:[%s3 + $0x16e0] sm:$0xff]
    %v1004 = vld [vmem:[%s3 + $0x16e8] sm:$0xff]
    %v1005 = vld [vmem:[%s3 + $0x16f0] sm:$0xff]
    %v1006 = vld [vmem:[%s3 + $0x16f8] sm:$0xff]
    %v1007 = vld [vmem:[%s3 + $0x1700] sm:$0xff]
    %v1008 = vld [vmem:[%s3 + $0x1708] sm:$0xff]
    %v1009 = vld [vmem:[%s3 + $0x1710] sm:$0xff]
    %v1010 = vld [vmem:[%s3 + $0x1718] sm:$0xff]
    %v1011 = vld [vmem:[%s3 + $0x1720] sm:$0xff]
    %v1012 = vld [vmem:[%s3 + $0x1728] sm:$0xff]
    %v1013 = vld [vmem:[%s3 + $0x1730] sm:$0xff]
    %v1014 = vld [vmem:[%s3 + $0x1738] sm:$0xff]
    %v1015 = vld [vmem:[%s3 + $0x1740] sm:$0xff]
    %v1016 = vld [vmem:[%s3 + $0x1748] sm:$0xff]
    %v1017 = vld [vmem:[%s3 + $0x1750] sm:$0xff]
    %v1018 = vld [vmem:[%s3 + $0x1758] sm:$0xff]
    %v1019 = vld [vmem:[%s3 + $0x1760] sm:$0xff]
    %v1020 = vld [vmem:[%s3 + $0x1768] sm:$0xff]
    %v1021 = vld [vmem:[%s3 + $0x1770] sm:$0xff]
    %v1022 = vld [vmem:[%s3 + $0x1778] sm:$0xff]
    %v1023 = vld [vmem:[%s3 + $0x1780] sm:$0xff]
    %v1024 = vld [vmem:[%s3 + $0x1788] sm:$0xff]
    %v1025 = vld [vmem:[%s3 + $0x1790] sm:$0xff]
    %v1026 = vld [vmem:[%s3 + $0x1798] sm:$0xff]
    %v1027 = vld [vmem:[%s3 + $0x17a0] sm:$0xff]
    %v1028 = vld [vmem:[%s3 + $0x17a8] sm:$0xff]
    %v1029 = vld [vmem:[%s3 + $0x17b0] sm:$0xff]
    %v1030 = vld [vmem:[%s3 + $0x17b8] sm:$0xff]
    %v1031 = vld [vmem:[%s3 + $0x17c0] sm:$0xff]
    %v1032 = vld [vmem:[%s3 + $0x17c8] sm:$0xff]
    %v1033 = vld [vmem:[%s3 + $0x17d0] sm:$0xff]
    %v1034 = vld [vmem:[%s3 + $0x17d8] sm:$0xff]
    %v1035 = vld [vmem:[%s3 + $0x17e0] sm:$0xff]
    %v1036 = vld [vmem:[%s3 + $0x17e8] sm:$0xff]
    %v1037 = vld [vmem:[%s3 + $0x17f0] sm:$0xff]
    %v1038 = vld [vmem:[%s3 + $0x17f8] sm:$0xff]
    %v1039 = vld [vmem:[%s3 + $0x1800] sm:$0xff]
    %v1040 = vld [vmem:[%s3 + $0x1808] sm:$0xff]
    %v1041 = vld [vmem:[%s3 + $0x1810] sm:$0xff]
    %v1042 = vld [vmem:[%s3 + $0x1818] sm:$0xff]
    %v1043 = vld [vmem:[%s3 + $0x1820] sm:$0xff]
    %v1044 = vld [vmem:[%s3 + $0x1828] sm:$0xff]
    %v1045 = vld [vmem:[%s3 + $0x1830] sm:$0xff]
    %v1046 = vld [vmem:[%s3 + $0x1838] sm:$0xff]
    %v1047 = vld [vmem:[%s3 + $0x1840] sm:$0xff]
    %v1048 = vld [vmem:[%s3 + $0x1848] sm:$0xff]
    %v1049 = vld [vmem:[%s3 + $0x1850] sm:$0xff]
    %v1050 = vld [vmem:[%s3 + $0x1858] sm:$0xff]
    %v1051 = vld [vmem:[%s3 + $0x1860] sm:$0xff]
    %v1052 = vld [vmem:[%s3 + $0x1868] sm:$0xff]
    %v1053 = vld [vmem:[%s3 + $0x1870] sm:$0xff]
    %v1054 = vld [vmem:[%s3 + $0x1878] sm:$0xff]
    %v1055 = vld [vmem:[%s4] sm:$0xff]
    %v1056 = vld [vmem:[%s4 + $0x8] sm:$0xff]
    %v1057 = vld [vmem:[%s4 + $0x10] sm:$0xff]
    %v1058 = vld [vmem:[%s4 + $0x18] sm:$0xff]
    %v1059 = vld [vmem:[%s4 + $0x20] sm:$0xff]
    %v1060 = vld [vmem:[%s4 + $0x28] sm:$0xff]
    %v1061 = vld [vmem:[%s4 + $0x30] sm:$0xff]
    %v1062 = vld [vmem:[%s4 + $0x38] sm:$0xff]
    %v1063 = vld [vmem:[%s4 + $0x40] sm:$0xff]
    %v1064 = vld [vmem:[%s4 + $0x48] sm:$0xff]
    %v1065 = vld [vmem:[%s4 + $0x50] sm:$0xff]
    %v1066 = vld [vmem:[%s4 + $0x58] sm:$0xff]
    %v1067 = vld [vmem:[%s4 + $0x60] sm:$0xff]
    %v1068 = vld [vmem:[%s4 + $0x68] sm:$0xff]
    %v1069 = vld [vmem:[%s4 + $0x70] sm:$0xff]
    %v1070 = vld [vmem:[%s4 + $0x78] sm:$0xff]
    %v1071 = vld [vmem:[%s4 + $0x80] sm:$0xff]
    %v1072 = vld [vmem:[%s4 + $0x88] sm:$0xff]
    %v1073 = vld [vmem:[%s4 + $0x90] sm:$0xff]
    %v1074 = vld [vmem:[%s4 + $0x98] sm:$0xff]
    %v1075 = vld [vmem:[%s4 + $0xa0] sm:$0xff]
    %v1076 = vld [vmem:[%s4 + $0xa8] sm:$0xff]
    %v1077 = vld [vmem:[%s4 + $0xb0] sm:$0xff]
    %v1078 = vld [vmem:[%s4 + $0xb8] sm:$0xff]
    %v1079 = vld [vmem:[%s4 + $0xc0] sm:$0xff]
    %v1080 = vld [vmem:[%s4 + $0xc8] sm:$0xff]
    %v1081 = vld [vmem:[%s4 + $0xd0] sm:$0xff]
    %v1082 = vld [vmem:[%s4 + $0xd8] sm:$0xff]
    %v1083 = vld [vmem:[%s4 + $0xe0] sm:$0xff]
    %v1084 = vld [vmem:[%s4 + $0xe8] sm:$0xff]
    %v1085 = vld [vmem:[%s4 + $0xf0] sm:$0xff]
    %v1086 = vld [vmem:[%s4 + $0xf8] sm:$0xff]
    %v1087 = vld [vmem:[%s4 + $0x100] sm:$0xff]
    %v1088 = vld [vmem:[%s4 + $0x108] sm:$0xff]
    %v1089 = vld [vmem:[%s4 + $0x110] sm:$0xff]
    %v1090 = vld [vmem:[%s4 + $0x118] sm:$0xff]
    %v1091 = vld [vmem:[%s4 + $0x120] sm:$0xff]
    %v1092 = vld [vmem:[%s4 + $0x128] sm:$0xff]
    %v1093 = vld [vmem:[%s4 + $0x130] sm:$0xff]
    %v1094 = vld [vmem:[%s4 + $0x138] sm:$0xff]
    %v1095 = vld [vmem:[%s4 + $0x140] sm:$0xff]
    %v1096 = vld [vmem:[%s4 + $0x148] sm:$0xff]
    %v1097 = vld [vmem:[%s4 + $0x150] sm:$0xff]
    %v1098 = vld [vmem:[%s4 + $0x158] sm:$0xff]
    %v1099 = vld [vmem:[%s4 + $0x160] sm:$0xff]
    %v1100 = vld [vmem:[%s4 + $0x168] sm:$0xff]
    %v1101 = vld [vmem:[%s4 + $0x170] sm:$0xff]
    %v1102 = vld [vmem:[%s4 + $0x178] sm:$0xff]
    %v1103 = vld [vmem:[%s4 + $0x180] sm:$0xff]
    %v1104 = vld [vmem:[%s4 + $0x188] sm:$0xff]
    %v1105 = vld [vmem:[%s4 + $0x190] sm:$0xff]
    %v1106 = vld [vmem:[%s4 + $0x198] sm:$0xff]
    %v1107 = vld [vmem:[%s4 + $0x1a0] sm:$0xff]
    %v1108 = vld [vmem:[%s4 + $0x1a8] sm:$0xff]
    %v1109 = vld [vmem:[%s4 + $0x1b0] sm:$0xff]
    %v1110 = vld [vmem:[%s4 + $0x1b8] sm:$0xff]
    %v1111 = vld [vmem:[%s4 + $0x1c0] sm:$0xff]
    %v1112 = vld [vmem:[%s4 + $0x1c8] sm:$0xff]
    %v1113 = vld [vmem:[%s4 + $0x1d0] sm:$0xff]
    %v1114 = vld [vmem:[%s4 + $0x1d8] sm:$0xff]
    %v1115 = vld [vmem:[%s4 + $0x1e0] sm:$0xff]
    %v1116 = vld [vmem:[%s4 + $0x1e8] sm:$0xff]
    %v1117 = vld [vmem:[%s4 + $0x1f0] sm:$0xff]
    %v1118 = vld [vmem:[%s4 + $0x1f8] sm:$0xff]
    %v1119 = vld [vmem:[%s4 + $0x200] sm:$0xff]
    %v1120 = vld [vmem:[%s4 + $0x208] sm:$0xff]
    %v1121 = vld [vmem:[%s4 + $0x210] sm:$0xff]
    %v1122 = vld [vmem:[%s4 + $0x218] sm:$0xff]
    %v1123 = vld [vmem:[%s4 + $0x220] sm:$0xff]
    %v1124 = vld [vmem:[%s4 + $0x228] sm:$0xff]
    %v1125 = vld [vmem:[%s4 + $0x230] sm:$0xff]
    %v1126 = vld [vmem:[%s4 + $0x238] sm:$0xff]
    %v1127 = vld [vmem:[%s4 + $0x240] sm:$0xff]
    %v1128 = vld [vmem:[%s4 + $0x248] sm:$0xff]
    %v1129 = vld [vmem:[%s4 + $0x250] sm:$0xff]
    %v1130 = vld [vmem:[%s4 + $0x258] sm:$0xff]
    %v1131 = vld [vmem:[%s4 + $0x260] sm:$0xff]
    %v1132 = vld [vmem:[%s4 + $0x268] sm:$0xff]
    %v1133 = vld [vmem:[%s4 + $0x270] sm:$0xff]
    %v1134 = vld [vmem:[%s4 + $0x278] sm:$0xff]
    %v1135 = vld [vmem:[%s4 + $0x280] sm:$0xff]
    %v1136 = vld [vmem:[%s4 + $0x288] sm:$0xff]
    %v1137 = vld [vmem:[%s4 + $0x290] sm:$0xff]
    %v1138 = vld [vmem:[%s4 + $0x298] sm:$0xff]
    %v1139 = vld [vmem:[%s4 + $0x2a0] sm:$0xff]
    %v1140 = vld [vmem:[%s4 + $0x2a8] sm:$0xff]
    %v1141 = vld [vmem:[%s4 + $0x2b0] sm:$0xff]
    %v1142 = vld [vmem:[%s4 + $0x2b8] sm:$0xff]
    %v1143 = vld [vmem:[%s4 + $0x2c0] sm:$0xff]
    %v1144 = vld [vmem:[%s4 + $0x2c8] sm:$0xff]
    %v1145 = vld [vmem:[%s4 + $0x2d0] sm:$0xff]
    %v1146 = vld [vmem:[%s4 + $0x2d8] sm:$0xff]
    %v1147 = vld [vmem:[%s4 + $0x2e0] sm:$0xff]
    %v1148 = vld [vmem:[%s4 + $0x2e8] sm:$0xff]
    %v1149 = vld [vmem:[%s4 + $0x2f0] sm:$0xff]
    %v1150 = vld [vmem:[%s4 + $0x2f8] sm:$0xff]
    %v1151 = vld [vmem:[%s4 + $0x300] sm:$0xff]
    %v1152 = vld [vmem:[%s4 + $0x308] sm:$0xff]
    %v1153 = vld [vmem:[%s4 + $0x310] sm:$0xff]
    %v1154 = vld [vmem:[%s4 + $0x318] sm:$0xff]
    %v1155 = vld [vmem:[%s4 + $0x320] sm:$0xff]
    %v1156 = vld [vmem:[%s4 + $0x328] sm:$0xff]
    %v1157 = vld [vmem:[%s4 + $0x330] sm:$0xff]
    %v1158 = vld [vmem:[%s4 + $0x338] sm:$0xff]
    %v1159 = vld [vmem:[%s4 + $0x340] sm:$0xff]
    %v1160 = vld [vmem:[%s4 + $0x348] sm:$0xff]
    %v1161 = vld [vmem:[%s4 + $0x350] sm:$0xff]
    %v1162 = vld [vmem:[%s4 + $0x358] sm:$0xff]
    %v1163 = vld [vmem:[%s4 + $0x360] sm:$0xff]
    %v1164 = vld [vmem:[%s4 + $0x368] sm:$0xff]
    %v1165 = vld [vmem:[%s4 + $0x370] sm:$0xff]
    %v1166 = vld [vmem:[%s4 + $0x378] sm:$0xff]
    %v1167 = vld [vmem:[%s4 + $0x380] sm:$0xff]
    %v1168 = vld [vmem:[%s4 + $0x388] sm:$0xff]
    %v1169 = vld [vmem:[%s4 + $0x390] sm:$0xff]
    %v1170 = vld [vmem:[%s4 + $0x398] sm:$0xff]
    %v1171 = vld [vmem:[%s4 + $0x3a0] sm:$0xff]
    %v1172 = vld [vmem:[%s4 + $0x3a8] sm:$0xff]
    %v1173 = vld [vmem:[%s4 + $0x3b0] sm:$0xff]
    %v1174 = vld [vmem:[%s4 + $0x3b8] sm:$0xff]
    %v1175 = vld [vmem:[%s4 + $0x3c0] sm:$0xff]
    %v1176 = vld [vmem:[%s4 + $0x3c8] sm:$0xff]
    %v1177 = vld [vmem:[%s4 + $0x3d0] sm:$0xff]
    %v1178 = vld [vmem:[%s4 + $0x3d8] sm:$0xff]
    %v1179 = vld [vmem:[%s4 + $0x3e0] sm:$0xff]
    %v1180 = vld [vmem:[%s4 + $0x3e8] sm:$0xff]
    %v1181 = vld [vmem:[%s4 + $0x3f0] sm:$0xff]
    %v1182 = vld [vmem:[%s4 + $0x3f8] sm:$0xff]
    %v1311 = vunpack.c.l.b16 %v1055
    %v1312 = vunpack.c.h.b16 %v1055
    %v1313 = vunpack.c.l.b16 %v1056
    %v1314 = vunpack.c.h.b16 %v1056
    %v1315 = vunpack.c.l.b16 %v1057
    %v1316 = vunpack.c.h.b16 %v1057
    %v1317 = vunpack.c.l.b16 %v1058
    %v1318 = vunpack.c.h.b16 %v1058
    %v1319 = vunpack.c.l.b16 %v1059
    %v1320 = vunpack.c.h.b16 %v1059
    %v1321 = vunpack.c.l.b16 %v1060
    %v1322 = vunpack.c.h.b16 %v1060
    %v1323 = vunpack.c.l.b16 %v1061
    %v1324 = vunpack.c.h.b16 %v1061
    %v1325 = vunpack.c.l.b16 %v1062
    %v1326 = vunpack.c.h.b16 %v1062
    %v1327 = vunpack.c.l.b16 %v1063
    %v1328 = vunpack.c.h.b16 %v1063
    %v1329 = vunpack.c.l.b16 %v1064
    %v1330 = vunpack.c.h.b16 %v1064
    %v1331 = vunpack.c.l.b16 %v1065
    %v1332 = vunpack.c.h.b16 %v1065
    %v1333 = vunpack.c.l.b16 %v1066
    %v1334 = vunpack.c.h.b16 %v1066
    %v1335 = vunpack.c.l.b16 %v1067
    %v1336 = vunpack.c.h.b16 %v1067
    %v1337 = vunpack.c.l.b16 %v1068
    %v1338 = vunpack.c.h.b16 %v1068
    %v1339 = vunpack.c.l.b16 %v1069
    %v1340 = vunpack.c.h.b16 %v1069
    %v1341 = vunpack.c.l.b16 %v1070
    %v1342 = vunpack.c.h.b16 %v1070
    %v1343 = vunpack.c.l.b16 %v1071
    %v1344 = vunpack.c.h.b16 %v1071
    %v1345 = vunpack.c.l.b16 %v1072
    %v1346 = vunpack.c.h.b16 %v1072
    %v1347 = vunpack.c.l.b16 %v1073
    %v1348 = vunpack.c.h.b16 %v1073
    %v1349 = vunpack.c.l.b16 %v1074
    %v1350 = vunpack.c.h.b16 %v1074
    %v1351 = vunpack.c.l.b16 %v1075
    %v1352 = vunpack.c.h.b16 %v1075
    %v1353 = vunpack.c.l.b16 %v1076
    %v1354 = vunpack.c.h.b16 %v1076
    %v1355 = vunpack.c.l.b16 %v1077
    %v1356 = vunpack.c.h.b16 %v1077
    %v1357 = vunpack.c.l.b16 %v1078
    %v1358 = vunpack.c.h.b16 %v1078
    %v1359 = vunpack.c.l.b16 %v1079
    %v1360 = vunpack.c.h.b16 %v1079
    %v1361 = vunpack.c.l.b16 %v1080
    %v1362 = vunpack.c.h.b16 %v1080
    %v1363 = vunpack.c.l.b16 %v1081
    %v1364 = vunpack.c.h.b16 %v1081
    %v1365 = vunpack.c.l.b16 %v1082
    %v1366 = vunpack.c.h.b16 %v1082
    %v1367 = vunpack.c.l.b16 %v1083
    %v1368 = vunpack.c.h.b16 %v1083
    %v1369 = vunpack.c.l.b16 %v1084
    %v1370 = vunpack.c.h.b16 %v1084
    %v1371 = vunpack.c.l.b16 %v1085
    %v1372 = vunpack.c.h.b16 %v1085
    %v1373 = vunpack.c.l.b16 %v1086
    %v1374 = vunpack.c.h.b16 %v1086
    %v1375 = vunpack.c.l.b16 %v1087
    %v1376 = vunpack.c.h.b16 %v1087
    %v1377 = vunpack.c.l.b16 %v1088
    %v1378 = vunpack.c.h.b16 %v1088
    %v1379 = vunpack.c.l.b16 %v1089
    %v1380 = vunpack.c.h.b16 %v1089
    %v1381 = vunpack.c.l.b16 %v1090
    %v1382 = vunpack.c.h.b16 %v1090
    %v1383 = vunpack.c.l.b16 %v1091
    %v1384 = vunpack.c.h.b16 %v1091
    %v1385 = vunpack.c.l.b16 %v1092
    %v1386 = vunpack.c.h.b16 %v1092
    %v1387 = vunpack.c.l.b16 %v1093
    %v1388 = vunpack.c.h.b16 %v1093
    %v1389 = vunpack.c.l.b16 %v1094
    %v1390 = vunpack.c.h.b16 %v1094
    %v1391 = vunpack.c.l.b16 %v1095
    %v1392 = vunpack.c.h.b16 %v1095
    %v1393 = vunpack.c.l.b16 %v1096
    %v1394 = vunpack.c.h.b16 %v1096
    %v1395 = vunpack.c.l.b16 %v1097
    %v1396 = vunpack.c.h.b16 %v1097
    %v1397 = vunpack.c.l.b16 %v1098
    %v1398 = vunpack.c.h.b16 %v1098
    %v1399 = vunpack.c.l.b16 %v1099
    %v1400 = vunpack.c.h.b16 %v1099
    %v1401 = vunpack.c.l.b16 %v1100
    %v1402 = vunpack.c.h.b16 %v1100
    %v1403 = vunpack.c.l.b16 %v1101
    %v1404 = vunpack.c.h.b16 %v1101
    %v1405 = vunpack.c.l.b16 %v1102
    %v1406 = vunpack.c.h.b16 %v1102
    %v1407 = vunpack.c.l.b16 %v1103
    %v1408 = vunpack.c.h.b16 %v1103
    %v1409 = vunpack.c.l.b16 %v1104
    %v1410 = vunpack.c.h.b16 %v1104
    %v1411 = vunpack.c.l.b16 %v1105
    %v1412 = vunpack.c.h.b16 %v1105
    %v1413 = vunpack.c.l.b16 %v1106
    %v1414 = vunpack.c.h.b16 %v1106
    %v1415 = vunpack.c.l.b16 %v1107
    %v1416 = vunpack.c.h.b16 %v1107
    %v1417 = vunpack.c.l.b16 %v1108
    %v1418 = vunpack.c.h.b16 %v1108
    %v1419 = vunpack.c.l.b16 %v1109
    %v1420 = vunpack.c.h.b16 %v1109
    %v1421 = vunpack.c.l.b16 %v1110
    %v1422 = vunpack.c.h.b16 %v1110
    %v1423 = vunpack.c.l.b16 %v1111
    %v1424 = vunpack.c.h.b16 %v1111
    %v1425 = vunpack.c.l.b16 %v1112
    %v1426 = vunpack.c.h.b16 %v1112
    %v1427 = vunpack.c.l.b16 %v1113
    %v1428 = vunpack.c.h.b16 %v1113
    %v1429 = vunpack.c.l.b16 %v1114
    %v1430 = vunpack.c.h.b16 %v1114
    %v1431 = vunpack.c.l.b16 %v1115
    %v1432 = vunpack.c.h.b16 %v1115
    %v1433 = vunpack.c.l.b16 %v1116
    %v1434 = vunpack.c.h.b16 %v1116
    %v1435 = vunpack.c.l.b16 %v1117
    %v1436 = vunpack.c.h.b16 %v1117
    %v1437 = vunpack.c.l.b16 %v1118
    %v1438 = vunpack.c.h.b16 %v1118
    %v1439 = vunpack.c.l.b16 %v1119
    %v1440 = vunpack.c.h.b16 %v1119
    %v1441 = vunpack.c.l.b16 %v1120
    %v1442 = vunpack.c.h.b16 %v1120
    %v1443 = vunpack.c.l.b16 %v1121
    %v1444 = vunpack.c.h.b16 %v1121
    %v1445 = vunpack.c.l.b16 %v1122
    %v1446 = vunpack.c.h.b16 %v1122
    %v1447 = vunpack.c.l.b16 %v1123
    %v1448 = vunpack.c.h.b16 %v1123
    %v1449 = vunpack.c.l.b16 %v1124
    %v1450 = vunpack.c.h.b16 %v1124
    %v1451 = vunpack.c.l.b16 %v1125
    %v1452 = vunpack.c.h.b16 %v1125
    %v1453 = vunpack.c.l.b16 %v1126
    %v1454 = vunpack.c.h.b16 %v1126
    %v1455 = vunpack.c.l.b16 %v1127
    %v1456 = vunpack.c.h.b16 %v1127
    %v1457 = vunpack.c.l.b16 %v1128
    %v1458 = vunpack.c.h.b16 %v1128
    %v1459 = vunpack.c.l.b16 %v1129
    %v1460 = vunpack.c.h.b16 %v1129
    %v1461 = vunpack.c.l.b16 %v1130
    %v1462 = vunpack.c.h.b16 %v1130
    %v1463 = vunpack.c.l.b16 %v1131
    %v1464 = vunpack.c.h.b16 %v1131
    %v1465 = vunpack.c.l.b16 %v1132
    %v1466 = vunpack.c.h.b16 %v1132
    %v1467 = vunpack.c.l.b16 %v1133
    %v1468 = vunpack.c.h.b16 %v1133
    %v1469 = vunpack.c.l.b16 %v1134
    %v1470 = vunpack.c.h.b16 %v1134
    %v1471 = vunpack.c.l.b16 %v1135
    %v1472 = vunpack.c.h.b16 %v1135
    %v1473 = vunpack.c.l.b16 %v1136
    %v1474 = vunpack.c.h.b16 %v1136
    %v1475 = vunpack.c.l.b16 %v1137
    %v1476 = vunpack.c.h.b16 %v1137
    %v1477 = vunpack.c.l.b16 %v1138
    %v1478 = vunpack.c.h.b16 %v1138
    %v1479 = vunpack.c.l.b16 %v1139
    %v1480 = vunpack.c.h.b16 %v1139
    %v1481 = vunpack.c.l.b16 %v1140
    %v1482 = vunpack.c.h.b16 %v1140
    %v1483 = vunpack.c.l.b16 %v1141
    %v1484 = vunpack.c.h.b16 %v1141
    %v1485 = vunpack.c.l.b16 %v1142
    %v1486 = vunpack.c.h.b16 %v1142
    %v1487 = vunpack.c.l.b16 %v1143
    %v1488 = vunpack.c.h.b16 %v1143
    %v1489 = vunpack.c.l.b16 %v1144
    %v1490 = vunpack.c.h.b16 %v1144
    %v1491 = vunpack.c.l.b16 %v1145
    %v1492 = vunpack.c.h.b16 %v1145
    %v1493 = vunpack.c.l.b16 %v1146
    %v1494 = vunpack.c.h.b16 %v1146
    %v1495 = vunpack.c.l.b16 %v1147
    %v1496 = vunpack.c.h.b16 %v1147
    %v1497 = vunpack.c.l.b16 %v1148
    %v1498 = vunpack.c.h.b16 %v1148
    %v1499 = vunpack.c.l.b16 %v1149
    %v1500 = vunpack.c.h.b16 %v1149
    %v1501 = vunpack.c.l.b16 %v1150
    %v1502 = vunpack.c.h.b16 %v1150
    %v1503 = vunpack.c.l.b16 %v1151
    %v1504 = vunpack.c.h.b16 %v1151
    %v1505 = vunpack.c.l.b16 %v1152
    %v1506 = vunpack.c.h.b16 %v1152
    %v1507 = vunpack.c.l.b16 %v1153
    %v1508 = vunpack.c.h.b16 %v1153
    %v1509 = vunpack.c.l.b16 %v1154
    %v1510 = vunpack.c.h.b16 %v1154
    %v1511 = vunpack.c.l.b16 %v1155
    %v1512 = vunpack.c.h.b16 %v1155
    %v1513 = vunpack.c.l.b16 %v1156
    %v1514 = vunpack.c.h.b16 %v1156
    %v1515 = vunpack.c.l.b16 %v1157
    %v1516 = vunpack.c.h.b16 %v1157
    %v1517 = vunpack.c.l.b16 %v1158
    %v1518 = vunpack.c.h.b16 %v1158
    %v1519 = vunpack.c.l.b16 %v1159
    %v1520 = vunpack.c.h.b16 %v1159
    %v1521 = vunpack.c.l.b16 %v1160
    %v1522 = vunpack.c.h.b16 %v1160
    %v1523 = vunpack.c.l.b16 %v1161
    %v1524 = vunpack.c.h.b16 %v1161
    %v1525 = vunpack.c.l.b16 %v1162
    %v1526 = vunpack.c.h.b16 %v1162
    %v1527 = vunpack.c.l.b16 %v1163
    %v1528 = vunpack.c.h.b16 %v1163
    %v1529 = vunpack.c.l.b16 %v1164
    %v1530 = vunpack.c.h.b16 %v1164
    %v1531 = vunpack.c.l.b16 %v1165
    %v1532 = vunpack.c.h.b16 %v1165
    %v1533 = vunpack.c.l.b16 %v1166
    %v1534 = vunpack.c.h.b16 %v1166
    %v1535 = vunpack.c.l.b16 %v1167
    %v1536 = vunpack.c.h.b16 %v1167
    %v1537 = vunpack.c.l.b16 %v1168
    %v1538 = vunpack.c.h.b16 %v1168
    %v1539 = vunpack.c.l.b16 %v1169
    %v1540 = vunpack.c.h.b16 %v1169
    %v1541 = vunpack.c.l.b16 %v1170
    %v1542 = vunpack.c.h.b16 %v1170
    %v1543 = vunpack.c.l.b16 %v1171
    %v1544 = vunpack.c.h.b16 %v1171
    %v1545 = vunpack.c.l.b16 %v1172
    %v1546 = vunpack.c.h.b16 %v1172
    %v1547 = vunpack.c.l.b16 %v1173
    %v1548 = vunpack.c.h.b16 %v1173
    %v1549 = vunpack.c.l.b16 %v1174
    %v1550 = vunpack.c.h.b16 %v1174
    %v1551 = vunpack.c.l.b16 %v1175
    %v1552 = vunpack.c.h.b16 %v1175
    %v1553 = vunpack.c.l.b16 %v1176
    %v1554 = vunpack.c.h.b16 %v1176
    %v1555 = vunpack.c.l.b16 %v1177
    %v1556 = vunpack.c.h.b16 %v1177
    %v1557 = vunpack.c.l.b16 %v1178
    %v1558 = vunpack.c.h.b16 %v1178
    %v1559 = vunpack.c.l.b16 %v1179
    %v1560 = vunpack.c.h.b16 %v1179
    %v1561 = vunpack.c.l.b16 %v1180
    %v1562 = vunpack.c.h.b16 %v1180
    %v1563 = vunpack.c.l.b16 %v1181
    %v1564 = vunpack.c.h.b16 %v1181
    %v1565 = vunpack.c.l.b16 %v1182
    %v1566 = vunpack.c.h.b16 %v1182
    %v1567 = vpack.c.b16 %v1315, %v1311
    %v1568 = vpack.c.b16 %v1316, %v1312
    %v1569 = vpack.c.b16 %v1317, %v1313
    %v1570 = vpack.c.b16 %v1318, %v1314
    %v1571 = vpack.c.b16 %v1323, %v1319
    %v1572 = vpack.c.b16 %v1324, %v1320
    %v1573 = vpack.c.b16 %v1325, %v1321
    %v1574 = vpack.c.b16 %v1326, %v1322
    %v1575 = vpack.c.b16 %v1331, %v1327
    %v1576 = vpack.c.b16 %v1332, %v1328
    %v1577 = vpack.c.b16 %v1333, %v1329
    %v1578 = vpack.c.b16 %v1334, %v1330
    %v1579 = vpack.c.b16 %v1339, %v1335
    %v1580 = vpack.c.b16 %v1340, %v1336
    %v1581 = vpack.c.b16 %v1341, %v1337
    %v1582 = vpack.c.b16 %v1342, %v1338
    %v1583 = vpack.c.b16 %v1347, %v1343
    %v1584 = vpack.c.b16 %v1348, %v1344
    %v1585 = vpack.c.b16 %v1349, %v1345
    %v1586 = vpack.c.b16 %v1350, %v1346
    %v1587 = vpack.c.b16 %v1355, %v1351
    %v1588 = vpack.c.b16 %v1356, %v1352
    %v1589 = vpack.c.b16 %v1357, %v1353
    %v1590 = vpack.c.b16 %v1358, %v1354
    %v1591 = vpack.c.b16 %v1363, %v1359
    %v1592 = vpack.c.b16 %v1364, %v1360
    %v1593 = vpack.c.b16 %v1365, %v1361
    %v1594 = vpack.c.b16 %v1366, %v1362
    %v1595 = vpack.c.b16 %v1371, %v1367
    %v1596 = vpack.c.b16 %v1372, %v1368
    %v1597 = vpack.c.b16 %v1373, %v1369
    %v1598 = vpack.c.b16 %v1374, %v1370
    %v1599 = vpack.c.b16 %v1379, %v1375
    %v1600 = vpack.c.b16 %v1380, %v1376
    %v1601 = vpack.c.b16 %v1381, %v1377
    %v1602 = vpack.c.b16 %v1382, %v1378
    %v1603 = vpack.c.b16 %v1387, %v1383
    %v1604 = vpack.c.b16 %v1388, %v1384
    %v1605 = vpack.c.b16 %v1389, %v1385
    %v1606 = vpack.c.b16 %v1390, %v1386
    %v1607 = vpack.c.b16 %v1395, %v1391
    %v1608 = vpack.c.b16 %v1396, %v1392
    %v1609 = vpack.c.b16 %v1397, %v1393
    %v1610 = vpack.c.b16 %v1398, %v1394
    %v1611 = vpack.c.b16 %v1403, %v1399
    %v1612 = vpack.c.b16 %v1404, %v1400
    %v1613 = vpack.c.b16 %v1405, %v1401
    %v1614 = vpack.c.b16 %v1406, %v1402
    %v1615 = vpack.c.b16 %v1411, %v1407
    %v1616 = vpack.c.b16 %v1412, %v1408
    %v1617 = vpack.c.b16 %v1413, %v1409
    %v1618 = vpack.c.b16 %v1414, %v1410
    %v1619 = vpack.c.b16 %v1419, %v1415
    %v1620 = vpack.c.b16 %v1420, %v1416
    %v1621 = vpack.c.b16 %v1421, %v1417
    %v1622 = vpack.c.b16 %v1422, %v1418
    %v1623 = vpack.c.b16 %v1427, %v1423
    %v1624 = vpack.c.b16 %v1428, %v1424
    %v1625 = vpack.c.b16 %v1429, %v1425
    %v1626 = vpack.c.b16 %v1430, %v1426
    %v1627 = vpack.c.b16 %v1435, %v1431
    %v1628 = vpack.c.b16 %v1436, %v1432
    %v1629 = vpack.c.b16 %v1437, %v1433
    %v1630 = vpack.c.b16 %v1438, %v1434
    %v1631 = vpack.c.b16 %v1443, %v1439
    %v1632 = vpack.c.b16 %v1444, %v1440
    %v1633 = vpack.c.b16 %v1445, %v1441
    %v1634 = vpack.c.b16 %v1446, %v1442
    %v1635 = vpack.c.b16 %v1451, %v1447
    %v1636 = vpack.c.b16 %v1452, %v1448
    %v1637 = vpack.c.b16 %v1453, %v1449
    %v1638 = vpack.c.b16 %v1454, %v1450
    %v1639 = vpack.c.b16 %v1459, %v1455
    %v1640 = vpack.c.b16 %v1460, %v1456
    %v1641 = vpack.c.b16 %v1461, %v1457
    %v1642 = vpack.c.b16 %v1462, %v1458
    %v1643 = vpack.c.b16 %v1467, %v1463
    %v1644 = vpack.c.b16 %v1468, %v1464
    %v1645 = vpack.c.b16 %v1469, %v1465
    %v1646 = vpack.c.b16 %v1470, %v1466
    %v1647 = vpack.c.b16 %v1475, %v1471
    %v1648 = vpack.c.b16 %v1476, %v1472
    %v1649 = vpack.c.b16 %v1477, %v1473
    %v1650 = vpack.c.b16 %v1478, %v1474
    %v1651 = vpack.c.b16 %v1483, %v1479
    %v1652 = vpack.c.b16 %v1484, %v1480
    %v1653 = vpack.c.b16 %v1485, %v1481
    %v1654 = vpack.c.b16 %v1486, %v1482
    %v1655 = vpack.c.b16 %v1491, %v1487
    %v1656 = vpack.c.b16 %v1492, %v1488
    %v1657 = vpack.c.b16 %v1493, %v1489
    %v1658 = vpack.c.b16 %v1494, %v1490
    %v1659 = vpack.c.b16 %v1499, %v1495
    %v1660 = vpack.c.b16 %v1500, %v1496
    %v1661 = vpack.c.b16 %v1501, %v1497
    %v1662 = vpack.c.b16 %v1502, %v1498
    %v1663 = vpack.c.b16 %v1507, %v1503
    %v1664 = vpack.c.b16 %v1508, %v1504
    %v1665 = vpack.c.b16 %v1509, %v1505
    %v1666 = vpack.c.b16 %v1510, %v1506
    %v1667 = vpack.c.b16 %v1515, %v1511
    %v1668 = vpack.c.b16 %v1516, %v1512
    %v1669 = vpack.c.b16 %v1517, %v1513
    %v1670 = vpack.c.b16 %v1518, %v1514
    %v1671 = vpack.c.b16 %v1523, %v1519
    %v1672 = vpack.c.b16 %v1524, %v1520
    %v1673 = vpack.c.b16 %v1525, %v1521
    %v1674 = vpack.c.b16 %v1526, %v1522
    %v1675 = vpack.c.b16 %v1531, %v1527
    %v1676 = vpack.c.b16 %v1532, %v1528
    %v1677 = vpack.c.b16 %v1533, %v1529
    %v1678 = vpack.c.b16 %v1534, %v1530
    %v1679 = vpack.c.b16 %v1539, %v1535
    %v1680 = vpack.c.b16 %v1540, %v1536
    %v1681 = vpack.c.b16 %v1541, %v1537
    %v1682 = vpack.c.b16 %v1542, %v1538
    %v1683 = vpack.c.b16 %v1547, %v1543
    %v1684 = vpack.c.b16 %v1548, %v1544
    %v1685 = vpack.c.b16 %v1549, %v1545
    %v1686 = vpack.c.b16 %v1550, %v1546
    %v1687 = vpack.c.b16 %v1555, %v1551
    %v1688 = vpack.c.b16 %v1556, %v1552
    %v1689 = vpack.c.b16 %v1557, %v1553
    %v1690 = vpack.c.b16 %v1558, %v1554
    %v1691 = vpack.c.b16 %v1563, %v1559
    %v1692 = vpack.c.b16 %v1564, %v1560
    %v1693 = vpack.c.b16 %v1565, %v1561
    %v1694 = vpack.c.b16 %v1566, %v1562
    %1823 = vmatprep.subr.bf16.mxu0 %v1568
    %1824 = vmatpush1.bf16.msra.mxu0 %v1567
    %1825 = vmatprep.subr.bf16.mxu0 %v1572
    %1826 = vmatpush1.bf16.msra.mxu0 %v1571
    %1827 = vmatprep.subr.bf16.mxu0 %v1576
    %1828 = vmatpush1.bf16.msra.mxu0 %v1575
    %1829 = vmatprep.subr.bf16.mxu0 %v1580
    %1830 = vmatpush1.bf16.msra.mxu0 %v1579
    %1831 = vmatprep.subr.bf16.mxu0 %v1584
    %1832 = vmatpush1.bf16.msra.mxu0 %v1583
    %1833 = vmatprep.subr.bf16.mxu0 %v1588
    %1834 = vmatpush1.bf16.msra.mxu0 %v1587
    %1835 = vmatprep.subr.bf16.mxu0 %v1592
    %1836 = vmatpush1.bf16.msra.mxu0 %v1591
    %1837 = vmatprep.subr.bf16.mxu0 %v1596
    %1838 = vmatpush1.bf16.msra.mxu0 %v1595
    %1839 = vmatprep.subr.bf16.mxu0 %v1600
    %1840 = vmatpush1.bf16.msra.mxu0 %v1599
    %1841 = vmatprep.subr.bf16.mxu0 %v1604
    %1842 = vmatpush1.bf16.msra.mxu0 %v1603
    %1843 = vmatprep.subr.bf16.mxu0 %v1608
    %1844 = vmatpush1.bf16.msra.mxu0 %v1607
    %1845 = vmatprep.subr.bf16.mxu0 %v1612
    %1846 = vmatpush1.bf16.msra.mxu0 %v1611
    %1847 = vmatprep.subr.bf16.mxu0 %v1616
    %1848 = vmatpush1.bf16.msra.mxu0 %v1615
    %1849 = vmatprep.subr.bf16.mxu0 %v1620
    %1850 = vmatpush1.bf16.msra.mxu0 %v1619
    %1851 = vmatprep.subr.bf16.mxu0 %v1624
    %1852 = vmatpush1.bf16.msra.mxu0 %v1623
    %1853 = vmatprep.subr.bf16.mxu0 %v1628
    %1854 = vmatpush1.bf16.msra.mxu0 %v1627
    %1855 = vmatprep.mubr.bf16.mxu0 %v241
    %1856 = vmatmul.mubr.bf16.gmra.mrb[0].mxu0 %v240
    %v1857 = vpop.f32.mrb[0].mxu0
    %v1858 = vadd.f32 0.0, %v1857
    %v1859 = vpop.f32.mrb[0].mxu0
    %v1860 = vadd.f32 0.0, %v1859
    %v1861 = vpop.f32.mrb[0].mxu0
    %v1862 = vpop.f32.mrb[0].mxu0
    %1863 = vdwg.mxu0
    %1864 = vmatprep.subr.bf16.mxu0 %v1632
    %1865 = vmatpush1.bf16.msra.mxu0 %v1631
    %1866 = vmatprep.subr.bf16.mxu0 %v1636
    %1867 = vmatpush1.bf16.msra.mxu0 %v1635
    %1868 = vmatprep.subr.bf16.mxu0 %v1640
    %1869 = vmatpush1.bf16.msra.mxu0 %v1639
    %1870 = vmatprep.subr.bf16.mxu0 %v1644
    %1871 = vmatpush1.bf16.msra.mxu0 %v1643
    %1872 = vmatprep.subr.bf16.mxu0 %v1648
    %1873 = vmatpush1.bf16.msra.mxu0 %v1647
    %1874 = vmatprep.subr.bf16.mxu0 %v1652
    %1875 = vmatpush1.bf16.msra.mxu0 %v1651
    %1876 = vmatprep.subr.bf16.mxu0 %v1656
    %1877 = vmatpush1.bf16.msra.mxu0 %v1655
    %1878 = vmatprep.subr.bf16.mxu0 %v1660
    %1879 = vmatpush1.bf16.msra.mxu0 %v1659
    %1880 = vmatprep.subr.bf16.mxu0 %v1664
    %1881 = vmatpush1.bf16.msra.mxu0 %v1663
    %1882 = vmatprep.subr.bf16.mxu0 %v1668
    %1883 = vmatpush1.bf16.msra.mxu0 %v1667
    %1884 = vmatprep.subr.bf16.mxu0 %v1672
    %1885 = vmatpush1.bf16.msra.mxu0 %v1671
    %1886 = vmatprep.subr.bf16.mxu0 %v1676
    %1887 = vmatpush1.bf16.msra.mxu0 %v1675
    %1888 = vmatprep.subr.bf16.mxu0 %v1680
    %1889 = vmatpush1.bf16.msra.mxu0 %v1679
    %1890 = vmatprep.subr.bf16.mxu0 %v1684
    %1891 = vmatpush1.bf16.msra.mxu0 %v1683
    %1892 = vmatprep.subr.bf16.mxu0 %v1688
    %1893 = vmatpush1.bf16.msra.mxu0 %v1687
    %1894 = vmatprep.subr.bf16.mxu0 %v1692
    %1895 = vmatpush1.bf16.msra.mxu0 %v1691
    %1896 = vmatprep.mubr.bf16.mxu0 %v243
    %1897 = vmatmul.mubr.bf16.gmra.mrb[0].mxu0 %v242
    %v1898 = vpop.f32.mrb[0].mxu0
    %v1899 = vadd.f32 %v1858, %v1898
    %v1900 = vpop.f32.mrb[0].mxu0
    %v1901 = vadd.f32 %v1860, %v1900
    %v1902 = vpop.f32.mrb[0].mxu0
    %v1903 = vpop.f32.mrb[0].mxu0
    %1904 = vdwg.mxu0
    %1905 = vmatprep.subr.bf16.mxu0 %v1570
    %1906 = vmatpush1.bf16.msra.mxu0 %v1569
    %1907 = vmatprep.subr.bf16.mxu0 %v1574
    %1908 = vmatpush1.bf16.msra.mxu0 %v1573
    %1909 = vmatprep.subr.bf16.mxu0 %v1578
    %1910 = vmatpush1.bf16.msra.mxu0 %v1577
    %1911 = vmatprep.subr.bf16.mxu0 %v1582
    %1912 = vmatpush1.bf16.msra.mxu0 %v1581
    %1913 = vmatprep.subr.bf16.mxu0 %v1586
    %1914 = vmatpush1.bf16.msra.mxu0 %v1585
    %1915 = vmatprep.subr.bf16.mxu0 %v1590
    %1916 = vmatpush1.bf16.msra.mxu0 %v1589
    %1917 = vmatprep.subr.bf16.mxu0 %v1594
    %1918 = vmatpush1.bf16.msra.mxu0 %v1593
    %1919 = vmatprep.subr.bf16.mxu0 %v1598
    %1920 = vmatpush1.bf16.msra.mxu0 %v1597
    %1921 = vmatprep.subr.bf16.mxu0 %v1602
    %1922 = vmatpush1.bf16.msra.mxu0 %v1601
    %1923 = vmatprep.subr.bf16.mxu0 %v1606
    %1924 = vmatpush1.bf16.msra.mxu0 %v1605
    %1925 = vmatprep.subr.bf16.mxu0 %v1610
    %1926 = vmatpush1.bf16.msra.mxu0 %v1609
    %1927 = vmatprep.subr.bf16.mxu0 %v1614
    %1928 = vmatpush1.bf16.msra.mxu0 %v1613
    %1929 = vmatprep.subr.bf16.mxu0 %v1618
    %1930 = vmatpush1.bf16.msra.mxu0 %v1617
    %1931 = vmatprep.subr.bf16.mxu0 %v1622
    %1932 = vmatpush1.bf16.msra.mxu0 %v1621
    %1933 = vmatprep.subr.bf16.mxu0 %v1626
    %1934 = vmatpush1.bf16.msra.mxu0 %v1625
    %1935 = vmatprep.subr.bf16.mxu0 %v1630
    %1936 = vmatpush1.bf16.msra.mxu0 %v1629
    %1937 = vmatprep.mubr.bf16.mxu0 %v241
    %1938 = vmatmul.mubr.bf16.gmra.mrb[0].mxu0 %v240
    %v1939 = vpop.f32.mrb[0].mxu0
    %v1940 = vadd.f32 0.0, %v1939
    %v1941 = vpop.f32.mrb[0].mxu0
    %v1942 = vadd.f32 0.0, %v1941
    %v1943 = vpop.f32.mrb[0].mxu0
    %v1944 = vpop.f32.mrb[0].mxu0
    %1945 = vdwg.mxu0
    %1946 = vmatprep.subr.bf16.mxu0 %v1634
    %1947 = vmatpush1.bf16.msra.mxu0 %v1633
    %1948 = vmatprep.subr.bf16.mxu0 %v1638
    %1949 = vmatpush1.bf16.msra.mxu0 %v1637
    %1950 = vmatprep.subr.bf16.mxu0 %v1642
    %1951 = vmatpush1.bf16.msra.mxu0 %v1641
    %1952 = vmatprep.subr.bf16.mxu0 %v1646
    %1953 = vmatpush1.bf16.msra.mxu0 %v1645
    %1954 = vmatprep.subr.bf16.mxu0 %v1650
    %1955 = vmatpush1.bf16.msra.mxu0 %v1649
    %1956 = vmatprep.subr.bf16.mxu0 %v1654
    %1957 = vmatpush1.bf16.msra.mxu0 %v1653
    %1958 = vmatprep.subr.bf16.mxu0 %v1658
    %1959 = vmatpush1.bf16.msra.mxu0 %v1657
    %1960 = vmatprep.subr.bf16.mxu0 %v1662
    %1961 = vmatpush1.bf16.msra.mxu0 %v1661
    %1962 = vmatprep.subr.bf16.mxu0 %v1666
    %1963 = vmatpush1.bf16.msra.mxu0 %v1665
    %1964 = vmatprep.subr.bf16.mxu0 %v1670
    %1965 = vmatpush1.bf16.msra.mxu0 %v1669
    %1966 = vmatprep.subr.bf16.mxu0 %v1674
    %1967 = vmatpush1.bf16.msra.mxu0 %v1673
    %1968 = vmatprep.subr.bf16.mxu0 %v1678
    %1969 = vmatpush1.bf16.msra.mxu0 %v1677
    %1970 = vmatprep.subr.bf16.mxu0 %v1682
    %1971 = vmatpush1.bf16.msra.mxu0 %v1681
    %1972 = vmatprep.subr.bf16.mxu0 %v1686
    %1973 = vmatpush1.bf16.msra.mxu0 %v1685
    %1974 = vmatprep.subr.bf16.mxu0 %v1690
    %1975 = vmatpush1.bf16.msra.mxu0 %v1689
    %1976 = vmatprep.subr.bf16.mxu0 %v1694
    %1977 = vmatpush1.bf16.msra.mxu0 %v1693
    %1978 = vmatprep.mubr.bf16.mxu0 %v243
    %1979 = vmatmul.mubr.bf16.gmra.mrb[0].mxu0 %v242
    %v1980 = vpop.f32.mrb[0].mxu0
    %v1981 = vadd.f32 %v1940, %v1980
    %v1982 = vpop.f32.mrb[0].mxu0
    %v1983 = vadd.f32 %v1942, %v1982
    %v1984 = vpop.f32.mrb[0].mxu0
    %v1985 = vpop.f32.mrb[0].mxu0
    %1986 = vdwg.mxu0
    %v2771 = vunpack.c.l.b16 %v271
    %v2772 = vunpack.c.h.b16 %v271
    %v2773 = vunpack.c.l.b16 %v272
    %v2774 = vunpack.c.h.b16 %v272
    %v2775 = vunpack.c.l.b16 %v273
    %v2776 = vunpack.c.h.b16 %v273
    %v2777 = vunpack.c.l.b16 %v274
    %v2778 = vunpack.c.h.b16 %v274
    %v2779 = vunpack.c.l.b16 %v275
    %v2780 = vunpack.c.h.b16 %v275
    %v2781 = vunpack.c.l.b16 %v276
    %v2782 = vunpack.c.h.b16 %v276
    %v2783 = vunpack.c.l.b16 %v277
    %v2784 = vunpack.c.h.b16 %v277
    %v2785 = vunpack.c.l.b16 %v278
    %v2786 = vunpack.c.h.b16 %v278
    %v2787 = vunpack.c.l.b16 %v279
    %v2788 = vunpack.c.h.b16 %v279
    %v2789 = vunpack.c.l.b16 %v280
    %v2790 = vunpack.c.h.b16 %v280
    %v2791 = vunpack.c.l.b16 %v281
    %v2792 = vunpack.c.h.b16 %v281
    %v2793 = vunpack.c.l.b16 %v282
    %v2794 = vunpack.c.h.b16 %v282
    %v2795 = vunpack.c.l.b16 %v283
    %v2796 = vunpack.c.h.b16 %v283
    %v2797 = vunpack.c.l.b16 %v284
    %v2798 = vunpack.c.h.b16 %v284
    %v2799 = vunpack.c.l.b16 %v285
    %v2800 = vunpack.c.h.b16 %v285
    %v2801 = vunpack.c.l.b16 %v286
    %v2802 = vunpack.c.h.b16 %v286
    %v2803 = vunpack.c.l.b16 %v287
    %v2804 = vunpack.c.h.b16 %v287
    %v2805 = vunpack.c.l.b16 %v288
    %v2806 = vunpack.c.h.b16 %v288
    %v2807 = vunpack.c.l.b16 %v289
    %v2808 = vunpack.c.h.b16 %v289
    %v2809 = vunpack.c.l.b16 %v290
    %v2810 = vunpack.c.h.b16 %v290
    %v2811 = vunpack.c.l.b16 %v291
    %v2812 = vunpack.c.h.b16 %v291
    %v2813 = vunpack.c.l.b16 %v292
    %v2814 = vunpack.c.h.b16 %v292
    %v2815 = vunpack.c.l.b16 %v293
    %v2816 = vunpack.c.h.b16 %v293
    %v2817 = vunpack.c.l.b16 %v294
    %v2818 = vunpack.c.h.b16 %v294
    %v2819 = vunpack.c.l.b16 %v295
    %v2820 = vunpack.c.h.b16 %v295
    %v2821 = vunpack.c.l.b16 %v296
    %v2822 = vunpack.c.h.b16 %v296
    %v2823 = vunpack.c.l.b16 %v297
    %v2824 = vunpack.c.h.b16 %v297
    %v2825 = vunpack.c.l.b16 %v298
    %v2826 = vunpack.c.h.b16 %v298
    %v2827 = vunpack.c.l.b16 %v299
    %v2828 = vunpack.c.h.b16 %v299
    %v2829 = vunpack.c.l.b16 %v300
    %v2830 = vunpack.c.h.b16 %v300
    %v2831 = vunpack.c.l.b16 %v301
    %v2832 = vunpack.c.h.b16 %v301
    %v2833 = vunpack.c.l.b16 %v302
    %v2834 = vunpack.c.h.b16 %v302
    %v2835 = vunpack.c.l.b16 %v303
    %v2836 = vunpack.c.h.b16 %v303
    %v2837 = vunpack.c.l.b16 %v304
    %v2838 = vunpack.c.h.b16 %v304
    %v2839 = vunpack.c.l.b16 %v305
    %v2840 = vunpack.c.h.b16 %v305
    %v2841 = vunpack.c.l.b16 %v306
    %v2842 = vunpack.c.h.b16 %v306
    %v2843 = vunpack.c.l.b16 %v307
    %v2844 = vunpack.c.h.b16 %v307
    %v2845 = vunpack.c.l.b16 %v308
    %v2846 = vunpack.c.h.b16 %v308
    %v2847 = vunpack.c.l.b16 %v309
    %v2848 = vunpack.c.h.b16 %v309
    %v2849 = vunpack.c.l.b16 %v310
    %v2850 = vunpack.c.h.b16 %v310
    %v2851 = vunpack.c.l.b16 %v311
    %v2852 = vunpack.c.h.b16 %v311
    %v2853 = vunpack.c.l.b16 %v312
    %v2854 = vunpack.c.h.b16 %v312
    %v2855 = vunpack.c.l.b16 %v313
    %v2856 = vunpack.c.h.b16 %v313
    %v2857 = vunpack.c.l.b16 %v314
    %v2858 = vunpack.c.h.b16 %v314
    %v2859 = vunpack.c.l.b16 %v315
    %v2860 = vunpack.c.h.b16 %v315
    %v2861 = vunpack.c.l.b16 %v316
    %v2862 = vunpack.c.h.b16 %v316
    %v2863 = vunpack.c.l.b16 %v317
    %v2864 = vunpack.c.h.b16 %v317
    %v2865 = vunpack.c.l.b16 %v318
    %v2866 = vunpack.c.h.b16 %v318
    %v2867 = vunpack.c.l.b16 %v319
    %v2868 = vunpack.c.h.b16 %v319
    %v2869 = vunpack.c.l.b16 %v320
    %v2870 = vunpack.c.h.b16 %v320
    %v2871 = vunpack.c.l.b16 %v321
    %v2872 = vunpack.c.h.b16 %v321
    %v2873 = vunpack.c.l.b16 %v322
    %v2874 = vunpack.c.h.b16 %v322
    %v2875 = vunpack.c.l.b16 %v323
    %v2876 = vunpack.c.h.b16 %v323
    %v2877 = vunpack.c.l.b16 %v324
    %v2878 = vunpack.c.h.b16 %v324
    %v2879 = vunpack.c.l.b16 %v325
    %v2880 = vunpack.c.h.b16 %v325
    %v2881 = vunpack.c.l.b16 %v326
    %v2882 = vunpack.c.h.b16 %v326
    %v2883 = vunpack.c.l.b16 %v327
    %v2884 = vunpack.c.h.b16 %v327
    %v2885 = vunpack.c.l.b16 %v328
    %v2886 = vunpack.c.h.b16 %v328
    %v2887 = vunpack.c.l.b16 %v329
    %v2888 = vunpack.c.h.b16 %v329
    %v2889 = vunpack.c.l.b16 %v330
    %v2890 = vunpack.c.h.b16 %v330
    %v2891 = vunpack.c.l.b16 %v331
    %v2892 = vunpack.c.h.b16 %v331
    %v2893 = vunpack.c.l.b16 %v332
    %v2894 = vunpack.c.h.b16 %v332
    %v2895 = vunpack.c.l.b16 %v333
    %v2896 = vunpack.c.h.b16 %v333
    %v2897 = vunpack.c.l.b16 %v334
    %v2898 = vunpack.c.h.b16 %v334
    %v2899 = vunpack.c.l.b16 %v335
    %v2900 = vunpack.c.h.b16 %v335
    %v2901 = vunpack.c.l.b16 %v336
    %v2902 = vunpack.c.h.b16 %v336
    %v2903 = vunpack.c.l.b16 %v337
    %v2904 = vunpack.c.h.b16 %v337
    %v2905 = vunpack.c.l.b16 %v338
    %v2906 = vunpack.c.h.b16 %v338
    %v2907 = vunpack.c.l.b16 %v339
    %v2908 = vunpack.c.h.b16 %v339
    %v2909 = vunpack.c.l.b16 %v340
    %v2910 = vunpack.c.h.b16 %v340
    %v2911 = vunpack.c.l.b16 %v341
    %v2912 = vunpack.c.h.b16 %v341
    %v2913 = vunpack.c.l.b16 %v342
    %v2914 = vunpack.c.h.b16 %v342
    %v2915 = vunpack.c.l.b16 %v343
    %v2916 = vunpack.c.h.b16 %v343
    %v2917 = vunpack.c.l.b16 %v344
    %v2918 = vunpack.c.h.b16 %v344
    %v2919 = vunpack.c.l.b16 %v345
    %v2920 = vunpack.c.h.b16 %v345
    %v2921 = vunpack.c.l.b16 %v346
    %v2922 = vunpack.c.h.b16 %v346
    %v2923 = vunpack.c.l.b16 %v347
    %v2924 = vunpack.c.h.b16 %v347
    %v2925 = vunpack.c.l.b16 %v348
    %v2926 = vunpack.c.h.b16 %v348
    %v2927 = vunpack.c.l.b16 %v349
    %v2928 = vunpack.c.h.b16 %v349
    %v2929 = vunpack.c.l.b16 %v350
    %v2930 = vunpack.c.h.b16 %v350
    %v2931 = vunpack.c.l.b16 %v351
    %v2932 = vunpack.c.h.b16 %v351
    %v2933 = vunpack.c.l.b16 %v352
    %v2934 = vunpack.c.h.b16 %v352
    %v2935 = vunpack.c.l.b16 %v353
    %v2936 = vunpack.c.h.b16 %v353
    %v2937 = vunpack.c.l.b16 %v354
    %v2938 = vunpack.c.h.b16 %v354
    %v2939 = vunpack.c.l.b16 %v355
    %v2940 = vunpack.c.h.b16 %v355
    %v2941 = vunpack.c.l.b16 %v356
    %v2942 = vunpack.c.h.b16 %v356
    %v2943 = vunpack.c.l.b16 %v357
    %v2944 = vunpack.c.h.b16 %v357
    %v2945 = vunpack.c.l.b16 %v358
    %v2946 = vunpack.c.h.b16 %v358
    %v2947 = vunpack.c.l.b16 %v359
    %v2948 = vunpack.c.h.b16 %v359
    %v2949 = vunpack.c.l.b16 %v360
    %v2950 = vunpack.c.h.b16 %v360
    %v2951 = vunpack.c.l.b16 %v361
    %v2952 = vunpack.c.h.b16 %v361
    %v2953 = vunpack.c.l.b16 %v362
    %v2954 = vunpack.c.h.b16 %v362
    %v2955 = vunpack.c.l.b16 %v363
    %v2956 = vunpack.c.h.b16 %v363
    %v2957 = vunpack.c.l.b16 %v364
    %v2958 = vunpack.c.h.b16 %v364
    %v2959 = vunpack.c.l.b16 %v365
    %v2960 = vunpack.c.h.b16 %v365
    %v2961 = vunpack.c.l.b16 %v366
    %v2962 = vunpack.c.h.b16 %v366
    %v2963 = vunpack.c.l.b16 %v367
    %v2964 = vunpack.c.h.b16 %v367
    %v2965 = vunpack.c.l.b16 %v368
    %v2966 = vunpack.c.h.b16 %v368
    %v2967 = vunpack.c.l.b16 %v369
    %v2968 = vunpack.c.h.b16 %v369
    %v2969 = vunpack.c.l.b16 %v370
    %v2970 = vunpack.c.h.b16 %v370
    %v2971 = vunpack.c.l.b16 %v371
    %v2972 = vunpack.c.h.b16 %v371
    %v2973 = vunpack.c.l.b16 %v372
    %v2974 = vunpack.c.h.b16 %v372
    %v2975 = vunpack.c.l.b16 %v373
    %v2976 = vunpack.c.h.b16 %v373
    %v2977 = vunpack.c.l.b16 %v374
    %v2978 = vunpack.c.h.b16 %v374
    %v2979 = vunpack.c.l.b16 %v375
    %v2980 = vunpack.c.h.b16 %v375
    %v2981 = vunpack.c.l.b16 %v376
    %v2982 = vunpack.c.h.b16 %v376
    %v2983 = vunpack.c.l.b16 %v377
    %v2984 = vunpack.c.h.b16 %v377
    %v2985 = vunpack.c.l.b16 %v378
    %v2986 = vunpack.c.h.b16 %v378
    %v2987 = vunpack.c.l.b16 %v379
    %v2988 = vunpack.c.h.b16 %v379
    %v2989 = vunpack.c.l.b16 %v380
    %v2990 = vunpack.c.h.b16 %v380
    %v2991 = vunpack.c.l.b16 %v381
    %v2992 = vunpack.c.h.b16 %v381
    %v2993 = vunpack.c.l.b16 %v382
    %v2994 = vunpack.c.h.b16 %v382
    %v2995 = vunpack.c.l.b16 %v383
    %v2996 = vunpack.c.h.b16 %v383
    %v2997 = vunpack.c.l.b16 %v384
    %v2998 = vunpack.c.h.b16 %v384
    %v2999 = vunpack.c.l.b16 %v385
    %v3000 = vunpack.c.h.b16 %v385
    %v3001 = vunpack.c.l.b16 %v386
    %v3002 = vunpack.c.h.b16 %v386
    %v3003 = vunpack.c.l.b16 %v387
    %v3004 = vunpack.c.h.b16 %v387
    %v3005 = vunpack.c.l.b16 %v388
    %v3006 = vunpack.c.h.b16 %v388
    %v3007 = vunpack.c.l.b16 %v389
    %v3008 = vunpack.c.h.b16 %v389
    %v3009 = vunpack.c.l.b16 %v390
    %v3010 = vunpack.c.h.b16 %v390
    %v3011 = vunpack.c.l.b16 %v391
    %v3012 = vunpack.c.h.b16 %v391
    %v3013 = vunpack.c.l.b16 %v392
    %v3014 = vunpack.c.h.b16 %v392
    %v3015 = vunpack.c.l.b16 %v393
    %v3016 = vunpack.c.h.b16 %v393
    %v3017 = vunpack.c.l.b16 %v394
    %v3018 = vunpack.c.h.b16 %v394
    %v3019 = vunpack.c.l.b16 %v395
    %v3020 = vunpack.c.h.b16 %v395
    %v3021 = vunpack.c.l.b16 %v396
    %v3022 = vunpack.c.h.b16 %v396
    %v3023 = vunpack.c.l.b16 %v397
    %v3024 = vunpack.c.h.b16 %v397
    %v3025 = vunpack.c.l.b16 %v398
    %v3026 = vunpack.c.h.b16 %v398
    %v3027 = vunpack.c.l.b16 %v399
    %v3028 = vunpack.c.h.b16 %v399
    %v3029 = vunpack.c.l.b16 %v400
    %v3030 = vunpack.c.h.b16 %v400
    %v3031 = vunpack.c.l.b16 %v401
    %v3032 = vunpack.c.h.b16 %v401
    %v3033 = vunpack.c.l.b16 %v402
    %v3034 = vunpack.c.h.b16 %v402
    %v3035 = vunpack.c.l.b16 %v403
    %v3036 = vunpack.c.h.b16 %v403
    %v3037 = vunpack.c.l.b16 %v404
    %v3038 = vunpack.c.h.b16 %v404
    %v3039 = vunpack.c.l.b16 %v405
    %v3040 = vunpack.c.h.b16 %v405
    %v3041 = vunpack.c.l.b16 %v406
    %v3042 = vunpack.c.h.b16 %v406
    %v3043 = vunpack.c.l.b16 %v407
    %v3044 = vunpack.c.h.b16 %v407
    %v3045 = vunpack.c.l.b16 %v408
    %v3046 = vunpack.c.h.b16 %v408
    %v3047 = vunpack.c.l.b16 %v409
    %v3048 = vunpack.c.h.b16 %v409
    %v3049 = vunpack.c.l.b16 %v410
    %v3050 = vunpack.c.h.b16 %v410
    %v3051 = vunpack.c.l.b16 %v411
    %v3052 = vunpack.c.h.b16 %v411
    %v3053 = vunpack.c.l.b16 %v412
    %v3054 = vunpack.c.h.b16 %v412
    %v3055 = vunpack.c.l.b16 %v413
    %v3056 = vunpack.c.h.b16 %v413
    %v3057 = vunpack.c.l.b16 %v414
    %v3058 = vunpack.c.h.b16 %v414
    %v3059 = vunpack.c.l.b16 %v415
    %v3060 = vunpack.c.h.b16 %v415
    %v3061 = vunpack.c.l.b16 %v416
    %v3062 = vunpack.c.h.b16 %v416
    %v3063 = vunpack.c.l.b16 %v417
    %v3064 = vunpack.c.h.b16 %v417
    %v3065 = vunpack.c.l.b16 %v418
    %v3066 = vunpack.c.h.b16 %v418
    %v3067 = vunpack.c.l.b16 %v419
    %v3068 = vunpack.c.h.b16 %v419
    %v3069 = vunpack.c.l.b16 %v420
    %v3070 = vunpack.c.h.b16 %v420
    %v3071 = vunpack.c.l.b16 %v421
    %v3072 = vunpack.c.h.b16 %v421
    %v3073 = vunpack.c.l.b16 %v422
    %v3074 = vunpack.c.h.b16 %v422
    %v3075 = vunpack.c.l.b16 %v423
    %v3076 = vunpack.c.h.b16 %v423
    %v3077 = vunpack.c.l.b16 %v424
    %v3078 = vunpack.c.h.b16 %v424
    %v3079 = vunpack.c.l.b16 %v425
    %v3080 = vunpack.c.h.b16 %v425
    %v3081 = vunpack.c.l.b16 %v426
    %v3082 = vunpack.c.h.b16 %v426
    %v3083 = vunpack.c.l.b16 %v427
    %v3084 = vunpack.c.h.b16 %v427
    %v3085 = vunpack.c.l.b16 %v428
    %v3086 = vunpack.c.h.b16 %v428
    %v3087 = vunpack.c.l.b16 %v429
    %v3088 = vunpack.c.h.b16 %v429
    %v3089 = vunpack.c.l.b16 %v430
    %v3090 = vunpack.c.h.b16 %v430
    %v3091 = vunpack.c.l.b16 %v431
    %v3092 = vunpack.c.h.b16 %v431
    %v3093 = vunpack.c.l.b16 %v432
    %v3094 = vunpack.c.h.b16 %v432
    %v3095 = vunpack.c.l.b16 %v433
    %v3096 = vunpack.c.h.b16 %v433
    %v3097 = vunpack.c.l.b16 %v434
    %v3098 = vunpack.c.h.b16 %v434
    %v3099 = vunpack.c.l.b16 %v435
    %v3100 = vunpack.c.h.b16 %v435
    %v3101 = vunpack.c.l.b16 %v436
    %v3102 = vunpack.c.h.b16 %v436
    %v3103 = vunpack.c.l.b16 %v437
    %v3104 = vunpack.c.h.b16 %v437
    %v3105 = vunpack.c.l.b16 %v438
    %v3106 = vunpack.c.h.b16 %v438
    %v3107 = vunpack.c.l.b16 %v439
    %v3108 = vunpack.c.h.b16 %v439
    %v3109 = vunpack.c.l.b16 %v440
    %v3110 = vunpack.c.h.b16 %v440
    %v3111 = vunpack.c.l.b16 %v441
    %v3112 = vunpack.c.h.b16 %v441
    %v3113 = vunpack.c.l.b16 %v442
    %v3114 = vunpack.c.h.b16 %v442
    %v3115 = vunpack.c.l.b16 %v443
    %v3116 = vunpack.c.h.b16 %v443
    %v3117 = vunpack.c.l.b16 %v444
    %v3118 = vunpack.c.h.b16 %v444
    %v3119 = vunpack.c.l.b16 %v445
    %v3120 = vunpack.c.h.b16 %v445
    %v3121 = vunpack.c.l.b16 %v446
    %v3122 = vunpack.c.h.b16 %v446
    %v3123 = vunpack.c.l.b16 %v447
    %v3124 = vunpack.c.h.b16 %v447
    %v3125 = vunpack.c.l.b16 %v448
    %v3126 = vunpack.c.h.b16 %v448
    %v3127 = vunpack.c.l.b16 %v449
    %v3128 = vunpack.c.h.b16 %v449
    %v3129 = vunpack.c.l.b16 %v450
    %v3130 = vunpack.c.h.b16 %v450
    %v3131 = vunpack.c.l.b16 %v451
    %v3132 = vunpack.c.h.b16 %v451
    %v3133 = vunpack.c.l.b16 %v452
    %v3134 = vunpack.c.h.b16 %v452
    %v3135 = vunpack.c.l.b16 %v453
    %v3136 = vunpack.c.h.b16 %v453
    %v3137 = vunpack.c.l.b16 %v454
    %v3138 = vunpack.c.h.b16 %v454
    %v3139 = vunpack.c.l.b16 %v455
    %v3140 = vunpack.c.h.b16 %v455
    %v3141 = vunpack.c.l.b16 %v456
    %v3142 = vunpack.c.h.b16 %v456
    %v3143 = vunpack.c.l.b16 %v457
    %v3144 = vunpack.c.h.b16 %v457
    %v3145 = vunpack.c.l.b16 %v458
    %v3146 = vunpack.c.h.b16 %v458
    %v3147 = vunpack.c.l.b16 %v459
    %v3148 = vunpack.c.h.b16 %v459
    %v3149 = vunpack.c.l.b16 %v460
    %v3150 = vunpack.c.h.b16 %v460
    %v3151 = vunpack.c.l.b16 %v461
    %v3152 = vunpack.c.h.b16 %v461
    %v3153 = vunpack.c.l.b16 %v462
    %v3154 = vunpack.c.h.b16 %v462
    %v3155 = vunpack.c.l.b16 %v463
    %v3156 = vunpack.c.h.b16 %v463
    %v3157 = vunpack.c.l.b16 %v464
    %v3158 = vunpack.c.h.b16 %v464
    %v3159 = vunpack.c.l.b16 %v465
    %v3160 = vunpack.c.h.b16 %v465
    %v3161 = vunpack.c.l.b16 %v466
    %v3162 = vunpack.c.h.b16 %v466
    %v3163 = vunpack.c.l.b16 %v467
    %v3164 = vunpack.c.h.b16 %v467
    %v3165 = vunpack.c.l.b16 %v468
    %v3166 = vunpack.c.h.b16 %v468
    %v3167 = vunpack.c.l.b16 %v469
    %v3168 = vunpack.c.h.b16 %v469
    %v3169 = vunpack.c.l.b16 %v470
    %v3170 = vunpack.c.h.b16 %v470
    %v3171 = vunpack.c.l.b16 %v471
    %v3172 = vunpack.c.h.b16 %v471
    %v3173 = vunpack.c.l.b16 %v472
    %v3174 = vunpack.c.h.b16 %v472
    %v3175 = vunpack.c.l.b16 %v473
    %v3176 = vunpack.c.h.b16 %v473
    %v3177 = vunpack.c.l.b16 %v474
    %v3178 = vunpack.c.h.b16 %v474
    %v3179 = vunpack.c.l.b16 %v475
    %v3180 = vunpack.c.h.b16 %v475
    %v3181 = vunpack.c.l.b16 %v476
    %v3182 = vunpack.c.h.b16 %v476
    %v3183 = vunpack.c.l.b16 %v477
    %v3184 = vunpack.c.h.b16 %v477
    %v3185 = vunpack.c.l.b16 %v478
    %v3186 = vunpack.c.h.b16 %v478
    %v3187 = vunpack.c.l.b16 %v479
    %v3188 = vunpack.c.h.b16 %v479
    %v3189 = vunpack.c.l.b16 %v480
    %v3190 = vunpack.c.h.b16 %v480
    %v3191 = vunpack.c.l.b16 %v481
    %v3192 = vunpack.c.h.b16 %v481
    %v3193 = vunpack.c.l.b16 %v482
    %v3194 = vunpack.c.h.b16 %v482
    %v3195 = vunpack.c.l.b16 %v483
    %v3196 = vunpack.c.h.b16 %v483
    %v3197 = vunpack.c.l.b16 %v484
    %v3198 = vunpack.c.h.b16 %v484
    %v3199 = vunpack.c.l.b16 %v485
    %v3200 = vunpack.c.h.b16 %v485
    %v3201 = vunpack.c.l.b16 %v486
    %v3202 = vunpack.c.h.b16 %v486
    %v3203 = vunpack.c.l.b16 %v487
    %v3204 = vunpack.c.h.b16 %v487
    %v3205 = vunpack.c.l.b16 %v488
    %v3206 = vunpack.c.h.b16 %v488
    %v3207 = vunpack.c.l.b16 %v489
    %v3208 = vunpack.c.h.b16 %v489
    %v3209 = vunpack.c.l.b16 %v490
    %v3210 = vunpack.c.h.b16 %v490
    %v3211 = vunpack.c.l.b16 %v491
    %v3212 = vunpack.c.h.b16 %v491
    %v3213 = vunpack.c.l.b16 %v492
    %v3214 = vunpack.c.h.b16 %v492
    %v3215 = vunpack.c.l.b16 %v493
    %v3216 = vunpack.c.h.b16 %v493
    %v3217 = vunpack.c.l.b16 %v494
    %v3218 = vunpack.c.h.b16 %v494
    %v3219 = vunpack.c.l.b16 %v495
    %v3220 = vunpack.c.h.b16 %v495
    %v3221 = vunpack.c.l.b16 %v496
    %v3222 = vunpack.c.h.b16 %v496
    %v3223 = vunpack.c.l.b16 %v497
    %v3224 = vunpack.c.h.b16 %v497
    %v3225 = vunpack.c.l.b16 %v498
    %v3226 = vunpack.c.h.b16 %v498
    %v3227 = vunpack.c.l.b16 %v499
    %v3228 = vunpack.c.h.b16 %v499
    %v3229 = vunpack.c.l.b16 %v500
    %v3230 = vunpack.c.h.b16 %v500
    %v3231 = vunpack.c.l.b16 %v501
    %v3232 = vunpack.c.h.b16 %v501
    %v3233 = vunpack.c.l.b16 %v502
    %v3234 = vunpack.c.h.b16 %v502
    %v3235 = vunpack.c.l.b16 %v503
    %v3236 = vunpack.c.h.b16 %v503
    %v3237 = vunpack.c.l.b16 %v504
    %v3238 = vunpack.c.h.b16 %v504
    %v3239 = vunpack.c.l.b16 %v505
    %v3240 = vunpack.c.h.b16 %v505
    %v3241 = vunpack.c.l.b16 %v506
    %v3242 = vunpack.c.h.b16 %v506
    %v3243 = vunpack.c.l.b16 %v507
    %v3244 = vunpack.c.h.b16 %v507
    %v3245 = vunpack.c.l.b16 %v508
    %v3246 = vunpack.c.h.b16 %v508
    %v3247 = vunpack.c.l.b16 %v509
    %v3248 = vunpack.c.h.b16 %v509
    %v3249 = vunpack.c.l.b16 %v510
    %v3250 = vunpack.c.h.b16 %v510
    %v3251 = vunpack.c.l.b16 %v511
    %v3252 = vunpack.c.h.b16 %v511
    %v3253 = vunpack.c.l.b16 %v512
    %v3254 = vunpack.c.h.b16 %v512
    %v3255 = vunpack.c.l.b16 %v513
    %v3256 = vunpack.c.h.b16 %v513
    %v3257 = vunpack.c.l.b16 %v514
    %v3258 = vunpack.c.h.b16 %v514
    %v3259 = vunpack.c.l.b16 %v515
    %v3260 = vunpack.c.h.b16 %v515
    %v3261 = vunpack.c.l.b16 %v516
    %v3262 = vunpack.c.h.b16 %v516
    %v3263 = vunpack.c.l.b16 %v517
    %v3264 = vunpack.c.h.b16 %v517
    %v3265 = vunpack.c.l.b16 %v518
    %v3266 = vunpack.c.h.b16 %v518
    %v3267 = vunpack.c.l.b16 %v519
    %v3268 = vunpack.c.h.b16 %v519
    %v3269 = vunpack.c.l.b16 %v520
    %v3270 = vunpack.c.h.b16 %v520
    %v3271 = vunpack.c.l.b16 %v521
    %v3272 = vunpack.c.h.b16 %v521
    %v3273 = vunpack.c.l.b16 %v522
    %v3274 = vunpack.c.h.b16 %v522
    %v3275 = vunpack.c.l.b16 %v523
    %v3276 = vunpack.c.h.b16 %v523
    %v3277 = vunpack.c.l.b16 %v524
    %v3278 = vunpack.c.h.b16 %v524
    %v3279 = vunpack.c.l.b16 %v525
    %v3280 = vunpack.c.h.b16 %v525
    %v3281 = vunpack.c.l.b16 %v526
    %v3282 = vunpack.c.h.b16 %v526
    %v3283 = vunpack.c.l.b16 %v527
    %v3284 = vunpack.c.h.b16 %v527
    %v3285 = vunpack.c.l.b16 %v528
    %v3286 = vunpack.c.h.b16 %v528
    %v3287 = vunpack.c.l.b16 %v529
    %v3288 = vunpack.c.h.b16 %v529
    %v3289 = vunpack.c.l.b16 %v530
    %v3290 = vunpack.c.h.b16 %v530
    %v3291 = vunpack.c.l.b16 %v531
    %v3292 = vunpack.c.h.b16 %v531
    %v3293 = vunpack.c.l.b16 %v532
    %v3294 = vunpack.c.h.b16 %v532
    %v3295 = vunpack.c.l.b16 %v533
    %v3296 = vunpack.c.h.b16 %v533
    %v3297 = vunpack.c.l.b16 %v534
    %v3298 = vunpack.c.h.b16 %v534
    %v3299 = vunpack.c.l.b16 %v535
    %v3300 = vunpack.c.h.b16 %v535
    %v3301 = vunpack.c.l.b16 %v536
    %v3302 = vunpack.c.h.b16 %v536
    %v3303 = vunpack.c.l.b16 %v537
    %v3304 = vunpack.c.h.b16 %v537
    %v3305 = vunpack.c.l.b16 %v538
    %v3306 = vunpack.c.h.b16 %v538
    %v3307 = vunpack.c.l.b16 %v539
    %v3308 = vunpack.c.h.b16 %v539
    %v3309 = vunpack.c.l.b16 %v540
    %v3310 = vunpack.c.h.b16 %v540
    %v3311 = vunpack.c.l.b16 %v541
    %v3312 = vunpack.c.h.b16 %v541
    %v3313 = vunpack.c.l.b16 %v542
    %v3314 = vunpack.c.h.b16 %v542
    %v3315 = vunpack.c.l.b16 %v543
    %v3316 = vunpack.c.h.b16 %v543
    %v3317 = vunpack.c.l.b16 %v544
    %v3318 = vunpack.c.h.b16 %v544
    %v3319 = vunpack.c.l.b16 %v545
    %v3320 = vunpack.c.h.b16 %v545
    %v3321 = vunpack.c.l.b16 %v546
    %v3322 = vunpack.c.h.b16 %v546
    %v3323 = vunpack.c.l.b16 %v547
    %v3324 = vunpack.c.h.b16 %v547
    %v3325 = vunpack.c.l.b16 %v548
    %v3326 = vunpack.c.h.b16 %v548
    %v3327 = vunpack.c.l.b16 %v549
    %v3328 = vunpack.c.h.b16 %v549
    %v3329 = vunpack.c.l.b16 %v550
    %v3330 = vunpack.c.h.b16 %v550
    %v3331 = vunpack.c.l.b16 %v551
    %v3332 = vunpack.c.h.b16 %v551
    %v3333 = vunpack.c.l.b16 %v552
    %v3334 = vunpack.c.h.b16 %v552
    %v3335 = vunpack.c.l.b16 %v553
    %v3336 = vunpack.c.h.b16 %v553
    %v3337 = vunpack.c.l.b16 %v554
    %v3338 = vunpack.c.h.b16 %v554
    %v3339 = vunpack.c.l.b16 %v555
    %v3340 = vunpack.c.h.b16 %v555
    %v3341 = vunpack.c.l.b16 %v556
    %v3342 = vunpack.c.h.b16 %v556
    %v3343 = vunpack.c.l.b16 %v557
    %v3344 = vunpack.c.h.b16 %v557
    %v3345 = vunpack.c.l.b16 %v558
    %v3346 = vunpack.c.h.b16 %v558
    %v3347 = vunpack.c.l.b16 %v559
    %v3348 = vunpack.c.h.b16 %v559
    %v3349 = vunpack.c.l.b16 %v560
    %v3350 = vunpack.c.h.b16 %v560
    %v3351 = vunpack.c.l.b16 %v561
    %v3352 = vunpack.c.h.b16 %v561
    %v3353 = vunpack.c.l.b16 %v562
    %v3354 = vunpack.c.h.b16 %v562
    %v3355 = vunpack.c.l.b16 %v563
    %v3356 = vunpack.c.h.b16 %v563
    %v3357 = vunpack.c.l.b16 %v564
    %v3358 = vunpack.c.h.b16 %v564
    %v3359 = vunpack.c.l.b16 %v565
    %v3360 = vunpack.c.h.b16 %v565
    %v3361 = vunpack.c.l.b16 %v566
    %v3362 = vunpack.c.h.b16 %v566
    %v3363 = vunpack.c.l.b16 %v567
    %v3364 = vunpack.c.h.b16 %v567
    %v3365 = vunpack.c.l.b16 %v568
    %v3366 = vunpack.c.h.b16 %v568
    %v3367 = vunpack.c.l.b16 %v569
    %v3368 = vunpack.c.h.b16 %v569
    %v3369 = vunpack.c.l.b16 %v570
    %v3370 = vunpack.c.h.b16 %v570
    %v3371 = vunpack.c.l.b16 %v571
    %v3372 = vunpack.c.h.b16 %v571
    %v3373 = vunpack.c.l.b16 %v572
    %v3374 = vunpack.c.h.b16 %v572
    %v3375 = vunpack.c.l.b16 %v573
    %v3376 = vunpack.c.h.b16 %v573
    %v3377 = vunpack.c.l.b16 %v574
    %v3378 = vunpack.c.h.b16 %v574
    %v3379 = vunpack.c.l.b16 %v575
    %v3380 = vunpack.c.h.b16 %v575
    %v3381 = vunpack.c.l.b16 %v576
    %v3382 = vunpack.c.h.b16 %v576
    %v3383 = vunpack.c.l.b16 %v577
    %v3384 = vunpack.c.h.b16 %v577
    %v3385 = vunpack.c.l.b16 %v578
    %v3386 = vunpack.c.h.b16 %v578
    %v3387 = vunpack.c.l.b16 %v579
    %v3388 = vunpack.c.h.b16 %v579
    %v3389 = vunpack.c.l.b16 %v580
    %v3390 = vunpack.c.h.b16 %v580
    %v3391 = vunpack.c.l.b16 %v581
    %v3392 = vunpack.c.h.b16 %v581
    %v3393 = vunpack.c.l.b16 %v582
    %v3394 = vunpack.c.h.b16 %v582
    %v3395 = vunpack.c.l.b16 %v583
    %v3396 = vunpack.c.h.b16 %v583
    %v3397 = vunpack.c.l.b16 %v584
    %v3398 = vunpack.c.h.b16 %v584
    %v3399 = vunpack.c.l.b16 %v585
    %v3400 = vunpack.c.h.b16 %v585
    %v3401 = vunpack.c.l.b16 %v586
    %v3402 = vunpack.c.h.b16 %v586
    %v3403 = vunpack.c.l.b16 %v587
    %v3404 = vunpack.c.h.b16 %v587
    %v3405 = vunpack.c.l.b16 %v588
    %v3406 = vunpack.c.h.b16 %v588
    %v3407 = vunpack.c.l.b16 %v589
    %v3408 = vunpack.c.h.b16 %v589
    %v3409 = vunpack.c.l.b16 %v590
    %v3410 = vunpack.c.h.b16 %v590
    %v3411 = vunpack.c.l.b16 %v591
    %v3412 = vunpack.c.h.b16 %v591
    %v3413 = vunpack.c.l.b16 %v592
    %v3414 = vunpack.c.h.b16 %v592
    %v3415 = vunpack.c.l.b16 %v593
    %v3416 = vunpack.c.h.b16 %v593
    %v3417 = vunpack.c.l.b16 %v594
    %v3418 = vunpack.c.h.b16 %v594
    %v3419 = vunpack.c.l.b16 %v595
    %v3420 = vunpack.c.h.b16 %v595
    %v3421 = vunpack.c.l.b16 %v596
    %v3422 = vunpack.c.h.b16 %v596
    %v3423 = vunpack.c.l.b16 %v597
    %v3424 = vunpack.c.h.b16 %v597
    %v3425 = vunpack.c.l.b16 %v598
    %v3426 = vunpack.c.h.b16 %v598
    %v3427 = vunpack.c.l.b16 %v599
    %v3428 = vunpack.c.h.b16 %v599
    %v3429 = vunpack.c.l.b16 %v600
    %v3430 = vunpack.c.h.b16 %v600
    %v3431 = vunpack.c.l.b16 %v601
    %v3432 = vunpack.c.h.b16 %v601
    %v3433 = vunpack.c.l.b16 %v602
    %v3434 = vunpack.c.h.b16 %v602
    %v3435 = vunpack.c.l.b16 %v603
    %v3436 = vunpack.c.h.b16 %v603
    %v3437 = vunpack.c.l.b16 %v604
    %v3438 = vunpack.c.h.b16 %v604
    %v3439 = vunpack.c.l.b16 %v605
    %v3440 = vunpack.c.h.b16 %v605
    %v3441 = vunpack.c.l.b16 %v606
    %v3442 = vunpack.c.h.b16 %v606
    %v3443 = vunpack.c.l.b16 %v607
    %v3444 = vunpack.c.h.b16 %v607
    %v3445 = vunpack.c.l.b16 %v608
    %v3446 = vunpack.c.h.b16 %v608
    %v3447 = vunpack.c.l.b16 %v609
    %v3448 = vunpack.c.h.b16 %v609
    %v3449 = vunpack.c.l.b16 %v610
    %v3450 = vunpack.c.h.b16 %v610
    %v3451 = vunpack.c.l.b16 %v611
    %v3452 = vunpack.c.h.b16 %v611
    %v3453 = vunpack.c.l.b16 %v612
    %v3454 = vunpack.c.h.b16 %v612
    %v3455 = vunpack.c.l.b16 %v613
    %v3456 = vunpack.c.h.b16 %v613
    %v3457 = vunpack.c.l.b16 %v614
    %v3458 = vunpack.c.h.b16 %v614
    %v3459 = vunpack.c.l.b16 %v615
    %v3460 = vunpack.c.h.b16 %v615
    %v3461 = vunpack.c.l.b16 %v616
    %v3462 = vunpack.c.h.b16 %v616
    %v3463 = vunpack.c.l.b16 %v617
    %v3464 = vunpack.c.h.b16 %v617
    %v3465 = vunpack.c.l.b16 %v618
    %v3466 = vunpack.c.h.b16 %v618
    %v3467 = vunpack.c.l.b16 %v619
    %v3468 = vunpack.c.h.b16 %v619
    %v3469 = vunpack.c.l.b16 %v620
    %v3470 = vunpack.c.h.b16 %v620
    %v3471 = vunpack.c.l.b16 %v621
    %v3472 = vunpack.c.h.b16 %v621
    %v3473 = vunpack.c.l.b16 %v622
    %v3474 = vunpack.c.h.b16 %v622
    %v3475 = vunpack.c.l.b16 %v623
    %v3476 = vunpack.c.h.b16 %v623
    %v3477 = vunpack.c.l.b16 %v624
    %v3478 = vunpack.c.h.b16 %v624
    %v3479 = vunpack.c.l.b16 %v625
    %v3480 = vunpack.c.h.b16 %v625
    %v3481 = vunpack.c.l.b16 %v626
    %v3482 = vunpack.c.h.b16 %v626
    %v3483 = vunpack.c.l.b16 %v627
    %v3484 = vunpack.c.h.b16 %v627
    %v3485 = vunpack.c.l.b16 %v628
    %v3486 = vunpack.c.h.b16 %v628
    %v3487 = vunpack.c.l.b16 %v629
    %v3488 = vunpack.c.h.b16 %v629
    %v3489 = vunpack.c.l.b16 %v630
    %v3490 = vunpack.c.h.b16 %v630
    %v3491 = vunpack.c.l.b16 %v631
    %v3492 = vunpack.c.h.b16 %v631
    %v3493 = vunpack.c.l.b16 %v632
    %v3494 = vunpack.c.h.b16 %v632
    %v3495 = vunpack.c.l.b16 %v633
    %v3496 = vunpack.c.h.b16 %v633
    %v3497 = vunpack.c.l.b16 %v634
    %v3498 = vunpack.c.h.b16 %v634
    %v3499 = vunpack.c.l.b16 %v635
    %v3500 = vunpack.c.h.b16 %v635
    %v3501 = vunpack.c.l.b16 %v636
    %v3502 = vunpack.c.h.b16 %v636
    %v3503 = vunpack.c.l.b16 %v637
    %v3504 = vunpack.c.h.b16 %v637
    %v3505 = vunpack.c.l.b16 %v638
    %v3506 = vunpack.c.h.b16 %v638
    %v3507 = vunpack.c.l.b16 %v639
    %v3508 = vunpack.c.h.b16 %v639
    %v3509 = vunpack.c.l.b16 %v640
    %v3510 = vunpack.c.h.b16 %v640
    %v3511 = vunpack.c.l.b16 %v641
    %v3512 = vunpack.c.h.b16 %v641
    %v3513 = vunpack.c.l.b16 %v642
    %v3514 = vunpack.c.h.b16 %v642
    %v3515 = vunpack.c.l.b16 %v643
    %v3516 = vunpack.c.h.b16 %v643
    %v3517 = vunpack.c.l.b16 %v644
    %v3518 = vunpack.c.h.b16 %v644
    %v3519 = vunpack.c.l.b16 %v645
    %v3520 = vunpack.c.h.b16 %v645
    %v3521 = vunpack.c.l.b16 %v646
    %v3522 = vunpack.c.h.b16 %v646
    %v3523 = vunpack.c.l.b16 %v647
    %v3524 = vunpack.c.h.b16 %v647
    %v3525 = vunpack.c.l.b16 %v648
    %v3526 = vunpack.c.h.b16 %v648
    %v3527 = vunpack.c.l.b16 %v649
    %v3528 = vunpack.c.h.b16 %v649
    %v3529 = vunpack.c.l.b16 %v650
    %v3530 = vunpack.c.h.b16 %v650
    %v3531 = vunpack.c.l.b16 %v651
    %v3532 = vunpack.c.h.b16 %v651
    %v3533 = vunpack.c.l.b16 %v652
    %v3534 = vunpack.c.h.b16 %v652
    %v3535 = vunpack.c.l.b16 %v653
    %v3536 = vunpack.c.h.b16 %v653
    %v3537 = vunpack.c.l.b16 %v654
    %v3538 = vunpack.c.h.b16 %v654
    %v3539 = vunpack.c.l.b16 %v655
    %v3540 = vunpack.c.h.b16 %v655
    %v3541 = vunpack.c.l.b16 %v656
    %v3542 = vunpack.c.h.b16 %v656
    %v3543 = vunpack.c.l.b16 %v657
    %v3544 = vunpack.c.h.b16 %v657
    %v3545 = vunpack.c.l.b16 %v658
    %v3546 = vunpack.c.h.b16 %v658
    %v3547 = vunpack.c.l.b16 %v659
    %v3548 = vunpack.c.h.b16 %v659
    %v3549 = vunpack.c.l.b16 %v660
    %v3550 = vunpack.c.h.b16 %v660
    %v3551 = vunpack.c.l.b16 %v661
    %v3552 = vunpack.c.h.b16 %v661
    %v3553 = vunpack.c.l.b16 %v662
    %v3554 = vunpack.c.h.b16 %v662
    %v3555 = vunpack.c.l.b16 %v663
    %v3556 = vunpack.c.h.b16 %v663
    %v3557 = vunpack.c.l.b16 %v664
    %v3558 = vunpack.c.h.b16 %v664
    %v3559 = vunpack.c.l.b16 %v665
    %v3560 = vunpack.c.h.b16 %v665
    %v3561 = vunpack.c.l.b16 %v666
    %v3562 = vunpack.c.h.b16 %v666
    %v3563 = vunpack.c.l.b16 %v667
    %v3564 = vunpack.c.h.b16 %v667
    %v3565 = vunpack.c.l.b16 %v668
    %v3566 = vunpack.c.h.b16 %v668
    %v3567 = vunpack.c.l.b16 %v669
    %v3568 = vunpack.c.h.b16 %v669
    %v3569 = vunpack.c.l.b16 %v670
    %v3570 = vunpack.c.h.b16 %v670
    %v3571 = vunpack.c.l.b16 %v671
    %v3572 = vunpack.c.h.b16 %v671
    %v3573 = vunpack.c.l.b16 %v672
    %v3574 = vunpack.c.h.b16 %v672
    %v3575 = vunpack.c.l.b16 %v673
    %v3576 = vunpack.c.h.b16 %v673
    %v3577 = vunpack.c.l.b16 %v674
    %v3578 = vunpack.c.h.b16 %v674
    %v3579 = vunpack.c.l.b16 %v675
    %v3580 = vunpack.c.h.b16 %v675
    %v3581 = vunpack.c.l.b16 %v676
    %v3582 = vunpack.c.h.b16 %v676
    %v3583 = vunpack.c.l.b16 %v677
    %v3584 = vunpack.c.h.b16 %v677
    %v3585 = vunpack.c.l.b16 %v678
    %v3586 = vunpack.c.h.b16 %v678
    %v3587 = vunpack.c.l.b16 %v679
    %v3588 = vunpack.c.h.b16 %v679
    %v3589 = vunpack.c.l.b16 %v680
    %v3590 = vunpack.c.h.b16 %v680
    %v3591 = vunpack.c.l.b16 %v681
    %v3592 = vunpack.c.h.b16 %v681
    %v3593 = vunpack.c.l.b16 %v682
    %v3594 = vunpack.c.h.b16 %v682
    %v3595 = vunpack.c.l.b16 %v683
    %v3596 = vunpack.c.h.b16 %v683
    %v3597 = vunpack.c.l.b16 %v684
    %v3598 = vunpack.c.h.b16 %v684
    %v3599 = vunpack.c.l.b16 %v685
    %v3600 = vunpack.c.h.b16 %v685
    %v3601 = vunpack.c.l.b16 %v686
    %v3602 = vunpack.c.h.b16 %v686
    %v3603 = vunpack.c.l.b16 %v687
    %v3604 = vunpack.c.h.b16 %v687
    %v3605 = vunpack.c.l.b16 %v688
    %v3606 = vunpack.c.h.b16 %v688
    %v3607 = vunpack.c.l.b16 %v689
    %v3608 = vunpack.c.h.b16 %v689
    %v3609 = vunpack.c.l.b16 %v690
    %v3610 = vunpack.c.h.b16 %v690
    %v3611 = vunpack.c.l.b16 %v691
    %v3612 = vunpack.c.h.b16 %v691
    %v3613 = vunpack.c.l.b16 %v692
    %v3614 = vunpack.c.h.b16 %v692
    %v3615 = vunpack.c.l.b16 %v693
    %v3616 = vunpack.c.h.b16 %v693
    %v3617 = vunpack.c.l.b16 %v694
    %v3618 = vunpack.c.h.b16 %v694
    %v3619 = vunpack.c.l.b16 %v695
    %v3620 = vunpack.c.h.b16 %v695
    %v3621 = vunpack.c.l.b16 %v696
    %v3622 = vunpack.c.h.b16 %v696
    %v3623 = vunpack.c.l.b16 %v697
    %v3624 = vunpack.c.h.b16 %v697
    %v3625 = vunpack.c.l.b16 %v698
    %v3626 = vunpack.c.h.b16 %v698
    %v3627 = vunpack.c.l.b16 %v699
    %v3628 = vunpack.c.h.b16 %v699
    %v3629 = vunpack.c.l.b16 %v700
    %v3630 = vunpack.c.h.b16 %v700
    %v3631 = vunpack.c.l.b16 %v701
    %v3632 = vunpack.c.h.b16 %v701
    %v3633 = vunpack.c.l.b16 %v702
    %v3634 = vunpack.c.h.b16 %v702
    %v3635 = vunpack.c.l.b16 %v703
    %v3636 = vunpack.c.h.b16 %v703
    %v3637 = vunpack.c.l.b16 %v704
    %v3638 = vunpack.c.h.b16 %v704
    %v3639 = vunpack.c.l.b16 %v705
    %v3640 = vunpack.c.h.b16 %v705
    %v3641 = vunpack.c.l.b16 %v706
    %v3642 = vunpack.c.h.b16 %v706
    %v3643 = vunpack.c.l.b16 %v707
    %v3644 = vunpack.c.h.b16 %v707
    %v3645 = vunpack.c.l.b16 %v708
    %v3646 = vunpack.c.h.b16 %v708
    %v3647 = vunpack.c.l.b16 %v709
    %v3648 = vunpack.c.h.b16 %v709
    %v3649 = vunpack.c.l.b16 %v710
    %v3650 = vunpack.c.h.b16 %v710
    %v3651 = vunpack.c.l.b16 %v711
    %v3652 = vunpack.c.h.b16 %v711
    %v3653 = vunpack.c.l.b16 %v712
    %v3654 = vunpack.c.h.b16 %v712
    %v3655 = vunpack.c.l.b16 %v713
    %v3656 = vunpack.c.h.b16 %v713
    %v3657 = vunpack.c.l.b16 %v714
    %v3658 = vunpack.c.h.b16 %v714
    %v3659 = vunpack.c.l.b16 %v715
    %v3660 = vunpack.c.h.b16 %v715
    %v3661 = vunpack.c.l.b16 %v716
    %v3662 = vunpack.c.h.b16 %v716
    %v3663 = vunpack.c.l.b16 %v717
    %v3664 = vunpack.c.h.b16 %v717
    %v3665 = vunpack.c.l.b16 %v718
    %v3666 = vunpack.c.h.b16 %v718
    %v3667 = vunpack.c.l.b16 %v719
    %v3668 = vunpack.c.h.b16 %v719
    %v3669 = vunpack.c.l.b16 %v720
    %v3670 = vunpack.c.h.b16 %v720
    %v3671 = vunpack.c.l.b16 %v721
    %v3672 = vunpack.c.h.b16 %v721
    %v3673 = vunpack.c.l.b16 %v722
    %v3674 = vunpack.c.h.b16 %v722
    %v3675 = vunpack.c.l.b16 %v723
    %v3676 = vunpack.c.h.b16 %v723
    %v3677 = vunpack.c.l.b16 %v724
    %v3678 = vunpack.c.h.b16 %v724
    %v3679 = vunpack.c.l.b16 %v725
    %v3680 = vunpack.c.h.b16 %v725
    %v3681 = vunpack.c.l.b16 %v726
    %v3682 = vunpack.c.h.b16 %v726
    %v3683 = vunpack.c.l.b16 %v727
    %v3684 = vunpack.c.h.b16 %v727
    %v3685 = vunpack.c.l.b16 %v728
    %v3686 = vunpack.c.h.b16 %v728
    %v3687 = vunpack.c.l.b16 %v729
    %v3688 = vunpack.c.h.b16 %v729
    %v3689 = vunpack.c.l.b16 %v730
    %v3690 = vunpack.c.h.b16 %v730
    %v3691 = vunpack.c.l.b16 %v731
    %v3692 = vunpack.c.h.b16 %v731
    %v3693 = vunpack.c.l.b16 %v732
    %v3694 = vunpack.c.h.b16 %v732
    %v3695 = vunpack.c.l.b16 %v733
    %v3696 = vunpack.c.h.b16 %v733
    %v3697 = vunpack.c.l.b16 %v734
    %v3698 = vunpack.c.h.b16 %v734
    %v3699 = vunpack.c.l.b16 %v735
    %v3700 = vunpack.c.h.b16 %v735
    %v3701 = vunpack.c.l.b16 %v736
    %v3702 = vunpack.c.h.b16 %v736
    %v3703 = vunpack.c.l.b16 %v737
    %v3704 = vunpack.c.h.b16 %v737
    %v3705 = vunpack.c.l.b16 %v738
    %v3706 = vunpack.c.h.b16 %v738
    %v3707 = vunpack.c.l.b16 %v739
    %v3708 = vunpack.c.h.b16 %v739
    %v3709 = vunpack.c.l.b16 %v740
    %v3710 = vunpack.c.h.b16 %v740
    %v3711 = vunpack.c.l.b16 %v741
    %v3712 = vunpack.c.h.b16 %v741
    %v3713 = vunpack.c.l.b16 %v742
    %v3714 = vunpack.c.h.b16 %v742
    %v3715 = vunpack.c.l.b16 %v743
    %v3716 = vunpack.c.h.b16 %v743
    %v3717 = vunpack.c.l.b16 %v744
    %v3718 = vunpack.c.h.b16 %v744
    %v3719 = vunpack.c.l.b16 %v745
    %v3720 = vunpack.c.h.b16 %v745
    %v3721 = vunpack.c.l.b16 %v746
    %v3722 = vunpack.c.h.b16 %v746
    %v3723 = vunpack.c.l.b16 %v747
    %v3724 = vunpack.c.h.b16 %v747
    %v3725 = vunpack.c.l.b16 %v748
    %v3726 = vunpack.c.h.b16 %v748
    %v3727 = vunpack.c.l.b16 %v749
    %v3728 = vunpack.c.h.b16 %v749
    %v3729 = vunpack.c.l.b16 %v750
    %v3730 = vunpack.c.h.b16 %v750
    %v3731 = vunpack.c.l.b16 %v751
    %v3732 = vunpack.c.h.b16 %v751
    %v3733 = vunpack.c.l.b16 %v752
    %v3734 = vunpack.c.h.b16 %v752
    %v3735 = vunpack.c.l.b16 %v753
    %v3736 = vunpack.c.h.b16 %v753
    %v3737 = vunpack.c.l.b16 %v754
    %v3738 = vunpack.c.h.b16 %v754
    %v3739 = vunpack.c.l.b16 %v755
    %v3740 = vunpack.c.h.b16 %v755
    %v3741 = vunpack.c.l.b16 %v756
    %v3742 = vunpack.c.h.b16 %v756
    %v3743 = vunpack.c.l.b16 %v757
    %v3744 = vunpack.c.h.b16 %v757
    %v3745 = vunpack.c.l.b16 %v758
    %v3746 = vunpack.c.h.b16 %v758
    %v3747 = vunpack.c.l.b16 %v759
    %v3748 = vunpack.c.h.b16 %v759
    %v3749 = vunpack.c.l.b16 %v760
    %v3750 = vunpack.c.h.b16 %v760
    %v3751 = vunpack.c.l.b16 %v761
    %v3752 = vunpack.c.h.b16 %v761
    %v3753 = vunpack.c.l.b16 %v762
    %v3754 = vunpack.c.h.b16 %v762
    %v3755 = vunpack.c.l.b16 %v763
    %v3756 = vunpack.c.h.b16 %v763
    %v3757 = vunpack.c.l.b16 %v764
    %v3758 = vunpack.c.h.b16 %v764
    %v3759 = vunpack.c.l.b16 %v765
    %v3760 = vunpack.c.h.b16 %v765
    %v3761 = vunpack.c.l.b16 %v766
    %v3762 = vunpack.c.h.b16 %v766
    %v3763 = vunpack.c.l.b16 %v767
    %v3764 = vunpack.c.h.b16 %v767
    %v3765 = vunpack.c.l.b16 %v768
    %v3766 = vunpack.c.h.b16 %v768
    %v3767 = vunpack.c.l.b16 %v769
    %v3768 = vunpack.c.h.b16 %v769
    %v3769 = vunpack.c.l.b16 %v770
    %v3770 = vunpack.c.h.b16 %v770
    %v3771 = vunpack.c.l.b16 %v771
    %v3772 = vunpack.c.h.b16 %v771
    %v3773 = vunpack.c.l.b16 %v772
    %v3774 = vunpack.c.h.b16 %v772
    %v3775 = vunpack.c.l.b16 %v773
    %v3776 = vunpack.c.h.b16 %v773
    %v3777 = vunpack.c.l.b16 %v774
    %v3778 = vunpack.c.h.b16 %v774
    %v3779 = vunpack.c.l.b16 %v775
    %v3780 = vunpack.c.h.b16 %v775
    %v3781 = vunpack.c.l.b16 %v776
    %v3782 = vunpack.c.h.b16 %v776
    %v3783 = vunpack.c.l.b16 %v777
    %v3784 = vunpack.c.h.b16 %v777
    %v3785 = vunpack.c.l.b16 %v778
    %v3786 = vunpack.c.h.b16 %v778
    %v3787 = vunpack.c.l.b16 %v779
    %v3788 = vunpack.c.h.b16 %v779
    %v3789 = vunpack.c.l.b16 %v780
    %v3790 = vunpack.c.h.b16 %v780
    %v3791 = vunpack.c.l.b16 %v781
    %v3792 = vunpack.c.h.b16 %v781
    %v3793 = vunpack.c.l.b16 %v782
    %v3794 = vunpack.c.h.b16 %v782
    %v3795 = vunpack.c.l.b16 %v783
    %v3796 = vunpack.c.h.b16 %v783
    %v3797 = vunpack.c.l.b16 %v784
    %v3798 = vunpack.c.h.b16 %v784
    %v3799 = vunpack.c.l.b16 %v785
    %v3800 = vunpack.c.h.b16 %v785
    %v3801 = vunpack.c.l.b16 %v786
    %v3802 = vunpack.c.h.b16 %v786
    %v3803 = vunpack.c.l.b16 %v787
    %v3804 = vunpack.c.h.b16 %v787
    %v3805 = vunpack.c.l.b16 %v788
    %v3806 = vunpack.c.h.b16 %v788
    %v3807 = vunpack.c.l.b16 %v789
    %v3808 = vunpack.c.h.b16 %v789
    %v3809 = vunpack.c.l.b16 %v790
    %v3810 = vunpack.c.h.b16 %v790
    %v3811 = vunpack.c.l.b16 %v791
    %v3812 = vunpack.c.h.b16 %v791
    %v3813 = vunpack.c.l.b16 %v792
    %v3814 = vunpack.c.h.b16 %v792
    %v3815 = vunpack.c.l.b16 %v793
    %v3816 = vunpack.c.h.b16 %v793
    %v3817 = vunpack.c.l.b16 %v794
    %v3818 = vunpack.c.h.b16 %v794
    %v3819 = vunpack.c.l.b16 %v795
    %v3820 = vunpack.c.h.b16 %v795
    %v3821 = vunpack.c.l.b16 %v796
    %v3822 = vunpack.c.h.b16 %v796
    %v3823 = vunpack.c.l.b16 %v797
    %v3824 = vunpack.c.h.b16 %v797
    %v3825 = vunpack.c.l.b16 %v798
    %v3826 = vunpack.c.h.b16 %v798
    %v3827 = vunpack.c.l.b16 %v799
    %v3828 = vunpack.c.h.b16 %v799
    %v3829 = vunpack.c.l.b16 %v800
    %v3830 = vunpack.c.h.b16 %v800
    %v3831 = vunpack.c.l.b16 %v801
    %v3832 = vunpack.c.h.b16 %v801
    %v3833 = vunpack.c.l.b16 %v802
    %v3834 = vunpack.c.h.b16 %v802
    %v3835 = vunpack.c.l.b16 %v803
    %v3836 = vunpack.c.h.b16 %v803
    %v3837 = vunpack.c.l.b16 %v804
    %v3838 = vunpack.c.h.b16 %v804
    %v3839 = vunpack.c.l.b16 %v805
    %v3840 = vunpack.c.h.b16 %v805
    %v3841 = vunpack.c.l.b16 %v806
    %v3842 = vunpack.c.h.b16 %v806
    %v3843 = vunpack.c.l.b16 %v807
    %v3844 = vunpack.c.h.b16 %v807
    %v3845 = vunpack.c.l.b16 %v808
    %v3846 = vunpack.c.h.b16 %v808
    %v3847 = vunpack.c.l.b16 %v809
    %v3848 = vunpack.c.h.b16 %v809
    %v3849 = vunpack.c.l.b16 %v810
    %v3850 = vunpack.c.h.b16 %v810
    %v3851 = vunpack.c.l.b16 %v811
    %v3852 = vunpack.c.h.b16 %v811
    %v3853 = vunpack.c.l.b16 %v812
    %v3854 = vunpack.c.h.b16 %v812
    %v3855 = vunpack.c.l.b16 %v813
    %v3856 = vunpack.c.h.b16 %v813
    %v3857 = vunpack.c.l.b16 %v814
    %v3858 = vunpack.c.h.b16 %v814
    %v3859 = vunpack.c.l.b16 %v815
    %v3860 = vunpack.c.h.b16 %v815
    %v3861 = vunpack.c.l.b16 %v816
    %v3862 = vunpack.c.h.b16 %v816
    %v3863 = vunpack.c.l.b16 %v817
    %v3864 = vunpack.c.h.b16 %v817
    %v3865 = vunpack.c.l.b16 %v818
    %v3866 = vunpack.c.h.b16 %v818
    %v3867 = vunpack.c.l.b16 %v819
    %v3868 = vunpack.c.h.b16 %v819
    %v3869 = vunpack.c.l.b16 %v820
    %v3870 = vunpack.c.h.b16 %v820
    %v3871 = vunpack.c.l.b16 %v821
    %v3872 = vunpack.c.h.b16 %v821
    %v3873 = vunpack.c.l.b16 %v822
    %v3874 = vunpack.c.h.b16 %v822
    %v3875 = vunpack.c.l.b16 %v823
    %v3876 = vunpack.c.h.b16 %v823
    %v3877 = vunpack.c.l.b16 %v824
    %v3878 = vunpack.c.h.b16 %v824
    %v3879 = vunpack.c.l.b16 %v825
    %v3880 = vunpack.c.h.b16 %v825
    %v3881 = vunpack.c.l.b16 %v826
    %v3882 = vunpack.c.h.b16 %v826
    %v3883 = vunpack.c.l.b16 %v827
    %v3884 = vunpack.c.h.b16 %v827
    %v3885 = vunpack.c.l.b16 %v828
    %v3886 = vunpack.c.h.b16 %v828
    %v3887 = vunpack.c.l.b16 %v829
    %v3888 = vunpack.c.h.b16 %v829
    %v3889 = vunpack.c.l.b16 %v830
    %v3890 = vunpack.c.h.b16 %v830
    %v3891 = vunpack.c.l.b16 %v831
    %v3892 = vunpack.c.h.b16 %v831
    %v3893 = vunpack.c.l.b16 %v832
    %v3894 = vunpack.c.h.b16 %v832
    %v3895 = vunpack.c.l.b16 %v833
    %v3896 = vunpack.c.h.b16 %v833
    %v3897 = vunpack.c.l.b16 %v834
    %v3898 = vunpack.c.h.b16 %v834
    %v3899 = vunpack.c.l.b16 %v835
    %v3900 = vunpack.c.h.b16 %v835
    %v3901 = vunpack.c.l.b16 %v836
    %v3902 = vunpack.c.h.b16 %v836
    %v3903 = vunpack.c.l.b16 %v837
    %v3904 = vunpack.c.h.b16 %v837
    %v3905 = vunpack.c.l.b16 %v838
    %v3906 = vunpack.c.h.b16 %v838
    %v3907 = vunpack.c.l.b16 %v839
    %v3908 = vunpack.c.h.b16 %v839
    %v3909 = vunpack.c.l.b16 %v840
    %v3910 = vunpack.c.h.b16 %v840
    %v3911 = vunpack.c.l.b16 %v841
    %v3912 = vunpack.c.h.b16 %v841
    %v3913 = vunpack.c.l.b16 %v842
    %v3914 = vunpack.c.h.b16 %v842
    %v3915 = vunpack.c.l.b16 %v843
    %v3916 = vunpack.c.h.b16 %v843
    %v3917 = vunpack.c.l.b16 %v844
    %v3918 = vunpack.c.h.b16 %v844
    %v3919 = vunpack.c.l.b16 %v845
    %v3920 = vunpack.c.h.b16 %v845
    %v3921 = vunpack.c.l.b16 %v846
    %v3922 = vunpack.c.h.b16 %v846
    %v3923 = vunpack.c.l.b16 %v847
    %v3924 = vunpack.c.h.b16 %v847
    %v3925 = vunpack.c.l.b16 %v848
    %v3926 = vunpack.c.h.b16 %v848
    %v3927 = vunpack.c.l.b16 %v849
    %v3928 = vunpack.c.h.b16 %v849
    %v3929 = vunpack.c.l.b16 %v850
    %v3930 = vunpack.c.h.b16 %v850
    %v3931 = vunpack.c.l.b16 %v851
    %v3932 = vunpack.c.h.b16 %v851
    %v3933 = vunpack.c.l.b16 %v852
    %v3934 = vunpack.c.h.b16 %v852
    %v3935 = vunpack.c.l.b16 %v853
    %v3936 = vunpack.c.h.b16 %v853
    %v3937 = vunpack.c.l.b16 %v854
    %v3938 = vunpack.c.h.b16 %v854
    %v3939 = vunpack.c.l.b16 %v855
    %v3940 = vunpack.c.h.b16 %v855
    %v3941 = vunpack.c.l.b16 %v856
    %v3942 = vunpack.c.h.b16 %v856
    %v3943 = vunpack.c.l.b16 %v857
    %v3944 = vunpack.c.h.b16 %v857
    %v3945 = vunpack.c.l.b16 %v858
    %v3946 = vunpack.c.h.b16 %v858
    %v3947 = vunpack.c.l.b16 %v859
    %v3948 = vunpack.c.h.b16 %v859
    %v3949 = vunpack.c.l.b16 %v860
    %v3950 = vunpack.c.h.b16 %v860
    %v3951 = vunpack.c.l.b16 %v861
    %v3952 = vunpack.c.h.b16 %v861
    %v3953 = vunpack.c.l.b16 %v862
    %v3954 = vunpack.c.h.b16 %v862
    %v3955 = vunpack.c.l.b16 %v863
    %v3956 = vunpack.c.h.b16 %v863
    %v3957 = vunpack.c.l.b16 %v864
    %v3958 = vunpack.c.h.b16 %v864
    %v3959 = vunpack.c.l.b16 %v865
    %v3960 = vunpack.c.h.b16 %v865
    %v3961 = vunpack.c.l.b16 %v866
    %v3962 = vunpack.c.h.b16 %v866
    %v3963 = vunpack.c.l.b16 %v867
    %v3964 = vunpack.c.h.b16 %v867
    %v3965 = vunpack.c.l.b16 %v868
    %v3966 = vunpack.c.h.b16 %v868
    %v3967 = vunpack.c.l.b16 %v869
    %v3968 = vunpack.c.h.b16 %v869
    %v3969 = vunpack.c.l.b16 %v870
    %v3970 = vunpack.c.h.b16 %v870
    %v3971 = vunpack.c.l.b16 %v871
    %v3972 = vunpack.c.h.b16 %v871
    %v3973 = vunpack.c.l.b16 %v872
    %v3974 = vunpack.c.h.b16 %v872
    %v3975 = vunpack.c.l.b16 %v873
    %v3976 = vunpack.c.h.b16 %v873
    %v3977 = vunpack.c.l.b16 %v874
    %v3978 = vunpack.c.h.b16 %v874
    %v3979 = vunpack.c.l.b16 %v875
    %v3980 = vunpack.c.h.b16 %v875
    %v3981 = vunpack.c.l.b16 %v876
    %v3982 = vunpack.c.h.b16 %v876
    %v3983 = vunpack.c.l.b16 %v877
    %v3984 = vunpack.c.h.b16 %v877
    %v3985 = vunpack.c.l.b16 %v878
    %v3986 = vunpack.c.h.b16 %v878
    %v3987 = vunpack.c.l.b16 %v879
    %v3988 = vunpack.c.h.b16 %v879
    %v3989 = vunpack.c.l.b16 %v880
    %v3990 = vunpack.c.h.b16 %v880
    %v3991 = vunpack.c.l.b16 %v881
    %v3992 = vunpack.c.h.b16 %v881
    %v3993 = vunpack.c.l.b16 %v882
    %v3994 = vunpack.c.h.b16 %v882
    %v3995 = vunpack.c.l.b16 %v883
    %v3996 = vunpack.c.h.b16 %v883
    %v3997 = vunpack.c.l.b16 %v884
    %v3998 = vunpack.c.h.b16 %v884
    %v3999 = vunpack.c.l.b16 %v885
    %v4000 = vunpack.c.h.b16 %v885
    %v4001 = vunpack.c.l.b16 %v886
    %v4002 = vunpack.c.h.b16 %v886
    %v4003 = vunpack.c.l.b16 %v887
    %v4004 = vunpack.c.h.b16 %v887
    %v4005 = vunpack.c.l.b16 %v888
    %v4006 = vunpack.c.h.b16 %v888
    %v4007 = vunpack.c.l.b16 %v889
    %v4008 = vunpack.c.h.b16 %v889
    %v4009 = vunpack.c.l.b16 %v890
    %v4010 = vunpack.c.h.b16 %v890
    %v4011 = vunpack.c.l.b16 %v891
    %v4012 = vunpack.c.h.b16 %v891
    %v4013 = vunpack.c.l.b16 %v892
    %v4014 = vunpack.c.h.b16 %v892
    %v4015 = vunpack.c.l.b16 %v893
    %v4016 = vunpack.c.h.b16 %v893
    %v4017 = vunpack.c.l.b16 %v894
    %v4018 = vunpack.c.h.b16 %v894
    %v4019 = vunpack.c.l.b16 %v895
    %v4020 = vunpack.c.h.b16 %v895
    %v4021 = vunpack.c.l.b16 %v896
    %v4022 = vunpack.c.h.b16 %v896
    %v4023 = vunpack.c.l.b16 %v897
    %v4024 = vunpack.c.h.b16 %v897
    %v4025 = vunpack.c.l.b16 %v898
    %v4026 = vunpack.c.h.b16 %v898
    %v4027 = vunpack.c.l.b16 %v899
    %v4028 = vunpack.c.h.b16 %v899
    %v4029 = vunpack.c.l.b16 %v900
    %v4030 = vunpack.c.h.b16 %v900
    %v4031 = vunpack.c.l.b16 %v901
    %v4032 = vunpack.c.h.b16 %v901
    %v4033 = vunpack.c.l.b16 %v902
    %v4034 = vunpack.c.h.b16 %v902
    %v4035 = vunpack.c.l.b16 %v903
    %v4036 = vunpack.c.h.b16 %v903
    %v4037 = vunpack.c.l.b16 %v904
    %v4038 = vunpack.c.h.b16 %v904
    %v4039 = vunpack.c.l.b16 %v905
    %v4040 = vunpack.c.h.b16 %v905
    %v4041 = vunpack.c.l.b16 %v906
    %v4042 = vunpack.c.h.b16 %v906
    %v4043 = vunpack.c.l.b16 %v907
    %v4044 = vunpack.c.h.b16 %v907
    %v4045 = vunpack.c.l.b16 %v908
    %v4046 = vunpack.c.h.b16 %v908
    %v4047 = vunpack.c.l.b16 %v909
    %v4048 = vunpack.c.h.b16 %v909
    %v4049 = vunpack.c.l.b16 %v910
    %v4050 = vunpack.c.h.b16 %v910
    %v4051 = vunpack.c.l.b16 %v911
    %v4052 = vunpack.c.h.b16 %v911
    %v4053 = vunpack.c.l.b16 %v912
    %v4054 = vunpack.c.h.b16 %v912
    %v4055 = vunpack.c.l.b16 %v913
    %v4056 = vunpack.c.h.b16 %v913
    %v4057 = vunpack.c.l.b16 %v914
    %v4058 = vunpack.c.h.b16 %v914
    %v4059 = vunpack.c.l.b16 %v915
    %v4060 = vunpack.c.h.b16 %v915
    %v4061 = vunpack.c.l.b16 %v916
    %v4062 = vunpack.c.h.b16 %v916
    %v4063 = vunpack.c.l.b16 %v917
    %v4064 = vunpack.c.h.b16 %v917
    %v4065 = vunpack.c.l.b16 %v918
    %v4066 = vunpack.c.h.b16 %v918
    %v4067 = vunpack.c.l.b16 %v919
    %v4068 = vunpack.c.h.b16 %v919
    %v4069 = vunpack.c.l.b16 %v920
    %v4070 = vunpack.c.h.b16 %v920
    %v4071 = vunpack.c.l.b16 %v921
    %v4072 = vunpack.c.h.b16 %v921
    %v4073 = vunpack.c.l.b16 %v922
    %v4074 = vunpack.c.h.b16 %v922
    %v4075 = vunpack.c.l.b16 %v923
    %v4076 = vunpack.c.h.b16 %v923
    %v4077 = vunpack.c.l.b16 %v924
    %v4078 = vunpack.c.h.b16 %v924
    %v4079 = vunpack.c.l.b16 %v925
    %v4080 = vunpack.c.h.b16 %v925
    %v4081 = vunpack.c.l.b16 %v926
    %v4082 = vunpack.c.h.b16 %v926
    %v4083 = vunpack.c.l.b16 %v927
    %v4084 = vunpack.c.h.b16 %v927
    %v4085 = vunpack.c.l.b16 %v928
    %v4086 = vunpack.c.h.b16 %v928
    %v4087 = vunpack.c.l.b16 %v929
    %v4088 = vunpack.c.h.b16 %v929
    %v4089 = vunpack.c.l.b16 %v930
    %v4090 = vunpack.c.h.b16 %v930
    %v4091 = vunpack.c.l.b16 %v931
    %v4092 = vunpack.c.h.b16 %v931
    %v4093 = vunpack.c.l.b16 %v932
    %v4094 = vunpack.c.h.b16 %v932
    %v4095 = vunpack.c.l.b16 %v933
    %v4096 = vunpack.c.h.b16 %v933
    %v4097 = vunpack.c.l.b16 %v934
    %v4098 = vunpack.c.h.b16 %v934
    %v4099 = vunpack.c.l.b16 %v935
    %v4100 = vunpack.c.h.b16 %v935
    %v4101 = vunpack.c.l.b16 %v936
    %v4102 = vunpack.c.h.b16 %v936
    %v4103 = vunpack.c.l.b16 %v937
    %v4104 = vunpack.c.h.b16 %v937
    %v4105 = vunpack.c.l.b16 %v938
    %v4106 = vunpack.c.h.b16 %v938
    %v4107 = vunpack.c.l.b16 %v939
    %v4108 = vunpack.c.h.b16 %v939
    %v4109 = vunpack.c.l.b16 %v940
    %v4110 = vunpack.c.h.b16 %v940
    %v4111 = vunpack.c.l.b16 %v941
    %v4112 = vunpack.c.h.b16 %v941
    %v4113 = vunpack.c.l.b16 %v942
    %v4114 = vunpack.c.h.b16 %v942
    %v4115 = vunpack.c.l.b16 %v943
    %v4116 = vunpack.c.h.b16 %v943
    %v4117 = vunpack.c.l.b16 %v944
    %v4118 = vunpack.c.h.b16 %v944
    %v4119 = vunpack.c.l.b16 %v945
    %v4120 = vunpack.c.h.b16 %v945
    %v4121 = vunpack.c.l.b16 %v946
    %v4122 = vunpack.c.h.b16 %v946
    %v4123 = vunpack.c.l.b16 %v947
    %v4124 = vunpack.c.h.b16 %v947
    %v4125 = vunpack.c.l.b16 %v948
    %v4126 = vunpack.c.h.b16 %v948
    %v4127 = vunpack.c.l.b16 %v949
    %v4128 = vunpack.c.h.b16 %v949
    %v4129 = vunpack.c.l.b16 %v950
    %v4130 = vunpack.c.h.b16 %v950
    %v4131 = vunpack.c.l.b16 %v951
    %v4132 = vunpack.c.h.b16 %v951
    %v4133 = vunpack.c.l.b16 %v952
    %v4134 = vunpack.c.h.b16 %v952
    %v4135 = vunpack.c.l.b16 %v953
    %v4136 = vunpack.c.h.b16 %v953
    %v4137 = vunpack.c.l.b16 %v954
    %v4138 = vunpack.c.h.b16 %v954
    %v4139 = vunpack.c.l.b16 %v955
    %v4140 = vunpack.c.h.b16 %v955
    %v4141 = vunpack.c.l.b16 %v956
    %v4142 = vunpack.c.h.b16 %v956
    %v4143 = vunpack.c.l.b16 %v957
    %v4144 = vunpack.c.h.b16 %v957
    %v4145 = vunpack.c.l.b16 %v958
    %v4146 = vunpack.c.h.b16 %v958
    %v4147 = vunpack.c.l.b16 %v959
    %v4148 = vunpack.c.h.b16 %v959
    %v4149 = vunpack.c.l.b16 %v960
    %v4150 = vunpack.c.h.b16 %v960
    %v4151 = vunpack.c.l.b16 %v961
    %v4152 = vunpack.c.h.b16 %v961
    %v4153 = vunpack.c.l.b16 %v962
    %v4154 = vunpack.c.h.b16 %v962
    %v4155 = vunpack.c.l.b16 %v963
    %v4156 = vunpack.c.h.b16 %v963
    %v4157 = vunpack.c.l.b16 %v964
    %v4158 = vunpack.c.h.b16 %v964
    %v4159 = vunpack.c.l.b16 %v965
    %v4160 = vunpack.c.h.b16 %v965
    %v4161 = vunpack.c.l.b16 %v966
    %v4162 = vunpack.c.h.b16 %v966
    %v4163 = vunpack.c.l.b16 %v967
    %v4164 = vunpack.c.h.b16 %v967
    %v4165 = vunpack.c.l.b16 %v968
    %v4166 = vunpack.c.h.b16 %v968
    %v4167 = vunpack.c.l.b16 %v969
    %v4168 = vunpack.c.h.b16 %v969
    %v4169 = vunpack.c.l.b16 %v970
    %v4170 = vunpack.c.h.b16 %v970
    %v4171 = vunpack.c.l.b16 %v971
    %v4172 = vunpack.c.h.b16 %v971
    %v4173 = vunpack.c.l.b16 %v972
    %v4174 = vunpack.c.h.b16 %v972
    %v4175 = vunpack.c.l.b16 %v973
    %v4176 = vunpack.c.h.b16 %v973
    %v4177 = vunpack.c.l.b16 %v974
    %v4178 = vunpack.c.h.b16 %v974
    %v4179 = vunpack.c.l.b16 %v975
    %v4180 = vunpack.c.h.b16 %v975
    %v4181 = vunpack.c.l.b16 %v976
    %v4182 = vunpack.c.h.b16 %v976
    %v4183 = vunpack.c.l.b16 %v977
    %v4184 = vunpack.c.h.b16 %v977
    %v4185 = vunpack.c.l.b16 %v978
    %v4186 = vunpack.c.h.b16 %v978
    %v4187 = vunpack.c.l.b16 %v979
    %v4188 = vunpack.c.h.b16 %v979
    %v4189 = vunpack.c.l.b16 %v980
    %v4190 = vunpack.c.h.b16 %v980
    %v4191 = vunpack.c.l.b16 %v981
    %v4192 = vunpack.c.h.b16 %v981
    %v4193 = vunpack.c.l.b16 %v982
    %v4194 = vunpack.c.h.b16 %v982
    %v4195 = vunpack.c.l.b16 %v983
    %v4196 = vunpack.c.h.b16 %v983
    %v4197 = vunpack.c.l.b16 %v984
    %v4198 = vunpack.c.h.b16 %v984
    %v4199 = vunpack.c.l.b16 %v985
    %v4200 = vunpack.c.h.b16 %v985
    %v4201 = vunpack.c.l.b16 %v986
    %v4202 = vunpack.c.h.b16 %v986
    %v4203 = vunpack.c.l.b16 %v987
    %v4204 = vunpack.c.h.b16 %v987
    %v4205 = vunpack.c.l.b16 %v988
    %v4206 = vunpack.c.h.b16 %v988
    %v4207 = vunpack.c.l.b16 %v989
    %v4208 = vunpack.c.h.b16 %v989
    %v4209 = vunpack.c.l.b16 %v990
    %v4210 = vunpack.c.h.b16 %v990
    %v4211 = vunpack.c.l.b16 %v991
    %v4212 = vunpack.c.h.b16 %v991
    %v4213 = vunpack.c.l.b16 %v992
    %v4214 = vunpack.c.h.b16 %v992
    %v4215 = vunpack.c.l.b16 %v993
    %v4216 = vunpack.c.h.b16 %v993
    %v4217 = vunpack.c.l.b16 %v994
    %v4218 = vunpack.c.h.b16 %v994
    %v4219 = vunpack.c.l.b16 %v995
    %v4220 = vunpack.c.h.b16 %v995
    %v4221 = vunpack.c.l.b16 %v996
    %v4222 = vunpack.c.h.b16 %v996
    %v4223 = vunpack.c.l.b16 %v997
    %v4224 = vunpack.c.h.b16 %v997
    %v4225 = vunpack.c.l.b16 %v998
    %v4226 = vunpack.c.h.b16 %v998
    %v4227 = vunpack.c.l.b16 %v999
    %v4228 = vunpack.c.h.b16 %v999
    %v4229 = vunpack.c.l.b16 %v1000
    %v4230 = vunpack.c.h.b16 %v1000
    %v4231 = vunpack.c.l.b16 %v1001
    %v4232 = vunpack.c.h.b16 %v1001
    %v4233 = vunpack.c.l.b16 %v1002
    %v4234 = vunpack.c.h.b16 %v1002
    %v4235 = vunpack.c.l.b16 %v1003
    %v4236 = vunpack.c.h.b16 %v1003
    %v4237 = vunpack.c.l.b16 %v1004
    %v4238 = vunpack.c.h.b16 %v1004
    %v4239 = vunpack.c.l.b16 %v1005
    %v4240 = vunpack.c.h.b16 %v1005
    %v4241 = vunpack.c.l.b16 %v1006
    %v4242 = vunpack.c.h.b16 %v1006
    %v4243 = vunpack.c.l.b16 %v1007
    %v4244 = vunpack.c.h.b16 %v1007
    %v4245 = vunpack.c.l.b16 %v1008
    %v4246 = vunpack.c.h.b16 %v1008
    %v4247 = vunpack.c.l.b16 %v1009
    %v4248 = vunpack.c.h.b16 %v1009
    %v4249 = vunpack.c.l.b16 %v1010
    %v4250 = vunpack.c.h.b16 %v1010
    %v4251 = vunpack.c.l.b16 %v1011
    %v4252 = vunpack.c.h.b16 %v1011
    %v4253 = vunpack.c.l.b16 %v1012
    %v4254 = vunpack.c.h.b16 %v1012
    %v4255 = vunpack.c.l.b16 %v1013
    %v4256 = vunpack.c.h.b16 %v1013
    %v4257 = vunpack.c.l.b16 %v1014
    %v4258 = vunpack.c.h.b16 %v1014
    %v4259 = vunpack.c.l.b16 %v1015
    %v4260 = vunpack.c.h.b16 %v1015
    %v4261 = vunpack.c.l.b16 %v1016
    %v4262 = vunpack.c.h.b16 %v1016
    %v4263 = vunpack.c.l.b16 %v1017
    %v4264 = vunpack.c.h.b16 %v1017
    %v4265 = vunpack.c.l.b16 %v1018
    %v4266 = vunpack.c.h.b16 %v1018
    %v4267 = vunpack.c.l.b16 %v1019
    %v4268 = vunpack.c.h.b16 %v1019
    %v4269 = vunpack.c.l.b16 %v1020
    %v4270 = vunpack.c.h.b16 %v1020
    %v4271 = vunpack.c.l.b16 %v1021
    %v4272 = vunpack.c.h.b16 %v1021
    %v4273 = vunpack.c.l.b16 %v1022
    %v4274 = vunpack.c.h.b16 %v1022
    %v4275 = vunpack.c.l.b16 %v1023
    %v4276 = vunpack.c.h.b16 %v1023
    %v4277 = vunpack.c.l.b16 %v1024
    %v4278 = vunpack.c.h.b16 %v1024
    %v4279 = vunpack.c.l.b16 %v1025
    %v4280 = vunpack.c.h.b16 %v1025
    %v4281 = vunpack.c.l.b16 %v1026
    %v4282 = vunpack.c.h.b16 %v1026
    %v4283 = vunpack.c.l.b16 %v1027
    %v4284 = vunpack.c.h.b16 %v1027
    %v4285 = vunpack.c.l.b16 %v1028
    %v4286 = vunpack.c.h.b16 %v1028
    %v4287 = vunpack.c.l.b16 %v1029
    %v4288 = vunpack.c.h.b16 %v1029
    %v4289 = vunpack.c.l.b16 %v1030
    %v4290 = vunpack.c.h.b16 %v1030
    %v4291 = vunpack.c.l.b16 %v1031
    %v4292 = vunpack.c.h.b16 %v1031
    %v4293 = vunpack.c.l.b16 %v1032
    %v4294 = vunpack.c.h.b16 %v1032
    %v4295 = vunpack.c.l.b16 %v1033
    %v4296 = vunpack.c.h.b16 %v1033
    %v4297 = vunpack.c.l.b16 %v1034
    %v4298 = vunpack.c.h.b16 %v1034
    %v4299 = vunpack.c.l.b16 %v1035
    %v4300 = vunpack.c.h.b16 %v1035
    %v4301 = vunpack.c.l.b16 %v1036
    %v4302 = vunpack.c.h.b16 %v1036
    %v4303 = vunpack.c.l.b16 %v1037
    %v4304 = vunpack.c.h.b16 %v1037
    %v4305 = vunpack.c.l.b16 %v1038
    %v4306 = vunpack.c.h.b16 %v1038
    %v4307 = vunpack.c.l.b16 %v1039
    %v4308 = vunpack.c.h.b16 %v1039
    %v4309 = vunpack.c.l.b16 %v1040
    %v4310 = vunpack.c.h.b16 %v1040
    %v4311 = vunpack.c.l.b16 %v1041
    %v4312 = vunpack.c.h.b16 %v1041
    %v4313 = vunpack.c.l.b16 %v1042
    %v4314 = vunpack.c.h.b16 %v1042
    %v4315 = vunpack.c.l.b16 %v1043
    %v4316 = vunpack.c.h.b16 %v1043
    %v4317 = vunpack.c.l.b16 %v1044
    %v4318 = vunpack.c.h.b16 %v1044
    %v4319 = vunpack.c.l.b16 %v1045
    %v4320 = vunpack.c.h.b16 %v1045
    %v4321 = vunpack.c.l.b16 %v1046
    %v4322 = vunpack.c.h.b16 %v1046
    %v4323 = vunpack.c.l.b16 %v1047
    %v4324 = vunpack.c.h.b16 %v1047
    %v4325 = vunpack.c.l.b16 %v1048
    %v4326 = vunpack.c.h.b16 %v1048
    %v4327 = vunpack.c.l.b16 %v1049
    %v4328 = vunpack.c.h.b16 %v1049
    %v4329 = vunpack.c.l.b16 %v1050
    %v4330 = vunpack.c.h.b16 %v1050
    %v4331 = vunpack.c.l.b16 %v1051
    %v4332 = vunpack.c.h.b16 %v1051
    %v4333 = vunpack.c.l.b16 %v1052
    %v4334 = vunpack.c.h.b16 %v1052
    %v4335 = vunpack.c.l.b16 %v1053
    %v4336 = vunpack.c.h.b16 %v1053
    %v4337 = vunpack.c.l.b16 %v1054
    %v4338 = vunpack.c.h.b16 %v1054
    %v4339 = vpack.c.b16 %v2775, %v2771
    %v4340 = vpack.c.b16 %v2776, %v2772
    %v4341 = vpack.c.b16 %v2777, %v2773
    %v4342 = vpack.c.b16 %v2778, %v2774
    %v4343 = vpack.c.b16 %v2783, %v2779
    %v4344 = vpack.c.b16 %v2784, %v2780
    %v4345 = vpack.c.b16 %v2785, %v2781
    %v4346 = vpack.c.b16 %v2786, %v2782
    %v4347 = vpack.c.b16 %v2791, %v2787
    %v4348 = vpack.c.b16 %v2792, %v2788
    %v4349 = vpack.c.b16 %v2793, %v2789
    %v4350 = vpack.c.b16 %v2794, %v2790
    %v4351 = vpack.c.b16 %v2799, %v2795
    %v4352 = vpack.c.b16 %v2800, %v2796
    %v4353 = vpack.c.b16 %v2801, %v2797
    %v4354 = vpack.c.b16 %v2802, %v2798
    %v4355 = vpack.c.b16 %v2807, %v2803
    %v4356 = vpack.c.b16 %v2808, %v2804
    %v4357 = vpack.c.b16 %v2809, %v2805
    %v4358 = vpack.c.b16 %v2810, %v2806
    %v4359 = vpack.c.b16 %v2815, %v2811
    %v4360 = vpack.c.b16 %v2816, %v2812
    %v4361 = vpack.c.b16 %v2817, %v2813
    %v4362 = vpack.c.b16 %v2818, %v2814
    %v4363 = vpack.c.b16 %v2823, %v2819
    %v4364 = vpack.c.b16 %v2824, %v2820
    %v4365 = vpack.c.b16 %v2825, %v2821
    %v4366 = vpack.c.b16 %v2826, %v2822
    %v4367 = vpack.c.b16 %v2831, %v2827
    %v4368 = vpack.c.b16 %v2832, %v2828
    %v4369 = vpack.c.b16 %v2833, %v2829
    %v4370 = vpack.c.b16 %v2834, %v2830
    %v4371 = vpack.c.b16 %v2839, %v2835
    %v4372 = vpack.c.b16 %v2840, %v2836
    %v4373 = vpack.c.b16 %v2841, %v2837
    %v4374 = vpack.c.b16 %v2842, %v2838
    %v4375 = vpack.c.b16 %v2847, %v2843
    %v4376 = vpack.c.b16 %v2848, %v2844
    %v4377 = vpack.c.b16 %v2849, %v2845
    %v4378 = vpack.c.b16 %v2850, %v2846
    %v4379 = vpack.c.b16 %v2855, %v2851
    %v4380 = vpack.c.b16 %v2856, %v2852
    %v4381 = vpack.c.b16 %v2857, %v2853
    %v4382 = vpack.c.b16 %v2858, %v2854
    %v4383 = vpack.c.b16 %v2863, %v2859
    %v4384 = vpack.c.b16 %v2864, %v2860
    %v4385 = vpack.c.b16 %v2865, %v2861
    %v4386 = vpack.c.b16 %v2866, %v2862
    %v4387 = vpack.c.b16 %v2871, %v2867
    %v4388 = vpack.c.b16 %v2872, %v2868
    %v4389 = vpack.c.b16 %v2873, %v2869
    %v4390 = vpack.c.b16 %v2874, %v2870
    %v4391 = vpack.c.b16 %v2879, %v2875
    %v4392 = vpack.c.b16 %v2880, %v2876
    %v4393 = vpack.c.b16 %v2881, %v2877
    %v4394 = vpack.c.b16 %v2882, %v2878
    %v4395 = vpack.c.b16 %v2887, %v2883
    %v4396 = vpack.c.b16 %v2888, %v2884
    %v4397 = vpack.c.b16 %v2889, %v2885
    %v4398 = vpack.c.b16 %v2890, %v2886
    %v4399 = vpack.c.b16 %v2895, %v2891
    %v4400 = vpack.c.b16 %v2896, %v2892
    %v4401 = vpack.c.b16 %v2897, %v2893
    %v4402 = vpack.c.b16 %v2898, %v2894
    %v4403 = vpack.c.b16 %v2903, %v2899
    %v4404 = vpack.c.b16 %v2904, %v2900
    %v4405 = vpack.c.b16 %v2905, %v2901
    %v4406 = vpack.c.b16 %v2906, %v2902
    %v4407 = vpack.c.b16 %v2911, %v2907
    %v4408 = vpack.c.b16 %v2912, %v2908
    %v4409 = vpack.c.b16 %v2913, %v2909
    %v4410 = vpack.c.b16 %v2914, %v2910
    %v4411 = vpack.c.b16 %v2919, %v2915
    %v4412 = vpack.c.b16 %v2920, %v2916
    %v4413 = vpack.c.b16 %v2921, %v2917
    %v4414 = vpack.c.b16 %v2922, %v2918
    %v4415 = vpack.c.b16 %v2927, %v2923
    %v4416 = vpack.c.b16 %v2928, %v2924
    %v4417 = vpack.c.b16 %v2929, %v2925
    %v4418 = vpack.c.b16 %v2930, %v2926
    %v4419 = vpack.c.b16 %v2935, %v2931
    %v4420 = vpack.c.b16 %v2936, %v2932
    %v4421 = vpack.c.b16 %v2937, %v2933
    %v4422 = vpack.c.b16 %v2938, %v2934
    %v4423 = vpack.c.b16 %v2943, %v2939
    %v4424 = vpack.c.b16 %v2944, %v2940
    %v4425 = vpack.c.b16 %v2945, %v2941
    %v4426 = vpack.c.b16 %v2946, %v2942
    %v4427 = vpack.c.b16 %v2951, %v2947
    %v4428 = vpack.c.b16 %v2952, %v2948
    %v4429 = vpack.c.b16 %v2953, %v2949
    %v4430 = vpack.c.b16 %v2954, %v2950
    %v4431 = vpack.c.b16 %v2959, %v2955
    %v4432 = vpack.c.b16 %v2960, %v2956
    %v4433 = vpack.c.b16 %v2961, %v2957
    %v4434 = vpack.c.b16 %v2962, %v2958
    %v4435 = vpack.c.b16 %v2967, %v2963
    %v4436 = vpack.c.b16 %v2968, %v2964
    %v4437 = vpack.c.b16 %v2969, %v2965
    %v4438 = vpack.c.b16 %v2970, %v2966
    %v4439 = vpack.c.b16 %v2975, %v2971
    %v4440 = vpack.c.b16 %v2976, %v2972
    %v4441 = vpack.c.b16 %v2977, %v2973
    %v4442 = vpack.c.b16 %v2978, %v2974
    %v4443 = vpack.c.b16 %v2983, %v2979
    %v4444 = vpack.c.b16 %v2984, %v2980
    %v4445 = vpack.c.b16 %v2985, %v2981
    %v4446 = vpack.c.b16 %v2986, %v2982
    %v4447 = vpack.c.b16 %v2991, %v2987
    %v4448 = vpack.c.b16 %v2992, %v2988
    %v4449 = vpack.c.b16 %v2993, %v2989
    %v4450 = vpack.c.b16 %v2994, %v2990
    %v4451 = vpack.c.b16 %v2999, %v2995
    %v4452 = vpack.c.b16 %v3000, %v2996
    %v4453 = vpack.c.b16 %v3001, %v2997
    %v4454 = vpack.c.b16 %v3002, %v2998
    %v4455 = vpack.c.b16 %v3007, %v3003
    %v4456 = vpack.c.b16 %v3008, %v3004
    %v4457 = vpack.c.b16 %v3009, %v3005
    %v4458 = vpack.c.b16 %v3010, %v3006
    %v4459 = vpack.c.b16 %v3015, %v3011
    %v4460 = vpack.c.b16 %v3016, %v3012
    %v4461 = vpack.c.b16 %v3017, %v3013
    %v4462 = vpack.c.b16 %v3018, %v3014
    %v4463 = vpack.c.b16 %v3023, %v3019
    %v4464 = vpack.c.b16 %v3024, %v3020
    %v4465 = vpack.c.b16 %v3025, %v3021
    %v4466 = vpack.c.b16 %v3026, %v3022
    %v4467 = vpack.c.b16 %v3031, %v3027
    %v4468 = vpack.c.b16 %v3032, %v3028
    %v4469 = vpack.c.b16 %v3033, %v3029
    %v4470 = vpack.c.b16 %v3034, %v3030
    %v4471 = vpack.c.b16 %v3039, %v3035
    %v4472 = vpack.c.b16 %v3040, %v3036
    %v4473 = vpack.c.b16 %v3041, %v3037
    %v4474 = vpack.c.b16 %v3042, %v3038
    %v4475 = vpack.c.b16 %v3047, %v3043
    %v4476 = vpack.c.b16 %v3048, %v3044
    %v4477 = vpack.c.b16 %v3049, %v3045
    %v4478 = vpack.c.b16 %v3050, %v3046
    %v4479 = vpack.c.b16 %v3055, %v3051
    %v4480 = vpack.c.b16 %v3056, %v3052
    %v4481 = vpack.c.b16 %v3057, %v3053
    %v4482 = vpack.c.b16 %v3058, %v3054
    %v4483 = vpack.c.b16 %v3063, %v3059
    %v4484 = vpack.c.b16 %v3064, %v3060
    %v4485 = vpack.c.b16 %v3065, %v3061
    %v4486 = vpack.c.b16 %v3066, %v3062
    %v4487 = vpack.c.b16 %v3071, %v3067
    %v4488 = vpack.c.b16 %v3072, %v3068
    %v4489 = vpack.c.b16 %v3073, %v3069
    %v4490 = vpack.c.b16 %v3074, %v3070
    %v4491 = vpack.c.b16 %v3079, %v3075
    %v4492 = vpack.c.b16 %v3080, %v3076
    %v4493 = vpack.c.b16 %v3081, %v3077
    %v4494 = vpack.c.b16 %v3082, %v3078
    %v4495 = vpack.c.b16 %v3087, %v3083
    %v4496 = vpack.c.b16 %v3088, %v3084
    %v4497 = vpack.c.b16 %v3089, %v3085
    %v4498 = vpack.c.b16 %v3090, %v3086
    %v4499 = vpack.c.b16 %v3095, %v3091
    %v4500 = vpack.c.b16 %v3096, %v3092
    %v4501 = vpack.c.b16 %v3097, %v3093
    %v4502 = vpack.c.b16 %v3098, %v3094
    %v4503 = vpack.c.b16 %v3103, %v3099
    %v4504 = vpack.c.b16 %v3104, %v3100
    %v4505 = vpack.c.b16 %v3105, %v3101
    %v4506 = vpack.c.b16 %v3106, %v3102
    %v4507 = vpack.c.b16 %v3111, %v3107
    %v4508 = vpack.c.b16 %v3112, %v3108
    %v4509 = vpack.c.b16 %v3113, %v3109
    %v4510 = vpack.c.b16 %v3114, %v3110
    %v4511 = vpack.c.b16 %v3119, %v3115
    %v4512 = vpack.c.b16 %v3120, %v3116
    %v4513 = vpack.c.b16 %v3121, %v3117
    %v4514 = vpack.c.b16 %v3122, %v3118
    %v4515 = vpack.c.b16 %v3127, %v3123
    %v4516 = vpack.c.b16 %v3128, %v3124
    %v4517 = vpack.c.b16 %v3129, %v3125
    %v4518 = vpack.c.b16 %v3130, %v3126
    %v4519 = vpack.c.b16 %v3135, %v3131
    %v4520 = vpack.c.b16 %v3136, %v3132
    %v4521 = vpack.c.b16 %v3137, %v3133
    %v4522 = vpack.c.b16 %v3138, %v3134
    %v4523 = vpack.c.b16 %v3143, %v3139
    %v4524 = vpack.c.b16 %v3144, %v3140
    %v4525 = vpack.c.b16 %v3145, %v3141
    %v4526 = vpack.c.b16 %v3146, %v3142
    %v4527 = vpack.c.b16 %v3151, %v3147
    %v4528 = vpack.c.b16 %v3152, %v3148
    %v4529 = vpack.c.b16 %v3153, %v3149
    %v4530 = vpack.c.b16 %v3154, %v3150
    %v4531 = vpack.c.b16 %v3159, %v3155
    %v4532 = vpack.c.b16 %v3160, %v3156
    %v4533 = vpack.c.b16 %v3161, %v3157
    %v4534 = vpack.c.b16 %v3162, %v3158
    %v4535 = vpack.c.b16 %v3167, %v3163
    %v4536 = vpack.c.b16 %v3168, %v3164
    %v4537 = vpack.c.b16 %v3169, %v3165
    %v4538 = vpack.c.b16 %v3170, %v3166
    %v4539 = vpack.c.b16 %v3175, %v3171
    %v4540 = vpack.c.b16 %v3176, %v3172
    %v4541 = vpack.c.b16 %v3177, %v3173
    %v4542 = vpack.c.b16 %v3178, %v3174
    %v4543 = vpack.c.b16 %v3183, %v3179
    %v4544 = vpack.c.b16 %v3184, %v3180
    %v4545 = vpack.c.b16 %v3185, %v3181
    %v4546 = vpack.c.b16 %v3186, %v3182
    %v4547 = vpack.c.b16 %v3191, %v3187
    %v4548 = vpack.c.b16 %v3192, %v3188
    %v4549 = vpack.c.b16 %v3193, %v3189
    %v4550 = vpack.c.b16 %v3194, %v3190
    %v4551 = vpack.c.b16 %v3199, %v3195
    %v4552 = vpack.c.b16 %v3200, %v3196
    %v4553 = vpack.c.b16 %v3201, %v3197
    %v4554 = vpack.c.b16 %v3202, %v3198
    %v4555 = vpack.c.b16 %v3207, %v3203
    %v4556 = vpack.c.b16 %v3208, %v3204
    %v4557 = vpack.c.b16 %v3209, %v3205
    %v4558 = vpack.c.b16 %v3210, %v3206
    %v4559 = vpack.c.b16 %v3215, %v3211
    %v4560 = vpack.c.b16 %v3216, %v3212
    %v4561 = vpack.c.b16 %v3217, %v3213
    %v4562 = vpack.c.b16 %v3218, %v3214
    %v4563 = vpack.c.b16 %v3223, %v3219
    %v4564 = vpack.c.b16 %v3224, %v3220
    %v4565 = vpack.c.b16 %v3225, %v3221
    %v4566 = vpack.c.b16 %v3226, %v3222
    %v4567 = vpack.c.b16 %v3231, %v3227
    %v4568 = vpack.c.b16 %v3232, %v3228
    %v4569 = vpack.c.b16 %v3233, %v3229
    %v4570 = vpack.c.b16 %v3234, %v3230
    %v4571 = vpack.c.b16 %v3239, %v3235
    %v4572 = vpack.c.b16 %v3240, %v3236
    %v4573 = vpack.c.b16 %v3241, %v3237
    %v4574 = vpack.c.b16 %v3242, %v3238
    %v4575 = vpack.c.b16 %v3247, %v3243
    %v4576 = vpack.c.b16 %v3248, %v3244
    %v4577 = vpack.c.b16 %v3249, %v3245
    %v4578 = vpack.c.b16 %v3250, %v3246
    %v4579 = vpack.c.b16 %v3255, %v3251
    %v4580 = vpack.c.b16 %v3256, %v3252
    %v4581 = vpack.c.b16 %v3257, %v3253
    %v4582 = vpack.c.b16 %v3258, %v3254
    %v4583 = vpack.c.b16 %v3263, %v3259
    %v4584 = vpack.c.b16 %v3264, %v3260
    %v4585 = vpack.c.b16 %v3265, %v3261
    %v4586 = vpack.c.b16 %v3266, %v3262
    %v4587 = vpack.c.b16 %v3271, %v3267
    %v4588 = vpack.c.b16 %v3272, %v3268
    %v4589 = vpack.c.b16 %v3273, %v3269
    %v4590 = vpack.c.b16 %v3274, %v3270
    %v4591 = vpack.c.b16 %v3279, %v3275
    %v4592 = vpack.c.b16 %v3280, %v3276
    %v4593 = vpack.c.b16 %v3281, %v3277
    %v4594 = vpack.c.b16 %v3282, %v3278
    %v4595 = vpack.c.b16 %v3287, %v3283
    %v4596 = vpack.c.b16 %v3288, %v3284
    %v4597 = vpack.c.b16 %v3289, %v3285
    %v4598 = vpack.c.b16 %v3290, %v3286
    %v4599 = vpack.c.b16 %v3295, %v3291
    %v4600 = vpack.c.b16 %v3296, %v3292
    %v4601 = vpack.c.b16 %v3297, %v3293
    %v4602 = vpack.c.b16 %v3298, %v3294
    %v4603 = vpack.c.b16 %v3303, %v3299
    %v4604 = vpack.c.b16 %v3304, %v3300
    %v4605 = vpack.c.b16 %v3305, %v3301
    %v4606 = vpack.c.b16 %v3306, %v3302
    %v4607 = vpack.c.b16 %v3311, %v3307
    %v4608 = vpack.c.b16 %v3312, %v3308
    %v4609 = vpack.c.b16 %v3313, %v3309
    %v4610 = vpack.c.b16 %v3314, %v3310
    %v4611 = vpack.c.b16 %v3319, %v3315
    %v4612 = vpack.c.b16 %v3320, %v3316
    %v4613 = vpack.c.b16 %v3321, %v3317
    %v4614 = vpack.c.b16 %v3322, %v3318
    %v4615 = vpack.c.b16 %v3327, %v3323
    %v4616 = vpack.c.b16 %v3328, %v3324
    %v4617 = vpack.c.b16 %v3329, %v3325
    %v4618 = vpack.c.b16 %v3330, %v3326
    %v4619 = vpack.c.b16 %v3335, %v3331
    %v4620 = vpack.c.b16 %v3336, %v3332
    %v4621 = vpack.c.b16 %v3337, %v3333
    %v4622 = vpack.c.b16 %v3338, %v3334
    %v4623 = vpack.c.b16 %v3343, %v3339
    %v4624 = vpack.c.b16 %v3344, %v3340
    %v4625 = vpack.c.b16 %v3345, %v3341
    %v4626 = vpack.c.b16 %v3346, %v3342
    %v4627 = vpack.c.b16 %v3351, %v3347
    %v4628 = vpack.c.b16 %v3352, %v3348
    %v4629 = vpack.c.b16 %v3353, %v3349
    %v4630 = vpack.c.b16 %v3354, %v3350
    %v4631 = vpack.c.b16 %v3359, %v3355
    %v4632 = vpack.c.b16 %v3360, %v3356
    %v4633 = vpack.c.b16 %v3361, %v3357
    %v4634 = vpack.c.b16 %v3362, %v3358
    %v4635 = vpack.c.b16 %v3367, %v3363
    %v4636 = vpack.c.b16 %v3368, %v3364
    %v4637 = vpack.c.b16 %v3369, %v3365
    %v4638 = vpack.c.b16 %v3370, %v3366
    %v4639 = vpack.c.b16 %v3375, %v3371
    %v4640 = vpack.c.b16 %v3376, %v3372
    %v4641 = vpack.c.b16 %v3377, %v3373
    %v4642 = vpack.c.b16 %v3378, %v3374
    %v4643 = vpack.c.b16 %v3383, %v3379
    %v4644 = vpack.c.b16 %v3384, %v3380
    %v4645 = vpack.c.b16 %v3385, %v3381
    %v4646 = vpack.c.b16 %v3386, %v3382
    %v4647 = vpack.c.b16 %v3391, %v3387
    %v4648 = vpack.c.b16 %v3392, %v3388
    %v4649 = vpack.c.b16 %v3393, %v3389
    %v4650 = vpack.c.b16 %v3394, %v3390
    %v4651 = vpack.c.b16 %v3399, %v3395
    %v4652 = vpack.c.b16 %v3400, %v3396
    %v4653 = vpack.c.b16 %v3401, %v3397
    %v4654 = vpack.c.b16 %v3402, %v3398
    %v4655 = vpack.c.b16 %v3407, %v3403
    %v4656 = vpack.c.b16 %v3408, %v3404
    %v4657 = vpack.c.b16 %v3409, %v3405
    %v4658 = vpack.c.b16 %v3410, %v3406
    %v4659 = vpack.c.b16 %v3415, %v3411
    %v4660 = vpack.c.b16 %v3416, %v3412
    %v4661 = vpack.c.b16 %v3417, %v3413
    %v4662 = vpack.c.b16 %v3418, %v3414
    %v4663 = vpack.c.b16 %v3423, %v3419
    %v4664 = vpack.c.b16 %v3424, %v3420
    %v4665 = vpack.c.b16 %v3425, %v3421
    %v4666 = vpack.c.b16 %v3426, %v3422
    %v4667 = vpack.c.b16 %v3431, %v3427
    %v4668 = vpack.c.b16 %v3432, %v3428
    %v4669 = vpack.c.b16 %v3433, %v3429
    %v4670 = vpack.c.b16 %v3434, %v3430
    %v4671 = vpack.c.b16 %v3439, %v3435
    %v4672 = vpack.c.b16 %v3440, %v3436
    %v4673 = vpack.c.b16 %v3441, %v3437
    %v4674 = vpack.c.b16 %v3442, %v3438
    %v4675 = vpack.c.b16 %v3447, %v3443
    %v4676 = vpack.c.b16 %v3448, %v3444
    %v4677 = vpack.c.b16 %v3449, %v3445
    %v4678 = vpack.c.b16 %v3450, %v3446
    %v4679 = vpack.c.b16 %v3455, %v3451
    %v4680 = vpack.c.b16 %v3456, %v3452
    %v4681 = vpack.c.b16 %v3457, %v3453
    %v4682 = vpack.c.b16 %v3458, %v3454
    %v4683 = vpack.c.b16 %v3463, %v3459
    %v4684 = vpack.c.b16 %v3464, %v3460
    %v4685 = vpack.c.b16 %v3465, %v3461
    %v4686 = vpack.c.b16 %v3466, %v3462
    %v4687 = vpack.c.b16 %v3471, %v3467
    %v4688 = vpack.c.b16 %v3472, %v3468
    %v4689 = vpack.c.b16 %v3473, %v3469
    %v4690 = vpack.c.b16 %v3474, %v3470
    %v4691 = vpack.c.b16 %v3479, %v3475
    %v4692 = vpack.c.b16 %v3480, %v3476
    %v4693 = vpack.c.b16 %v3481, %v3477
    %v4694 = vpack.c.b16 %v3482, %v3478
    %v4695 = vpack.c.b16 %v3487, %v3483
    %v4696 = vpack.c.b16 %v3488, %v3484
    %v4697 = vpack.c.b16 %v3489, %v3485
    %v4698 = vpack.c.b16 %v3490, %v3486
    %v4699 = vpack.c.b16 %v3495, %v3491
    %v4700 = vpack.c.b16 %v3496, %v3492
    %v4701 = vpack.c.b16 %v3497, %v3493
    %v4702 = vpack.c.b16 %v3498, %v3494
    %v4703 = vpack.c.b16 %v3503, %v3499
    %v4704 = vpack.c.b16 %v3504, %v3500
    %v4705 = vpack.c.b16 %v3505, %v3501
    %v4706 = vpack.c.b16 %v3506, %v3502
    %v4707 = vpack.c.b16 %v3511, %v3507
    %v4708 = vpack.c.b16 %v3512, %v3508
    %v4709 = vpack.c.b16 %v3513, %v3509
    %v4710 = vpack.c.b16 %v3514, %v3510
    %v4711 = vpack.c.b16 %v3519, %v3515
    %v4712 = vpack.c.b16 %v3520, %v3516
    %v4713 = vpack.c.b16 %v3521, %v3517
    %v4714 = vpack.c.b16 %v3522, %v3518
    %v4715 = vpack.c.b16 %v3527, %v3523
    %v4716 = vpack.c.b16 %v3528, %v3524
    %v4717 = vpack.c.b16 %v3529, %v3525
    %v4718 = vpack.c.b16 %v3530, %v3526
    %v4719 = vpack.c.b16 %v3535, %v3531
    %v4720 = vpack.c.b16 %v3536, %v3532
    %v4721 = vpack.c.b16 %v3537, %v3533
    %v4722 = vpack.c.b16 %v3538, %v3534
    %v4723 = vpack.c.b16 %v3543, %v3539
    %v4724 = vpack.c.b16 %v3544, %v3540
    %v4725 = vpack.c.b16 %v3545, %v3541
    %v4726 = vpack.c.b16 %v3546, %v3542
    %v4727 = vpack.c.b16 %v3551, %v3547
    %v4728 = vpack.c.b16 %v3552, %v3548
    %v4729 = vpack.c.b16 %v3553, %v3549
    %v4730 = vpack.c.b16 %v3554, %v3550
    %v4731 = vpack.c.b16 %v3559, %v3555
    %v4732 = vpack.c.b16 %v3560, %v3556
    %v4733 = vpack.c.b16 %v3561, %v3557
    %v4734 = vpack.c.b16 %v3562, %v3558
    %v4735 = vpack.c.b16 %v3567, %v3563
    %v4736 = vpack.c.b16 %v3568, %v3564
    %v4737 = vpack.c.b16 %v3569, %v3565
    %v4738 = vpack.c.b16 %v3570, %v3566
    %v4739 = vpack.c.b16 %v3575, %v3571
    %v4740 = vpack.c.b16 %v3576, %v3572
    %v4741 = vpack.c.b16 %v3577, %v3573
    %v4742 = vpack.c.b16 %v3578, %v3574
    %v4743 = vpack.c.b16 %v3583, %v3579
    %v4744 = vpack.c.b16 %v3584, %v3580
    %v4745 = vpack.c.b16 %v3585, %v3581
    %v4746 = vpack.c.b16 %v3586, %v3582
    %v4747 = vpack.c.b16 %v3591, %v3587
    %v4748 = vpack.c.b16 %v3592, %v3588
    %v4749 = vpack.c.b16 %v3593, %v3589
    %v4750 = vpack.c.b16 %v3594, %v3590
    %v4751 = vpack.c.b16 %v3599, %v3595
    %v4752 = vpack.c.b16 %v3600, %v3596
    %v4753 = vpack.c.b16 %v3601, %v3597
    %v4754 = vpack.c.b16 %v3602, %v3598
    %v4755 = vpack.c.b16 %v3607, %v3603
    %v4756 = vpack.c.b16 %v3608, %v3604
    %v4757 = vpack.c.b16 %v3609, %v3605
    %v4758 = vpack.c.b16 %v3610, %v3606
    %v4759 = vpack.c.b16 %v3615, %v3611
    %v4760 = vpack.c.b16 %v3616, %v3612
    %v4761 = vpack.c.b16 %v3617, %v3613
    %v4762 = vpack.c.b16 %v3618, %v3614
    %v4763 = vpack.c.b16 %v3623, %v3619
    %v4764 = vpack.c.b16 %v3624, %v3620
    %v4765 = vpack.c.b16 %v3625, %v3621
    %v4766 = vpack.c.b16 %v3626, %v3622
    %v4767 = vpack.c.b16 %v3631, %v3627
    %v4768 = vpack.c.b16 %v3632, %v3628
    %v4769 = vpack.c.b16 %v3633, %v3629
    %v4770 = vpack.c.b16 %v3634, %v3630
    %v4771 = vpack.c.b16 %v3639, %v3635
    %v4772 = vpack.c.b16 %v3640, %v3636
    %v4773 = vpack.c.b16 %v3641, %v3637
    %v4774 = vpack.c.b16 %v3642, %v3638
    %v4775 = vpack.c.b16 %v3647, %v3643
    %v4776 = vpack.c.b16 %v3648, %v3644
    %v4777 = vpack.c.b16 %v3649, %v3645
    %v4778 = vpack.c.b16 %v3650, %v3646
    %v4779 = vpack.c.b16 %v3655, %v3651
    %v4780 = vpack.c.b16 %v3656, %v3652
    %v4781 = vpack.c.b16 %v3657, %v3653
    %v4782 = vpack.c.b16 %v3658, %v3654
    %v4783 = vpack.c.b16 %v3663, %v3659
    %v4784 = vpack.c.b16 %v3664, %v3660
    %v4785 = vpack.c.b16 %v3665, %v3661
    %v4786 = vpack.c.b16 %v3666, %v3662
    %v4787 = vpack.c.b16 %v3671, %v3667
    %v4788 = vpack.c.b16 %v3672, %v3668
    %v4789 = vpack.c.b16 %v3673, %v3669
    %v4790 = vpack.c.b16 %v3674, %v3670
    %v4791 = vpack.c.b16 %v3679, %v3675
    %v4792 = vpack.c.b16 %v3680, %v3676
    %v4793 = vpack.c.b16 %v3681, %v3677
    %v4794 = vpack.c.b16 %v3682, %v3678
    %v4795 = vpack.c.b16 %v3687, %v3683
    %v4796 = vpack.c.b16 %v3688, %v3684
    %v4797 = vpack.c.b16 %v3689, %v3685
    %v4798 = vpack.c.b16 %v3690, %v3686
    %v4799 = vpack.c.b16 %v3695, %v3691
    %v4800 = vpack.c.b16 %v3696, %v3692
    %v4801 = vpack.c.b16 %v3697, %v3693
    %v4802 = vpack.c.b16 %v3698, %v3694
    %v4803 = vpack.c.b16 %v3703, %v3699
    %v4804 = vpack.c.b16 %v3704, %v3700
    %v4805 = vpack.c.b16 %v3705, %v3701
    %v4806 = vpack.c.b16 %v3706, %v3702
    %v4807 = vpack.c.b16 %v3711, %v3707
    %v4808 = vpack.c.b16 %v3712, %v3708
    %v4809 = vpack.c.b16 %v3713, %v3709
    %v4810 = vpack.c.b16 %v3714, %v3710
    %v4811 = vpack.c.b16 %v3719, %v3715
    %v4812 = vpack.c.b16 %v3720, %v3716
    %v4813 = vpack.c.b16 %v3721, %v3717
    %v4814 = vpack.c.b16 %v3722, %v3718
    %v4815 = vpack.c.b16 %v3727, %v3723
    %v4816 = vpack.c.b16 %v3728, %v3724
    %v4817 = vpack.c.b16 %v3729, %v3725
    %v4818 = vpack.c.b16 %v3730, %v3726
    %v4819 = vpack.c.b16 %v3735, %v3731
    %v4820 = vpack.c.b16 %v3736, %v3732
    %v4821 = vpack.c.b16 %v3737, %v3733
    %v4822 = vpack.c.b16 %v3738, %v3734
    %v4823 = vpack.c.b16 %v3743, %v3739
    %v4824 = vpack.c.b16 %v3744, %v3740
    %v4825 = vpack.c.b16 %v3745, %v3741
    %v4826 = vpack.c.b16 %v3746, %v3742
    %v4827 = vpack.c.b16 %v3751, %v3747
    %v4828 = vpack.c.b16 %v3752, %v3748
    %v4829 = vpack.c.b16 %v3753, %v3749
    %v4830 = vpack.c.b16 %v3754, %v3750
    %v4831 = vpack.c.b16 %v3759, %v3755
    %v4832 = vpack.c.b16 %v3760, %v3756
    %v4833 = vpack.c.b16 %v3761, %v3757
    %v4834 = vpack.c.b16 %v3762, %v3758
    %v4835 = vpack.c.b16 %v3767, %v3763
    %v4836 = vpack.c.b16 %v3768, %v3764
    %v4837 = vpack.c.b16 %v3769, %v3765
    %v4838 = vpack.c.b16 %v3770, %v3766
    %v4839 = vpack.c.b16 %v3775, %v3771
    %v4840 = vpack.c.b16 %v3776, %v3772
    %v4841 = vpack.c.b16 %v3777, %v3773
    %v4842 = vpack.c.b16 %v3778, %v3774
    %v4843 = vpack.c.b16 %v3783, %v3779
    %v4844 = vpack.c.b16 %v3784, %v3780
    %v4845 = vpack.c.b16 %v3785, %v3781
    %v4846 = vpack.c.b16 %v3786, %v3782
    %v4847 = vpack.c.b16 %v3791, %v3787
    %v4848 = vpack.c.b16 %v3792, %v3788
    %v4849 = vpack.c.b16 %v3793, %v3789
    %v4850 = vpack.c.b16 %v3794, %v3790
    %v4851 = vpack.c.b16 %v3799, %v3795
    %v4852 = vpack.c.b16 %v3800, %v3796
    %v4853 = vpack.c.b16 %v3801, %v3797
    %v4854 = vpack.c.b16 %v3802, %v3798
    %v4855 = vpack.c.b16 %v3807, %v3803
    %v4856 = vpack.c.b16 %v3808, %v3804
    %v4857 = vpack.c.b16 %v3809, %v3805
    %v4858 = vpack.c.b16 %v3810, %v3806
    %v4859 = vpack.c.b16 %v3815, %v3811
    %v4860 = vpack.c.b16 %v3816, %v3812
    %v4861 = vpack.c.b16 %v3817, %v3813
    %v4862 = vpack.c.b16 %v3818, %v3814
    %v4863 = vpack.c.b16 %v3823, %v3819
    %v4864 = vpack.c.b16 %v3824, %v3820
    %v4865 = vpack.c.b16 %v3825, %v3821
    %v4866 = vpack.c.b16 %v3826, %v3822
    %v4867 = vpack.c.b16 %v3831, %v3827
    %v4868 = vpack.c.b16 %v3832, %v3828
    %v4869 = vpack.c.b16 %v3833, %v3829
    %v4870 = vpack.c.b16 %v3834, %v3830
    %v4871 = vpack.c.b16 %v3839, %v3835
    %v4872 = vpack.c.b16 %v3840, %v3836
    %v4873 = vpack.c.b16 %v3841, %v3837
    %v4874 = vpack.c.b16 %v3842, %v3838
    %v4875 = vpack.c.b16 %v3847, %v3843
    %v4876 = vpack.c.b16 %v3848, %v3844
    %v4877 = vpack.c.b16 %v3849, %v3845
    %v4878 = vpack.c.b16 %v3850, %v3846
    %v4879 = vpack.c.b16 %v3855, %v3851
    %v4880 = vpack.c.b16 %v3856, %v3852
    %v4881 = vpack.c.b16 %v3857, %v3853
    %v4882 = vpack.c.b16 %v3858, %v3854
    %v4883 = vpack.c.b16 %v3863, %v3859
    %v4884 = vpack.c.b16 %v3864, %v3860
    %v4885 = vpack.c.b16 %v3865, %v3861
    %v4886 = vpack.c.b16 %v3866, %v3862
    %v4887 = vpack.c.b16 %v3871, %v3867
    %v4888 = vpack.c.b16 %v3872, %v3868
    %v4889 = vpack.c.b16 %v3873, %v3869
    %v4890 = vpack.c.b16 %v3874, %v3870
    %v4891 = vpack.c.b16 %v3879, %v3875
    %v4892 = vpack.c.b16 %v3880, %v3876
    %v4893 = vpack.c.b16 %v3881, %v3877
    %v4894 = vpack.c.b16 %v3882, %v3878
    %v4895 = vpack.c.b16 %v3887, %v3883
    %v4896 = vpack.c.b16 %v3888, %v3884
    %v4897 = vpack.c.b16 %v3889, %v3885
    %v4898 = vpack.c.b16 %v3890, %v3886
    %v4899 = vpack.c.b16 %v3895, %v3891
    %v4900 = vpack.c.b16 %v3896, %v3892
    %v4901 = vpack.c.b16 %v3897, %v3893
    %v4902 = vpack.c.b16 %v3898, %v3894
    %v4903 = vpack.c.b16 %v3903, %v3899
    %v4904 = vpack.c.b16 %v3904, %v3900
    %v4905 = vpack.c.b16 %v3905, %v3901
    %v4906 = vpack.c.b16 %v3906, %v3902
    %v4907 = vpack.c.b16 %v3911, %v3907
    %v4908 = vpack.c.b16 %v3912, %v3908
    %v4909 = vpack.c.b16 %v3913, %v3909
    %v4910 = vpack.c.b16 %v3914, %v3910
    %v4911 = vpack.c.b16 %v3919, %v3915
    %v4912 = vpack.c.b16 %v3920, %v3916
    %v4913 = vpack.c.b16 %v3921, %v3917
    %v4914 = vpack.c.b16 %v3922, %v3918
    %v4915 = vpack.c.b16 %v3927, %v3923
    %v4916 = vpack.c.b16 %v3928, %v3924
    %v4917 = vpack.c.b16 %v3929, %v3925
    %v4918 = vpack.c.b16 %v3930, %v3926
    %v4919 = vpack.c.b16 %v3935, %v3931
    %v4920 = vpack.c.b16 %v3936, %v3932
    %v4921 = vpack.c.b16 %v3937, %v3933
    %v4922 = vpack.c.b16 %v3938, %v3934
    %v4923 = vpack.c.b16 %v3943, %v3939
    %v4924 = vpack.c.b16 %v3944, %v3940
    %v4925 = vpack.c.b16 %v3945, %v3941
    %v4926 = vpack.c.b16 %v3946, %v3942
    %v4927 = vpack.c.b16 %v3951, %v3947
    %v4928 = vpack.c.b16 %v3952, %v3948
    %v4929 = vpack.c.b16 %v3953, %v3949
    %v4930 = vpack.c.b16 %v3954, %v3950
    %v4931 = vpack.c.b16 %v3959, %v3955
    %v4932 = vpack.c.b16 %v3960, %v3956
    %v4933 = vpack.c.b16 %v3961, %v3957
    %v4934 = vpack.c.b16 %v3962, %v3958
    %v4935 = vpack.c.b16 %v3967, %v3963
    %v4936 = vpack.c.b16 %v3968, %v3964
    %v4937 = vpack.c.b16 %v3969, %v3965
    %v4938 = vpack.c.b16 %v3970, %v3966
    %v4939 = vpack.c.b16 %v3975, %v3971
    %v4940 = vpack.c.b16 %v3976, %v3972
    %v4941 = vpack.c.b16 %v3977, %v3973
    %v4942 = vpack.c.b16 %v3978, %v3974
    %v4943 = vpack.c.b16 %v3983, %v3979
    %v4944 = vpack.c.b16 %v3984, %v3980
    %v4945 = vpack.c.b16 %v3985, %v3981
    %v4946 = vpack.c.b16 %v3986, %v3982
    %v4947 = vpack.c.b16 %v3991, %v3987
    %v4948 = vpack.c.b16 %v3992, %v3988
    %v4949 = vpack.c.b16 %v3993, %v3989
    %v4950 = vpack.c.b16 %v3994, %v3990
    %v4951 = vpack.c.b16 %v3999, %v3995
    %v4952 = vpack.c.b16 %v4000, %v3996
    %v4953 = vpack.c.b16 %v4001, %v3997
    %v4954 = vpack.c.b16 %v4002, %v3998
    %v4955 = vpack.c.b16 %v4007, %v4003
    %v4956 = vpack.c.b16 %v4008, %v4004
    %v4957 = vpack.c.b16 %v4009, %v4005
    %v4958 = vpack.c.b16 %v4010, %v4006
    %v4959 = vpack.c.b16 %v4015, %v4011
    %v4960 = vpack.c.b16 %v4016, %v4012
    %v4961 = vpack.c.b16 %v4017, %v4013
    %v4962 = vpack.c.b16 %v4018, %v4014
    %v4963 = vpack.c.b16 %v4023, %v4019
    %v4964 = vpack.c.b16 %v4024, %v4020
    %v4965 = vpack.c.b16 %v4025, %v4021
    %v4966 = vpack.c.b16 %v4026, %v4022
    %v4967 = vpack.c.b16 %v4031, %v4027
    %v4968 = vpack.c.b16 %v4032, %v4028
    %v4969 = vpack.c.b16 %v4033, %v4029
    %v4970 = vpack.c.b16 %v4034, %v4030
    %v4971 = vpack.c.b16 %v4039, %v4035
    %v4972 = vpack.c.b16 %v4040, %v4036
    %v4973 = vpack.c.b16 %v4041, %v4037
    %v4974 = vpack.c.b16 %v4042, %v4038
    %v4975 = vpack.c.b16 %v4047, %v4043
    %v4976 = vpack.c.b16 %v4048, %v4044
    %v4977 = vpack.c.b16 %v4049, %v4045
    %v4978 = vpack.c.b16 %v4050, %v4046
    %v4979 = vpack.c.b16 %v4055, %v4051
    %v4980 = vpack.c.b16 %v4056, %v4052
    %v4981 = vpack.c.b16 %v4057, %v4053
    %v4982 = vpack.c.b16 %v4058, %v4054
    %v4983 = vpack.c.b16 %v4063, %v4059
    %v4984 = vpack.c.b16 %v4064, %v4060
    %v4985 = vpack.c.b16 %v4065, %v4061
    %v4986 = vpack.c.b16 %v4066, %v4062
    %v4987 = vpack.c.b16 %v4071, %v4067
    %v4988 = vpack.c.b16 %v4072, %v4068
    %v4989 = vpack.c.b16 %v4073, %v4069
    %v4990 = vpack.c.b16 %v4074, %v4070
    %v4991 = vpack.c.b16 %v4079, %v4075
    %v4992 = vpack.c.b16 %v4080, %v4076
    %v4993 = vpack.c.b16 %v4081, %v4077
    %v4994 = vpack.c.b16 %v4082, %v4078
    %v4995 = vpack.c.b16 %v4087, %v4083
    %v4996 = vpack.c.b16 %v4088, %v4084
    %v4997 = vpack.c.b16 %v4089, %v4085
    %v4998 = vpack.c.b16 %v4090, %v4086
    %v4999 = vpack.c.b16 %v4095, %v4091
    %v5000 = vpack.c.b16 %v4096, %v4092
    %v5001 = vpack.c.b16 %v4097, %v4093
    %v5002 = vpack.c.b16 %v4098, %v4094
    %v5003 = vpack.c.b16 %v4103, %v4099
    %v5004 = vpack.c.b16 %v4104, %v4100
    %v5005 = vpack.c.b16 %v4105, %v4101
    %v5006 = vpack.c.b16 %v4106, %v4102
    %v5007 = vpack.c.b16 %v4111, %v4107
    %v5008 = vpack.c.b16 %v4112, %v4108
    %v5009 = vpack.c.b16 %v4113, %v4109
    %v5010 = vpack.c.b16 %v4114, %v4110
    %v5011 = vpack.c.b16 %v4119, %v4115
    %v5012 = vpack.c.b16 %v4120, %v4116
    %v5013 = vpack.c.b16 %v4121, %v4117
    %v5014 = vpack.c.b16 %v4122, %v4118
    %v5015 = vpack.c.b16 %v4127, %v4123
    %v5016 = vpack.c.b16 %v4128, %v4124
    %v5017 = vpack.c.b16 %v4129, %v4125
    %v5018 = vpack.c.b16 %v4130, %v4126
    %v5019 = vpack.c.b16 %v4135, %v4131
    %v5020 = vpack.c.b16 %v4136, %v4132
    %v5021 = vpack.c.b16 %v4137, %v4133
    %v5022 = vpack.c.b16 %v4138, %v4134
    %v5023 = vpack.c.b16 %v4143, %v4139
    %v5024 = vpack.c.b16 %v4144, %v4140
    %v5025 = vpack.c.b16 %v4145, %v4141
    %v5026 = vpack.c.b16 %v4146, %v4142
    %v5027 = vpack.c.b16 %v4151, %v4147
    %v5028 = vpack.c.b16 %v4152, %v4148
    %v5029 = vpack.c.b16 %v4153, %v4149
    %v5030 = vpack.c.b16 %v4154, %v4150
    %v5031 = vpack.c.b16 %v4159, %v4155
    %v5032 = vpack.c.b16 %v4160, %v4156
    %v5033 = vpack.c.b16 %v4161, %v4157
    %v5034 = vpack.c.b16 %v4162, %v4158
    %v5035 = vpack.c.b16 %v4167, %v4163
    %v5036 = vpack.c.b16 %v4168, %v4164
    %v5037 = vpack.c.b16 %v4169, %v4165
    %v5038 = vpack.c.b16 %v4170, %v4166
    %v5039 = vpack.c.b16 %v4175, %v4171
    %v5040 = vpack.c.b16 %v4176, %v4172
    %v5041 = vpack.c.b16 %v4177, %v4173
    %v5042 = vpack.c.b16 %v4178, %v4174
    %v5043 = vpack.c.b16 %v4183, %v4179
    %v5044 = vpack.c.b16 %v4184, %v4180
    %v5045 = vpack.c.b16 %v4185, %v4181
    %v5046 = vpack.c.b16 %v4186, %v4182
    %v5047 = vpack.c.b16 %v4191, %v4187
    %v5048 = vpack.c.b16 %v4192, %v4188
    %v5049 = vpack.c.b16 %v4193, %v4189
    %v5050 = vpack.c.b16 %v4194, %v4190
    %v5051 = vpack.c.b16 %v4199, %v4195
    %v5052 = vpack.c.b16 %v4200, %v4196
    %v5053 = vpack.c.b16 %v4201, %v4197
    %v5054 = vpack.c.b16 %v4202, %v4198
    %v5055 = vpack.c.b16 %v4207, %v4203
    %v5056 = vpack.c.b16 %v4208, %v4204
    %v5057 = vpack.c.b16 %v4209, %v4205
    %v5058 = vpack.c.b16 %v4210, %v4206
    %v5059 = vpack.c.b16 %v4215, %v4211
    %v5060 = vpack.c.b16 %v4216, %v4212
    %v5061 = vpack.c.b16 %v4217, %v4213
    %v5062 = vpack.c.b16 %v4218, %v4214
    %v5063 = vpack.c.b16 %v4223, %v4219
    %v5064 = vpack.c.b16 %v4224, %v4220
    %v5065 = vpack.c.b16 %v4225, %v4221
    %v5066 = vpack.c.b16 %v4226, %v4222
    %v5067 = vpack.c.b16 %v4231, %v4227
    %v5068 = vpack.c.b16 %v4232, %v4228
    %v5069 = vpack.c.b16 %v4233, %v4229
    %v5070 = vpack.c.b16 %v4234, %v4230
    %v5071 = vpack.c.b16 %v4239, %v4235
    %v5072 = vpack.c.b16 %v4240, %v4236
    %v5073 = vpack.c.b16 %v4241, %v4237
    %v5074 = vpack.c.b16 %v4242, %v4238
    %v5075 = vpack.c.b16 %v4247, %v4243
    %v5076 = vpack.c.b16 %v4248, %v4244
    %v5077 = vpack.c.b16 %v4249, %v4245
    %v5078 = vpack.c.b16 %v4250, %v4246
    %v5079 = vpack.c.b16 %v4255, %v4251
    %v5080 = vpack.c.b16 %v4256, %v4252
    %v5081 = vpack.c.b16 %v4257, %v4253
    %v5082 = vpack.c.b16 %v4258, %v4254
    %v5083 = vpack.c.b16 %v4263, %v4259
    %v5084 = vpack.c.b16 %v4264, %v4260
    %v5085 = vpack.c.b16 %v4265, %v4261
    %v5086 = vpack.c.b16 %v4266, %v4262
    %v5087 = vpack.c.b16 %v4271, %v4267
    %v5088 = vpack.c.b16 %v4272, %v4268
    %v5089 = vpack.c.b16 %v4273, %v4269
    %v5090 = vpack.c.b16 %v4274, %v4270
    %v5091 = vpack.c.b16 %v4279, %v4275
    %v5092 = vpack.c.b16 %v4280, %v4276
    %v5093 = vpack.c.b16 %v4281, %v4277
    %v5094 = vpack.c.b16 %v4282, %v4278
    %v5095 = vpack.c.b16 %v4287, %v4283
    %v5096 = vpack.c.b16 %v4288, %v4284
    %v5097 = vpack.c.b16 %v4289, %v4285
    %v5098 = vpack.c.b16 %v4290, %v4286
    %v5099 = vpack.c.b16 %v4295, %v4291
    %v5100 = vpack.c.b16 %v4296, %v4292
    %v5101 = vpack.c.b16 %v4297, %v4293
    %v5102 = vpack.c.b16 %v4298, %v4294
    %v5103 = vpack.c.b16 %v4303, %v4299
    %v5104 = vpack.c.b16 %v4304, %v4300
    %v5105 = vpack.c.b16 %v4305, %v4301
    %v5106 = vpack.c.b16 %v4306, %v4302
    %v5107 = vpack.c.b16 %v4311, %v4307
    %v5108 = vpack.c.b16 %v4312, %v4308
    %v5109 = vpack.c.b16 %v4313, %v4309
    %v5110 = vpack.c.b16 %v4314, %v4310
    %v5111 = vpack.c.b16 %v4319, %v4315
    %v5112 = vpack.c.b16 %v4320, %v4316
    %v5113 = vpack.c.b16 %v4321, %v4317
    %v5114 = vpack.c.b16 %v4322, %v4318
    %v5115 = vpack.c.b16 %v4327, %v4323
    %v5116 = vpack.c.b16 %v4328, %v4324
    %v5117 = vpack.c.b16 %v4329, %v4325
    %v5118 = vpack.c.b16 %v4330, %v4326
    %v5119 = vpack.c.b16 %v4335, %v4331
    %v5120 = vpack.c.b16 %v4336, %v4332
    %v5121 = vpack.c.b16 %v4337, %v4333
    %v5122 = vpack.c.b16 %v4338, %v4334
    %vm5907 = vcmask 523264
    %v5909 = vsel %vm5907, %v216, 0
    %5911 = vmatprep.subr.bf16.mxu0 %v4340
    %5912 = vmatpush1.bf16.msra.mxu0 %v4339
    %5913 = vmatprep.subr.bf16.mxu0 %v4344
    %5914 = vmatpush1.bf16.msra.mxu0 %v4343
    %5915 = vmatprep.subr.bf16.mxu0 %v4348
    %5916 = vmatpush1.bf16.msra.mxu0 %v4347
    %5917 = vmatprep.subr.bf16.mxu0 %v4352
    %5918 = vmatpush1.bf16.msra.mxu0 %v4351
    %5919 = vmatprep.subr.bf16.mxu0 %v4356
    %5920 = vmatpush1.bf16.msra.mxu0 %v4355
    %5921 = vmatprep.subr.bf16.mxu0 %v4360
    %5922 = vmatpush1.bf16.msra.mxu0 %v4359
    %5923 = vmatprep.subr.bf16.mxu0 %v4364
    %5924 = vmatpush1.bf16.msra.mxu0 %v4363
    %5925 = vmatprep.subr.bf16.mxu0 %v4368
    %5926 = vmatpush1.bf16.msra.mxu0 %v4367
    %5927 = vmatprep.subr.bf16.mxu0 %v4372
    %5928 = vmatpush1.bf16.msra.mxu0 %v4371
    %5929 = vmatprep.subr.bf16.mxu0 %v4376
    %5930 = vmatpush1.bf16.msra.mxu0 %v4375
    %5931 = vmatprep.subr.bf16.mxu0 %v4380
    %5932 = vmatpush1.bf16.msra.mxu0 %v4379
    %5933 = vmatprep.subr.bf16.mxu0 %v4384
    %5934 = vmatpush1.bf16.msra.mxu0 %v4383
    %5935 = vmatprep.subr.bf16.mxu0 %v4388
    %5936 = vmatpush1.bf16.msra.mxu0 %v4387
    %5937 = vmatprep.subr.bf16.mxu0 %v4392
    %5938 = vmatpush1.bf16.msra.mxu0 %v4391
    %5939 = vmatprep.subr.bf16.mxu0 %v4396
    %5940 = vmatpush1.bf16.msra.mxu0 %v4395
    %5941 = vmatprep.subr.bf16.mxu0 %v4400
    %5942 = vmatpush1.bf16.msra.mxu0 %v4399
    %5943 = vmatprep.mubr.bf16.mxu0 %v193
    %5944 = vmatmul.mubr.bf16.gmra.mrb[0].mxu0 %v192
    %v5945 = vpop.f32.mrb[0].mxu0
    %v5946 = vadd.f32 %v1899, %v5945
    %v5947 = vpop.f32.mrb[0].mxu0
    %v5948 = vadd.f32 %v1901, %v5947
    %v5949 = vpop.f32.mrb[0].mxu0
    %v5950 = vpop.f32.mrb[0].mxu0
    %5951 = vdwg.mxu0
    %5952 = vmatprep.subr.bf16.mxu0 %v4404
    %5953 = vmatpush1.bf16.msra.mxu0 %v4403
    %5954 = vmatprep.subr.bf16.mxu0 %v4408
    %5955 = vmatpush1.bf16.msra.mxu0 %v4407
    %5956 = vmatprep.subr.bf16.mxu0 %v4412
    %5957 = vmatpush1.bf16.msra.mxu0 %v4411
    %5958 = vmatprep.subr.bf16.mxu0 %v4416
    %5959 = vmatpush1.bf16.msra.mxu0 %v4415
    %5960 = vmatprep.subr.bf16.mxu0 %v4420
    %5961 = vmatpush1.bf16.msra.mxu0 %v4419
    %5962 = vmatprep.subr.bf16.mxu0 %v4424
    %5963 = vmatpush1.bf16.msra.mxu0 %v4423
    %5964 = vmatprep.subr.bf16.mxu0 %v4428
    %5965 = vmatpush1.bf16.msra.mxu0 %v4427
    %5966 = vmatprep.subr.bf16.mxu0 %v4432
    %5967 = vmatpush1.bf16.msra.mxu0 %v4431
    %5968 = vmatprep.subr.bf16.mxu0 %v4436
    %5969 = vmatpush1.bf16.msra.mxu0 %v4435
    %5970 = vmatprep.subr.bf16.mxu0 %v4440
    %5971 = vmatpush1.bf16.msra.mxu0 %v4439
    %5972 = vmatprep.subr.bf16.mxu0 %v4444
    %5973 = vmatpush1.bf16.msra.mxu0 %v4443
    %5974 = vmatprep.subr.bf16.mxu0 %v4448
    %5975 = vmatpush1.bf16.msra.mxu0 %v4447
    %5976 = vmatprep.subr.bf16.mxu0 %v4452
    %5977 = vmatpush1.bf16.msra.mxu0 %v4451
    %5978 = vmatprep.subr.bf16.mxu0 %v4456
    %5979 = vmatpush1.bf16.msra.mxu0 %v4455
    %5980 = vmatprep.subr.bf16.mxu0 %v4460
    %5981 = vmatpush1.bf16.msra.mxu0 %v4459
    %5982 = vmatprep.subr.bf16.mxu0 %v4464
    %5983 = vmatpush1.bf16.msra.mxu0 %v4463
    %5984 = vmatprep.mubr.bf16.mxu0 %v195
    %5985 = vmatmul.mubr.bf16.gmra.mrb[0].mxu0 %v194
    %v5986 = vpop.f32.mrb[0].mxu0
    %v5987 = vadd.f32 %v5946, %v5986
    %v5988 = vpop.f32.mrb[0].mxu0
    %v5989 = vadd.f32 %v5948, %v5988
    %v5990 = vpop.f32.mrb[0].mxu0
    %v5991 = vpop.f32.mrb[0].mxu0
    %5992 = vdwg.mxu0
    %5993 = vmatprep.subr.bf16.mxu0 %v4468
    %5994 = vmatpush1.bf16.msra.mxu0 %v4467
    %5995 = vmatprep.subr.bf16.mxu0 %v4472
    %5996 = vmatpush1.bf16.msra.mxu0 %v4471
    %5997 = vmatprep.subr.bf16.mxu0 %v4476
    %5998 = vmatpush1.bf16.msra.mxu0 %v4475
    %5999 = vmatprep.subr.bf16.mxu0 %v4480
    %6000 = vmatpush1.bf16.msra.mxu0 %v4479
    %6001 = vmatprep.subr.bf16.mxu0 %v4484
    %6002 = vmatpush1.bf16.msra.mxu0 %v4483
    %6003 = vmatprep.subr.bf16.mxu0 %v4488
    %6004 = vmatpush1.bf16.msra.mxu0 %v4487
    %6005 = vmatprep.subr.bf16.mxu0 %v4492
    %6006 = vmatpush1.bf16.msra.mxu0 %v4491
    %6007 = vmatprep.subr.bf16.mxu0 %v4496
    %6008 = vmatpush1.bf16.msra.mxu0 %v4495
    %6009 = vmatprep.subr.bf16.mxu0 %v4500
    %6010 = vmatpush1.bf16.msra.mxu0 %v4499
    %6011 = vmatprep.subr.bf16.mxu0 %v4504
    %6012 = vmatpush1.bf16.msra.mxu0 %v4503
    %6013 = vmatprep.subr.bf16.mxu0 %v4508
    %6014 = vmatpush1.bf16.msra.mxu0 %v4507
    %6015 = vmatprep.subr.bf16.mxu0 %v4512
    %6016 = vmatpush1.bf16.msra.mxu0 %v4511
    %6017 = vmatprep.subr.bf16.mxu0 %v4516
    %6018 = vmatpush1.bf16.msra.mxu0 %v4515
    %6019 = vmatprep.subr.bf16.mxu0 %v4520
    %6020 = vmatpush1.bf16.msra.mxu0 %v4519
    %6021 = vmatprep.subr.bf16.mxu0 %v4524
    %6022 = vmatpush1.bf16.msra.mxu0 %v4523
    %6023 = vmatprep.subr.bf16.mxu0 %v4528
    %6024 = vmatpush1.bf16.msra.mxu0 %v4527
    %6025 = vmatprep.mubr.bf16.mxu0 %v197
    %6026 = vmatmul.mubr.bf16.gmra.mrb[0].mxu0 %v196
    %v6027 = vpop.f32.mrb[0].mxu0
    %v6028 = vadd.f32 %v5987, %v6027
    %v6029 = vpop.f32.mrb[0].mxu0
    %v6030 = vadd.f32 %v5989, %v6029
    %v6031 = vpop.f32.mrb[0].mxu0
    %v6032 = vpop.f32.mrb[0].mxu0
    %6033 = vdwg.mxu0
    %6034 = vmatprep.subr.bf16.mxu0 %v4532
    %6035 = vmatpush1.bf16.msra.mxu0 %v4531
    %6036 = vmatprep.subr.bf16.mxu0 %v4536
    %6037 = vmatpush1.bf16.msra.mxu0 %v4535
    %6038 = vmatprep.subr.bf16.mxu0 %v4540
    %6039 = vmatpush1.bf16.msra.mxu0 %v4539
    %6040 = vmatprep.subr.bf16.mxu0 %v4544
    %6041 = vmatpush1.bf16.msra.mxu0 %v4543
    %6042 = vmatprep.subr.bf16.mxu0 %v4548
    %6043 = vmatpush1.bf16.msra.mxu0 %v4547
    %6044 = vmatprep.subr.bf16.mxu0 %v4552
    %6045 = vmatpush1.bf16.msra.mxu0 %v4551
    %6046 = vmatprep.subr.bf16.mxu0 %v4556
    %6047 = vmatpush1.bf16.msra.mxu0 %v4555
    %6048 = vmatprep.subr.bf16.mxu0 %v4560
    %6049 = vmatpush1.bf16.msra.mxu0 %v4559
    %6050 = vmatprep.subr.bf16.mxu0 %v4564
    %6051 = vmatpush1.bf16.msra.mxu0 %v4563
    %6052 = vmatprep.subr.bf16.mxu0 %v4568
    %6053 = vmatpush1.bf16.msra.mxu0 %v4567
    %6054 = vmatprep.subr.bf16.mxu0 %v4572
    %6055 = vmatpush1.bf16.msra.mxu0 %v4571
    %6056 = vmatprep.subr.bf16.mxu0 %v4576
    %6057 = vmatpush1.bf16.msra.mxu0 %v4575
    %6058 = vmatprep.subr.bf16.mxu0 %v4580
    %6059 = vmatpush1.bf16.msra.mxu0 %v4579
    %6060 = vmatprep.subr.bf16.mxu0 %v4584
    %6061 = vmatpush1.bf16.msra.mxu0 %v4583
    %6062 = vmatprep.subr.bf16.mxu0 %v4588
    %6063 = vmatpush1.bf16.msra.mxu0 %v4587
    %6064 = vmatprep.subr.bf16.mxu0 %v4592
    %6065 = vmatpush1.bf16.msra.mxu0 %v4591
    %6066 = vmatprep.mubr.bf16.mxu0 %v199
    %6067 = vmatmul.mubr.bf16.gmra.mrb[0].mxu0 %v198
    %v6068 = vpop.f32.mrb[0].mxu0
    %v6069 = vadd.f32 %v6028, %v6068
    %v6070 = vpop.f32.mrb[0].mxu0
    %v6071 = vadd.f32 %v6030, %v6070
    %v6072 = vpop.f32.mrb[0].mxu0
    %v6073 = vpop.f32.mrb[0].mxu0
    %6074 = vdwg.mxu0
    %6075 = vmatprep.subr.bf16.mxu0 %v4596
    %6076 = vmatpush1.bf16.msra.mxu0 %v4595
    %6077 = vmatprep.subr.bf16.mxu0 %v4600
    %6078 = vmatpush1.bf16.msra.mxu0 %v4599
    %6079 = vmatprep.subr.bf16.mxu0 %v4604
    %6080 = vmatpush1.bf16.msra.mxu0 %v4603
    %6081 = vmatprep.subr.bf16.mxu0 %v4608
    %6082 = vmatpush1.bf16.msra.mxu0 %v4607
    %6083 = vmatprep.subr.bf16.mxu0 %v4612
    %6084 = vmatpush1.bf16.msra.mxu0 %v4611
    %6085 = vmatprep.subr.bf16.mxu0 %v4616
    %6086 = vmatpush1.bf16.msra.mxu0 %v4615
    %6087 = vmatprep.subr.bf16.mxu0 %v4620
    %6088 = vmatpush1.bf16.msra.mxu0 %v4619
    %6089 = vmatprep.subr.bf16.mxu0 %v4624
    %6090 = vmatpush1.bf16.msra.mxu0 %v4623
    %6091 = vmatprep.subr.bf16.mxu0 %v4628
    %6092 = vmatpush1.bf16.msra.mxu0 %v4627
    %6093 = vmatprep.subr.bf16.mxu0 %v4632
    %6094 = vmatpush1.bf16.msra.mxu0 %v4631
    %6095 = vmatprep.subr.bf16.mxu0 %v4636
    %6096 = vmatpush1.bf16.msra.mxu0 %v4635
    %6097 = vmatprep.subr.bf16.mxu0 %v4640
    %6098 = vmatpush1.bf16.msra.mxu0 %v4639
    %6099 = vmatprep.subr.bf16.mxu0 %v4644
    %6100 = vmatpush1.bf16.msra.mxu0 %v4643
    %6101 = vmatprep.subr.bf16.mxu0 %v4648
    %6102 = vmatpush1.bf16.msra.mxu0 %v4647
    %6103 = vmatprep.subr.bf16.mxu0 %v4652
    %6104 = vmatpush1.bf16.msra.mxu0 %v4651
    %6105 = vmatprep.subr.bf16.mxu0 %v4656
    %6106 = vmatpush1.bf16.msra.mxu0 %v4655
    %6107 = vmatprep.mubr.bf16.mxu0 %v201
    %6108 = vmatmul.mubr.bf16.gmra.mrb[0].mxu0 %v200
    %v6109 = vpop.f32.mrb[0].mxu0
    %v6110 = vadd.f32 %v6069, %v6109
    %v6111 = vpop.f32.mrb[0].mxu0
    %v6112 = vadd.f32 %v6071, %v6111
    %v6113 = vpop.f32.mrb[0].mxu0
    %v6114 = vpop.f32.mrb[0].mxu0
    %6115 = vdwg.mxu0
    %6116 = vmatprep.subr.bf16.mxu0 %v4660
    %6117 = vmatpush1.bf16.msra.mxu0 %v4659
    %6118 = vmatprep.subr.bf16.mxu0 %v4664
    %6119 = vmatpush1.bf16.msra.mxu0 %v4663
    %6120 = vmatprep.subr.bf16.mxu0 %v4668
    %6121 = vmatpush1.bf16.msra.mxu0 %v4667
    %6122 = vmatprep.subr.bf16.mxu0 %v4672
    %6123 = vmatpush1.bf16.msra.mxu0 %v4671
    %6124 = vmatprep.subr.bf16.mxu0 %v4676
    %6125 = vmatpush1.bf16.msra.mxu0 %v4675
    %6126 = vmatprep.subr.bf16.mxu0 %v4680
    %6127 = vmatpush1.bf16.msra.mxu0 %v4679
    %6128 = vmatprep.subr.bf16.mxu0 %v4684
    %6129 = vmatpush1.bf16.msra.mxu0 %v4683
    %6130 = vmatprep.subr.bf16.mxu0 %v4688
    %6131 = vmatpush1.bf16.msra.mxu0 %v4687
    %6132 = vmatprep.subr.bf16.mxu0 %v4692
    %6133 = vmatpush1.bf16.msra.mxu0 %v4691
    %6134 = vmatprep.subr.bf16.mxu0 %v4696
    %6135 = vmatpush1.bf16.msra.mxu0 %v4695
    %6136 = vmatprep.subr.bf16.mxu0 %v4700
    %6137 = vmatpush1.bf16.msra.mxu0 %v4699
    %6138 = vmatprep.subr.bf16.mxu0 %v4704
    %6139 = vmatpush1.bf16.msra.mxu0 %v4703
    %6140 = vmatprep.subr.bf16.mxu0 %v4708
    %6141 = vmatpush1.bf16.msra.mxu0 %v4707
    %6142 = vmatprep.subr.bf16.mxu0 %v4712
    %6143 = vmatpush1.bf16.msra.mxu0 %v4711
    %6144 = vmatprep.subr.bf16.mxu0 %v4716
    %6145 = vmatpush1.bf16.msra.mxu0 %v4715
    %6146 = vmatprep.subr.bf16.mxu0 %v4720
    %6147 = vmatpush1.bf16.msra.mxu0 %v4719
    %6148 = vmatprep.mubr.bf16.mxu0 %v203
    %6149 = vmatmul.mubr.bf16.gmra.mrb[0].mxu0 %v202
    %v6150 = vpop.f32.mrb[0].mxu0
    %v6151 = vadd.f32 %v6110, %v6150
    %v6152 = vpop.f32.mrb[0].mxu0
    %v6153 = vadd.f32 %v6112, %v6152
    %v6154 = vpop.f32.mrb[0].mxu0
    %v6155 = vpop.f32.mrb[0].mxu0
    %6156 = vdwg.mxu0
    %6157 = vmatprep.subr.bf16.mxu0 %v4724
    %6158 = vmatpush1.bf16.msra.mxu0 %v4723
    %6159 = vmatprep.subr.bf16.mxu0 %v4728
    %6160 = vmatpush1.bf16.msra.mxu0 %v4727
    %6161 = vmatprep.subr.bf16.mxu0 %v4732
    %6162 = vmatpush1.bf16.msra.mxu0 %v4731
    %6163 = vmatprep.subr.bf16.mxu0 %v4736
    %6164 = vmatpush1.bf16.msra.mxu0 %v4735
    %6165 = vmatprep.subr.bf16.mxu0 %v4740
    %6166 = vmatpush1.bf16.msra.mxu0 %v4739
    %6167 = vmatprep.subr.bf16.mxu0 %v4744
    %6168 = vmatpush1.bf16.msra.mxu0 %v4743
    %6169 = vmatprep.subr.bf16.mxu0 %v4748
    %6170 = vmatpush1.bf16.msra.mxu0 %v4747
    %6171 = vmatprep.subr.bf16.mxu0 %v4752
    %6172 = vmatpush1.bf16.msra.mxu0 %v4751
    %6173 = vmatprep.subr.bf16.mxu0 %v4756
    %6174 = vmatpush1.bf16.msra.mxu0 %v4755
    %6175 = vmatprep.subr.bf16.mxu0 %v4760
    %6176 = vmatpush1.bf16.msra.mxu0 %v4759
    %6177 = vmatprep.subr.bf16.mxu0 %v4764
    %6178 = vmatpush1.bf16.msra.mxu0 %v4763
    %6179 = vmatprep.subr.bf16.mxu0 %v4768
    %6180 = vmatpush1.bf16.msra.mxu0 %v4767
    %6181 = vmatprep.subr.bf16.mxu0 %v4772
    %6182 = vmatpush1.bf16.msra.mxu0 %v4771
    %6183 = vmatprep.subr.bf16.mxu0 %v4776
    %6184 = vmatpush1.bf16.msra.mxu0 %v4775
    %6185 = vmatprep.subr.bf16.mxu0 %v4780
    %6186 = vmatpush1.bf16.msra.mxu0 %v4779
    %6187 = vmatprep.subr.bf16.mxu0 %v4784
    %6188 = vmatpush1.bf16.msra.mxu0 %v4783
    %6189 = vmatprep.mubr.bf16.mxu0 %v205
    %6190 = vmatmul.mubr.bf16.gmra.mrb[0].mxu0 %v204
    %v6191 = vpop.f32.mrb[0].mxu0
    %v6192 = vadd.f32 %v6151, %v6191
    %v6193 = vpop.f32.mrb[0].mxu0
    %v6194 = vadd.f32 %v6153, %v6193
    %v6195 = vpop.f32.mrb[0].mxu0
    %v6196 = vpop.f32.mrb[0].mxu0
    %6197 = vdwg.mxu0
    %6198 = vmatprep.subr.bf16.mxu0 %v4788
    %6199 = vmatpush1.bf16.msra.mxu0 %v4787
    %6200 = vmatprep.subr.bf16.mxu0 %v4792
    %6201 = vmatpush1.bf16.msra.mxu0 %v4791
    %6202 = vmatprep.subr.bf16.mxu0 %v4796
    %6203 = vmatpush1.bf16.msra.mxu0 %v4795
    %6204 = vmatprep.subr.bf16.mxu0 %v4800
    %6205 = vmatpush1.bf16.msra.mxu0 %v4799
    %6206 = vmatprep.subr.bf16.mxu0 %v4804
    %6207 = vmatpush1.bf16.msra.mxu0 %v4803
    %6208 = vmatprep.subr.bf16.mxu0 %v4808
    %6209 = vmatpush1.bf16.msra.mxu0 %v4807
    %6210 = vmatprep.subr.bf16.mxu0 %v4812
    %6211 = vmatpush1.bf16.msra.mxu0 %v4811
    %6212 = vmatprep.subr.bf16.mxu0 %v4816
    %6213 = vmatpush1.bf16.msra.mxu0 %v4815
    %6214 = vmatprep.subr.bf16.mxu0 %v4820
    %6215 = vmatpush1.bf16.msra.mxu0 %v4819
    %6216 = vmatprep.subr.bf16.mxu0 %v4824
    %6217 = vmatpush1.bf16.msra.mxu0 %v4823
    %6218 = vmatprep.subr.bf16.mxu0 %v4828
    %6219 = vmatpush1.bf16.msra.mxu0 %v4827
    %6220 = vmatprep.subr.bf16.mxu0 %v4832
    %6221 = vmatpush1.bf16.msra.mxu0 %v4831
    %6222 = vmatprep.subr.bf16.mxu0 %v4836
    %6223 = vmatpush1.bf16.msra.mxu0 %v4835
    %6224 = vmatprep.subr.bf16.mxu0 %v4840
    %6225 = vmatpush1.bf16.msra.mxu0 %v4839
    %6226 = vmatprep.subr.bf16.mxu0 %v4844
    %6227 = vmatpush1.bf16.msra.mxu0 %v4843
    %6228 = vmatprep.subr.bf16.mxu0 %v4848
    %6229 = vmatpush1.bf16.msra.mxu0 %v4847
    %6230 = vmatprep.mubr.bf16.mxu0 %v207
    %6231 = vmatmul.mubr.bf16.gmra.mrb[0].mxu0 %v206
    %v6232 = vpop.f32.mrb[0].mxu0
    %v6233 = vadd.f32 %v6192, %v6232
    %v6234 = vpop.f32.mrb[0].mxu0
    %v6235 = vadd.f32 %v6194, %v6234
    %v6236 = vpop.f32.mrb[0].mxu0
    %v6237 = vpop.f32.mrb[0].mxu0
    %6238 = vdwg.mxu0
    %6239 = vmatprep.subr.bf16.mxu0 %v4852
    %6240 = vmatpush1.bf16.msra.mxu0 %v4851
    %6241 = vmatprep.subr.bf16.mxu0 %v4856
    %6242 = vmatpush1.bf16.msra.mxu0 %v4855
    %6243 = vmatprep.subr.bf16.mxu0 %v4860
    %6244 = vmatpush1.bf16.msra.mxu0 %v4859
    %6245 = vmatprep.subr.bf16.mxu0 %v4864
    %6246 = vmatpush1.bf16.msra.mxu0 %v4863
    %6247 = vmatprep.subr.bf16.mxu0 %v4868
    %6248 = vmatpush1.bf16.msra.mxu0 %v4867
    %6249 = vmatprep.subr.bf16.mxu0 %v4872
    %6250 = vmatpush1.bf16.msra.mxu0 %v4871
    %6251 = vmatprep.subr.bf16.mxu0 %v4876
    %6252 = vmatpush1.bf16.msra.mxu0 %v4875
    %6253 = vmatprep.subr.bf16.mxu0 %v4880
    %6254 = vmatpush1.bf16.msra.mxu0 %v4879
    %6255 = vmatprep.subr.bf16.mxu0 %v4884
    %6256 = vmatpush1.bf16.msra.mxu0 %v4883
    %6257 = vmatprep.subr.bf16.mxu0 %v4888
    %6258 = vmatpush1.bf16.msra.mxu0 %v4887
    %6259 = vmatprep.subr.bf16.mxu0 %v4892
    %6260 = vmatpush1.bf16.msra.mxu0 %v4891
    %6261 = vmatprep.subr.bf16.mxu0 %v4896
    %6262 = vmatpush1.bf16.msra.mxu0 %v4895
    %6263 = vmatprep.subr.bf16.mxu0 %v4900
    %6264 = vmatpush1.bf16.msra.mxu0 %v4899
    %6265 = vmatprep.subr.bf16.mxu0 %v4904
    %6266 = vmatpush1.bf16.msra.mxu0 %v4903
    %6267 = vmatprep.subr.bf16.mxu0 %v4908
    %6268 = vmatpush1.bf16.msra.mxu0 %v4907
    %6269 = vmatprep.subr.bf16.mxu0 %v4912
    %6270 = vmatpush1.bf16.msra.mxu0 %v4911
    %6271 = vmatprep.mubr.bf16.mxu0 %v209
    %6272 = vmatmul.mubr.bf16.gmra.mrb[0].mxu0 %v208
    %v6273 = vpop.f32.mrb[0].mxu0
    %v6274 = vadd.f32 %v6233, %v6273
    %v6275 = vpop.f32.mrb[0].mxu0
    %v6276 = vadd.f32 %v6235, %v6275
    %v6277 = vpop.f32.mrb[0].mxu0
    %v6278 = vpop.f32.mrb[0].mxu0
    %6279 = vdwg.mxu0
    %6280 = vmatprep.subr.bf16.mxu0 %v4916
    %6281 = vmatpush1.bf16.msra.mxu0 %v4915
    %6282 = vmatprep.subr.bf16.mxu0 %v4920
    %6283 = vmatpush1.bf16.msra.mxu0 %v4919
    %6284 = vmatprep.subr.bf16.mxu0 %v4924
    %6285 = vmatpush1.bf16.msra.mxu0 %v4923
    %6286 = vmatprep.subr.bf16.mxu0 %v4928
    %6287 = vmatpush1.bf16.msra.mxu0 %v4927
    %6288 = vmatprep.subr.bf16.mxu0 %v4932
    %6289 = vmatpush1.bf16.msra.mxu0 %v4931
    %6290 = vmatprep.subr.bf16.mxu0 %v4936
    %6291 = vmatpush1.bf16.msra.mxu0 %v4935
    %6292 = vmatprep.subr.bf16.mxu0 %v4940
    %6293 = vmatpush1.bf16.msra.mxu0 %v4939
    %6294 = vmatprep.subr.bf16.mxu0 %v4944
    %6295 = vmatpush1.bf16.msra.mxu0 %v4943
    %6296 = vmatprep.subr.bf16.mxu0 %v4948
    %6297 = vmatpush1.bf16.msra.mxu0 %v4947
    %6298 = vmatprep.subr.bf16.mxu0 %v4952
    %6299 = vmatpush1.bf16.msra.mxu0 %v4951
    %6300 = vmatprep.subr.bf16.mxu0 %v4956
    %6301 = vmatpush1.bf16.msra.mxu0 %v4955
    %6302 = vmatprep.subr.bf16.mxu0 %v4960
    %6303 = vmatpush1.bf16.msra.mxu0 %v4959
    %6304 = vmatprep.subr.bf16.mxu0 %v4964
    %6305 = vmatpush1.bf16.msra.mxu0 %v4963
    %6306 = vmatprep.subr.bf16.mxu0 %v4968
    %6307 = vmatpush1.bf16.msra.mxu0 %v4967
    %6308 = vmatprep.subr.bf16.mxu0 %v4972
    %6309 = vmatpush1.bf16.msra.mxu0 %v4971
    %6310 = vmatprep.subr.bf16.mxu0 %v4976
    %6311 = vmatpush1.bf16.msra.mxu0 %v4975
    %6312 = vmatprep.mubr.bf16.mxu0 %v211
    %6313 = vmatmul.mubr.bf16.gmra.mrb[0].mxu0 %v210
    %v6314 = vpop.f32.mrb[0].mxu0
    %v6315 = vadd.f32 %v6274, %v6314
    %v6316 = vpop.f32.mrb[0].mxu0
    %v6317 = vadd.f32 %v6276, %v6316
    %v6318 = vpop.f32.mrb[0].mxu0
    %v6319 = vpop.f32.mrb[0].mxu0
    %6320 = vdwg.mxu0
    %6321 = vmatprep.subr.bf16.mxu0 %v4980
    %6322 = vmatpush1.bf16.msra.mxu0 %v4979
    %6323 = vmatprep.subr.bf16.mxu0 %v4984
    %6324 = vmatpush1.bf16.msra.mxu0 %v4983
    %6325 = vmatprep.subr.bf16.mxu0 %v4988
    %6326 = vmatpush1.bf16.msra.mxu0 %v4987
    %6327 = vmatprep.subr.bf16.mxu0 %v4992
    %6328 = vmatpush1.bf16.msra.mxu0 %v4991
    %6329 = vmatprep.subr.bf16.mxu0 %v4996
    %6330 = vmatpush1.bf16.msra.mxu0 %v4995
    %6331 = vmatprep.subr.bf16.mxu0 %v5000
    %6332 = vmatpush1.bf16.msra.mxu0 %v4999
    %6333 = vmatprep.subr.bf16.mxu0 %v5004
    %6334 = vmatpush1.bf16.msra.mxu0 %v5003
    %6335 = vmatprep.subr.bf16.mxu0 %v5008
    %6336 = vmatpush1.bf16.msra.mxu0 %v5007
    %6337 = vmatprep.subr.bf16.mxu0 %v5012
    %6338 = vmatpush1.bf16.msra.mxu0 %v5011
    %6339 = vmatprep.subr.bf16.mxu0 %v5016
    %6340 = vmatpush1.bf16.msra.mxu0 %v5015
    %6341 = vmatprep.subr.bf16.mxu0 %v5020
    %6342 = vmatpush1.bf16.msra.mxu0 %v5019
    %6343 = vmatprep.subr.bf16.mxu0 %v5024
    %6344 = vmatpush1.bf16.msra.mxu0 %v5023
    %6345 = vmatprep.subr.bf16.mxu0 %v5028
    %6346 = vmatpush1.bf16.msra.mxu0 %v5027
    %6347 = vmatprep.subr.bf16.mxu0 %v5032
    %6348 = vmatpush1.bf16.msra.mxu0 %v5031
    %6349 = vmatprep.subr.bf16.mxu0 %v5036
    %6350 = vmatpush1.bf16.msra.mxu0 %v5035
    %6351 = vmatprep.subr.bf16.mxu0 %v5040
    %6352 = vmatpush1.bf16.msra.mxu0 %v5039
    %6353 = vmatprep.mubr.bf16.mxu0 %v213
    %6354 = vmatmul.mubr.bf16.gmra.mrb[0].mxu0 %v212
    %v6355 = vpop.f32.mrb[0].mxu0
    %v6356 = vadd.f32 %v6315, %v6355
    %v6357 = vpop.f32.mrb[0].mxu0
    %v6358 = vadd.f32 %v6317, %v6357
    %v6359 = vpop.f32.mrb[0].mxu0
    %v6360 = vpop.f32.mrb[0].mxu0
    %6361 = vdwg.mxu0
    %6362 = vmatprep.subr.bf16.mxu0 %v5044
    %6363 = vmatpush1.bf16.msra.mxu0 %v5043
    %6364 = vmatprep.subr.bf16.mxu0 %v5048
    %6365 = vmatpush1.bf16.msra.mxu0 %v5047
    %6366 = vmatprep.subr.bf16.mxu0 %v5052
    %6367 = vmatpush1.bf16.msra.mxu0 %v5051
    %6368 = vmatprep.subr.bf16.mxu0 %v5056
    %6369 = vmatpush1.bf16.msra.mxu0 %v5055
    %6370 = vmatprep.subr.bf16.mxu0 %v5060
    %6371 = vmatpush1.bf16.msra.mxu0 %v5059
    %6372 = vmatprep.subr.bf16.mxu0 %v5064
    %6373 = vmatpush1.bf16.msra.mxu0 %v5063
    %6374 = vmatprep.subr.bf16.mxu0 %v5068
    %6375 = vmatpush1.bf16.msra.mxu0 %v5067
    %6376 = vmatprep.subr.bf16.mxu0 %v5072
    %6377 = vmatpush1.bf16.msra.mxu0 %v5071
    %6378 = vmatprep.subr.bf16.mxu0 %v5076
    %6379 = vmatpush1.bf16.msra.mxu0 %v5075
    %6380 = vmatprep.subr.bf16.mxu0 %v5080
    %6381 = vmatpush1.bf16.msra.mxu0 %v5079
    %6382 = vmatprep.subr.bf16.mxu0 %v5084
    %6383 = vmatpush1.bf16.msra.mxu0 %v5083
    %6384 = vmatprep.subr.bf16.mxu0 %v5088
    %6385 = vmatpush1.bf16.msra.mxu0 %v5087
    %6386 = vmatprep.subr.bf16.mxu0 %v5092
    %6387 = vmatpush1.bf16.msra.mxu0 %v5091
    %6388 = vmatprep.subr.bf16.mxu0 %v5096
    %6389 = vmatpush1.bf16.msra.mxu0 %v5095
    %6390 = vmatprep.subr.bf16.mxu0 %v5100
    %6391 = vmatpush1.bf16.msra.mxu0 %v5099
    %6392 = vmatprep.subr.bf16.mxu0 %v5104
    %6393 = vmatpush1.bf16.msra.mxu0 %v5103
    %6394 = vmatprep.mubr.bf16.mxu0 %v215
    %6395 = vmatmul.mubr.bf16.gmra.mrb[0].mxu0 %v214
    %v6396 = vpop.f32.mrb[0].mxu0
    %v6397 = vadd.f32 %v6356, %v6396
    %v6398 = vpop.f32.mrb[0].mxu0
    %v6399 = vadd.f32 %v6358, %v6398
    %v6400 = vpop.f32.mrb[0].mxu0
    %v6401 = vpop.f32.mrb[0].mxu0
    %6402 = vdwg.mxu0
    %6403 = vmatprep.subr.bf16.mxu0 %v5108
    %6404 = vmatpush1.bf16.msra.mxu0 %v5107
    %6405 = vmatprep.subr.bf16.mxu0 %v5112
    %6406 = vmatpush1.bf16.msra.mxu0 %v5111
    %6407 = vmatprep.subr.bf16.mxu0 %v5116
    %6408 = vmatpush1.bf16.msra.mxu0 %v5115
    %6409 = vmatprep.subr.bf16.mxu0 %v5120
    %6410 = vmatpush1.bf16.msra.mxu0 %v5119
    %6411 = vmatprep.subr.bf16.mxu0 0
    %6412 = vmatpush1.bf16.msra.mxu0 0
    %6413 = vmatprep.subr.bf16.mxu0 0
    %6414 = vmatpush1.bf16.msra.mxu0 0
    %6415 = vmatprep.subr.bf16.mxu0 0
    %6416 = vmatpush1.bf16.msra.mxu0 0
    %6417 = vmatprep.subr.bf16.mxu0 0
    %6418 = vmatpush1.bf16.msra.mxu0 0
    %6419 = vmatprep.subr.bf16.mxu0 0
    %6420 = vmatpush1.bf16.msra.mxu0 0
    %6421 = vmatprep.subr.bf16.mxu0 0
    %6422 = vmatpush1.bf16.msra.mxu0 0
    %6423 = vmatprep.subr.bf16.mxu0 0
    %6424 = vmatpush1.bf16.msra.mxu0 0
    %6425 = vmatprep.subr.bf16.mxu0 0
    %6426 = vmatpush1.bf16.msra.mxu0 0
    %6427 = vmatprep.subr.bf16.mxu0 0
    %6428 = vmatpush1.bf16.msra.mxu0 0
    %6429 = vmatprep.subr.bf16.mxu0 0
    %6430 = vmatpush1.bf16.msra.mxu0 0
    %6431 = vmatprep.subr.bf16.mxu0 0
    %6432 = vmatpush1.bf16.msra.mxu0 0
    %6433 = vmatprep.subr.bf16.mxu0 0
    %6434 = vmatpush1.bf16.msra.mxu0 0
    %6435 = vmatprep.mubr.bf16.mxu0 0
    %6436 = vmatmul.mubr.bf16.gmra.mrb[0].mxu0 %v5909
    %v6437 = vpop.f32.mrb[0].mxu0
    %v6438 = vadd.f32 %v6397, %v6437
    %v6439 = vpop.f32.mrb[0].mxu0
    %v6440 = vadd.f32 %v6399, %v6439
    %v6441 = vpop.f32.mrb[0].mxu0
    %v6442 = vpop.f32.mrb[0].mxu0
    %6443 = vdwg.mxu0
    %6444 = vmatprep.subr.bf16.mxu0 %v4342
    %6445 = vmatpush1.bf16.msra.mxu0 %v4341
    %6446 = vmatprep.subr.bf16.mxu0 %v4346
    %6447 = vmatpush1.bf16.msra.mxu0 %v4345
    %6448 = vmatprep.subr.bf16.mxu0 %v4350
    %6449 = vmatpush1.bf16.msra.mxu0 %v4349
    %6450 = vmatprep.subr.bf16.mxu0 %v4354
    %6451 = vmatpush1.bf16.msra.mxu0 %v4353
    %6452 = vmatprep.subr.bf16.mxu0 %v4358
    %6453 = vmatpush1.bf16.msra.mxu0 %v4357
    %6454 = vmatprep.subr.bf16.mxu0 %v4362
    %6455 = vmatpush1.bf16.msra.mxu0 %v4361
    %6456 = vmatprep.subr.bf16.mxu0 %v4366
    %6457 = vmatpush1.bf16.msra.mxu0 %v4365
    %6458 = vmatprep.subr.bf16.mxu0 %v4370
    %6459 = vmatpush1.bf16.msra.mxu0 %v4369
    %6460 = vmatprep.subr.bf16.mxu0 %v4374
    %6461 = vmatpush1.bf16.msra.mxu0 %v4373
    %6462 = vmatprep.subr.bf16.mxu0 %v4378
    %6463 = vmatpush1.bf16.msra.mxu0 %v4377
    %6464 = vmatprep.subr.bf16.mxu0 %v4382
    %6465 = vmatpush1.bf16.msra.mxu0 %v4381
    %6466 = vmatprep.subr.bf16.mxu0 %v4386
    %6467 = vmatpush1.bf16.msra.mxu0 %v4385
    %6468 = vmatprep.subr.bf16.mxu0 %v4390
    %6469 = vmatpush1.bf16.msra.mxu0 %v4389
    %6470 = vmatprep.subr.bf16.mxu0 %v4394
    %6471 = vmatpush1.bf16.msra.mxu0 %v4393
    %6472 = vmatprep.subr.bf16.mxu0 %v4398
    %6473 = vmatpush1.bf16.msra.mxu0 %v4397
    %6474 = vmatprep.subr.bf16.mxu0 %v4402
    %6475 = vmatpush1.bf16.msra.mxu0 %v4401
    %6476 = vmatprep.mubr.bf16.mxu0 %v193
    %6477 = vmatmul.mubr.bf16.gmra.mrb[0].mxu0 %v192
    %v6478 = vpop.f32.mrb[0].mxu0
    %v6479 = vadd.f32 %v1981, %v6478
    %v6480 = vpop.f32.mrb[0].mxu0
    %v6481 = vadd.f32 %v1983, %v6480
    %v6482 = vpop.f32.mrb[0].mxu0
    %v6483 = vpop.f32.mrb[0].mxu0
    %6484 = vdwg.mxu0
    %6485 = vmatprep.subr.bf16.mxu0 %v4406
    %6486 = vmatpush1.bf16.msra.mxu0 %v4405
    %6487 = vmatprep.subr.bf16.mxu0 %v4410
    %6488 = vmatpush1.bf16.msra.mxu0 %v4409
    %6489 = vmatprep.subr.bf16.mxu0 %v4414
    %6490 = vmatpush1.bf16.msra.mxu0 %v4413
    %6491 = vmatprep.subr.bf16.mxu0 %v4418
    %6492 = vmatpush1.bf16.msra.mxu0 %v4417
    %6493 = vmatprep.subr.bf16.mxu0 %v4422
    %6494 = vmatpush1.bf16.msra.mxu0 %v4421
    %6495 = vmatprep.subr.bf16.mxu0 %v4426
    %6496 = vmatpush1.bf16.msra.mxu0 %v4425
    %6497 = vmatprep.subr.bf16.mxu0 %v4430
    %6498 = vmatpush1.bf16.msra.mxu0 %v4429
    %6499 = vmatprep.subr.bf16.mxu0 %v4434
    %6500 = vmatpush1.bf16.msra.mxu0 %v4433
    %6501 = vmatprep.subr.bf16.mxu0 %v4438
    %6502 = vmatpush1.bf16.msra.mxu0 %v4437
    %6503 = vmatprep.subr.bf16.mxu0 %v4442
    %6504 = vmatpush1.bf16.msra.mxu0 %v4441
    %6505 = vmatprep.subr.bf16.mxu0 %v4446
    %6506 = vmatpush1.bf16.msra.mxu0 %v4445
    %6507 = vmatprep.subr.bf16.mxu0 %v4450
    %6508 = vmatpush1.bf16.msra.mxu0 %v4449
    %6509 = vmatprep.subr.bf16.mxu0 %v4454
    %6510 = vmatpush1.bf16.msra.mxu0 %v4453
    %6511 = vmatprep.subr.bf16.mxu0 %v4458
    %6512 = vmatpush1.bf16.msra.mxu0 %v4457
    %6513 = vmatprep.subr.bf16.mxu0 %v4462
    %6514 = vmatpush1.bf16.msra.mxu0 %v4461
    %6515 = vmatprep.subr.bf16.mxu0 %v4466
    %6516 = vmatpush1.bf16.msra.mxu0 %v4465
    %6517 = vmatprep.mubr.bf16.mxu0 %v195
    %6518 = vmatmul.mubr.bf16.gmra.mrb[0].mxu0 %v194
    %v6519 = vpop.f32.mrb[0].mxu0
    %v6520 = vadd.f32 %v6479, %v6519
    %v6521 = vpop.f32.mrb[0].mxu0
    %v6522 = vadd.f32 %v6481, %v6521
    %v6523 = vpop.f32.mrb[0].mxu0
    %v6524 = vpop.f32.mrb[0].mxu0
    %6525 = vdwg.mxu0
    %6526 = vmatprep.subr.bf16.mxu0 %v4470
    %6527 = vmatpush1.bf16.msra.mxu0 %v4469
    %6528 = vmatprep.subr.bf16.mxu0 %v4474
    %6529 = vmatpush1.bf16.msra.mxu0 %v4473
    %6530 = vmatprep.subr.bf16.mxu0 %v4478
    %6531 = vmatpush1.bf16.msra.mxu0 %v4477
    %6532 = vmatprep.subr.bf16.mxu0 %v4482
    %6533 = vmatpush1.bf16.msra.mxu0 %v4481
    %6534 = vmatprep.subr.bf16.mxu0 %v4486
    %6535 = vmatpush1.bf16.msra.mxu0 %v4485
    %6536 = vmatprep.subr.bf16.mxu0 %v4490
    %6537 = vmatpush1.bf16.msra.mxu0 %v4489
    %6538 = vmatprep.subr.bf16.mxu0 %v4494
    %6539 = vmatpush1.bf16.msra.mxu0 %v4493
    %6540 = vmatprep.subr.bf16.mxu0 %v4498
    %6541 = vmatpush1.bf16.msra.mxu0 %v4497
    %6542 = vmatprep.subr.bf16.mxu0 %v4502
    %6543 = vmatpush1.bf16.msra.mxu0 %v4501
    %6544 = vmatprep.subr.bf16.mxu0 %v4506
    %6545 = vmatpush1.bf16.msra.mxu0 %v4505
    %6546 = vmatprep.subr.bf16.mxu0 %v4510
    %6547 = vmatpush1.bf16.msra.mxu0 %v4509
    %6548 = vmatprep.subr.bf16.mxu0 %v4514
    %6549 = vmatpush1.bf16.msra.mxu0 %v4513
    %6550 = vmatprep.subr.bf16.mxu0 %v4518
    %6551 = vmatpush1.bf16.msra.mxu0 %v4517
    %6552 = vmatprep.subr.bf16.mxu0 %v4522
    %6553 = vmatpush1.bf16.msra.mxu0 %v4521
    %6554 = vmatprep.subr.bf16.mxu0 %v4526
    %6555 = vmatpush1.bf16.msra.mxu0 %v4525
    %6556 = vmatprep.subr.bf16.mxu0 %v4530
    %6557 = vmatpush1.bf16.msra.mxu0 %v4529
    %6558 = vmatprep.mubr.bf16.mxu0 %v197
    %6559 = vmatmul.mubr.bf16.gmra.mrb[0].mxu0 %v196
    %v6560 = vpop.f32.mrb[0].mxu0
    %v6561 = vadd.f32 %v6520, %v6560
    %v6562 = vpop.f32.mrb[0].mxu0
    %v6563 = vadd.f32 %v6522, %v6562
    %v6564 = vpop.f32.mrb[0].mxu0
    %v6565 = vpop.f32.mrb[0].mxu0
    %6566 = vdwg.mxu0
    %6567 = vmatprep.subr.bf16.mxu0 %v4534
    %6568 = vmatpush1.bf16.msra.mxu0 %v4533
    %6569 = vmatprep.subr.bf16.mxu0 %v4538
    %6570 = vmatpush1.bf16.msra.mxu0 %v4537
    %6571 = vmatprep.subr.bf16.mxu0 %v4542
    %6572 = vmatpush1.bf16.msra.mxu0 %v4541
    %6573 = vmatprep.subr.bf16.mxu0 %v4546
    %6574 = vmatpush1.bf16.msra.mxu0 %v4545
    %6575 = vmatprep.subr.bf16.mxu0 %v4550
    %6576 = vmatpush1.bf16.msra.mxu0 %v4549
    %6577 = vmatprep.subr.bf16.mxu0 %v4554
    %6578 = vmatpush1.bf16.msra.mxu0 %v4553
    %6579 = vmatprep.subr.bf16.mxu0 %v4558
    %6580 = vmatpush1.bf16.msra.mxu0 %v4557
    %6581 = vmatprep.subr.bf16.mxu0 %v4562
    %6582 = vmatpush1.bf16.msra.mxu0 %v4561
    %6583 = vmatprep.subr.bf16.mxu0 %v4566
    %6584 = vmatpush1.bf16.msra.mxu0 %v4565
    %6585 = vmatprep.subr.bf16.mxu0 %v4570
    %6586 = vmatpush1.bf16.msra.mxu0 %v4569
    %6587 = vmatprep.subr.bf16.mxu0 %v4574
    %6588 = vmatpush1.bf16.msra.mxu0 %v4573
    %6589 = vmatprep.subr.bf16.mxu0 %v4578
    %6590 = vmatpush1.bf16.msra.mxu0 %v4577
    %6591 = vmatprep.subr.bf16.mxu0 %v4582
    %6592 = vmatpush1.bf16.msra.mxu0 %v4581
    %6593 = vmatprep.subr.bf16.mxu0 %v4586
    %6594 = vmatpush1.bf16.msra.mxu0 %v4585
    %6595 = vmatprep.subr.bf16.mxu0 %v4590
    %6596 = vmatpush1.bf16.msra.mxu0 %v4589
    %6597 = vmatprep.subr.bf16.mxu0 %v4594
    %6598 = vmatpush1.bf16.msra.mxu0 %v4593
    %6599 = vmatprep.mubr.bf16.mxu0 %v199
    %6600 = vmatmul.mubr.bf16.gmra.mrb[0].mxu0 %v198
    %v6601 = vpop.f32.mrb[0].mxu0
    %v6602 = vadd.f32 %v6561, %v6601
    %v6603 = vpop.f32.mrb[0].mxu0
    %v6604 = vadd.f32 %v6563, %v6603
    %v6605 = vpop.f32.mrb[0].mxu0
    %v6606 = vpop.f32.mrb[0].mxu0
    %6607 = vdwg.mxu0
    %6608 = vmatprep.subr.bf16.mxu0 %v4598
    %6609 = vmatpush1.bf16.msra.mxu0 %v4597
    %6610 = vmatprep.subr.bf16.mxu0 %v4602
    %6611 = vmatpush1.bf16.msra.mxu0 %v4601
    %6612 = vmatprep.subr.bf16.mxu0 %v4606
    %6613 = vmatpush1.bf16.msra.mxu0 %v4605
    %6614 = vmatprep.subr.bf16.mxu0 %v4610
    %6615 = vmatpush1.bf16.msra.mxu0 %v4609
    %6616 = vmatprep.subr.bf16.mxu0 %v4614
    %6617 = vmatpush1.bf16.msra.mxu0 %v4613
    %6618 = vmatprep.subr.bf16.mxu0 %v4618
    %6619 = vmatpush1.bf16.msra.mxu0 %v4617
    %6620 = vmatprep.subr.bf16.mxu0 %v4622
    %6621 = vmatpush1.bf16.msra.mxu0 %v4621
    %6622 = vmatprep.subr.bf16.mxu0 %v4626
    %6623 = vmatpush1.bf16.msra.mxu0 %v4625
    %6624 = vmatprep.subr.bf16.mxu0 %v4630
    %6625 = vmatpush1.bf16.msra.mxu0 %v4629
    %6626 = vmatprep.subr.bf16.mxu0 %v4634
    %6627 = vmatpush1.bf16.msra.mxu0 %v4633
    %6628 = vmatprep.subr.bf16.mxu0 %v4638
    %6629 = vmatpush1.bf16.msra.mxu0 %v4637
    %6630 = vmatprep.subr.bf16.mxu0 %v4642
    %6631 = vmatpush1.bf16.msra.mxu0 %v4641
    %6632 = vmatprep.subr.bf16.mxu0 %v4646
    %6633 = vmatpush1.bf16.msra.mxu0 %v4645
    %6634 = vmatprep.subr.bf16.mxu0 %v4650
    %6635 = vmatpush1.bf16.msra.mxu0 %v4649
    %6636 = vmatprep.subr.bf16.mxu0 %v4654
    %6637 = vmatpush1.bf16.msra.mxu0 %v4653
    %6638 = vmatprep.subr.bf16.mxu0 %v4658
    %6639 = vmatpush1.bf16.msra.mxu0 %v4657
    %6640 = vmatprep.mubr.bf16.mxu0 %v201
    %6641 = vmatmul.mubr.bf16.gmra.mrb[0].mxu0 %v200
    %v6642 = vpop.f32.mrb[0].mxu0
    %v6643 = vadd.f32 %v6602, %v6642
    %v6644 = vpop.f32.mrb[0].mxu0
    %v6645 = vadd.f32 %v6604, %v6644
    %v6646 = vpop.f32.mrb[0].mxu0
    %v6647 = vpop.f32.mrb[0].mxu0
    %6648 = vdwg.mxu0
    %6649 = vmatprep.subr.bf16.mxu0 %v4662
    %6650 = vmatpush1.bf16.msra.mxu0 %v4661
    %6651 = vmatprep.subr.bf16.mxu0 %v4666
    %6652 = vmatpush1.bf16.msra.mxu0 %v4665
    %6653 = vmatprep.subr.bf16.mxu0 %v4670
    %6654 = vmatpush1.bf16.msra.mxu0 %v4669
    %6655 = vmatprep.subr.bf16.mxu0 %v4674
    %6656 = vmatpush1.bf16.msra.mxu0 %v4673
    %6657 = vmatprep.subr.bf16.mxu0 %v4678
    %6658 = vmatpush1.bf16.msra.mxu0 %v4677
    %6659 = vmatprep.subr.bf16.mxu0 %v4682
    %6660 = vmatpush1.bf16.msra.mxu0 %v4681
    %6661 = vmatprep.subr.bf16.mxu0 %v4686
    %6662 = vmatpush1.bf16.msra.mxu0 %v4685
    %6663 = vmatprep.subr.bf16.mxu0 %v4690
    %6664 = vmatpush1.bf16.msra.mxu0 %v4689
    %6665 = vmatprep.subr.bf16.mxu0 %v4694
    %6666 = vmatpush1.bf16.msra.mxu0 %v4693
    %6667 = vmatprep.subr.bf16.mxu0 %v4698
    %6668 = vmatpush1.bf16.msra.mxu0 %v4697
    %6669 = vmatprep.subr.bf16.mxu0 %v4702
    %6670 = vmatpush1.bf16.msra.mxu0 %v4701
    %6671 = vmatprep.subr.bf16.mxu0 %v4706
    %6672 = vmatpush1.bf16.msra.mxu0 %v4705
    %6673 = vmatprep.subr.bf16.mxu0 %v4710
    %6674 = vmatpush1.bf16.msra.mxu0 %v4709
    %6675 = vmatprep.subr.bf16.mxu0 %v4714
    %6676 = vmatpush1.bf16.msra.mxu0 %v4713
    %6677 = vmatprep.subr.bf16.mxu0 %v4718
    %6678 = vmatpush1.bf16.msra.mxu0 %v4717
    %6679 = vmatprep.subr.bf16.mxu0 %v4722
    %6680 = vmatpush1.bf16.msra.mxu0 %v4721
    %6681 = vmatprep.mubr.bf16.mxu0 %v203
    %6682 = vmatmul.mubr.bf16.gmra.mrb[0].mxu0 %v202
    %v6683 = vpop.f32.mrb[0].mxu0
    %v6684 = vadd.f32 %v6643, %v6683
    %v6685 = vpop.f32.mrb[0].mxu0
    %v6686 = vadd.f32 %v6645, %v6685
    %v6687 = vpop.f32.mrb[0].mxu0
    %v6688 = vpop.f32.mrb[0].mxu0
    %6689 = vdwg.mxu0
    %6690 = vmatprep.subr.bf16.mxu0 %v4726
    %6691 = vmatpush1.bf16.msra.mxu0 %v4725
    %6692 = vmatprep.subr.bf16.mxu0 %v4730
    %6693 = vmatpush1.bf16.msra.mxu0 %v4729
    %6694 = vmatprep.subr.bf16.mxu0 %v4734
    %6695 = vmatpush1.bf16.msra.mxu0 %v4733
    %6696 = vmatprep.subr.bf16.mxu0 %v4738
    %6697 = vmatpush1.bf16.msra.mxu0 %v4737
    %6698 = vmatprep.subr.bf16.mxu0 %v4742
    %6699 = vmatpush1.bf16.msra.mxu0 %v4741
    %6700 = vmatprep.subr.bf16.mxu0 %v4746
    %6701 = vmatpush1.bf16.msra.mxu0 %v4745
    %6702 = vmatprep.subr.bf16.mxu0 %v4750
    %6703 = vmatpush1.bf16.msra.mxu0 %v4749
    %6704 = vmatprep.subr.bf16.mxu0 %v4754
    %6705 = vmatpush1.bf16.msra.mxu0 %v4753
    %6706 = vmatprep.subr.bf16.mxu0 %v4758
    %6707 = vmatpush1.bf16.msra.mxu0 %v4757
    %6708 = vmatprep.subr.bf16.mxu0 %v4762
    %6709 = vmatpush1.bf16.msra.mxu0 %v4761
    %6710 = vmatprep.subr.bf16.mxu0 %v4766
    %6711 = vmatpush1.bf16.msra.mxu0 %v4765
    %6712 = vmatprep.subr.bf16.mxu0 %v4770
    %6713 = vmatpush1.bf16.msra.mxu0 %v4769
    %6714 = vmatprep.subr.bf16.mxu0 %v4774
    %6715 = vmatpush1.bf16.msra.mxu0 %v4773
    %6716 = vmatprep.subr.bf16.mxu0 %v4778
    %6717 = vmatpush1.bf16.msra.mxu0 %v4777
    %6718 = vmatprep.subr.bf16.mxu0 %v4782
    %6719 = vmatpush1.bf16.msra.mxu0 %v4781
    %6720 = vmatprep.subr.bf16.mxu0 %v4786
    %6721 = vmatpush1.bf16.msra.mxu0 %v4785
    %6722 = vmatprep.mubr.bf16.mxu0 %v205
    %6723 = vmatmul.mubr.bf16.gmra.mrb[0].mxu0 %v204
    %v6724 = vpop.f32.mrb[0].mxu0
    %v6725 = vadd.f32 %v6684, %v6724
    %v6726 = vpop.f32.mrb[0].mxu0
    %v6727 = vadd.f32 %v6686, %v6726
    %v6728 = vpop.f32.mrb[0].mxu0
    %v6729 = vpop.f32.mrb[0].mxu0
    %6730 = vdwg.mxu0
    %6731 = vmatprep.subr.bf16.mxu0 %v4790
    %6732 = vmatpush1.bf16.msra.mxu0 %v4789
    %6733 = vmatprep.subr.bf16.mxu0 %v4794
    %6734 = vmatpush1.bf16.msra.mxu0 %v4793
    %6735 = vmatprep.subr.bf16.mxu0 %v4798
    %6736 = vmatpush1.bf16.msra.mxu0 %v4797
    %6737 = vmatprep.subr.bf16.mxu0 %v4802
    %6738 = vmatpush1.bf16.msra.mxu0 %v4801
    %6739 = vmatprep.subr.bf16.mxu0 %v4806
    %6740 = vmatpush1.bf16.msra.mxu0 %v4805
    %6741 = vmatprep.subr.bf16.mxu0 %v4810
    %6742 = vmatpush1.bf16.msra.mxu0 %v4809
    %6743 = vmatprep.subr.bf16.mxu0 %v4814
    %6744 = vmatpush1.bf16.msra.mxu0 %v4813
    %6745 = vmatprep.subr.bf16.mxu0 %v4818
    %6746 = vmatpush1.bf16.msra.mxu0 %v4817
    %6747 = vmatprep.subr.bf16.mxu0 %v4822
    %6748 = vmatpush1.bf16.msra.mxu0 %v4821
    %6749 = vmatprep.subr.bf16.mxu0 %v4826
    %6750 = vmatpush1.bf16.msra.mxu0 %v4825
    %6751 = vmatprep.subr.bf16.mxu0 %v4830
    %6752 = vmatpush1.bf16.msra.mxu0 %v4829
    %6753 = vmatprep.subr.bf16.mxu0 %v4834
    %6754 = vmatpush1.bf16.msra.mxu0 %v4833
    %6755 = vmatprep.subr.bf16.mxu0 %v4838
    %6756 = vmatpush1.bf16.msra.mxu0 %v4837
    %6757 = vmatprep.subr.bf16.mxu0 %v4842
    %6758 = vmatpush1.bf16.msra.mxu0 %v4841
    %6759 = vmatprep.subr.bf16.mxu0 %v4846
    %6760 = vmatpush1.bf16.msra.mxu0 %v4845
    %6761 = vmatprep.subr.bf16.mxu0 %v4850
    %6762 = vmatpush1.bf16.msra.mxu0 %v4849
    %6763 = vmatprep.mubr.bf16.mxu0 %v207
    %6764 = vmatmul.mubr.bf16.gmra.mrb[0].mxu0 %v206
    %v6765 = vpop.f32.mrb[0].mxu0
    %v6766 = vadd.f32 %v6725, %v6765
    %v6767 = vpop.f32.mrb[0].mxu0
    %v6768 = vadd.f32 %v6727, %v6767
    %v6769 = vpop.f32.mrb[0].mxu0
    %v6770 = vpop.f32.mrb[0].mxu0
    %6771 = vdwg.mxu0
    %6772 = vmatprep.subr.bf16.mxu0 %v4854
    %6773 = vmatpush1.bf16.msra.mxu0 %v4853
    %6774 = vmatprep.subr.bf16.mxu0 %v4858
    %6775 = vmatpush1.bf16.msra.mxu0 %v4857
    %6776 = vmatprep.subr.bf16.mxu0 %v4862
    %6777 = vmatpush1.bf16.msra.mxu0 %v4861
    %6778 = vmatprep.subr.bf16.mxu0 %v4866
    %6779 = vmatpush1.bf16.msra.mxu0 %v4865
    %6780 = vmatprep.subr.bf16.mxu0 %v4870
    %6781 = vmatpush1.bf16.msra.mxu0 %v4869
    %6782 = vmatprep.subr.bf16.mxu0 %v4874
    %6783 = vmatpush1.bf16.msra.mxu0 %v4873
    %6784 = vmatprep.subr.bf16.mxu0 %v4878
    %6785 = vmatpush1.bf16.msra.mxu0 %v4877
    %6786 = vmatprep.subr.bf16.mxu0 %v4882
    %6787 = vmatpush1.bf16.msra.mxu0 %v4881
    %6788 = vmatprep.subr.bf16.mxu0 %v4886
    %6789 = vmatpush1.bf16.msra.mxu0 %v4885
    %6790 = vmatprep.subr.bf16.mxu0 %v4890
    %6791 = vmatpush1.bf16.msra.mxu0 %v4889
    %6792 = vmatprep.subr.bf16.mxu0 %v4894
    %6793 = vmatpush1.bf16.msra.mxu0 %v4893
    %6794 = vmatprep.subr.bf16.mxu0 %v4898
    %6795 = vmatpush1.bf16.msra.mxu0 %v4897
    %6796 = vmatprep.subr.bf16.mxu0 %v4902
    %6797 = vmatpush1.bf16.msra.mxu0 %v4901
    %6798 = vmatprep.subr.bf16.mxu0 %v4906
    %6799 = vmatpush1.bf16.msra.mxu0 %v4905
    %6800 = vmatprep.subr.bf16.mxu0 %v4910
    %6801 = vmatpush1.bf16.msra.mxu0 %v4909
    %6802 = vmatprep.subr.bf16.mxu0 %v4914
    %6803 = vmatpush1.bf16.msra.mxu0 %v4913
    %6804 = vmatprep.mubr.bf16.mxu0 %v209
    %6805 = vmatmul.mubr.bf16.gmra.mrb[0].mxu0 %v208
    %v6806 = vpop.f32.mrb[0].mxu0
    %v6807 = vadd.f32 %v6766, %v6806
    %v6808 = vpop.f32.mrb[0].mxu0
    %v6809 = vadd.f32 %v6768, %v6808
    %v6810 = vpop.f32.mrb[0].mxu0
    %v6811 = vpop.f32.mrb[0].mxu0
    %6812 = vdwg.mxu0
    %6813 = vmatprep.subr.bf16.mxu0 %v4918
    %6814 = vmatpush1.bf16.msra.mxu0 %v4917
    %6815 = vmatprep.subr.bf16.mxu0 %v4922
    %6816 = vmatpush1.bf16.msra.mxu0 %v4921
    %6817 = vmatprep.subr.bf16.mxu0 %v4926
    %6818 = vmatpush1.bf16.msra.mxu0 %v4925
    %6819 = vmatprep.subr.bf16.mxu0 %v4930
    %6820 = vmatpush1.bf16.msra.mxu0 %v4929
    %6821 = vmatprep.subr.bf16.mxu0 %v4934
    %6822 = vmatpush1.bf16.msra.mxu0 %v4933
    %6823 = vmatprep.subr.bf16.mxu0 %v4938
    %6824 = vmatpush1.bf16.msra.mxu0 %v4937
    %6825 = vmatprep.subr.bf16.mxu0 %v4942
    %6826 = vmatpush1.bf16.msra.mxu0 %v4941
    %6827 = vmatprep.subr.bf16.mxu0 %v4946
    %6828 = vmatpush1.bf16.msra.mxu0 %v4945
    %6829 = vmatprep.subr.bf16.mxu0 %v4950
    %6830 = vmatpush1.bf16.msra.mxu0 %v4949
    %6831 = vmatprep.subr.bf16.mxu0 %v4954
    %6832 = vmatpush1.bf16.msra.mxu0 %v4953
    %6833 = vmatprep.subr.bf16.mxu0 %v4958
    %6834 = vmatpush1.bf16.msra.mxu0 %v4957
    %6835 = vmatprep.subr.bf16.mxu0 %v4962
    %6836 = vmatpush1.bf16.msra.mxu0 %v4961
    %6837 = vmatprep.subr.bf16.mxu0 %v4966
    %6838 = vmatpush1.bf16.msra.mxu0 %v4965
    %6839 = vmatprep.subr.bf16.mxu0 %v4970
    %6840 = vmatpush1.bf16.msra.mxu0 %v4969
    %6841 = vmatprep.subr.bf16.mxu0 %v4974
    %6842 = vmatpush1.bf16.msra.mxu0 %v4973
    %6843 = vmatprep.subr.bf16.mxu0 %v4978
    %6844 = vmatpush1.bf16.msra.mxu0 %v4977
    %6845 = vmatprep.mubr.bf16.mxu0 %v211
    %6846 = vmatmul.mubr.bf16.gmra.mrb[0].mxu0 %v210
    %v6847 = vpop.f32.mrb[0].mxu0
    %v6848 = vadd.f32 %v6807, %v6847
    %v6849 = vpop.f32.mrb[0].mxu0
    %v6850 = vadd.f32 %v6809, %v6849
    %v6851 = vpop.f32.mrb[0].mxu0
    %v6852 = vpop.f32.mrb[0].mxu0
    %6853 = vdwg.mxu0
    %6854 = vmatprep.subr.bf16.mxu0 %v4982
    %6855 = vmatpush1.bf16.msra.mxu0 %v4981
    %6856 = vmatprep.subr.bf16.mxu0 %v4986
    %6857 = vmatpush1.bf16.msra.mxu0 %v4985
    %6858 = vmatprep.subr.bf16.mxu0 %v4990
    %6859 = vmatpush1.bf16.msra.mxu0 %v4989
    %6860 = vmatprep.subr.bf16.mxu0 %v4994
    %6861 = vmatpush1.bf16.msra.mxu0 %v4993
    %6862 = vmatprep.subr.bf16.mxu0 %v4998
    %6863 = vmatpush1.bf16.msra.mxu0 %v4997
    %6864 = vmatprep.subr.bf16.mxu0 %v5002
    %6865 = vmatpush1.bf16.msra.mxu0 %v5001
    %6866 = vmatprep.subr.bf16.mxu0 %v5006
    %6867 = vmatpush1.bf16.msra.mxu0 %v5005
    %6868 = vmatprep.subr.bf16.mxu0 %v5010
    %6869 = vmatpush1.bf16.msra.mxu0 %v5009
    %6870 = vmatprep.subr.bf16.mxu0 %v5014
    %6871 = vmatpush1.bf16.msra.mxu0 %v5013
    %6872 = vmatprep.subr.bf16.mxu0 %v5018
    %6873 = vmatpush1.bf16.msra.mxu0 %v5017
    %6874 = vmatprep.subr.bf16.mxu0 %v5022
    %6875 = vmatpush1.bf16.msra.mxu0 %v5021
    %6876 = vmatprep.subr.bf16.mxu0 %v5026
    %6877 = vmatpush1.bf16.msra.mxu0 %v5025
    %6878 = vmatprep.subr.bf16.mxu0 %v5030
    %6879 = vmatpush1.bf16.msra.mxu0 %v5029
    %6880 = vmatprep.subr.bf16.mxu0 %v5034
    %6881 = vmatpush1.bf16.msra.mxu0 %v5033
    %6882 = vmatprep.subr.bf16.mxu0 %v5038
    %6883 = vmatpush1.bf16.msra.mxu0 %v5037
    %6884 = vmatprep.subr.bf16.mxu0 %v5042
    %6885 = vmatpush1.bf16.msra.mxu0 %v5041
    %6886 = vmatprep.mubr.bf16.mxu0 %v213
    %6887 = vmatmul.mubr.bf16.gmra.mrb[0].mxu0 %v212
    %v6888 = vpop.f32.mrb[0].mxu0
    %v6889 = vadd.f32 %v6848, %v6888
    %v6890 = vpop.f32.mrb[0].mxu0
    %v6891 = vadd.f32 %v6850, %v6890
    %v6892 = vpop.f32.mrb[0].mxu0
    %v6893 = vpop.f32.mrb[0].mxu0
    %6894 = vdwg.mxu0
    %6895 = vmatprep.subr.bf16.mxu0 %v5046
    %6896 = vmatpush1.bf16.msra.mxu0 %v5045
    %6897 = vmatprep.subr.bf16.mxu0 %v5050
    %6898 = vmatpush1.bf16.msra.mxu0 %v5049
    %6899 = vmatprep.subr.bf16.mxu0 %v5054
    %6900 = vmatpush1.bf16.msra.mxu0 %v5053
    %6901 = vmatprep.subr.bf16.mxu0 %v5058
    %6902 = vmatpush1.bf16.msra.mxu0 %v5057
    %6903 = vmatprep.subr.bf16.mxu0 %v5062
    %6904 = vmatpush1.bf16.msra.mxu0 %v5061
    %6905 = vmatprep.subr.bf16.mxu0 %v5066
    %6906 = vmatpush1.bf16.msra.mxu0 %v5065
    %6907 = vmatprep.subr.bf16.mxu0 %v5070
    %6908 = vmatpush1.bf16.msra.mxu0 %v5069
    %6909 = vmatprep.subr.bf16.mxu0 %v5074
    %6910 = vmatpush1.bf16.msra.mxu0 %v5073
    %6911 = vmatprep.subr.bf16.mxu0 %v5078
    %6912 = vmatpush1.bf16.msra.mxu0 %v5077
    %6913 = vmatprep.subr.bf16.mxu0 %v5082
    %6914 = vmatpush1.bf16.msra.mxu0 %v5081
    %6915 = vmatprep.subr.bf16.mxu0 %v5086
    %6916 = vmatpush1.bf16.msra.mxu0 %v5085
    %6917 = vmatprep.subr.bf16.mxu0 %v5090
    %6918 = vmatpush1.bf16.msra.mxu0 %v5089
    %6919 = vmatprep.subr.bf16.mxu0 %v5094
    %6920 = vmatpush1.bf16.msra.mxu0 %v5093
    %6921 = vmatprep.subr.bf16.mxu0 %v5098
    %6922 = vmatpush1.bf16.msra.mxu0 %v5097
    %6923 = vmatprep.subr.bf16.mxu0 %v5102
    %6924 = vmatpush1.bf16.msra.mxu0 %v5101
    %6925 = vmatprep.subr.bf16.mxu0 %v5106
    %6926 = vmatpush1.bf16.msra.mxu0 %v5105
    %6927 = vmatprep.mubr.bf16.mxu0 %v215
    %6928 = vmatmul.mubr.bf16.gmra.mrb[0].mxu0 %v214
    %v6929 = vpop.f32.mrb[0].mxu0
    %v6930 = vadd.f32 %v6889, %v6929
    %v6931 = vpop.f32.mrb[0].mxu0
    %v6932 = vadd.f32 %v6891, %v6931
    %v6933 = vpop.f32.mrb[0].mxu0
    %v6934 = vpop.f32.mrb[0].mxu0
    %6935 = vdwg.mxu0
    %6936 = vmatprep.subr.bf16.mxu0 %v5110
    %6937 = vmatpush1.bf16.msra.mxu0 %v5109
    %6938 = vmatprep.subr.bf16.mxu0 %v5114
    %6939 = vmatpush1.bf16.msra.mxu0 %v5113
    %6940 = vmatprep.subr.bf16.mxu0 %v5118
    %6941 = vmatpush1.bf16.msra.mxu0 %v5117
    %6942 = vmatprep.subr.bf16.mxu0 %v5122
    %6943 = vmatpush1.bf16.msra.mxu0 %v5121
    %6944 = vmatprep.subr.bf16.mxu0 0
    %6945 = vmatpush1.bf16.msra.mxu0 0
    %6946 = vmatprep.subr.bf16.mxu0 0
    %6947 = vmatpush1.bf16.msra.mxu0 0
    %6948 = vmatprep.subr.bf16.mxu0 0
    %6949 = vmatpush1.bf16.msra.mxu0 0
    %6950 = vmatprep.subr.bf16.mxu0 0
    %6951 = vmatpush1.bf16.msra.mxu0 0
    %6952 = vmatprep.subr.bf16.mxu0 0
    %6953 = vmatpush1.bf16.msra.mxu0 0
    %6954 = vmatprep.subr.bf16.mxu0 0
    %6955 = vmatpush1.bf16.msra.mxu0 0
    %6956 = vmatprep.subr.bf16.mxu0 0
    %6957 = vmatpush1.bf16.msra.mxu0 0
    %6958 = vmatprep.subr.bf16.mxu0 0
    %6959 = vmatpush1.bf16.msra.mxu0 0
    %6960 = vmatprep.subr.bf16.mxu0 0
    %6961 = vmatpush1.bf16.msra.mxu0 0
    %6962 = vmatprep.subr.bf16.mxu0 0
    %6963 = vmatpush1.bf16.msra.mxu0 0
    %6964 = vmatprep.subr.bf16.mxu0 0
    %6965 = vmatpush1.bf16.msra.mxu0 0
    %6966 = vmatprep.subr.bf16.mxu0 0
    %6967 = vmatpush1.bf16.msra.mxu0 0
    %6968 = vmatprep.mubr.bf16.mxu0 0
    %6969 = vmatmul.mubr.bf16.gmra.mrb[0].mxu0 %v5909
    %v6970 = vpop.f32.mrb[0].mxu0
    %v6971 = vadd.f32 %v6930, %v6970
    %v6972 = vpop.f32.mrb[0].mxu0
    %v6973 = vadd.f32 %v6932, %v6972
    %v6974 = vpop.f32.mrb[0].mxu0
    %v6975 = vpop.f32.mrb[0].mxu0
    %6976 = vdwg.mxu0
    %v6977 = vld [vmem:[%s5] sm:$0xf]
    %v6979 = vlaneseq
    %v6980 = vshrl.u32 %v6979, 7
    %v6981 = vsub.s32 0, %v6980
    %v6982 = vrot.slane %v6977, %v6981
    %v6983 = vlaneseq
    %v6984 = vshrl.u32 %v6983, 7
    %v6985 = vsub.s32 1, %v6984
    %v6986 = vrot.slane %v6977, %v6985
    %v6987 = vlaneseq
    %v6988 = vshrl.u32 %v6987, 7
    %v6989 = vsub.s32 2, %v6988
    %v6990 = vrot.slane %v6977, %v6989
    %v6991 = vlaneseq
    %v6992 = vshrl.u32 %v6991, 7
    %v6993 = vsub.s32 3, %v6992
    %v6994 = vrot.slane %v6977, %v6993
    %v6999 = vadd.f32 %v6438, %v6982
    %v7000 = vadd.f32 %v6440, %v6986
    %v7001 = vadd.f32 %v6971, %v6990
    %v7002 = vadd.f32 %v6973, %v6994
    %v7003 = vtanh.pop %v6999
    %v7004 = vtanh.pop %v7000
    %v7005 = vtanh.pop %v7001
    %v7006 = vtanh.pop %v7002
    %v7007 = vpack.c.bf16 %v7003, %v7003
    %v7008 = vpack.c.bf16 %v7004, %v7004
    %v7009 = vpack.c.bf16 %v7005, %v7005
    %v7010 = vpack.c.bf16 %v7006, %v7006
    %v7011 = vld [vmem:[%s6] sm:$0xff]
    %v7012 = vld [vmem:[%s6 + $0x8] sm:$0xff]
    %v7013 = vld [vmem:[%s6 + $0x10] sm:$0xff]
    %v7014 = vld [vmem:[%s6 + $0x18] sm:$0xff]
    %v7015 = vld [vmem:[%s6 + $0x20] sm:$0xff]
    %v7016 = vld [vmem:[%s6 + $0x28] sm:$0xff]
    %v7017 = vld [vmem:[%s6 + $0x30] sm:$0xff]
    %v7018 = vld [vmem:[%s6 + $0x38] sm:$0xff]
    %v7019 = vld [vmem:[%s6 + $0x40] sm:$0xff]
    %v7020 = vld [vmem:[%s6 + $0x48] sm:$0xff]
    %v7021 = vld [vmem:[%s6 + $0x50] sm:$0xff]
    %v7022 = vld [vmem:[%s6 + $0x58] sm:$0xff]
    %v7023 = vld [vmem:[%s6 + $0x60] sm:$0xff]
    %v7024 = vld [vmem:[%s6 + $0x68] sm:$0xff]
    %v7025 = vld [vmem:[%s6 + $0x70] sm:$0xff]
    %v7026 = vld [vmem:[%s6 + $0x78] sm:$0xff]
    %v7027 = vld [vmem:[%s6 + $0x80] sm:$0xff]
    %v7028 = vld [vmem:[%s6 + $0x88] sm:$0xff]
    %v7029 = vld [vmem:[%s6 + $0x90] sm:$0xff]
    %v7030 = vld [vmem:[%s6 + $0x98] sm:$0xff]
    %v7031 = vld [vmem:[%s6 + $0xa0] sm:$0xff]
    %v7032 = vld [vmem:[%s6 + $0xa8] sm:$0xff]
    %v7033 = vld [vmem:[%s6 + $0xb0] sm:$0xff]
    %v7034 = vld [vmem:[%s6 + $0xb8] sm:$0xff]
    %v7035 = vld [vmem:[%s6 + $0xc0] sm:$0xff]
    %v7036 = vld [vmem:[%s6 + $0xc8] sm:$0xff]
    %v7037 = vld [vmem:[%s6 + $0xd0] sm:$0xff]
    %v7038 = vld [vmem:[%s6 + $0xd8] sm:$0xff]
    %v7039 = vld [vmem:[%s6 + $0xe0] sm:$0xff]
    %v7040 = vld [vmem:[%s6 + $0xe8] sm:$0xff]
    %v7041 = vld [vmem:[%s6 + $0xf0] sm:$0xff]
    %v7042 = vld [vmem:[%s6 + $0xf8] sm:$0xff]
    %v7043 = vld [vmem:[%s6 + $0x100] sm:$0xff]
    %v7044 = vld [vmem:[%s6 + $0x108] sm:$0xff]
    %v7045 = vld [vmem:[%s6 + $0x110] sm:$0xff]
    %v7046 = vld [vmem:[%s6 + $0x118] sm:$0xff]
    %v7047 = vld [vmem:[%s6 + $0x120] sm:$0xff]
    %v7048 = vld [vmem:[%s6 + $0x128] sm:$0xff]
    %v7049 = vld [vmem:[%s6 + $0x130] sm:$0xff]
    %v7050 = vld [vmem:[%s6 + $0x138] sm:$0xff]
    %v7051 = vld [vmem:[%s6 + $0x140] sm:$0xff]
    %v7052 = vld [vmem:[%s6 + $0x148] sm:$0xff]
    %v7053 = vld [vmem:[%s6 + $0x150] sm:$0xff]
    %v7054 = vld [vmem:[%s6 + $0x158] sm:$0xff]
    %v7055 = vld [vmem:[%s6 + $0x160] sm:$0xff]
    %v7056 = vld [vmem:[%s6 + $0x168] sm:$0xff]
    %v7057 = vld [vmem:[%s6 + $0x170] sm:$0xff]
    %v7058 = vld [vmem:[%s6 + $0x178] sm:$0xff]
    %v7059 = vld [vmem:[%s6 + $0x180] sm:$0xff]
    %v7060 = vld [vmem:[%s6 + $0x188] sm:$0xff]
    %v7061 = vld [vmem:[%s6 + $0x190] sm:$0xff]
    %v7062 = vld [vmem:[%s6 + $0x198] sm:$0xff]
    %v7063 = vld [vmem:[%s6 + $0x1a0] sm:$0xff]
    %v7064 = vld [vmem:[%s6 + $0x1a8] sm:$0xff]
    %v7065 = vld [vmem:[%s6 + $0x1b0] sm:$0xff]
    %v7066 = vld [vmem:[%s6 + $0x1b8] sm:$0xff]
    %v7067 = vld [vmem:[%s6 + $0x1c0] sm:$0xff]
    %v7068 = vld [vmem:[%s6 + $0x1c8] sm:$0xff]
    %v7069 = vld [vmem:[%s6 + $0x1d0] sm:$0xff]
    %v7070 = vld [vmem:[%s6 + $0x1d8] sm:$0xff]
    %v7071 = vld [vmem:[%s6 + $0x1e0] sm:$0xff]
    %v7072 = vld [vmem:[%s6 + $0x1e8] sm:$0xff]
    %v7073 = vld [vmem:[%s6 + $0x1f0] sm:$0xff]
    %v7074 = vld [vmem:[%s6 + $0x1f8] sm:$0xff]
    %v7075 = vld [vmem:[%s6 + $0x200] sm:$0xff]
    %v7076 = vld [vmem:[%s6 + $0x208] sm:$0xff]
    %v7077 = vld [vmem:[%s6 + $0x210] sm:$0xff]
    %v7078 = vld [vmem:[%s6 + $0x218] sm:$0xff]
    %v7079 = vld [vmem:[%s6 + $0x220] sm:$0xff]
    %v7080 = vld [vmem:[%s6 + $0x228] sm:$0xff]
    %v7081 = vld [vmem:[%s6 + $0x230] sm:$0xff]
    %v7082 = vld [vmem:[%s6 + $0x238] sm:$0xff]
    %v7083 = vld [vmem:[%s6 + $0x240] sm:$0xff]
    %v7084 = vld [vmem:[%s6 + $0x248] sm:$0xff]
    %v7085 = vld [vmem:[%s6 + $0x250] sm:$0xff]
    %v7086 = vld [vmem:[%s6 + $0x258] sm:$0xff]
    %v7087 = vld [vmem:[%s6 + $0x260] sm:$0xff]
    %v7088 = vld [vmem:[%s6 + $0x268] sm:$0xff]
    %v7089 = vld [vmem:[%s6 + $0x270] sm:$0xff]
    %v7090 = vld [vmem:[%s6 + $0x278] sm:$0xff]
    %v7091 = vld [vmem:[%s6 + $0x280] sm:$0xff]
    %v7092 = vld [vmem:[%s6 + $0x288] sm:$0xff]
    %v7093 = vld [vmem:[%s6 + $0x290] sm:$0xff]
    %v7094 = vld [vmem:[%s6 + $0x298] sm:$0xff]
    %v7095 = vld [vmem:[%s6 + $0x2a0] sm:$0xff]
    %v7096 = vld [vmem:[%s6 + $0x2a8] sm:$0xff]
    %v7097 = vld [vmem:[%s6 + $0x2b0] sm:$0xff]
    %v7098 = vld [vmem:[%s6 + $0x2b8] sm:$0xff]
    %v7099 = vld [vmem:[%s6 + $0x2c0] sm:$0xff]
    %v7100 = vld [vmem:[%s6 + $0x2c8] sm:$0xff]
    %v7101 = vld [vmem:[%s6 + $0x2d0] sm:$0xff]
    %v7102 = vld [vmem:[%s6 + $0x2d8] sm:$0xff]
    %v7103 = vld [vmem:[%s6 + $0x2e0] sm:$0xff]
    %v7104 = vld [vmem:[%s6 + $0x2e8] sm:$0xff]
    %v7105 = vld [vmem:[%s6 + $0x2f0] sm:$0xff]
    %v7106 = vld [vmem:[%s6 + $0x2f8] sm:$0xff]
    %v7107 = vld [vmem:[%s6 + $0x300] sm:$0xff]
    %v7108 = vld [vmem:[%s6 + $0x308] sm:$0xff]
    %v7109 = vld [vmem:[%s6 + $0x310] sm:$0xff]
    %v7110 = vld [vmem:[%s6 + $0x318] sm:$0xff]
    %v7111 = vld [vmem:[%s6 + $0x320] sm:$0xff]
    %v7112 = vld [vmem:[%s6 + $0x328] sm:$0xff]
    %v7113 = vld [vmem:[%s6 + $0x330] sm:$0xff]
    %v7114 = vld [vmem:[%s6 + $0x338] sm:$0xff]
    %v7115 = vld [vmem:[%s6 + $0x340] sm:$0xff]
    %v7116 = vld [vmem:[%s6 + $0x348] sm:$0xff]
    %v7117 = vld [vmem:[%s6 + $0x350] sm:$0xff]
    %v7118 = vld [vmem:[%s6 + $0x358] sm:$0xff]
    %v7119 = vld [vmem:[%s6 + $0x360] sm:$0xff]
    %v7120 = vld [vmem:[%s6 + $0x368] sm:$0xff]
    %v7121 = vld [vmem:[%s6 + $0x370] sm:$0xff]
    %v7122 = vld [vmem:[%s6 + $0x378] sm:$0xff]
    %v7123 = vld [vmem:[%s6 + $0x380] sm:$0xff]
    %v7124 = vld [vmem:[%s6 + $0x388] sm:$0xff]
    %v7125 = vld [vmem:[%s6 + $0x390] sm:$0xff]
    %v7126 = vld [vmem:[%s6 + $0x398] sm:$0xff]
    %v7127 = vld [vmem:[%s6 + $0x3a0] sm:$0xff]
    %v7128 = vld [vmem:[%s6 + $0x3a8] sm:$0xff]
    %v7129 = vld [vmem:[%s6 + $0x3b0] sm:$0xff]
    %v7130 = vld [vmem:[%s6 + $0x3b8] sm:$0xff]
    %v7131 = vld [vmem:[%s6 + $0x3c0] sm:$0xff]
    %v7132 = vld [vmem:[%s6 + $0x3c8] sm:$0xff]
    %v7133 = vld [vmem:[%s6 + $0x3d0] sm:$0xff]
    %v7134 = vld [vmem:[%s6 + $0x3d8] sm:$0xff]
    %v7135 = vld [vmem:[%s6 + $0x3e0] sm:$0xff]
    %v7136 = vld [vmem:[%s6 + $0x3e8] sm:$0xff]
    %v7137 = vld [vmem:[%s6 + $0x3f0] sm:$0xff]
    %v7138 = vld [vmem:[%s6 + $0x3f8] sm:$0xff]
    %v7139 = vld [vmem:[%s7] sm:$0xff]
    %v7140 = vld [vmem:[%s7 + $0x8] sm:$0xff]
    %v7141 = vld [vmem:[%s7 + $0x10] sm:$0xff]
    %v7142 = vld [vmem:[%s7 + $0x18] sm:$0xff]
    %v7143 = vld [vmem:[%s7 + $0x20] sm:$0xff]
    %v7144 = vld [vmem:[%s7 + $0x28] sm:$0xff]
    %v7145 = vld [vmem:[%s7 + $0x30] sm:$0xff]
    %v7146 = vld [vmem:[%s7 + $0x38] sm:$0xff]
    %v7147 = vld [vmem:[%s7 + $0x40] sm:$0xff]
    %v7148 = vld [vmem:[%s7 + $0x48] sm:$0xff]
    %v7149 = vld [vmem:[%s7 + $0x50] sm:$0xff]
    %v7150 = vld [vmem:[%s7 + $0x58] sm:$0xff]
    %v7151 = vld [vmem:[%s7 + $0x60] sm:$0xff]
    %v7152 = vld [vmem:[%s7 + $0x68] sm:$0xff]
    %v7153 = vld [vmem:[%s7 + $0x70] sm:$0xff]
    %v7154 = vld [vmem:[%s7 + $0x78] sm:$0xff]
    %v7155 = vld [vmem:[%s7 + $0x80] sm:$0xff]
    %v7156 = vld [vmem:[%s7 + $0x88] sm:$0xff]
    %v7157 = vld [vmem:[%s7 + $0x90] sm:$0xff]
    %v7158 = vld [vmem:[%s7 + $0x98] sm:$0xff]
    %v7159 = vld [vmem:[%s7 + $0xa0] sm:$0xff]
    %v7160 = vld [vmem:[%s7 + $0xa8] sm:$0xff]
    %v7161 = vld [vmem:[%s7 + $0xb0] sm:$0xff]
    %v7162 = vld [vmem:[%s7 + $0xb8] sm:$0xff]
    %v7163 = vld [vmem:[%s7 + $0xc0] sm:$0xff]
    %v7164 = vld [vmem:[%s7 + $0xc8] sm:$0xff]
    %v7165 = vld [vmem:[%s7 + $0xd0] sm:$0xff]
    %v7166 = vld [vmem:[%s7 + $0xd8] sm:$0xff]
    %v7167 = vld [vmem:[%s7 + $0xe0] sm:$0xff]
    %v7168 = vld [vmem:[%s7 + $0xe8] sm:$0xff]
    %v7169 = vld [vmem:[%s7 + $0xf0] sm:$0xff]
    %v7170 = vld [vmem:[%s7 + $0xf8] sm:$0xff]
    %v7171 = vld [vmem:[%s7 + $0x100] sm:$0xff]
    %v7172 = vld [vmem:[%s7 + $0x108] sm:$0xff]
    %v7173 = vld [vmem:[%s7 + $0x110] sm:$0xff]
    %v7174 = vld [vmem:[%s7 + $0x118] sm:$0xff]
    %v7175 = vld [vmem:[%s7 + $0x120] sm:$0xff]
    %v7176 = vld [vmem:[%s7 + $0x128] sm:$0xff]
    %v7177 = vld [vmem:[%s7 + $0x130] sm:$0xff]
    %v7178 = vld [vmem:[%s7 + $0x138] sm:$0xff]
    %v7179 = vld [vmem:[%s7 + $0x140] sm:$0xff]
    %v7180 = vld [vmem:[%s7 + $0x148] sm:$0xff]
    %v7181 = vld [vmem:[%s7 + $0x150] sm:$0xff]
    %v7182 = vld [vmem:[%s7 + $0x158] sm:$0xff]
    %v7183 = vld [vmem:[%s7 + $0x160] sm:$0xff]
    %v7184 = vld [vmem:[%s7 + $0x168] sm:$0xff]
    %v7185 = vld [vmem:[%s7 + $0x170] sm:$0xff]
    %v7186 = vld [vmem:[%s7 + $0x178] sm:$0xff]
    %v7187 = vld [vmem:[%s7 + $0x180] sm:$0xff]
    %v7188 = vld [vmem:[%s7 + $0x188] sm:$0xff]
    %v7189 = vld [vmem:[%s7 + $0x190] sm:$0xff]
    %v7190 = vld [vmem:[%s7 + $0x198] sm:$0xff]
    %v7191 = vld [vmem:[%s7 + $0x1a0] sm:$0xff]
    %v7192 = vld [vmem:[%s7 + $0x1a8] sm:$0xff]
    %v7193 = vld [vmem:[%s7 + $0x1b0] sm:$0xff]
    %v7194 = vld [vmem:[%s7 + $0x1b8] sm:$0xff]
    %v7195 = vld [vmem:[%s7 + $0x1c0] sm:$0xff]
    %v7196 = vld [vmem:[%s7 + $0x1c8] sm:$0xff]
    %v7197 = vld [vmem:[%s7 + $0x1d0] sm:$0xff]
    %v7198 = vld [vmem:[%s7 + $0x1d8] sm:$0xff]
    %v7199 = vld [vmem:[%s7 + $0x1e0] sm:$0xff]
    %v7200 = vld [vmem:[%s7 + $0x1e8] sm:$0xff]
    %v7201 = vld [vmem:[%s7 + $0x1f0] sm:$0xff]
    %v7202 = vld [vmem:[%s7 + $0x1f8] sm:$0xff]
    %v7203 = vld [vmem:[%s7 + $0x200] sm:$0xff]
    %v7204 = vld [vmem:[%s7 + $0x208] sm:$0xff]
    %v7205 = vld [vmem:[%s7 + $0x210] sm:$0xff]
    %v7206 = vld [vmem:[%s7 + $0x218] sm:$0xff]
    %v7207 = vld [vmem:[%s7 + $0x220] sm:$0xff]
    %v7208 = vld [vmem:[%s7 + $0x228] sm:$0xff]
    %v7209 = vld [vmem:[%s7 + $0x230] sm:$0xff]
    %v7210 = vld [vmem:[%s7 + $0x238] sm:$0xff]
    %v7211 = vld [vmem:[%s7 + $0x240] sm:$0xff]
    %v7212 = vld [vmem:[%s7 + $0x248] sm:$0xff]
    %v7213 = vld [vmem:[%s7 + $0x250] sm:$0xff]
    %v7214 = vld [vmem:[%s7 + $0x258] sm:$0xff]
    %v7215 = vld [vmem:[%s7 + $0x260] sm:$0xff]
    %v7216 = vld [vmem:[%s7 + $0x268] sm:$0xff]
    %v7217 = vld [vmem:[%s7 + $0x270] sm:$0xff]
    %v7218 = vld [vmem:[%s7 + $0x278] sm:$0xff]
    %v7219 = vld [vmem:[%s7 + $0x280] sm:$0xff]
    %v7220 = vld [vmem:[%s7 + $0x288] sm:$0xff]
    %v7221 = vld [vmem:[%s7 + $0x290] sm:$0xff]
    %v7222 = vld [vmem:[%s7 + $0x298] sm:$0xff]
    %v7223 = vld [vmem:[%s7 + $0x2a0] sm:$0xff]
    %v7224 = vld [vmem:[%s7 + $0x2a8] sm:$0xff]
    %v7225 = vld [vmem:[%s7 + $0x2b0] sm:$0xff]
    %v7226 = vld [vmem:[%s7 + $0x2b8] sm:$0xff]
    %v7227 = vld [vmem:[%s7 + $0x2c0] sm:$0xff]
    %v7228 = vld [vmem:[%s7 + $0x2c8] sm:$0xff]
    %v7229 = vld [vmem:[%s7 + $0x2d0] sm:$0xff]
    %v7230 = vld [vmem:[%s7 + $0x2d8] sm:$0xff]
    %v7231 = vld [vmem:[%s7 + $0x2e0] sm:$0xff]
    %v7232 = vld [vmem:[%s7 + $0x2e8] sm:$0xff]
    %v7233 = vld [vmem:[%s7 + $0x2f0] sm:$0xff]
    %v7234 = vld [vmem:[%s7 + $0x2f8] sm:$0xff]
    %v7235 = vld [vmem:[%s7 + $0x300] sm:$0xff]
    %v7236 = vld [vmem:[%s7 + $0x308] sm:$0xff]
    %v7237 = vld [vmem:[%s7 + $0x310] sm:$0xff]
    %v7238 = vld [vmem:[%s7 + $0x318] sm:$0xff]
    %v7239 = vld [vmem:[%s7 + $0x320] sm:$0xff]
    %v7240 = vld [vmem:[%s7 + $0x328] sm:$0xff]
    %v7241 = vld [vmem:[%s7 + $0x330] sm:$0xff]
    %v7242 = vld [vmem:[%s7 + $0x338] sm:$0xff]
    %v7243 = vld [vmem:[%s7 + $0x340] sm:$0xff]
    %v7244 = vld [vmem:[%s7 + $0x348] sm:$0xff]
    %v7245 = vld [vmem:[%s7 + $0x350] sm:$0xff]
    %v7246 = vld [vmem:[%s7 + $0x358] sm:$0xff]
    %v7247 = vld [vmem:[%s7 + $0x360] sm:$0xff]
    %v7248 = vld [vmem:[%s7 + $0x368] sm:$0xff]
    %v7249 = vld [vmem:[%s7 + $0x370] sm:$0xff]
    %v7250 = vld [vmem:[%s7 + $0x378] sm:$0xff]
    %v7251 = vld [vmem:[%s7 + $0x380] sm:$0xff]
    %v7252 = vld [vmem:[%s7 + $0x388] sm:$0xff]
    %v7253 = vld [vmem:[%s7 + $0x390] sm:$0xff]
    %v7254 = vld [vmem:[%s7 + $0x398] sm:$0xff]
    %v7255 = vld [vmem:[%s7 + $0x3a0] sm:$0xff]
    %v7256 = vld [vmem:[%s7 + $0x3a8] sm:$0xff]
    %v7257 = vld [vmem:[%s7 + $0x3b0] sm:$0xff]
    %v7258 = vld [vmem:[%s7 + $0x3b8] sm:$0xff]
    %v7259 = vld [vmem:[%s7 + $0x3c0] sm:$0xff]
    %v7260 = vld [vmem:[%s7 + $0x3c8] sm:$0xff]
    %v7261 = vld [vmem:[%s7 + $0x3d0] sm:$0xff]
    %v7262 = vld [vmem:[%s7 + $0x3d8] sm:$0xff]
    %v7263 = vld [vmem:[%s7 + $0x3e0] sm:$0xff]
    %v7264 = vld [vmem:[%s7 + $0x3e8] sm:$0xff]
    %v7265 = vld [vmem:[%s7 + $0x3f0] sm:$0xff]
    %v7266 = vld [vmem:[%s7 + $0x3f8] sm:$0xff]
    %v7395 = vunpack.c.l.b16 %v7139
    %v7396 = vunpack.c.h.b16 %v7139
    %v7397 = vunpack.c.l.b16 %v7140
    %v7398 = vunpack.c.h.b16 %v7140
    %v7399 = vunpack.c.l.b16 %v7141
    %v7400 = vunpack.c.h.b16 %v7141
    %v7401 = vunpack.c.l.b16 %v7142
    %v7402 = vunpack.c.h.b16 %v7142
    %v7403 = vunpack.c.l.b16 %v7143
    %v7404 = vunpack.c.h.b16 %v7143
    %v7405 = vunpack.c.l.b16 %v7144
    %v7406 = vunpack.c.h.b16 %v7144
    %v7407 = vunpack.c.l.b16 %v7145
    %v7408 = vunpack.c.h.b16 %v7145
    %v7409 = vunpack.c.l.b16 %v7146
    %v7410 = vunpack.c.h.b16 %v7146
    %v7411 = vunpack.c.l.b16 %v7147
    %v7412 = vunpack.c.h.b16 %v7147
    %v7413 = vunpack.c.l.b16 %v7148
    %v7414 = vunpack.c.h.b16 %v7148
    %v7415 = vunpack.c.l.b16 %v7149
    %v7416 = vunpack.c.h.b16 %v7149
    %v7417 = vunpack.c.l.b16 %v7150
    %v7418 = vunpack.c.h.b16 %v7150
    %v7419 = vunpack.c.l.b16 %v7151
    %v7420 = vunpack.c.h.b16 %v7151
    %v7421 = vunpack.c.l.b16 %v7152
    %v7422 = vunpack.c.h.b16 %v7152
    %v7423 = vunpack.c.l.b16 %v7153
    %v7424 = vunpack.c.h.b16 %v7153
    %v7425 = vunpack.c.l.b16 %v7154
    %v7426 = vunpack.c.h.b16 %v7154
    %v7427 = vunpack.c.l.b16 %v7155
    %v7428 = vunpack.c.h.b16 %v7155
    %v7429 = vunpack.c.l.b16 %v7156
    %v7430 = vunpack.c.h.b16 %v7156
    %v7431 = vunpack.c.l.b16 %v7157
    %v7432 = vunpack.c.h.b16 %v7157
    %v7433 = vunpack.c.l.b16 %v7158
    %v7434 = vunpack.c.h.b16 %v7158
    %v7435 = vunpack.c.l.b16 %v7159
    %v7436 = vunpack.c.h.b16 %v7159
    %v7437 = vunpack.c.l.b16 %v7160
    %v7438 = vunpack.c.h.b16 %v7160
    %v7439 = vunpack.c.l.b16 %v7161
    %v7440 = vunpack.c.h.b16 %v7161
    %v7441 = vunpack.c.l.b16 %v7162
    %v7442 = vunpack.c.h.b16 %v7162
    %v7443 = vunpack.c.l.b16 %v7163
    %v7444 = vunpack.c.h.b16 %v7163
    %v7445 = vunpack.c.l.b16 %v7164
    %v7446 = vunpack.c.h.b16 %v7164
    %v7447 = vunpack.c.l.b16 %v7165
    %v7448 = vunpack.c.h.b16 %v7165
    %v7449 = vunpack.c.l.b16 %v7166
    %v7450 = vunpack.c.h.b16 %v7166
    %v7451 = vunpack.c.l.b16 %v7167
    %v7452 = vunpack.c.h.b16 %v7167
    %v7453 = vunpack.c.l.b16 %v7168
    %v7454 = vunpack.c.h.b16 %v7168
    %v7455 = vunpack.c.l.b16 %v7169
    %v7456 = vunpack.c.h.b16 %v7169
    %v7457 = vunpack.c.l.b16 %v7170
    %v7458 = vunpack.c.h.b16 %v7170
    %v7459 = vunpack.c.l.b16 %v7171
    %v7460 = vunpack.c.h.b16 %v7171
    %v7461 = vunpack.c.l.b16 %v7172
    %v7462 = vunpack.c.h.b16 %v7172
    %v7463 = vunpack.c.l.b16 %v7173
    %v7464 = vunpack.c.h.b16 %v7173
    %v7465 = vunpack.c.l.b16 %v7174
    %v7466 = vunpack.c.h.b16 %v7174
    %v7467 = vunpack.c.l.b16 %v7175
    %v7468 = vunpack.c.h.b16 %v7175
    %v7469 = vunpack.c.l.b16 %v7176
    %v7470 = vunpack.c.h.b16 %v7176
    %v7471 = vunpack.c.l.b16 %v7177
    %v7472 = vunpack.c.h.b16 %v7177
    %v7473 = vunpack.c.l.b16 %v7178
    %v7474 = vunpack.c.h.b16 %v7178
    %v7475 = vunpack.c.l.b16 %v7179
    %v7476 = vunpack.c.h.b16 %v7179
    %v7477 = vunpack.c.l.b16 %v7180
    %v7478 = vunpack.c.h.b16 %v7180
    %v7479 = vunpack.c.l.b16 %v7181
    %v7480 = vunpack.c.h.b16 %v7181
    %v7481 = vunpack.c.l.b16 %v7182
    %v7482 = vunpack.c.h.b16 %v7182
    %v7483 = vunpack.c.l.b16 %v7183
    %v7484 = vunpack.c.h.b16 %v7183
    %v7485 = vunpack.c.l.b16 %v7184
    %v7486 = vunpack.c.h.b16 %v7184
    %v7487 = vunpack.c.l.b16 %v7185
    %v7488 = vunpack.c.h.b16 %v7185
    %v7489 = vunpack.c.l.b16 %v7186
    %v7490 = vunpack.c.h.b16 %v7186
    %v7491 = vunpack.c.l.b16 %v7187
    %v7492 = vunpack.c.h.b16 %v7187
    %v7493 = vunpack.c.l.b16 %v7188
    %v7494 = vunpack.c.h.b16 %v7188
    %v7495 = vunpack.c.l.b16 %v7189
    %v7496 = vunpack.c.h.b16 %v7189
    %v7497 = vunpack.c.l.b16 %v7190
    %v7498 = vunpack.c.h.b16 %v7190
    %v7499 = vunpack.c.l.b16 %v7191
    %v7500 = vunpack.c.h.b16 %v7191
    %v7501 = vunpack.c.l.b16 %v7192
    %v7502 = vunpack.c.h.b16 %v7192
    %v7503 = vunpack.c.l.b16 %v7193
    %v7504 = vunpack.c.h.b16 %v7193
    %v7505 = vunpack.c.l.b16 %v7194
    %v7506 = vunpack.c.h.b16 %v7194
    %v7507 = vunpack.c.l.b16 %v7195
    %v7508 = vunpack.c.h.b16 %v7195
    %v7509 = vunpack.c.l.b16 %v7196
    %v7510 = vunpack.c.h.b16 %v7196
    %v7511 = vunpack.c.l.b16 %v7197
    %v7512 = vunpack.c.h.b16 %v7197
    %v7513 = vunpack.c.l.b16 %v7198
    %v7514 = vunpack.c.h.b16 %v7198
    %v7515 = vunpack.c.l.b16 %v7199
    %v7516 = vunpack.c.h.b16 %v7199
    %v7517 = vunpack.c.l.b16 %v7200
    %v7518 = vunpack.c.h.b16 %v7200
    %v7519 = vunpack.c.l.b16 %v7201
    %v7520 = vunpack.c.h.b16 %v7201
    %v7521 = vunpack.c.l.b16 %v7202
    %v7522 = vunpack.c.h.b16 %v7202
    %v7523 = vunpack.c.l.b16 %v7203
    %v7524 = vunpack.c.h.b16 %v7203
    %v7525 = vunpack.c.l.b16 %v7204
    %v7526 = vunpack.c.h.b16 %v7204
    %v7527 = vunpack.c.l.b16 %v7205
    %v7528 = vunpack.c.h.b16 %v7205
    %v7529 = vunpack.c.l.b16 %v7206
    %v7530 = vunpack.c.h.b16 %v7206
    %v7531 = vunpack.c.l.b16 %v7207
    %v7532 = vunpack.c.h.b16 %v7207
    %v7533 = vunpack.c.l.b16 %v7208
    %v7534 = vunpack.c.h.b16 %v7208
    %v7535 = vunpack.c.l.b16 %v7209
    %v7536 = vunpack.c.h.b16 %v7209
    %v7537 = vunpack.c.l.b16 %v7210
    %v7538 = vunpack.c.h.b16 %v7210
    %v7539 = vunpack.c.l.b16 %v7211
    %v7540 = vunpack.c.h.b16 %v7211
    %v7541 = vunpack.c.l.b16 %v7212
    %v7542 = vunpack.c.h.b16 %v7212
    %v7543 = vunpack.c.l.b16 %v7213
    %v7544 = vunpack.c.h.b16 %v7213
    %v7545 = vunpack.c.l.b16 %v7214
    %v7546 = vunpack.c.h.b16 %v7214
    %v7547 = vunpack.c.l.b16 %v7215
    %v7548 = vunpack.c.h.b16 %v7215
    %v7549 = vunpack.c.l.b16 %v7216
    %v7550 = vunpack.c.h.b16 %v7216
    %v7551 = vunpack.c.l.b16 %v7217
    %v7552 = vunpack.c.h.b16 %v7217
    %v7553 = vunpack.c.l.b16 %v7218
    %v7554 = vunpack.c.h.b16 %v7218
    %v7555 = vunpack.c.l.b16 %v7219
    %v7556 = vunpack.c.h.b16 %v7219
    %v7557 = vunpack.c.l.b16 %v7220
    %v7558 = vunpack.c.h.b16 %v7220
    %v7559 = vunpack.c.l.b16 %v7221
    %v7560 = vunpack.c.h.b16 %v7221
    %v7561 = vunpack.c.l.b16 %v7222
    %v7562 = vunpack.c.h.b16 %v7222
    %v7563 = vunpack.c.l.b16 %v7223
    %v7564 = vunpack.c.h.b16 %v7223
    %v7565 = vunpack.c.l.b16 %v7224
    %v7566 = vunpack.c.h.b16 %v7224
    %v7567 = vunpack.c.l.b16 %v7225
    %v7568 = vunpack.c.h.b16 %v7225
    %v7569 = vunpack.c.l.b16 %v7226
    %v7570 = vunpack.c.h.b16 %v7226
    %v7571 = vunpack.c.l.b16 %v7227
    %v7572 = vunpack.c.h.b16 %v7227
    %v7573 = vunpack.c.l.b16 %v7228
    %v7574 = vunpack.c.h.b16 %v7228
    %v7575 = vunpack.c.l.b16 %v7229
    %v7576 = vunpack.c.h.b16 %v7229
    %v7577 = vunpack.c.l.b16 %v7230
    %v7578 = vunpack.c.h.b16 %v7230
    %v7579 = vunpack.c.l.b16 %v7231
    %v7580 = vunpack.c.h.b16 %v7231
    %v7581 = vunpack.c.l.b16 %v7232
    %v7582 = vunpack.c.h.b16 %v7232
    %v7583 = vunpack.c.l.b16 %v7233
    %v7584 = vunpack.c.h.b16 %v7233
    %v7585 = vunpack.c.l.b16 %v7234
    %v7586 = vunpack.c.h.b16 %v7234
    %v7587 = vunpack.c.l.b16 %v7235
    %v7588 = vunpack.c.h.b16 %v7235
    %v7589 = vunpack.c.l.b16 %v7236
    %v7590 = vunpack.c.h.b16 %v7236
    %v7591 = vunpack.c.l.b16 %v7237
    %v7592 = vunpack.c.h.b16 %v7237
    %v7593 = vunpack.c.l.b16 %v7238
    %v7594 = vunpack.c.h.b16 %v7238
    %v7595 = vunpack.c.l.b16 %v7239
    %v7596 = vunpack.c.h.b16 %v7239
    %v7597 = vunpack.c.l.b16 %v7240
    %v7598 = vunpack.c.h.b16 %v7240
    %v7599 = vunpack.c.l.b16 %v7241
    %v7600 = vunpack.c.h.b16 %v7241
    %v7601 = vunpack.c.l.b16 %v7242
    %v7602 = vunpack.c.h.b16 %v7242
    %v7603 = vunpack.c.l.b16 %v7243
    %v7604 = vunpack.c.h.b16 %v7243
    %v7605 = vunpack.c.l.b16 %v7244
    %v7606 = vunpack.c.h.b16 %v7244
    %v7607 = vunpack.c.l.b16 %v7245
    %v7608 = vunpack.c.h.b16 %v7245
    %v7609 = vunpack.c.l.b16 %v7246
    %v7610 = vunpack.c.h.b16 %v7246
    %v7611 = vunpack.c.l.b16 %v7247
    %v7612 = vunpack.c.h.b16 %v7247
    %v7613 = vunpack.c.l.b16 %v7248
    %v7614 = vunpack.c.h.b16 %v7248
    %v7615 = vunpack.c.l.b16 %v7249
    %v7616 = vunpack.c.h.b16 %v7249
    %v7617 = vunpack.c.l.b16 %v7250
    %v7618 = vunpack.c.h.b16 %v7250
    %v7619 = vunpack.c.l.b16 %v7251
    %v7620 = vunpack.c.h.b16 %v7251
    %v7621 = vunpack.c.l.b16 %v7252
    %v7622 = vunpack.c.h.b16 %v7252
    %v7623 = vunpack.c.l.b16 %v7253
    %v7624 = vunpack.c.h.b16 %v7253
    %v7625 = vunpack.c.l.b16 %v7254
    %v7626 = vunpack.c.h.b16 %v7254
    %v7627 = vunpack.c.l.b16 %v7255
    %v7628 = vunpack.c.h.b16 %v7255
    %v7629 = vunpack.c.l.b16 %v7256
    %v7630 = vunpack.c.h.b16 %v7256
    %v7631 = vunpack.c.l.b16 %v7257
    %v7632 = vunpack.c.h.b16 %v7257
    %v7633 = vunpack.c.l.b16 %v7258
    %v7634 = vunpack.c.h.b16 %v7258
    %v7635 = vunpack.c.l.b16 %v7259
    %v7636 = vunpack.c.h.b16 %v7259
    %v7637 = vunpack.c.l.b16 %v7260
    %v7638 = vunpack.c.h.b16 %v7260
    %v7639 = vunpack.c.l.b16 %v7261
    %v7640 = vunpack.c.h.b16 %v7261
    %v7641 = vunpack.c.l.b16 %v7262
    %v7642 = vunpack.c.h.b16 %v7262
    %v7643 = vunpack.c.l.b16 %v7263
    %v7644 = vunpack.c.h.b16 %v7263
    %v7645 = vunpack.c.l.b16 %v7264
    %v7646 = vunpack.c.h.b16 %v7264
    %v7647 = vunpack.c.l.b16 %v7265
    %v7648 = vunpack.c.h.b16 %v7265
    %v7649 = vunpack.c.l.b16 %v7266
    %v7650 = vunpack.c.h.b16 %v7266
    %v7651 = vpack.c.b16 %v7399, %v7395
    %v7652 = vpack.c.b16 %v7400, %v7396
    %v7653 = vpack.c.b16 %v7401, %v7397
    %v7654 = vpack.c.b16 %v7402, %v7398
    %v7655 = vpack.c.b16 %v7407, %v7403
    %v7656 = vpack.c.b16 %v7408, %v7404
    %v7657 = vpack.c.b16 %v7409, %v7405
    %v7658 = vpack.c.b16 %v7410, %v7406
    %v7659 = vpack.c.b16 %v7415, %v7411
    %v7660 = vpack.c.b16 %v7416, %v7412
    %v7661 = vpack.c.b16 %v7417, %v7413
    %v7662 = vpack.c.b16 %v7418, %v7414
    %v7663 = vpack.c.b16 %v7423, %v7419
    %v7664 = vpack.c.b16 %v7424, %v7420
    %v7665 = vpack.c.b16 %v7425, %v7421
    %v7666 = vpack.c.b16 %v7426, %v7422
    %v7667 = vpack.c.b16 %v7431, %v7427
    %v7668 = vpack.c.b16 %v7432, %v7428
    %v7669 = vpack.c.b16 %v7433, %v7429
    %v7670 = vpack.c.b16 %v7434, %v7430
    %v7671 = vpack.c.b16 %v7439, %v7435
    %v7672 = vpack.c.b16 %v7440, %v7436
    %v7673 = vpack.c.b16 %v7441, %v7437
    %v7674 = vpack.c.b16 %v7442, %v7438
    %v7675 = vpack.c.b16 %v7447, %v7443
    %v7676 = vpack.c.b16 %v7448, %v7444
    %v7677 = vpack.c.b16 %v7449, %v7445
    %v7678 = vpack.c.b16 %v7450, %v7446
    %v7679 = vpack.c.b16 %v7455, %v7451
    %v7680 = vpack.c.b16 %v7456, %v7452
    %v7681 = vpack.c.b16 %v7457, %v7453
    %v7682 = vpack.c.b16 %v7458, %v7454
    %v7683 = vpack.c.b16 %v7463, %v7459
    %v7684 = vpack.c.b16 %v7464, %v7460
    %v7685 = vpack.c.b16 %v7465, %v7461
    %v7686 = vpack.c.b16 %v7466, %v7462
    %v7687 = vpack.c.b16 %v7471, %v7467
    %v7688 = vpack.c.b16 %v7472, %v7468
    %v7689 = vpack.c.b16 %v7473, %v7469
    %v7690 = vpack.c.b16 %v7474, %v7470
    %v7691 = vpack.c.b16 %v7479, %v7475
    %v7692 = vpack.c.b16 %v7480, %v7476
    %v7693 = vpack.c.b16 %v7481, %v7477
    %v7694 = vpack.c.b16 %v7482, %v7478
    %v7695 = vpack.c.b16 %v7487, %v7483
    %v7696 = vpack.c.b16 %v7488, %v7484
    %v7697 = vpack.c.b16 %v7489, %v7485
    %v7698 = vpack.c.b16 %v7490, %v7486
    %v7699 = vpack.c.b16 %v7495, %v7491
    %v7700 = vpack.c.b16 %v7496, %v7492
    %v7701 = vpack.c.b16 %v7497, %v7493
    %v7702 = vpack.c.b16 %v7498, %v7494
    %v7703 = vpack.c.b16 %v7503, %v7499
    %v7704 = vpack.c.b16 %v7504, %v7500
    %v7705 = vpack.c.b16 %v7505, %v7501
    %v7706 = vpack.c.b16 %v7506, %v7502
    %v7707 = vpack.c.b16 %v7511, %v7507
    %v7708 = vpack.c.b16 %v7512, %v7508
    %v7709 = vpack.c.b16 %v7513, %v7509
    %v7710 = vpack.c.b16 %v7514, %v7510
    %v7711 = vpack.c.b16 %v7519, %v7515
    %v7712 = vpack.c.b16 %v7520, %v7516
    %v7713 = vpack.c.b16 %v7521, %v7517
    %v7714 = vpack.c.b16 %v7522, %v7518
    %v7715 = vpack.c.b16 %v7527, %v7523
    %v7716 = vpack.c.b16 %v7528, %v7524
    %v7717 = vpack.c.b16 %v7529, %v7525
    %v7718 = vpack.c.b16 %v7530, %v7526
    %v7719 = vpack.c.b16 %v7535, %v7531
    %v7720 = vpack.c.b16 %v7536, %v7532
    %v7721 = vpack.c.b16 %v7537, %v7533
    %v7722 = vpack.c.b16 %v7538, %v7534
    %v7723 = vpack.c.b16 %v7543, %v7539
    %v7724 = vpack.c.b16 %v7544, %v7540
    %v7725 = vpack.c.b16 %v7545, %v7541
    %v7726 = vpack.c.b16 %v7546, %v7542
    %v7727 = vpack.c.b16 %v7551, %v7547
    %v7728 = vpack.c.b16 %v7552, %v7548
    %v7729 = vpack.c.b16 %v7553, %v7549
    %v7730 = vpack.c.b16 %v7554, %v7550
    %v7731 = vpack.c.b16 %v7559, %v7555
    %v7732 = vpack.c.b16 %v7560, %v7556
    %v7733 = vpack.c.b16 %v7561, %v7557
    %v7734 = vpack.c.b16 %v7562, %v7558
    %v7735 = vpack.c.b16 %v7567, %v7563
    %v7736 = vpack.c.b16 %v7568, %v7564
    %v7737 = vpack.c.b16 %v7569, %v7565
    %v7738 = vpack.c.b16 %v7570, %v7566
    %v7739 = vpack.c.b16 %v7575, %v7571
    %v7740 = vpack.c.b16 %v7576, %v7572
    %v7741 = vpack.c.b16 %v7577, %v7573
    %v7742 = vpack.c.b16 %v7578, %v7574
    %v7743 = vpack.c.b16 %v7583, %v7579
    %v7744 = vpack.c.b16 %v7584, %v7580
    %v7745 = vpack.c.b16 %v7585, %v7581
    %v7746 = vpack.c.b16 %v7586, %v7582
    %v7747 = vpack.c.b16 %v7591, %v7587
    %v7748 = vpack.c.b16 %v7592, %v7588
    %v7749 = vpack.c.b16 %v7593, %v7589
    %v7750 = vpack.c.b16 %v7594, %v7590
    %v7751 = vpack.c.b16 %v7599, %v7595
    %v7752 = vpack.c.b16 %v7600, %v7596
    %v7753 = vpack.c.b16 %v7601, %v7597
    %v7754 = vpack.c.b16 %v7602, %v7598
    %v7755 = vpack.c.b16 %v7607, %v7603
    %v7756 = vpack.c.b16 %v7608, %v7604
    %v7757 = vpack.c.b16 %v7609, %v7605
    %v7758 = vpack.c.b16 %v7610, %v7606
    %v7759 = vpack.c.b16 %v7615, %v7611
    %v7760 = vpack.c.b16 %v7616, %v7612
    %v7761 = vpack.c.b16 %v7617, %v7613
    %v7762 = vpack.c.b16 %v7618, %v7614
    %v7763 = vpack.c.b16 %v7623, %v7619
    %v7764 = vpack.c.b16 %v7624, %v7620
    %v7765 = vpack.c.b16 %v7625, %v7621
    %v7766 = vpack.c.b16 %v7626, %v7622
    %v7767 = vpack.c.b16 %v7631, %v7627
    %v7768 = vpack.c.b16 %v7632, %v7628
    %v7769 = vpack.c.b16 %v7633, %v7629
    %v7770 = vpack.c.b16 %v7634, %v7630
    %v7771 = vpack.c.b16 %v7639, %v7635
    %v7772 = vpack.c.b16 %v7640, %v7636
    %v7773 = vpack.c.b16 %v7641, %v7637
    %v7774 = vpack.c.b16 %v7642, %v7638
    %v7775 = vpack.c.b16 %v7647, %v7643
    %v7776 = vpack.c.b16 %v7648, %v7644
    %v7777 = vpack.c.b16 %v7649, %v7645
    %v7778 = vpack.c.b16 %v7650, %v7646
    %7907 = vmatprep.subr.bf16.mxu0 %v7652
    %7908 = vmatpush1.bf16.msra.mxu0 %v7651
    %7909 = vmatprep.subr.bf16.mxu0 %v7656
    %7910 = vmatpush1.bf16.msra.mxu0 %v7655
    %7911 = vmatprep.subr.bf16.mxu0 %v7660
    %7912 = vmatpush1.bf16.msra.mxu0 %v7659
    %7913 = vmatprep.subr.bf16.mxu0 %v7664
    %7914 = vmatpush1.bf16.msra.mxu0 %v7663
    %7915 = vmatprep.subr.bf16.mxu0 %v7668
    %7916 = vmatpush1.bf16.msra.mxu0 %v7667
    %7917 = vmatprep.subr.bf16.mxu0 %v7672
    %7918 = vmatpush1.bf16.msra.mxu0 %v7671
    %7919 = vmatprep.subr.bf16.mxu0 %v7676
    %7920 = vmatpush1.bf16.msra.mxu0 %v7675
    %7921 = vmatprep.subr.bf16.mxu0 %v7680
    %7922 = vmatpush1.bf16.msra.mxu0 %v7679
    %7923 = vmatprep.subr.bf16.mxu0 %v7684
    %7924 = vmatpush1.bf16.msra.mxu0 %v7683
    %7925 = vmatprep.subr.bf16.mxu0 %v7688
    %7926 = vmatpush1.bf16.msra.mxu0 %v7687
    %7927 = vmatprep.subr.bf16.mxu0 %v7692
    %7928 = vmatpush1.bf16.msra.mxu0 %v7691
    %7929 = vmatprep.subr.bf16.mxu0 %v7696
    %7930 = vmatpush1.bf16.msra.mxu0 %v7695
    %7931 = vmatprep.subr.bf16.mxu0 %v7700
    %7932 = vmatpush1.bf16.msra.mxu0 %v7699
    %7933 = vmatprep.subr.bf16.mxu0 %v7704
    %7934 = vmatpush1.bf16.msra.mxu0 %v7703
    %7935 = vmatprep.subr.bf16.mxu0 %v7708
    %7936 = vmatpush1.bf16.msra.mxu0 %v7707
    %7937 = vmatprep.subr.bf16.mxu0 %v7712
    %7938 = vmatpush1.bf16.msra.mxu0 %v7711
    %7939 = vmatprep.mubr.bf16.mxu0 %v268
    %7940 = vmatmul.mubr.bf16.gmra.mrb[0].mxu0 %v267
    %v7941 = vpop.f32.mrb[0].mxu0
    %v7942 = vadd.f32 0.0, %v7941
    %v7943 = vpop.f32.mrb[0].mxu0
    %v7944 = vadd.f32 0.0, %v7943
    %v7945 = vpop.f32.mrb[0].mxu0
    %v7946 = vpop.f32.mrb[0].mxu0
    %7947 = vdwg.mxu0
    %7948 = vmatprep.subr.bf16.mxu0 %v7716
    %7949 = vmatpush1.bf16.msra.mxu0 %v7715
    %7950 = vmatprep.subr.bf16.mxu0 %v7720
    %7951 = vmatpush1.bf16.msra.mxu0 %v7719
    %7952 = vmatprep.subr.bf16.mxu0 %v7724
    %7953 = vmatpush1.bf16.msra.mxu0 %v7723
    %7954 = vmatprep.subr.bf16.mxu0 %v7728
    %7955 = vmatpush1.bf16.msra.mxu0 %v7727
    %7956 = vmatprep.subr.bf16.mxu0 %v7732
    %7957 = vmatpush1.bf16.msra.mxu0 %v7731
    %7958 = vmatprep.subr.bf16.mxu0 %v7736
    %7959 = vmatpush1.bf16.msra.mxu0 %v7735
    %7960 = vmatprep.subr.bf16.mxu0 %v7740
    %7961 = vmatpush1.bf16.msra.mxu0 %v7739
    %7962 = vmatprep.subr.bf16.mxu0 %v7744
    %7963 = vmatpush1.bf16.msra.mxu0 %v7743
    %7964 = vmatprep.subr.bf16.mxu0 %v7748
    %7965 = vmatpush1.bf16.msra.mxu0 %v7747
    %7966 = vmatprep.subr.bf16.mxu0 %v7752
    %7967 = vmatpush1.bf16.msra.mxu0 %v7751
    %7968 = vmatprep.subr.bf16.mxu0 %v7756
    %7969 = vmatpush1.bf16.msra.mxu0 %v7755
    %7970 = vmatprep.subr.bf16.mxu0 %v7760
    %7971 = vmatpush1.bf16.msra.mxu0 %v7759
    %7972 = vmatprep.subr.bf16.mxu0 %v7764
    %7973 = vmatpush1.bf16.msra.mxu0 %v7763
    %7974 = vmatprep.subr.bf16.mxu0 %v7768
    %7975 = vmatpush1.bf16.msra.mxu0 %v7767
    %7976 = vmatprep.subr.bf16.mxu0 %v7772
    %7977 = vmatpush1.bf16.msra.mxu0 %v7771
    %7978 = vmatprep.subr.bf16.mxu0 %v7776
    %7979 = vmatpush1.bf16.msra.mxu0 %v7775
    %7980 = vmatprep.mubr.bf16.mxu0 %v270
    %7981 = vmatmul.mubr.bf16.gmra.mrb[0].mxu0 %v269
    %v7982 = vpop.f32.mrb[0].mxu0
    %v7983 = vadd.f32 %v7942, %v7982
    %v7984 = vpop.f32.mrb[0].mxu0
    %v7985 = vadd.f32 %v7944, %v7984
    %v7986 = vpop.f32.mrb[0].mxu0
    %v7987 = vpop.f32.mrb[0].mxu0
    %7988 = vdwg.mxu0
    %7989 = vmatprep.subr.bf16.mxu0 %v7654
    %7990 = vmatpush1.bf16.msra.mxu0 %v7653
    %7991 = vmatprep.subr.bf16.mxu0 %v7658
    %7992 = vmatpush1.bf16.msra.mxu0 %v7657
    %7993 = vmatprep.subr.bf16.mxu0 %v7662
    %7994 = vmatpush1.bf16.msra.mxu0 %v7661
    %7995 = vmatprep.subr.bf16.mxu0 %v7666
    %7996 = vmatpush1.bf16.msra.mxu0 %v7665
    %7997 = vmatprep.subr.bf16.mxu0 %v7670
    %7998 = vmatpush1.bf16.msra.mxu0 %v7669
    %7999 = vmatprep.subr.bf16.mxu0 %v7674
    %8000 = vmatpush1.bf16.msra.mxu0 %v7673
    %8001 = vmatprep.subr.bf16.mxu0 %v7678
    %8002 = vmatpush1.bf16.msra.mxu0 %v7677
    %8003 = vmatprep.subr.bf16.mxu0 %v7682
    %8004 = vmatpush1.bf16.msra.mxu0 %v7681
    %8005 = vmatprep.subr.bf16.mxu0 %v7686
    %8006 = vmatpush1.bf16.msra.mxu0 %v7685
    %8007 = vmatprep.subr.bf16.mxu0 %v7690
    %8008 = vmatpush1.bf16.msra.mxu0 %v7689
    %8009 = vmatprep.subr.bf16.mxu0 %v7694
    %8010 = vmatpush1.bf16.msra.mxu0 %v7693
    %8011 = vmatprep.subr.bf16.mxu0 %v7698
    %8012 = vmatpush1.bf16.msra.mxu0 %v7697
    %8013 = vmatprep.subr.bf16.mxu0 %v7702
    %8014 = vmatpush1.bf16.msra.mxu0 %v7701
    %8015 = vmatprep.subr.bf16.mxu0 %v7706
    %8016 = vmatpush1.bf16.msra.mxu0 %v7705
    %8017 = vmatprep.subr.bf16.mxu0 %v7710
    %8018 = vmatpush1.bf16.msra.mxu0 %v7709
    %8019 = vmatprep.subr.bf16.mxu0 %v7714
    %8020 = vmatpush1.bf16.msra.mxu0 %v7713
    %8021 = vmatprep.mubr.bf16.mxu0 %v268
    %8022 = vmatmul.mubr.bf16.gmra.mrb[0].mxu0 %v267
    %v8023 = vpop.f32.mrb[0].mxu0
    %v8024 = vadd.f32 0.0, %v8023
    %v8025 = vpop.f32.mrb[0].mxu0
    %v8026 = vadd.f32 0.0, %v8025
    %v8027 = vpop.f32.mrb[0].mxu0
    %v8028 = vpop.f32.mrb[0].mxu0
    %8029 = vdwg.mxu0
    %8030 = vmatprep.subr.bf16.mxu0 %v7718
    %8031 = vmatpush1.bf16.msra.mxu0 %v7717
    %8032 = vmatprep.subr.bf16.mxu0 %v7722
    %8033 = vmatpush1.bf16.msra.mxu0 %v7721
    %8034 = vmatprep.subr.bf16.mxu0 %v7726
    %8035 = vmatpush1.bf16.msra.mxu0 %v7725
    %8036 = vmatprep.subr.bf16.mxu0 %v7730
    %8037 = vmatpush1.bf16.msra.mxu0 %v7729
    %8038 = vmatprep.subr.bf16.mxu0 %v7734
    %8039 = vmatpush1.bf16.msra.mxu0 %v7733
    %8040 = vmatprep.subr.bf16.mxu0 %v7738
    %8041 = vmatpush1.bf16.msra.mxu0 %v7737
    %8042 = vmatprep.subr.bf16.mxu0 %v7742
    %8043 = vmatpush1.bf16.msra.mxu0 %v7741
    %8044 = vmatprep.subr.bf16.mxu0 %v7746
    %8045 = vmatpush1.bf16.msra.mxu0 %v7745
    %8046 = vmatprep.subr.bf16.mxu0 %v7750
    %8047 = vmatpush1.bf16.msra.mxu0 %v7749
    %8048 = vmatprep.subr.bf16.mxu0 %v7754
    %8049 = vmatpush1.bf16.msra.mxu0 %v7753
    %8050 = vmatprep.subr.bf16.mxu0 %v7758
    %8051 = vmatpush1.bf16.msra.mxu0 %v7757
    %8052 = vmatprep.subr.bf16.mxu0 %v7762
    %8053 = vmatpush1.bf16.msra.mxu0 %v7761
    %8054 = vmatprep.subr.bf16.mxu0 %v7766
    %8055 = vmatpush1.bf16.msra.mxu0 %v7765
    %8056 = vmatprep.subr.bf16.mxu0 %v7770
    %8057 = vmatpush1.bf16.msra.mxu0 %v7769
    %8058 = vmatprep.subr.bf16.mxu0 %v7774
    %8059 = vmatpush1.bf16.msra.mxu0 %v7773
    %8060 = vmatprep.subr.bf16.mxu0 %v7778
    %8061 = vmatpush1.bf16.msra.mxu0 %v7777
    %8062 = vmatprep.mubr.bf16.mxu0 %v270
    %8063 = vmatmul.mubr.bf16.gmra.mrb[0].mxu0 %v269
    %v8064 = vpop.f32.mrb[0].mxu0
    %v8065 = vadd.f32 %v8024, %v8064
    %v8066 = vpop.f32.mrb[0].mxu0
    %v8067 = vadd.f32 %v8026, %v8066
    %v8068 = vpop.f32.mrb[0].mxu0
    %v8069 = vpop.f32.mrb[0].mxu0
    %8070 = vdwg.mxu0
    %v8199 = vunpack.c.l.b16 %v7011
    %v8200 = vunpack.c.h.b16 %v7011
    %v8201 = vunpack.c.l.b16 %v7012
    %v8202 = vunpack.c.h.b16 %v7012
    %v8203 = vunpack.c.l.b16 %v7013
    %v8204 = vunpack.c.h.b16 %v7013
    %v8205 = vunpack.c.l.b16 %v7014
    %v8206 = vunpack.c.h.b16 %v7014
    %v8207 = vunpack.c.l.b16 %v7015
    %v8208 = vunpack.c.h.b16 %v7015
    %v8209 = vunpack.c.l.b16 %v7016
    %v8210 = vunpack.c.h.b16 %v7016
    %v8211 = vunpack.c.l.b16 %v7017
    %v8212 = vunpack.c.h.b16 %v7017
    %v8213 = vunpack.c.l.b16 %v7018
    %v8214 = vunpack.c.h.b16 %v7018
    %v8215 = vunpack.c.l.b16 %v7019
    %v8216 = vunpack.c.h.b16 %v7019
    %v8217 = vunpack.c.l.b16 %v7020
    %v8218 = vunpack.c.h.b16 %v7020
    %v8219 = vunpack.c.l.b16 %v7021
    %v8220 = vunpack.c.h.b16 %v7021
    %v8221 = vunpack.c.l.b16 %v7022
    %v8222 = vunpack.c.h.b16 %v7022
    %v8223 = vunpack.c.l.b16 %v7023
    %v8224 = vunpack.c.h.b16 %v7023
    %v8225 = vunpack.c.l.b16 %v7024
    %v8226 = vunpack.c.h.b16 %v7024
    %v8227 = vunpack.c.l.b16 %v7025
    %v8228 = vunpack.c.h.b16 %v7025
    %v8229 = vunpack.c.l.b16 %v7026
    %v8230 = vunpack.c.h.b16 %v7026
    %v8231 = vunpack.c.l.b16 %v7027
    %v8232 = vunpack.c.h.b16 %v7027
    %v8233 = vunpack.c.l.b16 %v7028
    %v8234 = vunpack.c.h.b16 %v7028
    %v8235 = vunpack.c.l.b16 %v7029
    %v8236 = vunpack.c.h.b16 %v7029
    %v8237 = vunpack.c.l.b16 %v7030
    %v8238 = vunpack.c.h.b16 %v7030
    %v8239 = vunpack.c.l.b16 %v7031
    %v8240 = vunpack.c.h.b16 %v7031
    %v8241 = vunpack.c.l.b16 %v7032
    %v8242 = vunpack.c.h.b16 %v7032
    %v8243 = vunpack.c.l.b16 %v7033
    %v8244 = vunpack.c.h.b16 %v7033
    %v8245 = vunpack.c.l.b16 %v7034
    %v8246 = vunpack.c.h.b16 %v7034
    %v8247 = vunpack.c.l.b16 %v7035
    %v8248 = vunpack.c.h.b16 %v7035
    %v8249 = vunpack.c.l.b16 %v7036
    %v8250 = vunpack.c.h.b16 %v7036
    %v8251 = vunpack.c.l.b16 %v7037
    %v8252 = vunpack.c.h.b16 %v7037
    %v8253 = vunpack.c.l.b16 %v7038
    %v8254 = vunpack.c.h.b16 %v7038
    %v8255 = vunpack.c.l.b16 %v7039
    %v8256 = vunpack.c.h.b16 %v7039
    %v8257 = vunpack.c.l.b16 %v7040
    %v8258 = vunpack.c.h.b16 %v7040
    %v8259 = vunpack.c.l.b16 %v7041
    %v8260 = vunpack.c.h.b16 %v7041
    %v8261 = vunpack.c.l.b16 %v7042
    %v8262 = vunpack.c.h.b16 %v7042
    %v8263 = vunpack.c.l.b16 %v7043
    %v8264 = vunpack.c.h.b16 %v7043
    %v8265 = vunpack.c.l.b16 %v7044
    %v8266 = vunpack.c.h.b16 %v7044
    %v8267 = vunpack.c.l.b16 %v7045
    %v8268 = vunpack.c.h.b16 %v7045
    %v8269 = vunpack.c.l.b16 %v7046
    %v8270 = vunpack.c.h.b16 %v7046
    %v8271 = vunpack.c.l.b16 %v7047
    %v8272 = vunpack.c.h.b16 %v7047
    %v8273 = vunpack.c.l.b16 %v7048
    %v8274 = vunpack.c.h.b16 %v7048
    %v8275 = vunpack.c.l.b16 %v7049
    %v8276 = vunpack.c.h.b16 %v7049
    %v8277 = vunpack.c.l.b16 %v7050
    %v8278 = vunpack.c.h.b16 %v7050
    %v8279 = vunpack.c.l.b16 %v7051
    %v8280 = vunpack.c.h.b16 %v7051
    %v8281 = vunpack.c.l.b16 %v7052
    %v8282 = vunpack.c.h.b16 %v7052
    %v8283 = vunpack.c.l.b16 %v7053
    %v8284 = vunpack.c.h.b16 %v7053
    %v8285 = vunpack.c.l.b16 %v7054
    %v8286 = vunpack.c.h.b16 %v7054
    %v8287 = vunpack.c.l.b16 %v7055
    %v8288 = vunpack.c.h.b16 %v7055
    %v8289 = vunpack.c.l.b16 %v7056
    %v8290 = vunpack.c.h.b16 %v7056
    %v8291 = vunpack.c.l.b16 %v7057
    %v8292 = vunpack.c.h.b16 %v7057
    %v8293 = vunpack.c.l.b16 %v7058
    %v8294 = vunpack.c.h.b16 %v7058
    %v8295 = vunpack.c.l.b16 %v7059
    %v8296 = vunpack.c.h.b16 %v7059
    %v8297 = vunpack.c.l.b16 %v7060
    %v8298 = vunpack.c.h.b16 %v7060
    %v8299 = vunpack.c.l.b16 %v7061
    %v8300 = vunpack.c.h.b16 %v7061
    %v8301 = vunpack.c.l.b16 %v7062
    %v8302 = vunpack.c.h.b16 %v7062
    %v8303 = vunpack.c.l.b16 %v7063
    %v8304 = vunpack.c.h.b16 %v7063
    %v8305 = vunpack.c.l.b16 %v7064
    %v8306 = vunpack.c.h.b16 %v7064
    %v8307 = vunpack.c.l.b16 %v7065
    %v8308 = vunpack.c.h.b16 %v7065
    %v8309 = vunpack.c.l.b16 %v7066
    %v8310 = vunpack.c.h.b16 %v7066
    %v8311 = vunpack.c.l.b16 %v7067
    %v8312 = vunpack.c.h.b16 %v7067
    %v8313 = vunpack.c.l.b16 %v7068
    %v8314 = vunpack.c.h.b16 %v7068
    %v8315 = vunpack.c.l.b16 %v7069
    %v8316 = vunpack.c.h.b16 %v7069
    %v8317 = vunpack.c.l.b16 %v7070
    %v8318 = vunpack.c.h.b16 %v7070
    %v8319 = vunpack.c.l.b16 %v7071
    %v8320 = vunpack.c.h.b16 %v7071
    %v8321 = vunpack.c.l.b16 %v7072
    %v8322 = vunpack.c.h.b16 %v7072
    %v8323 = vunpack.c.l.b16 %v7073
    %v8324 = vunpack.c.h.b16 %v7073
    %v8325 = vunpack.c.l.b16 %v7074
    %v8326 = vunpack.c.h.b16 %v7074
    %v8327 = vunpack.c.l.b16 %v7075
    %v8328 = vunpack.c.h.b16 %v7075
    %v8329 = vunpack.c.l.b16 %v7076
    %v8330 = vunpack.c.h.b16 %v7076
    %v8331 = vunpack.c.l.b16 %v7077
    %v8332 = vunpack.c.h.b16 %v7077
    %v8333 = vunpack.c.l.b16 %v7078
    %v8334 = vunpack.c.h.b16 %v7078
    %v8335 = vunpack.c.l.b16 %v7079
    %v8336 = vunpack.c.h.b16 %v7079
    %v8337 = vunpack.c.l.b16 %v7080
    %v8338 = vunpack.c.h.b16 %v7080
    %v8339 = vunpack.c.l.b16 %v7081
    %v8340 = vunpack.c.h.b16 %v7081
    %v8341 = vunpack.c.l.b16 %v7082
    %v8342 = vunpack.c.h.b16 %v7082
    %v8343 = vunpack.c.l.b16 %v7083
    %v8344 = vunpack.c.h.b16 %v7083
    %v8345 = vunpack.c.l.b16 %v7084
    %v8346 = vunpack.c.h.b16 %v7084
    %v8347 = vunpack.c.l.b16 %v7085
    %v8348 = vunpack.c.h.b16 %v7085
    %v8349 = vunpack.c.l.b16 %v7086
    %v8350 = vunpack.c.h.b16 %v7086
    %v8351 = vunpack.c.l.b16 %v7087
    %v8352 = vunpack.c.h.b16 %v7087
    %v8353 = vunpack.c.l.b16 %v7088
    %v8354 = vunpack.c.h.b16 %v7088
    %v8355 = vunpack.c.l.b16 %v7089
    %v8356 = vunpack.c.h.b16 %v7089
    %v8357 = vunpack.c.l.b16 %v7090
    %v8358 = vunpack.c.h.b16 %v7090
    %v8359 = vunpack.c.l.b16 %v7091
    %v8360 = vunpack.c.h.b16 %v7091
    %v8361 = vunpack.c.l.b16 %v7092
    %v8362 = vunpack.c.h.b16 %v7092
    %v8363 = vunpack.c.l.b16 %v7093
    %v8364 = vunpack.c.h.b16 %v7093
    %v8365 = vunpack.c.l.b16 %v7094
    %v8366 = vunpack.c.h.b16 %v7094
    %v8367 = vunpack.c.l.b16 %v7095
    %v8368 = vunpack.c.h.b16 %v7095
    %v8369 = vunpack.c.l.b16 %v7096
    %v8370 = vunpack.c.h.b16 %v7096
    %v8371 = vunpack.c.l.b16 %v7097
    %v8372 = vunpack.c.h.b16 %v7097
    %v8373 = vunpack.c.l.b16 %v7098
    %v8374 = vunpack.c.h.b16 %v7098
    %v8375 = vunpack.c.l.b16 %v7099
    %v8376 = vunpack.c.h.b16 %v7099
    %v8377 = vunpack.c.l.b16 %v7100
    %v8378 = vunpack.c.h.b16 %v7100
    %v8379 = vunpack.c.l.b16 %v7101
    %v8380 = vunpack.c.h.b16 %v7101
    %v8381 = vunpack.c.l.b16 %v7102
    %v8382 = vunpack.c.h.b16 %v7102
    %v8383 = vunpack.c.l.b16 %v7103
    %v8384 = vunpack.c.h.b16 %v7103
    %v8385 = vunpack.c.l.b16 %v7104
    %v8386 = vunpack.c.h.b16 %v7104
    %v8387 = vunpack.c.l.b16 %v7105
    %v8388 = vunpack.c.h.b16 %v7105
    %v8389 = vunpack.c.l.b16 %v7106
    %v8390 = vunpack.c.h.b16 %v7106
    %v8391 = vunpack.c.l.b16 %v7107
    %v8392 = vunpack.c.h.b16 %v7107
    %v8393 = vunpack.c.l.b16 %v7108
    %v8394 = vunpack.c.h.b16 %v7108
    %v8395 = vunpack.c.l.b16 %v7109
    %v8396 = vunpack.c.h.b16 %v7109
    %v8397 = vunpack.c.l.b16 %v7110
    %v8398 = vunpack.c.h.b16 %v7110
    %v8399 = vunpack.c.l.b16 %v7111
    %v8400 = vunpack.c.h.b16 %v7111
    %v8401 = vunpack.c.l.b16 %v7112
    %v8402 = vunpack.c.h.b16 %v7112
    %v8403 = vunpack.c.l.b16 %v7113
    %v8404 = vunpack.c.h.b16 %v7113
    %v8405 = vunpack.c.l.b16 %v7114
    %v8406 = vunpack.c.h.b16 %v7114
    %v8407 = vunpack.c.l.b16 %v7115
    %v8408 = vunpack.c.h.b16 %v7115
    %v8409 = vunpack.c.l.b16 %v7116
    %v8410 = vunpack.c.h.b16 %v7116
    %v8411 = vunpack.c.l.b16 %v7117
    %v8412 = vunpack.c.h.b16 %v7117
    %v8413 = vunpack.c.l.b16 %v7118
    %v8414 = vunpack.c.h.b16 %v7118
    %v8415 = vunpack.c.l.b16 %v7119
    %v8416 = vunpack.c.h.b16 %v7119
    %v8417 = vunpack.c.l.b16 %v7120
    %v8418 = vunpack.c.h.b16 %v7120
    %v8419 = vunpack.c.l.b16 %v7121
    %v8420 = vunpack.c.h.b16 %v7121
    %v8421 = vunpack.c.l.b16 %v7122
    %v8422 = vunpack.c.h.b16 %v7122
    %v8423 = vunpack.c.l.b16 %v7123
    %v8424 = vunpack.c.h.b16 %v7123
    %v8425 = vunpack.c.l.b16 %v7124
    %v8426 = vunpack.c.h.b16 %v7124
    %v8427 = vunpack.c.l.b16 %v7125
    %v8428 = vunpack.c.h.b16 %v7125
    %v8429 = vunpack.c.l.b16 %v7126
    %v8430 = vunpack.c.h.b16 %v7126
    %v8431 = vunpack.c.l.b16 %v7127
    %v8432 = vunpack.c.h.b16 %v7127
    %v8433 = vunpack.c.l.b16 %v7128
    %v8434 = vunpack.c.h.b16 %v7128
    %v8435 = vunpack.c.l.b16 %v7129
    %v8436 = vunpack.c.h.b16 %v7129
    %v8437 = vunpack.c.l.b16 %v7130
    %v8438 = vunpack.c.h.b16 %v7130
    %v8439 = vunpack.c.l.b16 %v7131
    %v8440 = vunpack.c.h.b16 %v7131
    %v8441 = vunpack.c.l.b16 %v7132
    %v8442 = vunpack.c.h.b16 %v7132
    %v8443 = vunpack.c.l.b16 %v7133
    %v8444 = vunpack.c.h.b16 %v7133
    %v8445 = vunpack.c.l.b16 %v7134
    %v8446 = vunpack.c.h.b16 %v7134
    %v8447 = vunpack.c.l.b16 %v7135
    %v8448 = vunpack.c.h.b16 %v7135
    %v8449 = vunpack.c.l.b16 %v7136
    %v8450 = vunpack.c.h.b16 %v7136
    %v8451 = vunpack.c.l.b16 %v7137
    %v8452 = vunpack.c.h.b16 %v7137
    %v8453 = vunpack.c.l.b16 %v7138
    %v8454 = vunpack.c.h.b16 %v7138
    %v8455 = vpack.c.b16 %v8203, %v8199
    %v8456 = vpack.c.b16 %v8204, %v8200
    %v8457 = vpack.c.b16 %v8205, %v8201
    %v8458 = vpack.c.b16 %v8206, %v8202
    %v8459 = vpack.c.b16 %v8211, %v8207
    %v8460 = vpack.c.b16 %v8212, %v8208
    %v8461 = vpack.c.b16 %v8213, %v8209
    %v8462 = vpack.c.b16 %v8214, %v8210
    %v8463 = vpack.c.b16 %v8219, %v8215
    %v8464 = vpack.c.b16 %v8220, %v8216
    %v8465 = vpack.c.b16 %v8221, %v8217
    %v8466 = vpack.c.b16 %v8222, %v8218
    %v8467 = vpack.c.b16 %v8227, %v8223
    %v8468 = vpack.c.b16 %v8228, %v8224
    %v8469 = vpack.c.b16 %v8229, %v8225
    %v8470 = vpack.c.b16 %v8230, %v8226
    %v8471 = vpack.c.b16 %v8235, %v8231
    %v8472 = vpack.c.b16 %v8236, %v8232
    %v8473 = vpack.c.b16 %v8237, %v8233
    %v8474 = vpack.c.b16 %v8238, %v8234
    %v8475 = vpack.c.b16 %v8243, %v8239
    %v8476 = vpack.c.b16 %v8244, %v8240
    %v8477 = vpack.c.b16 %v8245, %v8241
    %v8478 = vpack.c.b16 %v8246, %v8242
    %v8479 = vpack.c.b16 %v8251, %v8247
    %v8480 = vpack.c.b16 %v8252, %v8248
    %v8481 = vpack.c.b16 %v8253, %v8249
    %v8482 = vpack.c.b16 %v8254, %v8250
    %v8483 = vpack.c.b16 %v8259, %v8255
    %v8484 = vpack.c.b16 %v8260, %v8256
    %v8485 = vpack.c.b16 %v8261, %v8257
    %v8486 = vpack.c.b16 %v8262, %v8258
    %v8487 = vpack.c.b16 %v8267, %v8263
    %v8488 = vpack.c.b16 %v8268, %v8264
    %v8489 = vpack.c.b16 %v8269, %v8265
    %v8490 = vpack.c.b16 %v8270, %v8266
    %v8491 = vpack.c.b16 %v8275, %v8271
    %v8492 = vpack.c.b16 %v8276, %v8272
    %v8493 = vpack.c.b16 %v8277, %v8273
    %v8494 = vpack.c.b16 %v8278, %v8274
    %v8495 = vpack.c.b16 %v8283, %v8279
    %v8496 = vpack.c.b16 %v8284, %v8280
    %v8497 = vpack.c.b16 %v8285, %v8281
    %v8498 = vpack.c.b16 %v8286, %v8282
    %v8499 = vpack.c.b16 %v8291, %v8287
    %v8500 = vpack.c.b16 %v8292, %v8288
    %v8501 = vpack.c.b16 %v8293, %v8289
    %v8502 = vpack.c.b16 %v8294, %v8290
    %v8503 = vpack.c.b16 %v8299, %v8295
    %v8504 = vpack.c.b16 %v8300, %v8296
    %v8505 = vpack.c.b16 %v8301, %v8297
    %v8506 = vpack.c.b16 %v8302, %v8298
    %v8507 = vpack.c.b16 %v8307, %v8303
    %v8508 = vpack.c.b16 %v8308, %v8304
    %v8509 = vpack.c.b16 %v8309, %v8305
    %v8510 = vpack.c.b16 %v8310, %v8306
    %v8511 = vpack.c.b16 %v8315, %v8311
    %v8512 = vpack.c.b16 %v8316, %v8312
    %v8513 = vpack.c.b16 %v8317, %v8313
    %v8514 = vpack.c.b16 %v8318, %v8314
    %v8515 = vpack.c.b16 %v8323, %v8319
    %v8516 = vpack.c.b16 %v8324, %v8320
    %v8517 = vpack.c.b16 %v8325, %v8321
    %v8518 = vpack.c.b16 %v8326, %v8322
    %v8519 = vpack.c.b16 %v8331, %v8327
    %v8520 = vpack.c.b16 %v8332, %v8328
    %v8521 = vpack.c.b16 %v8333, %v8329
    %v8522 = vpack.c.b16 %v8334, %v8330
    %v8523 = vpack.c.b16 %v8339, %v8335
    %v8524 = vpack.c.b16 %v8340, %v8336
    %v8525 = vpack.c.b16 %v8341, %v8337
    %v8526 = vpack.c.b16 %v8342, %v8338
    %v8527 = vpack.c.b16 %v8347, %v8343
    %v8528 = vpack.c.b16 %v8348, %v8344
    %v8529 = vpack.c.b16 %v8349, %v8345
    %v8530 = vpack.c.b16 %v8350, %v8346
    %v8531 = vpack.c.b16 %v8355, %v8351
    %v8532 = vpack.c.b16 %v8356, %v8352
    %v8533 = vpack.c.b16 %v8357, %v8353
    %v8534 = vpack.c.b16 %v8358, %v8354
    %v8535 = vpack.c.b16 %v8363, %v8359
    %v8536 = vpack.c.b16 %v8364, %v8360
    %v8537 = vpack.c.b16 %v8365, %v8361
    %v8538 = vpack.c.b16 %v8366, %v8362
    %v8539 = vpack.c.b16 %v8371, %v8367
    %v8540 = vpack.c.b16 %v8372, %v8368
    %v8541 = vpack.c.b16 %v8373, %v8369
    %v8542 = vpack.c.b16 %v8374, %v8370
    %v8543 = vpack.c.b16 %v8379, %v8375
    %v8544 = vpack.c.b16 %v8380, %v8376
    %v8545 = vpack.c.b16 %v8381, %v8377
    %v8546 = vpack.c.b16 %v8382, %v8378
    %v8547 = vpack.c.b16 %v8387, %v8383
    %v8548 = vpack.c.b16 %v8388, %v8384
    %v8549 = vpack.c.b16 %v8389, %v8385
    %v8550 = vpack.c.b16 %v8390, %v8386
    %v8551 = vpack.c.b16 %v8395, %v8391
    %v8552 = vpack.c.b16 %v8396, %v8392
    %v8553 = vpack.c.b16 %v8397, %v8393
    %v8554 = vpack.c.b16 %v8398, %v8394
    %v8555 = vpack.c.b16 %v8403, %v8399
    %v8556 = vpack.c.b16 %v8404, %v8400
    %v8557 = vpack.c.b16 %v8405, %v8401
    %v8558 = vpack.c.b16 %v8406, %v8402
    %v8559 = vpack.c.b16 %v8411, %v8407
    %v8560 = vpack.c.b16 %v8412, %v8408
    %v8561 = vpack.c.b16 %v8413, %v8409
    %v8562 = vpack.c.b16 %v8414, %v8410
    %v8563 = vpack.c.b16 %v8419, %v8415
    %v8564 = vpack.c.b16 %v8420, %v8416
    %v8565 = vpack.c.b16 %v8421, %v8417
    %v8566 = vpack.c.b16 %v8422, %v8418
    %v8567 = vpack.c.b16 %v8427, %v8423
    %v8568 = vpack.c.b16 %v8428, %v8424
    %v8569 = vpack.c.b16 %v8429, %v8425
    %v8570 = vpack.c.b16 %v8430, %v8426
    %v8571 = vpack.c.b16 %v8435, %v8431
    %v8572 = vpack.c.b16 %v8436, %v8432
    %v8573 = vpack.c.b16 %v8437, %v8433
    %v8574 = vpack.c.b16 %v8438, %v8434
    %v8575 = vpack.c.b16 %v8443, %v8439
    %v8576 = vpack.c.b16 %v8444, %v8440
    %v8577 = vpack.c.b16 %v8445, %v8441
    %v8578 = vpack.c.b16 %v8446, %v8442
    %v8579 = vpack.c.b16 %v8451, %v8447
    %v8580 = vpack.c.b16 %v8452, %v8448
    %v8581 = vpack.c.b16 %v8453, %v8449
    %v8582 = vpack.c.b16 %v8454, %v8450
    %8711 = vmatprep.subr.bf16.mxu0 %v8456
    %8712 = vmatpush1.bf16.msra.mxu0 %v8455
    %8713 = vmatprep.subr.bf16.mxu0 %v8460
    %8714 = vmatpush1.bf16.msra.mxu0 %v8459
    %8715 = vmatprep.subr.bf16.mxu0 %v8464
    %8716 = vmatpush1.bf16.msra.mxu0 %v8463
    %8717 = vmatprep.subr.bf16.mxu0 %v8468
    %8718 = vmatpush1.bf16.msra.mxu0 %v8467
    %8719 = vmatprep.subr.bf16.mxu0 %v8472
    %8720 = vmatpush1.bf16.msra.mxu0 %v8471
    %8721 = vmatprep.subr.bf16.mxu0 %v8476
    %8722 = vmatpush1.bf16.msra.mxu0 %v8475
    %8723 = vmatprep.subr.bf16.mxu0 %v8480
    %8724 = vmatpush1.bf16.msra.mxu0 %v8479
    %8725 = vmatprep.subr.bf16.mxu0 %v8484
    %8726 = vmatpush1.bf16.msra.mxu0 %v8483
    %8727 = vmatprep.subr.bf16.mxu0 %v8488
    %8728 = vmatpush1.bf16.msra.mxu0 %v8487
    %8729 = vmatprep.subr.bf16.mxu0 %v8492
    %8730 = vmatpush1.bf16.msra.mxu0 %v8491
    %8731 = vmatprep.subr.bf16.mxu0 %v8496
    %8732 = vmatpush1.bf16.msra.mxu0 %v8495
    %8733 = vmatprep.subr.bf16.mxu0 %v8500
    %8734 = vmatpush1.bf16.msra.mxu0 %v8499
    %8735 = vmatprep.subr.bf16.mxu0 %v8504
    %8736 = vmatpush1.bf16.msra.mxu0 %v8503
    %8737 = vmatprep.subr.bf16.mxu0 %v8508
    %8738 = vmatpush1.bf16.msra.mxu0 %v8507
    %8739 = vmatprep.subr.bf16.mxu0 %v8512
    %8740 = vmatpush1.bf16.msra.mxu0 %v8511
    %8741 = vmatprep.subr.bf16.mxu0 %v8516
    %8742 = vmatpush1.bf16.msra.mxu0 %v8515
    %8743 = vmatprep.mubr.bf16.mxu0 %v7008
    %8744 = vmatmul.mubr.bf16.gmra.mrb[0].mxu0 %v7007
    %v8745 = vpop.f32.mrb[0].mxu0
    %v8746 = vadd.f32 %v7983, %v8745
    %v8747 = vpop.f32.mrb[0].mxu0
    %v8748 = vadd.f32 %v7985, %v8747
    %v8749 = vpop.f32.mrb[0].mxu0
    %v8750 = vpop.f32.mrb[0].mxu0
    %8751 = vdwg.mxu0
    %8752 = vmatprep.subr.bf16.mxu0 %v8520
    %8753 = vmatpush1.bf16.msra.mxu0 %v8519
    %8754 = vmatprep.subr.bf16.mxu0 %v8524
    %8755 = vmatpush1.bf16.msra.mxu0 %v8523
    %8756 = vmatprep.subr.bf16.mxu0 %v8528
    %8757 = vmatpush1.bf16.msra.mxu0 %v8527
    %8758 = vmatprep.subr.bf16.mxu0 %v8532
    %8759 = vmatpush1.bf16.msra.mxu0 %v8531
    %8760 = vmatprep.subr.bf16.mxu0 %v8536
    %8761 = vmatpush1.bf16.msra.mxu0 %v8535
    %8762 = vmatprep.subr.bf16.mxu0 %v8540
    %8763 = vmatpush1.bf16.msra.mxu0 %v8539
    %8764 = vmatprep.subr.bf16.mxu0 %v8544
    %8765 = vmatpush1.bf16.msra.mxu0 %v8543
    %8766 = vmatprep.subr.bf16.mxu0 %v8548
    %8767 = vmatpush1.bf16.msra.mxu0 %v8547
    %8768 = vmatprep.subr.bf16.mxu0 %v8552
    %8769 = vmatpush1.bf16.msra.mxu0 %v8551
    %8770 = vmatprep.subr.bf16.mxu0 %v8556
    %8771 = vmatpush1.bf16.msra.mxu0 %v8555
    %8772 = vmatprep.subr.bf16.mxu0 %v8560
    %8773 = vmatpush1.bf16.msra.mxu0 %v8559
    %8774 = vmatprep.subr.bf16.mxu0 %v8564
    %8775 = vmatpush1.bf16.msra.mxu0 %v8563
    %8776 = vmatprep.subr.bf16.mxu0 %v8568
    %8777 = vmatpush1.bf16.msra.mxu0 %v8567
    %8778 = vmatprep.subr.bf16.mxu0 %v8572
    %8779 = vmatpush1.bf16.msra.mxu0 %v8571
    %8780 = vmatprep.subr.bf16.mxu0 %v8576
    %8781 = vmatpush1.bf16.msra.mxu0 %v8575
    %8782 = vmatprep.subr.bf16.mxu0 %v8580
    %8783 = vmatpush1.bf16.msra.mxu0 %v8579
    %8784 = vmatprep.mubr.bf16.mxu0 %v7010
    %8785 = vmatmul.mubr.bf16.gmra.mrb[0].mxu0 %v7009
    %v8786 = vpop.f32.mrb[0].mxu0
    %v8787 = vadd.f32 %v8746, %v8786
    %v8788 = vpop.f32.mrb[0].mxu0
    %v8789 = vadd.f32 %v8748, %v8788
    %v8790 = vpop.f32.mrb[0].mxu0
    %v8791 = vpop.f32.mrb[0].mxu0
    %8792 = vdwg.mxu0
    %8793 = vmatprep.subr.bf16.mxu0 %v8458
    %8794 = vmatpush1.bf16.msra.mxu0 %v8457
    %8795 = vmatprep.subr.bf16.mxu0 %v8462
    %8796 = vmatpush1.bf16.msra.mxu0 %v8461
    %8797 = vmatprep.subr.bf16.mxu0 %v8466
    %8798 = vmatpush1.bf16.msra.mxu0 %v8465
    %8799 = vmatprep.subr.bf16.mxu0 %v8470
    %8800 = vmatpush1.bf16.msra.mxu0 %v8469
    %8801 = vmatprep.subr.bf16.mxu0 %v8474
    %8802 = vmatpush1.bf16.msra.mxu0 %v8473
    %8803 = vmatprep.subr.bf16.mxu0 %v8478
    %8804 = vmatpush1.bf16.msra.mxu0 %v8477
    %8805 = vmatprep.subr.bf16.mxu0 %v8482
    %8806 = vmatpush1.bf16.msra.mxu0 %v8481
    %8807 = vmatprep.subr.bf16.mxu0 %v8486
    %8808 = vmatpush1.bf16.msra.mxu0 %v8485
    %8809 = vmatprep.subr.bf16.mxu0 %v8490
    %8810 = vmatpush1.bf16.msra.mxu0 %v8489
    %8811 = vmatprep.subr.bf16.mxu0 %v8494
    %8812 = vmatpush1.bf16.msra.mxu0 %v8493
    %8813 = vmatprep.subr.bf16.mxu0 %v8498
    %8814 = vmatpush1.bf16.msra.mxu0 %v8497
    %8815 = vmatprep.subr.bf16.mxu0 %v8502
    %8816 = vmatpush1.bf16.msra.mxu0 %v8501
    %8817 = vmatprep.subr.bf16.mxu0 %v8506
    %8818 = vmatpush1.bf16.msra.mxu0 %v8505
    %8819 = vmatprep.subr.bf16.mxu0 %v8510
    %8820 = vmatpush1.bf16.msra.mxu0 %v8509
    %8821 = vmatprep.subr.bf16.mxu0 %v8514
    %8822 = vmatpush1.bf16.msra.mxu0 %v8513
    %8823 = vmatprep.subr.bf16.mxu0 %v8518
    %8824 = vmatpush1.bf16.msra.mxu0 %v8517
    %8825 = vmatprep.mubr.bf16.mxu0 %v7008
    %8826 = vmatmul.mubr.bf16.gmra.mrb[0].mxu0 %v7007
    %v8827 = vpop.f32.mrb[0].mxu0
    %v8828 = vadd.f32 %v8065, %v8827
    %v8829 = vpop.f32.mrb[0].mxu0
    %v8830 = vadd.f32 %v8067, %v8829
    %v8831 = vpop.f32.mrb[0].mxu0
    %v8832 = vpop.f32.mrb[0].mxu0
    %8833 = vdwg.mxu0
    %8834 = vmatprep.subr.bf16.mxu0 %v8522
    %8835 = vmatpush1.bf16.msra.mxu0 %v8521
    %8836 = vmatprep.subr.bf16.mxu0 %v8526
    %8837 = vmatpush1.bf16.msra.mxu0 %v8525
    %8838 = vmatprep.subr.bf16.mxu0 %v8530
    %8839 = vmatpush1.bf16.msra.mxu0 %v8529
    %8840 = vmatprep.subr.bf16.mxu0 %v8534
    %8841 = vmatpush1.bf16.msra.mxu0 %v8533
    %8842 = vmatprep.subr.bf16.mxu0 %v8538
    %8843 = vmatpush1.bf16.msra.mxu0 %v8537
    %8844 = vmatprep.subr.bf16.mxu0 %v8542
    %8845 = vmatpush1.bf16.msra.mxu0 %v8541
    %8846 = vmatprep.subr.bf16.mxu0 %v8546
    %8847 = vmatpush1.bf16.msra.mxu0 %v8545
    %8848 = vmatprep.subr.bf16.mxu0 %v8550
    %8849 = vmatpush1.bf16.msra.mxu0 %v8549
    %8850 = vmatprep.subr.bf16.mxu0 %v8554
    %8851 = vmatpush1.bf16.msra.mxu0 %v8553
    %8852 = vmatprep.subr.bf16.mxu0 %v8558
    %8853 = vmatpush1.bf16.msra.mxu0 %v8557
    %8854 = vmatprep.subr.bf16.mxu0 %v8562
    %8855 = vmatpush1.bf16.msra.mxu0 %v8561
    %8856 = vmatprep.subr.bf16.mxu0 %v8566
    %8857 = vmatpush1.bf16.msra.mxu0 %v8565
    %8858 = vmatprep.subr.bf16.mxu0 %v8570
    %8859 = vmatpush1.bf16.msra.mxu0 %v8569
    %8860 = vmatprep.subr.bf16.mxu0 %v8574
    %8861 = vmatpush1.bf16.msra.mxu0 %v8573
    %8862 = vmatprep.subr.bf16.mxu0 %v8578
    %8863 = vmatpush1.bf16.msra.mxu0 %v8577
    %8864 = vmatprep.subr.bf16.mxu0 %v8582
    %8865 = vmatpush1.bf16.msra.mxu0 %v8581
    %8866 = vmatprep.mubr.bf16.mxu0 %v7010
    %8867 = vmatmul.mubr.bf16.gmra.mrb[0].mxu0 %v7009
    %v8868 = vpop.f32.mrb[0].mxu0
    %v8869 = vadd.f32 %v8828, %v8868
    %v8870 = vpop.f32.mrb[0].mxu0
    %v8871 = vadd.f32 %v8830, %v8870
    %v8872 = vpop.f32.mrb[0].mxu0
    %v8873 = vpop.f32.mrb[0].mxu0
    %8874 = vdwg.mxu0
    %v8875 = vld [vmem:[%s8] sm:$0xf]
    %v8877 = vlaneseq
    %v8878 = vshrl.u32 %v8877, 7
    %v8879 = vsub.s32 0, %v8878
    %v8880 = vrot.slane %v8875, %v8879
    %v8881 = vlaneseq
    %v8882 = vshrl.u32 %v8881, 7
    %v8883 = vsub.s32 1, %v8882
    %v8884 = vrot.slane %v8875, %v8883
    %v8885 = vlaneseq
    %v8886 = vshrl.u32 %v8885, 7
    %v8887 = vsub.s32 2, %v8886
    %v8888 = vrot.slane %v8875, %v8887
    %v8889 = vlaneseq
    %v8890 = vshrl.u32 %v8889, 7
    %v8891 = vsub.s32 3, %v8890
    %v8892 = vrot.slane %v8875, %v8891
    %v8897 = vadd.f32 %v8787, %v8880
    %v8898 = vadd.f32 %v8789, %v8884
    %v8899 = vadd.f32 %v8869, %v8888
    %v8900 = vadd.f32 %v8871, %v8892
    %v8901 = vtanh.pop %v8897
    %v8902 = vtanh.pop %v8898
    %v8903 = vtanh.pop %v8899
    %v8904 = vtanh.pop %v8900
    %v8905 = vpack.c.bf16 %v8901, %v8901
    %v8906 = vpack.c.bf16 %v8902, %v8902
    %v8907 = vpack.c.bf16 %v8903, %v8903
    %v8908 = vpack.c.bf16 %v8904, %v8904
    %v8909 = vld [vmem:[%s9] sm:$0xf]
    %v8910 = vld [vmem:[%s9 + $0x4] sm:$0xf]
    %v8911 = vld [vmem:[%s9 + $0x8] sm:$0xf]
    %v8912 = vld [vmem:[%s9 + $0xc] sm:$0xf]
    %v8913 = vld [vmem:[%s9 + $0x10] sm:$0xf]
    %v8914 = vld [vmem:[%s9 + $0x14] sm:$0xf]
    %v8915 = vld [vmem:[%s9 + $0x18] sm:$0xf]
    %v8916 = vld [vmem:[%s9 + $0x1c] sm:$0xf]
    %v8917 = vld [vmem:[%s9 + $0x20] sm:$0xf]
    %v8918 = vld [vmem:[%s9 + $0x24] sm:$0xf]
    %v8919 = vld [vmem:[%s9 + $0x28] sm:$0xf]
    %v8920 = vld [vmem:[%s9 + $0x2c] sm:$0xf]
    %v8921 = vld [vmem:[%s9 + $0x30] sm:$0xf]
    %v8922 = vld [vmem:[%s9 + $0x34] sm:$0xf]
    %v8923 = vld [vmem:[%s9 + $0x38] sm:$0xf]
    %v8924 = vld [vmem:[%s9 + $0x3c] sm:$0xf]
    %v8925 = vld [vmem:[%s9 + $0x40] sm:$0xf]
    %v8926 = vld [vmem:[%s9 + $0x44] sm:$0xf]
    %v8927 = vld [vmem:[%s9 + $0x48] sm:$0xf]
    %v8928 = vld [vmem:[%s9 + $0x4c] sm:$0xf]
    %v8929 = vld [vmem:[%s9 + $0x50] sm:$0xf]
    %v8930 = vld [vmem:[%s9 + $0x54] sm:$0xf]
    %v8931 = vld [vmem:[%s9 + $0x58] sm:$0xf]
    %v8932 = vld [vmem:[%s9 + $0x5c] sm:$0xf]
    %v8933 = vld [vmem:[%s9 + $0x60] sm:$0xf]
    %v8934 = vld [vmem:[%s9 + $0x64] sm:$0xf]
    %v8935 = vld [vmem:[%s9 + $0x68] sm:$0xf]
    %v8936 = vld [vmem:[%s9 + $0x6c] sm:$0xf]
    %v8937 = vld [vmem:[%s9 + $0x70] sm:$0xf]
    %v8938 = vld [vmem:[%s9 + $0x74] sm:$0xf]
    %v8939 = vld [vmem:[%s9 + $0x78] sm:$0xf]
    %v8940 = vld [vmem:[%s9 + $0x7c] sm:$0xf]
    %v8941 = vld [vmem:[%s9 + $0x80] sm:$0xf]
    %v8942 = vld [vmem:[%s9 + $0x84] sm:$0xf]
    %v8943 = vld [vmem:[%s9 + $0x88] sm:$0xf]
    %v8944 = vld [vmem:[%s9 + $0x8c] sm:$0xf]
    %v8945 = vld [vmem:[%s9 + $0x90] sm:$0xf]
    %v8946 = vld [vmem:[%s9 + $0x94] sm:$0xf]
    %v8947 = vld [vmem:[%s9 + $0x98] sm:$0xf]
    %v8948 = vld [vmem:[%s9 + $0x9c] sm:$0xf]
    %v8949 = vld [vmem:[%s9 + $0xa0] sm:$0xf]
    %v8950 = vld [vmem:[%s9 + $0xa4] sm:$0xf]
    %v8951 = vld [vmem:[%s9 + $0xa8] sm:$0xf]
    %v8952 = vld [vmem:[%s9 + $0xac] sm:$0xf]
    %v8953 = vld [vmem:[%s9 + $0xb0] sm:$0xf]
    %v8954 = vld [vmem:[%s9 + $0xb4] sm:$0xf]
    %v8955 = vld [vmem:[%s9 + $0xb8] sm:$0xf]
    %v8956 = vld [vmem:[%s9 + $0xbc] sm:$0xf]
    %v8957 = vld [vmem:[%s9 + $0xc0] sm:$0xf]
    %v8958 = vld [vmem:[%s9 + $0xc4] sm:$0xf]
    %v8959 = vld [vmem:[%s9 + $0xc8] sm:$0xf]
    %v8960 = vld [vmem:[%s9 + $0xcc] sm:$0xf]
    %v8961 = vld [vmem:[%s9 + $0xd0] sm:$0xf]
    %v8962 = vld [vmem:[%s9 + $0xd4] sm:$0xf]
    %v8963 = vld [vmem:[%s9 + $0xd8] sm:$0xf]
    %v8964 = vld [vmem:[%s9 + $0xdc] sm:$0xf]
    %v8965 = vld [vmem:[%s9 + $0xe0] sm:$0xf]
    %v8966 = vld [vmem:[%s9 + $0xe4] sm:$0xf]
    %v8967 = vld [vmem:[%s9 + $0xe8] sm:$0xf]
    %v8968 = vld [vmem:[%s9 + $0xec] sm:$0xf]
    %v8969 = vld [vmem:[%s9 + $0xf0] sm:$0xf]
    %v8970 = vld [vmem:[%s9 + $0xf4] sm:$0xf]
    %v8971 = vld [vmem:[%s9 + $0xf8] sm:$0xf]
    %v8972 = vld [vmem:[%s9 + $0xfc] sm:$0xf]
    %v8973 = vld [vmem:[%s10] sm:$0x1]
    %v8975 = vlaneseq
    %v8976 = vshrl.u32 %v8975, 7
    %v8977 = vsub.s32 0, %v8976
    %v8978 = vrot.slane %v8973, %v8977
    %v9044 = vunpack.c.l.b16 %v8909
    %v9045 = vunpack.c.l.b16 %v8910
    %v9046 = vunpack.c.l.b16 %v8911
    %v9047 = vunpack.c.l.b16 %v8912
    %v9048 = vunpack.c.l.b16 %v8913
    %v9049 = vunpack.c.l.b16 %v8914
    %v9050 = vunpack.c.l.b16 %v8915
    %v9051 = vunpack.c.l.b16 %v8916
    %v9052 = vunpack.c.l.b16 %v8917
    %v9053 = vunpack.c.l.b16 %v8918
    %v9054 = vunpack.c.l.b16 %v8919
    %v9055 = vunpack.c.l.b16 %v8920
    %v9056 = vunpack.c.l.b16 %v8921
    %v9057 = vunpack.c.l.b16 %v8922
    %v9058 = vunpack.c.l.b16 %v8923
    %v9059 = vunpack.c.l.b16 %v8924
    %v9060 = vunpack.c.l.b16 %v8925
    %v9061 = vunpack.c.l.b16 %v8926
    %v9062 = vunpack.c.l.b16 %v8927
    %v9063 = vunpack.c.l.b16 %v8928
    %v9064 = vunpack.c.l.b16 %v8929
    %v9065 = vunpack.c.l.b16 %v8930
    %v9066 = vunpack.c.l.b16 %v8931
    %v9067 = vunpack.c.l.b16 %v8932
    %v9068 = vunpack.c.l.b16 %v8933
    %v9069 = vunpack.c.l.b16 %v8934
    %v9070 = vunpack.c.l.b16 %v8935
    %v9071 = vunpack.c.l.b16 %v8936
    %v9072 = vunpack.c.l.b16 %v8937
    %v9073 = vunpack.c.l.b16 %v8938
    %v9074 = vunpack.c.l.b16 %v8939
    %v9075 = vunpack.c.l.b16 %v8940
    %v9076 = vunpack.c.l.b16 %v8941
    %v9077 = vunpack.c.l.b16 %v8942
    %v9078 = vunpack.c.l.b16 %v8943
    %v9079 = vunpack.c.l.b16 %v8944
    %v9080 = vunpack.c.l.b16 %v8945
    %v9081 = vunpack.c.l.b16 %v8946
    %v9082 = vunpack.c.l.b16 %v8947
    %v9083 = vunpack.c.l.b16 %v8948
    %v9084 = vunpack.c.l.b16 %v8949
    %v9085 = vunpack.c.l.b16 %v8950
    %v9086 = vunpack.c.l.b16 %v8951
    %v9087 = vunpack.c.l.b16 %v8952
    %v9088 = vunpack.c.l.b16 %v8953
    %v9089 = vunpack.c.l.b16 %v8954
    %v9090 = vunpack.c.l.b16 %v8955
    %v9091 = vunpack.c.l.b16 %v8956
    %v9092 = vunpack.c.l.b16 %v8957
    %v9093 = vunpack.c.l.b16 %v8958
    %v9094 = vunpack.c.l.b16 %v8959
    %v9095 = vunpack.c.l.b16 %v8960
    %v9096 = vunpack.c.l.b16 %v8961
    %v9097 = vunpack.c.l.b16 %v8962
    %v9098 = vunpack.c.l.b16 %v8963
    %v9099 = vunpack.c.l.b16 %v8964
    %v9100 = vunpack.c.l.b16 %v8965
    %v9101 = vunpack.c.l.b16 %v8966
    %v9102 = vunpack.c.l.b16 %v8967
    %v9103 = vunpack.c.l.b16 %v8968
    %v9104 = vunpack.c.l.b16 %v8969
    %v9105 = vunpack.c.l.b16 %v8970
    %v9106 = vunpack.c.l.b16 %v8971
    %v9107 = vunpack.c.l.b16 %v8972
    %v9108 = vpack.c.b16 %v9045, %v9044
    %v9109 = vpack.c.b16 %v9047, %v9046
    %v9110 = vpack.c.b16 %v9049, %v9048
    %v9111 = vpack.c.b16 %v9051, %v9050
    %v9112 = vpack.c.b16 %v9053, %v9052
    %v9113 = vpack.c.b16 %v9055, %v9054
    %v9114 = vpack.c.b16 %v9057, %v9056
    %v9115 = vpack.c.b16 %v9059, %v9058
    %v9116 = vpack.c.b16 %v9061, %v9060
    %v9117 = vpack.c.b16 %v9063, %v9062
    %v9118 = vpack.c.b16 %v9065, %v9064
    %v9119 = vpack.c.b16 %v9067, %v9066
    %v9120 = vpack.c.b16 %v9069, %v9068
    %v9121 = vpack.c.b16 %v9071, %v9070
    %v9122 = vpack.c.b16 %v9073, %v9072
    %v9123 = vpack.c.b16 %v9075, %v9074
    %v9124 = vpack.c.b16 %v9077, %v9076
    %v9125 = vpack.c.b16 %v9079, %v9078
    %v9126 = vpack.c.b16 %v9081, %v9080
    %v9127 = vpack.c.b16 %v9083, %v9082
    %v9128 = vpack.c.b16 %v9085, %v9084
    %v9129 = vpack.c.b16 %v9087, %v9086
    %v9130 = vpack.c.b16 %v9089, %v9088
    %v9131 = vpack.c.b16 %v9091, %v9090
    %v9132 = vpack.c.b16 %v9093, %v9092
    %v9133 = vpack.c.b16 %v9095, %v9094
    %v9134 = vpack.c.b16 %v9097, %v9096
    %v9135 = vpack.c.b16 %v9099, %v9098
    %v9136 = vpack.c.b16 %v9101, %v9100
    %v9137 = vpack.c.b16 %v9103, %v9102
    %v9138 = vpack.c.b16 %v9105, %v9104
    %v9139 = vpack.c.b16 %v9107, %v9106
    %9172 = vmatprep.subr.bf16.mxu0 0
    %9173 = vmatpush1.bf16.msra.mxu0 %v9108
    %9174 = vmatprep.subr.bf16.mxu0 0
    %9175 = vmatpush1.bf16.msra.mxu0 %v9109
    %9176 = vmatprep.subr.bf16.mxu0 0
    %9177 = vmatpush1.bf16.msra.mxu0 %v9110
    %9178 = vmatprep.subr.bf16.mxu0 0
    %9179 = vmatpush1.bf16.msra.mxu0 %v9111
    %9180 = vmatprep.subr.bf16.mxu0 0
    %9181 = vmatpush1.bf16.msra.mxu0 %v9112
    %9182 = vmatprep.subr.bf16.mxu0 0
    %9183 = vmatpush1.bf16.msra.mxu0 %v9113
    %9184 = vmatprep.subr.bf16.mxu0 0
    %9185 = vmatpush1.bf16.msra.mxu0 %v9114
    %9186 = vmatprep.subr.bf16.mxu0 0
    %9187 = vmatpush1.bf16.msra.mxu0 %v9115
    %9188 = vmatprep.subr.bf16.mxu0 0
    %9189 = vmatpush1.bf16.msra.mxu0 %v9116
    %9190 = vmatprep.subr.bf16.mxu0 0
    %9191 = vmatpush1.bf16.msra.mxu0 %v9117
    %9192 = vmatprep.subr.bf16.mxu0 0
    %9193 = vmatpush1.bf16.msra.mxu0 %v9118
    %9194 = vmatprep.subr.bf16.mxu0 0
    %9195 = vmatpush1.bf16.msra.mxu0 %v9119
    %9196 = vmatprep.subr.bf16.mxu0 0
    %9197 = vmatpush1.bf16.msra.mxu0 %v9120
    %9198 = vmatprep.subr.bf16.mxu0 0
    %9199 = vmatpush1.bf16.msra.mxu0 %v9121
    %9200 = vmatprep.subr.bf16.mxu0 0
    %9201 = vmatpush1.bf16.msra.mxu0 %v9122
    %9202 = vmatprep.subr.bf16.mxu0 0
    %9203 = vmatpush1.bf16.msra.mxu0 %v9123
    %9204 = vmatprep.mubr.bf16.mxu0 %v8906
    %9205 = vmatmul.mubr.bf16.gmra.mrb[0].mxu0 %v8905
    %v9206 = vpop.f32.mrb[0].mxu0
    %v9207 = vadd.f32 %v8978, %v9206
    %v9208 = vpop.f32.mrb[0].mxu0
    %v9209 = vpop.f32.mrb[0].mxu0
    %v9210 = vpop.f32.mrb[0].mxu0
    %9211 = vdwg.mxu0
    %9212 = vmatprep.subr.bf16.mxu0 0
    %9213 = vmatpush1.bf16.msra.mxu0 %v9124
    %9214 = vmatprep.subr.bf16.mxu0 0
    %9215 = vmatpush1.bf16.msra.mxu0 %v9125
    %9216 = vmatprep.subr.bf16.mxu0 0
    %9217 = vmatpush1.bf16.msra.mxu0 %v9126
    %9218 = vmatprep.subr.bf16.mxu0 0
    %9219 = vmatpush1.bf16.msra.mxu0 %v9127
    %9220 = vmatprep.subr.bf16.mxu0 0
    %9221 = vmatpush1.bf16.msra.mxu0 %v9128
    %9222 = vmatprep.subr.bf16.mxu0 0
    %9223 = vmatpush1.bf16.msra.mxu0 %v9129
    %9224 = vmatprep.subr.bf16.mxu0 0
    %9225 = vmatpush1.bf16.msra.mxu0 %v9130
    %9226 = vmatprep.subr.bf16.mxu0 0
    %9227 = vmatpush1.bf16.msra.mxu0 %v9131
    %9228 = vmatprep.subr.bf16.mxu0 0
    %9229 = vmatpush1.bf16.msra.mxu0 %v9132
    %9230 = vmatprep.subr.bf16.mxu0 0
    %9231 = vmatpush1.bf16.msra.mxu0 %v9133
    %9232 = vmatprep.subr.bf16.mxu0 0
    %9233 = vmatpush1.bf16.msra.mxu0 %v9134
    %9234 = vmatprep.subr.bf16.mxu0 0
    %9235 = vmatpush1.bf16.msra.mxu0 %v9135
    %9236 = vmatprep.subr.bf16.mxu0 0
    %9237 = vmatpush1.bf16.msra.mxu0 %v9136
    %9238 = vmatprep.subr.bf16.mxu0 0
    %9239 = vmatpush1.bf16.msra.mxu0 %v9137
    %9240 = vmatprep.subr.bf16.mxu0 0
    %9241 = vmatpush1.bf16.msra.mxu0 %v9138
    %9242 = vmatprep.subr.bf16.mxu0 0
    %9243 = vmatpush1.bf16.msra.mxu0 %v9139
    %9244 = vmatprep.mubr.bf16.mxu0 %v8908
    %9245 = vmatmul.mubr.bf16.gmra.mrb[0].mxu0 %v8907
    %v9246 = vpop.f32.mrb[0].mxu0
    %v9247 = vadd.f32 %v9207, %v9246
    %v9248 = vpop.f32.mrb[0].mxu0
    %v9249 = vpop.f32.mrb[0].mxu0
    %v9250 = vpop.f32.mrb[0].mxu0
    %9251 = vdwg.mxu0
    %v9256 = vcombine.low %v7003, %v7004
    %v9257 = vcombine.low %v7005, %v7006
    %v9259 = vunpack.c.l.s4 1983009808
    %v9260 = vunpack.c.0.s8 %v9259
    %v9261 = vlaneseq
    %v9262 = vshrl.u32 %v9261, 7
    %v9263 = vsub.s32 %v9260, %v9262
    %v9264 = vrot.slane %v9256, %v9263
    %v9266 = vunpack.c.l.s4 1983009808
    %v9267 = vunpack.c.0.s8 %v9266
    %v9268 = vlaneseq
    %v9269 = vshrl.u32 %v9268, 7
    %v9270 = vsub.s32 %v9267, %v9269
    %v9271 = vrot.slane %v9257, %v9270
    %v9272 = vcombine.low %v9264, %v9271
    %9274 = vst [vmem:[#allocation4] sm:$0xff] %v9272
    %v9279 = vcombine.low %v8901, %v8902
    %v9280 = vcombine.low %v8903, %v8904
    %v9282 = vunpack.c.l.s4 1983009808
    %v9283 = vunpack.c.0.s8 %v9282
    %v9284 = vlaneseq
    %v9285 = vshrl.u32 %v9284, 7
    %v9286 = vsub.s32 %v9283, %v9285
    %v9287 = vrot.slane %v9279, %v9286
    %v9289 = vunpack.c.l.s4 1983009808
    %v9290 = vunpack.c.0.s8 %v9289
    %v9291 = vlaneseq
    %v9292 = vshrl.u32 %v9291, 7
    %v9293 = vsub.s32 %v9290, %v9292
    %v9294 = vrot.slane %v9280, %v9293
    %v9295 = vcombine.low %v9287, %v9294
    %9297 = vst [vmem:[#allocation6] sm:$0xff] %v9295
    %9298 = vst [vmem:[#allocation2] sm:$0x3] %v9247
    // Predicated region
    $region46: #{forward.7} parent=1 // pred_check
      _
    $region47: #{forward.7} parent=1 // pred_check_branch
      %9300 = sbr.rel (0) target = $region49
    $region48: #{forward.7} parent=1 // pred_region
      %s9302 = ssub.s32 32, 32
      %9303 = vsyncadd [#allocation3], %s9302
      %s9305 = sshll.u32 [#allocation2], 4
      %s9306 = int_to_ptr.vmem [resolvable:$true] %s9305
      %9308 = dma.vmem_to_hbm [thread:$0]  %s9306, 32, %s11, [#allocation3]
    $region49: #{forward.7} parent=1 // pred_fallthru
      _
    // Predicated region
    $region50: #{forward.7} parent=1 // pred_check
      _
    $region51: #{forward.7} parent=1 // pred_check_branch
      %9310 = sbr.rel (0) target = $region53
    $region52: #{forward.7} parent=1 // pred_region
      %s9312 = ssub.s32 128, 128
      %9313 = vsyncadd [#allocation5], %s9312
      %s9315 = sshll.u32 [#allocation4], 4
      %s9316 = int_to_ptr.vmem [resolvable:$true] %s9315
      %9318 = dma.vmem_to_hbm [thread:$0]  %s9316, 128, %s12, [#allocation5]
    $region53: #{forward.7} parent=1 // pred_fallthru
      _
    // Predicated region
    $region54: #{forward.7} parent=1 // pred_check
      _
    $region55: #{forward.7} parent=1 // pred_check_branch
      %9320 = sbr.rel (0) target = $region57
    $region56: #{forward.7} parent=1 // pred_region
      %s9322 = ssub.s32 128, 128
      %9323 = vsyncadd [#allocation5], %s9322
      %s9325 = sshll.u32 [#allocation6], 4
      %s9326 = int_to_ptr.vmem [resolvable:$true] %s9325
      %9328 = dma.vmem_to_hbm [thread:$0]  %s9326, 128, %s13, [#allocation5]
    $region57: #{forward.7} parent=1 // pred_fallthru
      _
    // Predicated region
    $region58: #{forward.7} parent=1 // pred_check
      _
    $region59: #{forward.7} parent=1 // pred_check_branch
      %9330 = sbr.rel (0) target = $region61
    $region60: #{forward.7} parent=1 // pred_region
      %9331 = dma.done [#allocation3], 32
    $region61: #{forward.7} parent=1 // pred_fallthru
      _
    // Predicated region
    $region62: #{forward.7} parent=1 // pred_check
      _
    $region63: #{forward.7} parent=1 // pred_check_branch
      %9333 = sbr.rel (0) target = $region65
    $region64: #{forward.7} parent=1 // pred_region
      %9334 = dma.done [#allocation5], 128
    $region65: #{forward.7} parent=1 // pred_fallthru
      _
    // Predicated region
    $region66: #{forward.7} parent=1 // pred_check
      _
    $region67: #{forward.7} parent=1 // pred_check_branch
      %9336 = sbr.rel (0) target = $region69
    $region68: #{forward.7} parent=1 // pred_region
      %9337 = dma.done [#allocation5], 128
    $region69: #{forward.7} parent=1 // pred_fallthru
      _
    %9338 = vsyncpa [#allocation3], 1
    %9339 = vsyncpa [#allocation5], 1

</llo_original>
